<compile_context>
chip_gen: v5e
topology: v5e:2x2
jax: 0.10.0
libtpu: 0.0.40
codegen_flags: <defaults>
</compile_context>

<pallas_src>
import numpy as np
import jax
import jax.numpy as jnp
from jax.experimental import pallas as pl
from jax.experimental.pallas import tpu as pltpu

LANE = 128      # vreg lane width
SUBLANE = 8     # vreg sublane width (f32)


def _ceil_to(x, m):
    return ((x + m - 1) // m) * m


# --------------------------- fused LSTM+Linear kernel --------------------------
def make_fused_kernel(num_layers, T, B, Bp, Ep, Hp, Vp):
    """Kernel refs:
       capts (SMEM), feat, emb, (w_ih, w_hh, bias) * L, lin_w, lin_b,
       out, x_scr, h_scr, pre_scr (VMEM scratch)."""

    def kernel(*refs):
        capts_ref = refs[0]                         # SMEM (B, T-1) int32
        feat_ref = refs[1]                          # (Bp, Ep) f32
        emb_ref = refs[2]                           # (Vr, Ep) f32
        layer_refs = refs[3:3 + 3 * num_layers]     # per layer: w_ih, w_hh, bias
        lin_w_ref = refs[3 + 3 * num_layers]        # (Hp, Vp) bf16
        lin_b_ref = refs[4 + 3 * num_layers]        # (1, Vp) f32
        out_ref = refs[5 + 3 * num_layers]          # (T*Bp, Vp) f32
        x_scr = refs[6 + 3 * num_layers]            # (T*Bp, Ep) f32 scratch
        h_scr = refs[7 + 3 * num_layers]            # (T*Bp, Hp) f32 scratch
        pre_scr = refs[8 + 3 * num_layers]          # (T*Bp, 4*Hp) f32 scratch

        # ---- Build layer-0 input in-kernel (pack layout: row t*Bp + b) ----
        #   t == 0 : input_features[b]
        #   t >= 1 : embedding[capts[b, t-1]]
        x_scr[...] = jnp.zeros_like(x_scr)          # zero the padded batch rows
        x_scr[0:Bp, :] = feat_ref[...]              # t = 0 block (padded rows 0)
        for t in range(1, T):
            for b in range(B):
                tok = capts_ref[b, t - 1]           # scalar read from SMEM
                r = t * Bp + b
                x_scr[r:r + 1, :] = emb_ref[pl.ds(tok, 1), :]

        # ---- Layer-major LSTM stack ----
        in_scr = x_scr
        for l in range(num_layers):
            w_ih_ref = layer_refs[3 * l]            # (in_pad, 4*Hp) bf16
            w_hh_ref = layer_refs[3 * l + 1]        # (Hp, 4*Hp) bf16
            bias_ref = layer_refs[3 * l + 2]        # (1, 4*Hp) f32

            # Batched input-side GEMM over all timesteps; bias folded in once.
            pre_scr[...] = (
                jnp.dot(in_scr[...].astype(jnp.bfloat16), w_ih_ref[...],
                        preferred_element_type=jnp.float32)
                + bias_ref[...])

            # Only the h x W_hh recurrence stays in the serial time loop.
            h = jnp.zeros((Bp, Hp), jnp.float32)
            c = jnp.zeros((Bp, Hp), jnp.float32)
            for t in range(T):                      # static unroll (T small)
                gates = (pre_scr[t * Bp:(t + 1) * Bp, :]
                         + jnp.dot(h.astype(jnp.bfloat16), w_hh_ref[...],
                                   preferred_element_type=jnp.float32))
                # Each gate on its own 128-lane group -> whole-vreg views.
                # Padded lanes: zero bias -> sigmoid(0)*tanh(0) = 0 stays 0.
                i_g = jax.nn.sigmoid(gates[:, 0 * Hp:1 * Hp])
                f_g = jax.nn.sigmoid(gates[:, 1 * Hp:2 * Hp])
                g_g = jnp.tanh(gates[:, 2 * Hp:3 * Hp])
                o_g = jax.nn.sigmoid(gates[:, 3 * Hp:4 * Hp])
                c = f_g * c + i_g * g_g
                h = o_g * jnp.tanh(c)
                h_scr[t * Bp:(t + 1) * Bp, :] = h
            in_scr = h_scr                          # feeds next layer's GEMM

        # ---- Output Linear batched over all timesteps (one matmul/store) ----
        out_ref[...] = (
            jnp.dot(h_scr[...].astype(jnp.bfloat16), lin_w_ref[...],
                    preferred_element_type=jnp.float32)
            + lin_b_ref[...])

    return kernel


def fused_lstm_linear(capts, feat_pad, params, T, B):
    """capts (B, T-1) int32, feat_pad (Bp, Ep) f32 -> padded logits (T*Bp, Vp)."""
    Bp, Ep = feat_pad.shape
    Hp, Vp = params["Hp"], params["Vp"]
    num_layers = len(params["lstm"])
    emb_pad = params["embedding_pad"]

    inputs = [capts, feat_pad, emb_pad]
    in_specs = [
        pl.BlockSpec(feat_pad.shape, lambda i, *_: (0, 0)),
        pl.BlockSpec(emb_pad.shape, lambda i, *_: (0, 0)),
    ]
    for layer in params["lstm"]:
        in_pad = layer["w_ih_pad"].shape[0]
        inputs += [layer["w_ih_pad"], layer["w_hh_pad"], layer["bias_pad"]]
        in_specs += [
            pl.BlockSpec((in_pad, 4 * Hp), lambda i, *_: (0, 0)),
            pl.BlockSpec((Hp, 4 * Hp), lambda i, *_: (0, 0)),
            pl.BlockSpec((1, 4 * Hp), lambda i, *_: (0, 0)),
        ]
    inputs += [params["linear_w_pad"], params["linear_b_pad"]]
    in_specs += [pl.BlockSpec((Hp, Vp), lambda i, *_: (0, 0)),
                 pl.BlockSpec((1, Vp), lambda i, *_: (0, 0))]

    kernel = make_fused_kernel(num_layers, T, B, Bp, Ep, Hp, Vp)

    return pl.pallas_call(
        kernel,
        out_shape=jax.ShapeDtypeStruct((T * Bp, Vp), jnp.float32),
        grid_spec=pltpu.PrefetchScalarGridSpec(
            num_scalar_prefetch=1,           # capts -> SMEM
            grid=(1,),
            in_specs=in_specs,
            out_specs=pl.BlockSpec((T * Bp, Vp), lambda i, *_: (0, 0)),
            scratch_shapes=[
                pltpu.VMEM((T * Bp, Ep), jnp.float32),       # layer-0 input x
                pltpu.VMEM((T * Bp, Hp), jnp.float32),       # per-layer h outputs
                pltpu.VMEM((T * Bp, 4 * Hp), jnp.float32),   # batched input GEMM
            ]),
        compiler_params=pltpu.CompilerParams(
            dimension_semantics=("arbitrary",)),
    )(*inputs)


# ------------------------------ Full forward ----------------------------------
def lstm_model_forward(params, input_features, capts, lens):
    """Mirrors LSTMModel.forward.

    input_features: (B, E) f32, capts: (B, Tc) int32, lens: python list of ints
    (sorted descending, as pack_padded_sequence requires).
    Returns (sum(lens), vocab) f32 — logits over the packed sequence.
    """
    B, E = input_features.shape
    V = params["vocab_size"]
    Ep = params["Ep"]
    Bp = _ceil_to(B, SUBLANE)
    T = 1 + capts.shape[1]                    # image feature + caption tokens

    # Only host-side prep left: pad the image feature to (Bp, Ep).
    feat_pad = (jnp.zeros((Bp, Ep), jnp.float32)
                .at[:B, :E].set(input_features.astype(jnp.float32)))

    logits_flat = fused_lstm_linear(capts.astype(jnp.int32), feat_pad, params,
                                    T, B)                        # (T*Bp, Vp)

    # Gather in PyTorch pack_padded_sequence order: time-major, batch sorted.
    # (lens is a host-side python list; changing it changes output shape.)
    t_idx = np.array([t for t in range(T) for b in range(B) if lens[b] > t],
                     dtype=np.int32)
    b_idx = np.array([b for t in range(T) for b in range(B) if lens[b] > t],
                     dtype=np.int32)
    return logits_flat[t_idx * Bp + b_idx, :V]                   # (N, V)


# ------------------------------ Parameter init --------------------------------
def _pad_gate_weight(w_t, in_pad, H, Hp):
    """(in_dim, 4H) -> (in_pad, 4*Hp), gate k on lanes [k*Hp, k*Hp+H)."""
    in_dim = w_t.shape[0]
    w4 = w_t.reshape(in_dim, 4, H)
    w4 = jnp.pad(w4, ((0, in_pad - in_dim), (0, 0), (0, Hp - H)))
    return w4.reshape(in_pad, 4 * Hp)


def _pad_gate_bias(b, H, Hp):
    """(4H,) -> (1, 4*Hp), gate k on lanes [k*Hp, k*Hp+H); padding MUST be 0."""
    b4 = b.reshape(4, H)
    b4 = jnp.pad(b4, ((0, 0), (0, Hp - H)))
    return b4.reshape(1, 4 * Hp)


def init_params(key, embedding_size, hidden_size, vocab_size, num_layers):
    keys = jax.random.split(key, 3 + 4 * num_layers)
    k = 1.0 / np.sqrt(hidden_size)

    Ep = _ceil_to(embedding_size, LANE)
    Hp = _ceil_to(hidden_size, LANE)
    Vp = _ceil_to(vocab_size, LANE)
    Vr = _ceil_to(vocab_size, SUBLANE)     # embedding-table rows (sublane pad)

    params = {
        "hidden_size": hidden_size,
        "vocab_size": vocab_size,
        "Ep": Ep, "Hp": Hp, "Vp": Vp,
    }

    # nn.Embedding default: N(0, 1).  Padded table lives in VMEM in the kernel.
    emb = jax.random.normal(keys[0], (vocab_size, embedding_size), jnp.float32)
    params["embedding_pad"] = (jnp.zeros((Vr, Ep), jnp.float32)
                               .at[:vocab_size, :embedding_size].set(emb))

    # nn.LSTM default: U(-1/sqrt(H), 1/sqrt(H)) for all weights/biases.
    # Gate order (i, f, g, o); b_ih + b_hh folded into a single bias.
    # Matmul weights stored bf16 (f32 accumulation in-kernel).
    lstm_layers = []
    for l in range(num_layers):
        in_dim = embedding_size if l == 0 else hidden_size
        in_pad = Ep if l == 0 else Hp
        kw = keys[3 + 4 * l: 3 + 4 * (l + 1)]
        w_ih = jax.random.uniform(kw[0], (4 * hidden_size, in_dim),
                                  jnp.float32, -k, k)
        w_hh = jax.random.uniform(kw[1], (4 * hidden_size, hidden_size),
                                  jnp.float32, -k, k)
        b_ih = jax.random.uniform(kw[2], (4 * hidden_size,), jnp.float32, -k, k)
        b_hh = jax.random.uniform(kw[3], (4 * hidden_size,), jnp.float32, -k, k)
        lstm_layers.append({
            "w_ih_pad": _pad_gate_weight(w_ih.T, in_pad, hidden_size,
                                         Hp).astype(jnp.bfloat16),
            "w_hh_pad": _pad_gate_weight(w_hh.T, Hp, hidden_size,
                                         Hp).astype(jnp.bfloat16),
            "bias_pad": _pad_gate_bias(b_ih + b_hh, hidden_size, Hp),  # f32
        })
    params["lstm"] = lstm_layers

    # nn.Linear default: U(-1/sqrt(fan_in), 1/sqrt(fan_in))
    lw = jax.random.uniform(keys[1], (vocab_size, hidden_size),
                            jnp.float32, -k, k)
    lb = jax.random.uniform(keys[2], (vocab_size,), jnp.float32, -k, k)
    params["linear_w_pad"] = (jnp.zeros((Hp, Vp), jnp.float32)
                              .at[:hidden_size, :vocab_size].set(lw.T)
                              .astype(jnp.bfloat16))
    params["linear_b_pad"] = (jnp.zeros((1, Vp), jnp.float32)
                              .at[0, :vocab_size].set(lb))
    return params


if __name__ == "__main__":
    embedding_size = 32
    hidden_size = 32
    vocab_size = 50
    num_layers = 2
    batch = 4
    caption_len = 7                     # LSTM sequence length = 1 + 7 = 8
    lens = [8, 6, 5, 3]                 # sorted descending (pack_padded_sequence)

    key = jax.random.PRNGKey(0)
    k_par, k_feat, k_cap = jax.random.split(key, 3)

    params = init_params(k_par, embedding_size, hidden_size, vocab_size, num_layers)
    input_features = jax.random.normal(k_feat, (batch, embedding_size), jnp.float32)
    capts = jax.random.randint(k_cap, (batch, caption_len), 0, vocab_size, jnp.int32)

    out = lstm_model_forward(params, input_features, capts, lens)
    out = jax.block_until_ready(out)

    expected_rows = sum(lens)
    assert out.shape == (expected_rows, vocab_size), out.shape
    assert bool(jnp.all(jnp.isfinite(out)))
    print("KERNEL_OK")
</pallas_src>

<mosaic_0001>
module attributes {stable_mosaic.version = 11 : i64} {
  func.func @kernel(%arg0: i32, %arg1: memref<4x7xi32, #tpu.memory_space<smem>>, %arg2: memref<8x128xf32, #tpu.memory_space<vmem>>, %arg3: memref<56x128xf32, #tpu.memory_space<vmem>>, %arg4: memref<128x512xbf16, #tpu.memory_space<vmem>>, %arg5: memref<128x512xbf16, #tpu.memory_space<vmem>>, %arg6: memref<1x512xf32, #tpu.memory_space<vmem>>, %arg7: memref<128x512xbf16, #tpu.memory_space<vmem>>, %arg8: memref<128x512xbf16, #tpu.memory_space<vmem>>, %arg9: memref<1x512xf32, #tpu.memory_space<vmem>>, %arg10: memref<128x128xbf16, #tpu.memory_space<vmem>>, %arg11: memref<1x128xf32, #tpu.memory_space<vmem>>, %arg12: memref<64x128xf32, #tpu.memory_space<vmem>>, %arg13: memref<64x128xf32, #tpu.memory_space<vmem>>, %arg14: memref<64x128xf32, #tpu.memory_space<vmem>>, %arg15: memref<64x512xf32, #tpu.memory_space<vmem>>) attributes {dimension_semantics = [#tpu.dimension_semantics<arbitrary>], iteration_bounds = array<i64: 1>, scalar_prefetch = 1 : i64, scratch_operands = 3 : i64, tpu.core_type = #tpu.core_type<tc>, window_params = [{pipeline_mode = #tpu.pipeline_mode<synchronous>, transform_indices = @transform_0, window_bounds = array<i64: 8, 128>}, {pipeline_mode = #tpu.pipeline_mode<synchronous>, transform_indices = @transform_1, window_bounds = array<i64: 56, 128>}, {pipeline_mode = #tpu.pipeline_mode<synchronous>, transform_indices = @transform_2, window_bounds = array<i64: 128, 512>}, {pipeline_mode = #tpu.pipeline_mode<synchronous>, transform_indices = @transform_3, window_bounds = array<i64: 128, 512>}, {pipeline_mode = #tpu.pipeline_mode<synchronous>, transform_indices = @transform_4, window_bounds = array<i64: 1, 512>}, {pipeline_mode = #tpu.pipeline_mode<synchronous>, transform_indices = @transform_5, window_bounds = array<i64: 128, 512>}, {pipeline_mode = #tpu.pipeline_mode<synchronous>, transform_indices = @transform_6, window_bounds = array<i64: 128, 512>}, {pipeline_mode = #tpu.pipeline_mode<synchronous>, transform_indices = @transform_7, window_bounds = array<i64: 1, 512>}, {pipeline_mode = #tpu.pipeline_mode<synchronous>, transform_indices = @transform_8, window_bounds = array<i64: 128, 128>}, {pipeline_mode = #tpu.pipeline_mode<synchronous>, transform_indices = @transform_9, window_bounds = array<i64: 1, 128>}, {pipeline_mode = #tpu.pipeline_mode<synchronous>, transform_indices = @transform_10, window_bounds = array<i64: 64, 128>}]} {
    %cst = arith.constant 0.000000e+00 : f32
    %0 = vector.broadcast %cst : f32 to vector<64x128xf32>
    %c0 = arith.constant 0 : index
    %c0_0 = arith.constant 0 : index
    %1 = vector.load %arg13[%c0, %c0_0] : memref<64x128xf32, #tpu.memory_space<vmem>>, vector<64x128xf32>
    tpu.vector_store %arg13[%c0, %c0_0], %0 {strides = array<i32>} : memref<64x128xf32, #tpu.memory_space<vmem>>, vector<64x128xf32>,
    %c0_1 = arith.constant 0 : index
    %c0_2 = arith.constant 0 : index
    %2 = vector.load %arg2[%c0_1, %c0_2] : memref<8x128xf32, #tpu.memory_space<vmem>>, vector<8x128xf32>
    %c0_3 = arith.constant 0 : index
    %c0_4 = arith.constant 0 : index
    %3 = vector.load %arg13[%c0_3, %c0_4] : memref<64x128xf32, #tpu.memory_space<vmem>>, vector<8x128xf32>
    tpu.vector_store %arg13[%c0_3, %c0_4], %2 {strides = array<i32>} : memref<64x128xf32, #tpu.memory_space<vmem>>, vector<8x128xf32>,
    %c0_5 = arith.constant 0 : index
    %c0_6 = arith.constant 0 : index
    %4 = memref.load %arg1[%c0_5, %c0_6] : memref<4x7xi32, #tpu.memory_space<smem>>
    %5 = arith.index_cast %4 : i32 to index
    %c0_7 = arith.constant 0 : index
    %6 = vector.load %arg3[%5, %c0_7] : memref<56x128xf32, #tpu.memory_space<vmem>>, vector<1x128xf32>
    %c8 = arith.constant 8 : index
    %c0_8 = arith.constant 0 : index
    %7 = vector.load %arg13[%c8, %c0_8] : memref<64x128xf32, #tpu.memory_space<vmem>>, vector<1x128xf32>
    tpu.vector_store %arg13[%c8, %c0_8], %6 {strides = array<i32>} : memref<64x128xf32, #tpu.memory_space<vmem>>, vector<1x128xf32>,
    %c1 = arith.constant 1 : index
    %c0_9 = arith.constant 0 : index
    %8 = memref.load %arg1[%c1, %c0_9] : memref<4x7xi32, #tpu.memory_space<smem>>
    %9 = arith.index_cast %8 : i32 to index
    %c0_10 = arith.constant 0 : index
    %10 = vector.load %arg3[%9, %c0_10] : memref<56x128xf32, #tpu.memory_space<vmem>>, vector<1x128xf32>
    %c9 = arith.constant 9 : index
    %c0_11 = arith.constant 0 : index
    %11 = vector.load %arg13[%c9, %c0_11] : memref<64x128xf32, #tpu.memory_space<vmem>>, vector<1x128xf32>
    tpu.vector_store %arg13[%c9, %c0_11], %10 {strides = array<i32>} : memref<64x128xf32, #tpu.memory_space<vmem>>, vector<1x128xf32>,
    %c2 = arith.constant 2 : index
    %c0_12 = arith.constant 0 : index
    %12 = memref.load %arg1[%c2, %c0_12] : memref<4x7xi32, #tpu.memory_space<smem>>
    %13 = arith.index_cast %12 : i32 to index
    %c0_13 = arith.constant 0 : index
    %14 = vector.load %arg3[%13, %c0_13] : memref<56x128xf32, #tpu.memory_space<vmem>>, vector<1x128xf32>
    %c10 = arith.constant 10 : index
    %c0_14 = arith.constant 0 : index
    %15 = vector.load %arg13[%c10, %c0_14] : memref<64x128xf32, #tpu.memory_space<vmem>>, vector<1x128xf32>
    tpu.vector_store %arg13[%c10, %c0_14], %14 {strides = array<i32>} : memref<64x128xf32, #tpu.memory_space<vmem>>, vector<1x128xf32>,
    %c3 = arith.constant 3 : index
    %c0_15 = arith.constant 0 : index
    %16 = memref.load %arg1[%c3, %c0_15] : memref<4x7xi32, #tpu.memory_space<smem>>
    %17 = arith.index_cast %16 : i32 to index
    %c0_16 = arith.constant 0 : index
    %18 = vector.load %arg3[%17, %c0_16] : memref<56x128xf32, #tpu.memory_space<vmem>>, vector<1x128xf32>
    %c11 = arith.constant 11 : index
    %c0_17 = arith.constant 0 : index
    %19 = vector.load %arg13[%c11, %c0_17] : memref<64x128xf32, #tpu.memory_space<vmem>>, vector<1x128xf32>
    tpu.vector_store %arg13[%c11, %c0_17], %18 {strides = array<i32>} : memref<64x128xf32, #tpu.memory_space<vmem>>, vector<1x128xf32>,
    %c0_18 = arith.constant 0 : index
    %c1_19 = arith.constant 1 : index
    %20 = memref.load %arg1[%c0_18, %c1_19] : memref<4x7xi32, #tpu.memory_space<smem>>
    %21 = arith.index_cast %20 : i32 to index
    %c0_20 = arith.constant 0 : index
    %22 = vector.load %arg3[%21, %c0_20] : memref<56x128xf32, #tpu.memory_space<vmem>>, vector<1x128xf32>
    %c16 = arith.constant 16 : index
    %c0_21 = arith.constant 0 : index
    %23 = vector.load %arg13[%c16, %c0_21] : memref<64x128xf32, #tpu.memory_space<vmem>>, vector<1x128xf32>
    tpu.vector_store %arg13[%c16, %c0_21], %22 {strides = array<i32>} : memref<64x128xf32, #tpu.memory_space<vmem>>, vector<1x128xf32>,
    %c1_22 = arith.constant 1 : index
    %c1_23 = arith.constant 1 : index
    %24 = memref.load %arg1[%c1_22, %c1_23] : memref<4x7xi32, #tpu.memory_space<smem>>
    %25 = arith.index_cast %24 : i32 to index
    %c0_24 = arith.constant 0 : index
    %26 = vector.load %arg3[%25, %c0_24] : memref<56x128xf32, #tpu.memory_space<vmem>>, vector<1x128xf32>
    %c17 = arith.constant 17 : index
    %c0_25 = arith.constant 0 : index
    %27 = vector.load %arg13[%c17, %c0_25] : memref<64x128xf32, #tpu.memory_space<vmem>>, vector<1x128xf32>
    tpu.vector_store %arg13[%c17, %c0_25], %26 {strides = array<i32>} : memref<64x128xf32, #tpu.memory_space<vmem>>, vector<1x128xf32>,
    %c2_26 = arith.constant 2 : index
    %c1_27 = arith.constant 1 : index
    %28 = memref.load %arg1[%c2_26, %c1_27] : memref<4x7xi32, #tpu.memory_space<smem>>
    %29 = arith.index_cast %28 : i32 to index
    %c0_28 = arith.constant 0 : index
    %30 = vector.load %arg3[%29, %c0_28] : memref<56x128xf32, #tpu.memory_space<vmem>>, vector<1x128xf32>
    %c18 = arith.constant 18 : index
    %c0_29 = arith.constant 0 : index
    %31 = vector.load %arg13[%c18, %c0_29] : memref<64x128xf32, #tpu.memory_space<vmem>>, vector<1x128xf32>
    tpu.vector_store %arg13[%c18, %c0_29], %30 {strides = array<i32>} : memref<64x128xf32, #tpu.memory_space<vmem>>, vector<1x128xf32>,
    %c3_30 = arith.constant 3 : index
    %c1_31 = arith.constant 1 : index
    %32 = memref.load %arg1[%c3_30, %c1_31] : memref<4x7xi32, #tpu.memory_space<smem>>
    %33 = arith.index_cast %32 : i32 to index
    %c0_32 = arith.constant 0 : index
    %34 = vector.load %arg3[%33, %c0_32] : memref<56x128xf32, #tpu.memory_space<vmem>>, vector<1x128xf32>
    %c19 = arith.constant 19 : index
    %c0_33 = arith.constant 0 : index
    %35 = vector.load %arg13[%c19, %c0_33] : memref<64x128xf32, #tpu.memory_space<vmem>>, vector<1x128xf32>
    tpu.vector_store %arg13[%c19, %c0_33], %34 {strides = array<i32>} : memref<64x128xf32, #tpu.memory_space<vmem>>, vector<1x128xf32>,
    %c0_34 = arith.constant 0 : index
    %c2_35 = arith.constant 2 : index
    %36 = memref.load %arg1[%c0_34, %c2_35] : memref<4x7xi32, #tpu.memory_space<smem>>
    %37 = arith.index_cast %36 : i32 to index
    %c0_36 = arith.constant 0 : index
    %38 = vector.load %arg3[%37, %c0_36] : memref<56x128xf32, #tpu.memory_space<vmem>>, vector<1x128xf32>
    %c24 = arith.constant 24 : index
    %c0_37 = arith.constant 0 : index
    %39 = vector.load %arg13[%c24, %c0_37] : memref<64x128xf32, #tpu.memory_space<vmem>>, vector<1x128xf32>
    tpu.vector_store %arg13[%c24, %c0_37], %38 {strides = array<i32>} : memref<64x128xf32, #tpu.memory_space<vmem>>, vector<1x128xf32>,
    %c1_38 = arith.constant 1 : index
    %c2_39 = arith.constant 2 : index
    %40 = memref.load %arg1[%c1_38, %c2_39] : memref<4x7xi32, #tpu.memory_space<smem>>
    %41 = arith.index_cast %40 : i32 to index
    %c0_40 = arith.constant 0 : index
    %42 = vector.load %arg3[%41, %c0_40] : memref<56x128xf32, #tpu.memory_space<vmem>>, vector<1x128xf32>
    %c25 = arith.constant 25 : index
    %c0_41 = arith.constant 0 : index
    %43 = vector.load %arg13[%c25, %c0_41] : memref<64x128xf32, #tpu.memory_space<vmem>>, vector<1x128xf32>
    tpu.vector_store %arg13[%c25, %c0_41], %42 {strides = array<i32>} : memref<64x128xf32, #tpu.memory_space<vmem>>, vector<1x128xf32>,
    %c2_42 = arith.constant 2 : index
    %c2_43 = arith.constant 2 : index
    %44 = memref.load %arg1[%c2_42, %c2_43] : memref<4x7xi32, #tpu.memory_space<smem>>
    %45 = arith.index_cast %44 : i32 to index
    %c0_44 = arith.constant 0 : index
    %46 = vector.load %arg3[%45, %c0_44] : memref<56x128xf32, #tpu.memory_space<vmem>>, vector<1x128xf32>
    %c26 = arith.constant 26 : index
    %c0_45 = arith.constant 0 : index
    %47 = vector.load %arg13[%c26, %c0_45] : memref<64x128xf32, #tpu.memory_space<vmem>>, vector<1x128xf32>
    tpu.vector_store %arg13[%c26, %c0_45], %46 {strides = array<i32>} : memref<64x128xf32, #tpu.memory_space<vmem>>, vector<1x128xf32>,
    %c3_46 = arith.constant 3 : index
    %c2_47 = arith.constant 2 : index
    %48 = memref.load %arg1[%c3_46, %c2_47] : memref<4x7xi32, #tpu.memory_space<smem>>
    %49 = arith.index_cast %48 : i32 to index
    %c0_48 = arith.constant 0 : index
    %50 = vector.load %arg3[%49, %c0_48] : memref<56x128xf32, #tpu.memory_space<vmem>>, vector<1x128xf32>
    %c27 = arith.constant 27 : index
    %c0_49 = arith.constant 0 : index
    %51 = vector.load %arg13[%c27, %c0_49] : memref<64x128xf32, #tpu.memory_space<vmem>>, vector<1x128xf32>
    tpu.vector_store %arg13[%c27, %c0_49], %50 {strides = array<i32>} : memref<64x128xf32, #tpu.memory_space<vmem>>, vector<1x128xf32>,
    %c0_50 = arith.constant 0 : index
    %c3_51 = arith.constant 3 : index
    %52 = memref.load %arg1[%c0_50, %c3_51] : memref<4x7xi32, #tpu.memory_space<smem>>
    %53 = arith.index_cast %52 : i32 to index
    %c0_52 = arith.constant 0 : index
    %54 = vector.load %arg3[%53, %c0_52] : memref<56x128xf32, #tpu.memory_space<vmem>>, vector<1x128xf32>
    %c32 = arith.constant 32 : index
    %c0_53 = arith.constant 0 : index
    %55 = vector.load %arg13[%c32, %c0_53] : memref<64x128xf32, #tpu.memory_space<vmem>>, vector<1x128xf32>
    tpu.vector_store %arg13[%c32, %c0_53], %54 {strides = array<i32>} : memref<64x128xf32, #tpu.memory_space<vmem>>, vector<1x128xf32>,
    %c1_54 = arith.constant 1 : index
    %c3_55 = arith.constant 3 : index
    %56 = memref.load %arg1[%c1_54, %c3_55] : memref<4x7xi32, #tpu.memory_space<smem>>
    %57 = arith.index_cast %56 : i32 to index
    %c0_56 = arith.constant 0 : index
    %58 = vector.load %arg3[%57, %c0_56] : memref<56x128xf32, #tpu.memory_space<vmem>>, vector<1x128xf32>
    %c33 = arith.constant 33 : index
    %c0_57 = arith.constant 0 : index
    %59 = vector.load %arg13[%c33, %c0_57] : memref<64x128xf32, #tpu.memory_space<vmem>>, vector<1x128xf32>
    tpu.vector_store %arg13[%c33, %c0_57], %58 {strides = array<i32>} : memref<64x128xf32, #tpu.memory_space<vmem>>, vector<1x128xf32>,
    %c2_58 = arith.constant 2 : index
    %c3_59 = arith.constant 3 : index
    %60 = memref.load %arg1[%c2_58, %c3_59] : memref<4x7xi32, #tpu.memory_space<smem>>
    %61 = arith.index_cast %60 : i32 to index
    %c0_60 = arith.constant 0 : index
    %62 = vector.load %arg3[%61, %c0_60] : memref<56x128xf32, #tpu.memory_space<vmem>>, vector<1x128xf32>
    %c34 = arith.constant 34 : index
    %c0_61 = arith.constant 0 : index
    %63 = vector.load %arg13[%c34, %c0_61] : memref<64x128xf32, #tpu.memory_space<vmem>>, vector<1x128xf32>
    tpu.vector_store %arg13[%c34, %c0_61], %62 {strides = array<i32>} : memref<64x128xf32, #tpu.memory_space<vmem>>, vector<1x128xf32>,
    %c3_62 = arith.constant 3 : index
    %c3_63 = arith.constant 3 : index
    %64 = memref.load %arg1[%c3_62, %c3_63] : memref<4x7xi32, #tpu.memory_space<smem>>
    %65 = arith.index_cast %64 : i32 to index
    %c0_64 = arith.constant 0 : index
    %66 = vector.load %arg3[%65, %c0_64] : memref<56x128xf32, #tpu.memory_space<vmem>>, vector<1x128xf32>
    %c35 = arith.constant 35 : index
    %c0_65 = arith.constant 0 : index
    %67 = vector.load %arg13[%c35, %c0_65] : memref<64x128xf32, #tpu.memory_space<vmem>>, vector<1x128xf32>
    tpu.vector_store %arg13[%c35, %c0_65], %66 {strides = array<i32>} : memref<64x128xf32, #tpu.memory_space<vmem>>, vector<1x128xf32>,
    %c0_66 = arith.constant 0 : index
    %c4 = arith.constant 4 : index
    %68 = memref.load %arg1[%c0_66, %c4] : memref<4x7xi32, #tpu.memory_space<smem>>
    %69 = arith.index_cast %68 : i32 to index
    %c0_67 = arith.constant 0 : index
    %70 = vector.load %arg3[%69, %c0_67] : memref<56x128xf32, #tpu.memory_space<vmem>>, vector<1x128xf32>
    %c40 = arith.constant 40 : index
    %c0_68 = arith.constant 0 : index
    %71 = vector.load %arg13[%c40, %c0_68] : memref<64x128xf32, #tpu.memory_space<vmem>>, vector<1x128xf32>
    tpu.vector_store %arg13[%c40, %c0_68], %70 {strides = array<i32>} : memref<64x128xf32, #tpu.memory_space<vmem>>, vector<1x128xf32>,
    %c1_69 = arith.constant 1 : index
    %c4_70 = arith.constant 4 : index
    %72 = memref.load %arg1[%c1_69, %c4_70] : memref<4x7xi32, #tpu.memory_space<smem>>
    %73 = arith.index_cast %72 : i32 to index
    %c0_71 = arith.constant 0 : index
    %74 = vector.load %arg3[%73, %c0_71] : memref<56x128xf32, #tpu.memory_space<vmem>>, vector<1x128xf32>
    %c41 = arith.constant 41 : index
    %c0_72 = arith.constant 0 : index
    %75 = vector.load %arg13[%c41, %c0_72] : memref<64x128xf32, #tpu.memory_space<vmem>>, vector<1x128xf32>
    tpu.vector_store %arg13[%c41, %c0_72], %74 {strides = array<i32>} : memref<64x128xf32, #tpu.memory_space<vmem>>, vector<1x128xf32>,
    %c2_73 = arith.constant 2 : index
    %c4_74 = arith.constant 4 : index
    %76 = memref.load %arg1[%c2_73, %c4_74] : memref<4x7xi32, #tpu.memory_space<smem>>
    %77 = arith.index_cast %76 : i32 to index
    %c0_75 = arith.constant 0 : index
    %78 = vector.load %arg3[%77, %c0_75] : memref<56x128xf32, #tpu.memory_space<vmem>>, vector<1x128xf32>
    %c42 = arith.constant 42 : index
    %c0_76 = arith.constant 0 : index
    %79 = vector.load %arg13[%c42, %c0_76] : memref<64x128xf32, #tpu.memory_space<vmem>>, vector<1x128xf32>
    tpu.vector_store %arg13[%c42, %c0_76], %78 {strides = array<i32>} : memref<64x128xf32, #tpu.memory_space<vmem>>, vector<1x128xf32>,
    %c3_77 = arith.constant 3 : index
    %c4_78 = arith.constant 4 : index
    %80 = memref.load %arg1[%c3_77, %c4_78] : memref<4x7xi32, #tpu.memory_space<smem>>
    %81 = arith.index_cast %80 : i32 to index
    %c0_79 = arith.constant 0 : index
    %82 = vector.load %arg3[%81, %c0_79] : memref<56x128xf32, #tpu.memory_space<vmem>>, vector<1x128xf32>
    %c43 = arith.constant 43 : index
    %c0_80 = arith.constant 0 : index
    %83 = vector.load %arg13[%c43, %c0_80] : memref<64x128xf32, #tpu.memory_space<vmem>>, vector<1x128xf32>
    tpu.vector_store %arg13[%c43, %c0_80], %82 {strides = array<i32>} : memref<64x128xf32, #tpu.memory_space<vmem>>, vector<1x128xf32>,
    %c0_81 = arith.constant 0 : index
    %c5 = arith.constant 5 : index
    %84 = memref.load %arg1[%c0_81, %c5] : memref<4x7xi32, #tpu.memory_space<smem>>
    %85 = arith.index_cast %84 : i32 to index
    %c0_82 = arith.constant 0 : index
    %86 = vector.load %arg3[%85, %c0_82] : memref<56x128xf32, #tpu.memory_space<vmem>>, vector<1x128xf32>
    %c48 = arith.constant 48 : index
    %c0_83 = arith.constant 0 : index
    %87 = vector.load %arg13[%c48, %c0_83] : memref<64x128xf32, #tpu.memory_space<vmem>>, vector<1x128xf32>
    tpu.vector_store %arg13[%c48, %c0_83], %86 {strides = array<i32>} : memref<64x128xf32, #tpu.memory_space<vmem>>, vector<1x128xf32>,
    %c1_84 = arith.constant 1 : index
    %c5_85 = arith.constant 5 : index
    %88 = memref.load %arg1[%c1_84, %c5_85] : memref<4x7xi32, #tpu.memory_space<smem>>
    %89 = arith.index_cast %88 : i32 to index
    %c0_86 = arith.constant 0 : index
    %90 = vector.load %arg3[%89, %c0_86] : memref<56x128xf32, #tpu.memory_space<vmem>>, vector<1x128xf32>
    %c49 = arith.constant 49 : index
    %c0_87 = arith.constant 0 : index
    %91 = vector.load %arg13[%c49, %c0_87] : memref<64x128xf32, #tpu.memory_space<vmem>>, vector<1x128xf32>
    tpu.vector_store %arg13[%c49, %c0_87], %90 {strides = array<i32>} : memref<64x128xf32, #tpu.memory_space<vmem>>, vector<1x128xf32>,
    %c2_88 = arith.constant 2 : index
    %c5_89 = arith.constant 5 : index
    %92 = memref.load %arg1[%c2_88, %c5_89] : memref<4x7xi32, #tpu.memory_space<smem>>
    %93 = arith.index_cast %92 : i32 to index
    %c0_90 = arith.constant 0 : index
    %94 = vector.load %arg3[%93, %c0_90] : memref<56x128xf32, #tpu.memory_space<vmem>>, vector<1x128xf32>
    %c50 = arith.constant 50 : index
    %c0_91 = arith.constant 0 : index
    %95 = vector.load %arg13[%c50, %c0_91] : memref<64x128xf32, #tpu.memory_space<vmem>>, vector<1x128xf32>
    tpu.vector_store %arg13[%c50, %c0_91], %94 {strides = array<i32>} : memref<64x128xf32, #tpu.memory_space<vmem>>, vector<1x128xf32>,
    %c3_92 = arith.constant 3 : index
    %c5_93 = arith.constant 5 : index
    %96 = memref.load %arg1[%c3_92, %c5_93] : memref<4x7xi32, #tpu.memory_space<smem>>
    %97 = arith.index_cast %96 : i32 to index
    %c0_94 = arith.constant 0 : index
    %98 = vector.load %arg3[%97, %c0_94] : memref<56x128xf32, #tpu.memory_space<vmem>>, vector<1x128xf32>
    %c51 = arith.constant 51 : index
    %c0_95 = arith.constant 0 : index
    %99 = vector.load %arg13[%c51, %c0_95] : memref<64x128xf32, #tpu.memory_space<vmem>>, vector<1x128xf32>
    tpu.vector_store %arg13[%c51, %c0_95], %98 {strides = array<i32>} : memref<64x128xf32, #tpu.memory_space<vmem>>, vector<1x128xf32>,
    %c0_96 = arith.constant 0 : index
    %c6 = arith.constant 6 : index
    %100 = memref.load %arg1[%c0_96, %c6] : memref<4x7xi32, #tpu.memory_space<smem>>
    %101 = arith.index_cast %100 : i32 to index
    %c0_97 = arith.constant 0 : index
    %102 = vector.load %arg3[%101, %c0_97] : memref<56x128xf32, #tpu.memory_space<vmem>>, vector<1x128xf32>
    %c56 = arith.constant 56 : index
    %c0_98 = arith.constant 0 : index
    %103 = vector.load %arg13[%c56, %c0_98] : memref<64x128xf32, #tpu.memory_space<vmem>>, vector<1x128xf32>
    tpu.vector_store %arg13[%c56, %c0_98], %102 {strides = array<i32>} : memref<64x128xf32, #tpu.memory_space<vmem>>, vector<1x128xf32>,
    %c1_99 = arith.constant 1 : index
    %c6_100 = arith.constant 6 : index
    %104 = memref.load %arg1[%c1_99, %c6_100] : memref<4x7xi32, #tpu.memory_space<smem>>
    %105 = arith.index_cast %104 : i32 to index
    %c0_101 = arith.constant 0 : index
    %106 = vector.load %arg3[%105, %c0_101] : memref<56x128xf32, #tpu.memory_space<vmem>>, vector<1x128xf32>
    %c57 = arith.constant 57 : index
    %c0_102 = arith.constant 0 : index
    %107 = vector.load %arg13[%c57, %c0_102] : memref<64x128xf32, #tpu.memory_space<vmem>>, vector<1x128xf32>
    tpu.vector_store %arg13[%c57, %c0_102], %106 {strides = array<i32>} : memref<64x128xf32, #tpu.memory_space<vmem>>, vector<1x128xf32>,
    %c2_103 = arith.constant 2 : index
    %c6_104 = arith.constant 6 : index
    %108 = memref.load %arg1[%c2_103, %c6_104] : memref<4x7xi32, #tpu.memory_space<smem>>
    %109 = arith.index_cast %108 : i32 to index
    %c0_105 = arith.constant 0 : index
    %110 = vector.load %arg3[%109, %c0_105] : memref<56x128xf32, #tpu.memory_space<vmem>>, vector<1x128xf32>
    %c58 = arith.constant 58 : index
    %c0_106 = arith.constant 0 : index
    %111 = vector.load %arg13[%c58, %c0_106] : memref<64x128xf32, #tpu.memory_space<vmem>>, vector<1x128xf32>
    tpu.vector_store %arg13[%c58, %c0_106], %110 {strides = array<i32>} : memref<64x128xf32, #tpu.memory_space<vmem>>, vector<1x128xf32>,
    %c3_107 = arith.constant 3 : index
    %c6_108 = arith.constant 6 : index
    %112 = memref.load %arg1[%c3_107, %c6_108] : memref<4x7xi32, #tpu.memory_space<smem>>
    %113 = arith.index_cast %112 : i32 to index
    %c0_109 = arith.constant 0 : index
    %114 = vector.load %arg3[%113, %c0_109] : memref<56x128xf32, #tpu.memory_space<vmem>>, vector<1x128xf32>
    %c59 = arith.constant 59 : index
    %c0_110 = arith.constant 0 : index
    %115 = vector.load %arg13[%c59, %c0_110] : memref<64x128xf32, #tpu.memory_space<vmem>>, vector<1x128xf32>
    tpu.vector_store %arg13[%c59, %c0_110], %114 {strides = array<i32>} : memref<64x128xf32, #tpu.memory_space<vmem>>, vector<1x128xf32>,
    %c0_111 = arith.constant 0 : index
    %c0_112 = arith.constant 0 : index
    %116 = vector.load %arg13[%c0_111, %c0_112] : memref<64x128xf32, #tpu.memory_space<vmem>>, vector<64x128xf32>
    %117 = arith.truncf %116 : vector<64x128xf32> to vector<64x128xbf16>
    %c0_113 = arith.constant 0 : index
    %c0_114 = arith.constant 0 : index
    %118 = vector.load %arg4[%c0_113, %c0_114] : memref<128x512xbf16, #tpu.memory_space<vmem>>, vector<128x512xbf16>
    %cst_115 = arith.constant dense<0.000000e+00> : vector<64x512xf32>
    %119 = tpu.matmul %117, %118, %cst_115 {dimension_numbers = #tpu.dot_dimension_numbers<[1], [0], [0], [1], [0, 0, 1, 1], [], []>} : vector<64x128xbf16>, vector<128x512xbf16>, vector<64x512xf32> -> vector<64x512xf32>
    %c0_116 = arith.constant 0 : index
    %c0_117 = arith.constant 0 : index
    %120 = vector.load %arg6[%c0_116, %c0_117] : memref<1x512xf32, #tpu.memory_space<vmem>>, vector<1x512xf32>
    %121 = vector.broadcast %120 : vector<1x512xf32> to vector<64x512xf32>
    %122 = arith.addf %119, %121 : vector<64x512xf32>
    %c0_118 = arith.constant 0 : index
    %c0_119 = arith.constant 0 : index
    %123 = vector.load %arg15[%c0_118, %c0_119] : memref<64x512xf32, #tpu.memory_space<vmem>>, vector<64x512xf32>
    tpu.vector_store %arg15[%c0_118, %c0_119], %122 {strides = array<i32>} : memref<64x512xf32, #tpu.memory_space<vmem>>, vector<64x512xf32>,
    %cst_120 = arith.constant 0.000000e+00 : f32
    %124 = vector.broadcast %cst_120 : f32 to vector<8x128xf32>
    %cst_121 = arith.constant 0.000000e+00 : f32
    %125 = vector.broadcast %cst_121 : f32 to vector<8x128xf32>
    %c0_122 = arith.constant 0 : index
    %c0_123 = arith.constant 0 : index
    %126 = vector.load %arg15[%c0_122, %c0_123] : memref<64x512xf32, #tpu.memory_space<vmem>>, vector<8x512xf32>
    %127 = arith.truncf %124 : vector<8x128xf32> to vector<8x128xbf16>
    %c0_124 = arith.constant 0 : index
    %c0_125 = arith.constant 0 : index
    %128 = vector.load %arg5[%c0_124, %c0_125] : memref<128x512xbf16, #tpu.memory_space<vmem>>, vector<128x512xbf16>
    %cst_126 = arith.constant dense<0.000000e+00> : vector<8x512xf32>
    %129 = tpu.matmul %127, %128, %cst_126 {dimension_numbers = #tpu.dot_dimension_numbers<[1], [0], [0], [1], [0, 0, 1, 1], [], []>} : vector<8x128xbf16>, vector<128x512xbf16>, vector<8x512xf32> -> vector<8x512xf32>
    %130 = arith.addf %126, %129 : vector<8x512xf32>
    %131 = vector.extract_strided_slice %130 {offsets = [0, 0], sizes = [8, 128], strides = [1, 1]} : vector<8x512xf32> to vector<8x128xf32>
    %132 = arith.negf %131 : vector<8x128xf32>
    %133 = math.exp %132 : vector<8x128xf32>
    %cst_127 = arith.constant 1.000000e+00 : f32
    %134 = vector.broadcast %cst_127 : f32 to vector<8x128xf32>
    %135 = arith.addf %134, %133 : vector<8x128xf32>
    %136 = arith.divf %134, %135 : vector<8x128xf32>
    %137 = vector.extract_strided_slice %130 {offsets = [0, 128], sizes = [8, 128], strides = [1, 1]} : vector<8x512xf32> to vector<8x128xf32>
    %138 = arith.negf %137 : vector<8x128xf32>
    %139 = math.exp %138 : vector<8x128xf32>
    %cst_128 = arith.constant 1.000000e+00 : f32
    %140 = vector.broadcast %cst_128 : f32 to vector<8x128xf32>
    %141 = arith.addf %140, %139 : vector<8x128xf32>
    %142 = arith.divf %140, %141 : vector<8x128xf32>
    %143 = vector.extract_strided_slice %130 {offsets = [0, 256], sizes = [8, 128], strides = [1, 1]} : vector<8x512xf32> to vector<8x128xf32>
    %144 = math.tanh %143 : vector<8x128xf32>
    %145 = vector.extract_strided_slice %130 {offsets = [0, 384], sizes = [8, 128], strides = [1, 1]} : vector<8x512xf32> to vector<8x128xf32>
    %146 = arith.negf %145 : vector<8x128xf32>
    %147 = math.exp %146 : vector<8x128xf32>
    %cst_129 = arith.constant 1.000000e+00 : f32
    %148 = vector.broadcast %cst_129 : f32 to vector<8x128xf32>
    %149 = arith.addf %148, %147 : vector<8x128xf32>
    %150 = arith.divf %148, %149 : vector<8x128xf32>
    %151 = arith.mulf %142, %125 : vector<8x128xf32>
    %152 = arith.mulf %136, %144 : vector<8x128xf32>
    %153 = arith.addf %151, %152 : vector<8x128xf32>
    %154 = math.tanh %153 : vector<8x128xf32>
    %155 = arith.mulf %150, %154 : vector<8x128xf32>
    %c0_130 = arith.constant 0 : index
    %c0_131 = arith.constant 0 : index
    %156 = vector.load %arg14[%c0_130, %c0_131] : memref<64x128xf32, #tpu.memory_space<vmem>>, vector<8x128xf32>
    tpu.vector_store %arg14[%c0_130, %c0_131], %155 {strides = array<i32>} : memref<64x128xf32, #tpu.memory_space<vmem>>, vector<8x128xf32>,
    %c8_132 = arith.constant 8 : index
    %c0_133 = arith.constant 0 : index
    %157 = vector.load %arg15[%c8_132, %c0_133] : memref<64x512xf32, #tpu.memory_space<vmem>>, vector<8x512xf32>
    %158 = arith.truncf %155 : vector<8x128xf32> to vector<8x128xbf16>
    %c0_134 = arith.constant 0 : index
    %c0_135 = arith.constant 0 : index
    %159 = vector.load %arg5[%c0_134, %c0_135] : memref<128x512xbf16, #tpu.memory_space<vmem>>, vector<128x512xbf16>
    %cst_136 = arith.constant dense<0.000000e+00> : vector<8x512xf32>
    %160 = tpu.matmul %158, %159, %cst_136 {dimension_numbers = #tpu.dot_dimension_numbers<[1], [0], [0], [1], [0, 0, 1, 1], [], []>} : vector<8x128xbf16>, vector<128x512xbf16>, vector<8x512xf32> -> vector<8x512xf32>
    %161 = arith.addf %157, %160 : vector<8x512xf32>
    %162 = vector.extract_strided_slice %161 {offsets = [0, 0], sizes = [8, 128], strides = [1, 1]} : vector<8x512xf32> to vector<8x128xf32>
    %163 = arith.negf %162 : vector<8x128xf32>
    %164 = math.exp %163 : vector<8x128xf32>
    %cst_137 = arith.constant 1.000000e+00 : f32
    %165 = vector.broadcast %cst_137 : f32 to vector<8x128xf32>
    %166 = arith.addf %165, %164 : vector<8x128xf32>
    %167 = arith.divf %165, %166 : vector<8x128xf32>
    %168 = vector.extract_strided_slice %161 {offsets = [0, 128], sizes = [8, 128], strides = [1, 1]} : vector<8x512xf32> to vector<8x128xf32>
    %169 = arith.negf %168 : vector<8x128xf32>
    %170 = math.exp %169 : vector<8x128xf32>
    %cst_138 = arith.constant 1.000000e+00 : f32
    %171 = vector.broadcast %cst_138 : f32 to vector<8x128xf32>
    %172 = arith.addf %171, %170 : vector<8x128xf32>
    %173 = arith.divf %171, %172 : vector<8x128xf32>
    %174 = vector.extract_strided_slice %161 {offsets = [0, 256], sizes = [8, 128], strides = [1, 1]} : vector<8x512xf32> to vector<8x128xf32>
    %175 = math.tanh %174 : vector<8x128xf32>
    %176 = vector.extract_strided_slice %161 {offsets = [0, 384], sizes = [8, 128], strides = [1, 1]} : vector<8x512xf32> to vector<8x128xf32>
    %177 = arith.negf %176 : vector<8x128xf32>
    %178 = math.exp %177 : vector<8x128xf32>
    %cst_139 = arith.constant 1.000000e+00 : f32
    %179 = vector.broadcast %cst_139 : f32 to vector<8x128xf32>
    %180 = arith.addf %179, %178 : vector<8x128xf32>
    %181 = arith.divf %179, %180 : vector<8x128xf32>
    %182 = arith.mulf %173, %153 : vector<8x128xf32>
    %183 = arith.mulf %167, %175 : vector<8x128xf32>
    %184 = arith.addf %182, %183 : vector<8x128xf32>
    %185 = math.tanh %184 : vector<8x128xf32>
    %186 = arith.mulf %181, %185 : vector<8x128xf32>
    %c8_140 = arith.constant 8 : index
    %c0_141 = arith.constant 0 : index
    %187 = vector.load %arg14[%c8_140, %c0_141] : memref<64x128xf32, #tpu.memory_space<vmem>>, vector<8x128xf32>
    tpu.vector_store %arg14[%c8_140, %c0_141], %186 {strides = array<i32>} : memref<64x128xf32, #tpu.memory_space<vmem>>, vector<8x128xf32>,
    %c16_142 = arith.constant 16 : index
    %c0_143 = arith.constant 0 : index
    %188 = vector.load %arg15[%c16_142, %c0_143] : memref<64x512xf32, #tpu.memory_space<vmem>>, vector<8x512xf32>
    %189 = arith.truncf %186 : vector<8x128xf32> to vector<8x128xbf16>
    %c0_144 = arith.constant 0 : index
    %c0_145 = arith.constant 0 : index
    %190 = vector.load %arg5[%c0_144, %c0_145] : memref<128x512xbf16, #tpu.memory_space<vmem>>, vector<128x512xbf16>
    %cst_146 = arith.constant dense<0.000000e+00> : vector<8x512xf32>
    %191 = tpu.matmul %189, %190, %cst_146 {dimension_numbers = #tpu.dot_dimension_numbers<[1], [0], [0], [1], [0, 0, 1, 1], [], []>} : vector<8x128xbf16>, vector<128x512xbf16>, vector<8x512xf32> -> vector<8x512xf32>
    %192 = arith.addf %188, %191 : vector<8x512xf32>
    %193 = vector.extract_strided_slice %192 {offsets = [0, 0], sizes = [8, 128], strides = [1, 1]} : vector<8x512xf32> to vector<8x128xf32>
    %194 = arith.negf %193 : vector<8x128xf32>
    %195 = math.exp %194 : vector<8x128xf32>
    %cst_147 = arith.constant 1.000000e+00 : f32
    %196 = vector.broadcast %cst_147 : f32 to vector<8x128xf32>
    %197 = arith.addf %196, %195 : vector<8x128xf32>
    %198 = arith.divf %196, %197 : vector<8x128xf32>
    %199 = vector.extract_strided_slice %192 {offsets = [0, 128], sizes = [8, 128], strides = [1, 1]} : vector<8x512xf32> to vector<8x128xf32>
    %200 = arith.negf %199 : vector<8x128xf32>
    %201 = math.exp %200 : vector<8x128xf32>
    %cst_148 = arith.constant 1.000000e+00 : f32
    %202 = vector.broadcast %cst_148 : f32 to vector<8x128xf32>
    %203 = arith.addf %202, %201 : vector<8x128xf32>
    %204 = arith.divf %202, %203 : vector<8x128xf32>
    %205 = vector.extract_strided_slice %192 {offsets = [0, 256], sizes = [8, 128], strides = [1, 1]} : vector<8x512xf32> to vector<8x128xf32>
    %206 = math.tanh %205 : vector<8x128xf32>
    %207 = vector.extract_strided_slice %192 {offsets = [0, 384], sizes = [8, 128], strides = [1, 1]} : vector<8x512xf32> to vector<8x128xf32>
    %208 = arith.negf %207 : vector<8x128xf32>
    %209 = math.exp %208 : vector<8x128xf32>
    %cst_149 = arith.constant 1.000000e+00 : f32
    %210 = vector.broadcast %cst_149 : f32 to vector<8x128xf32>
    %211 = arith.addf %210, %209 : vector<8x128xf32>
    %212 = arith.divf %210, %211 : vector<8x128xf32>
    %213 = arith.mulf %204, %184 : vector<8x128xf32>
    %214 = arith.mulf %198, %206 : vector<8x128xf32>
    %215 = arith.addf %213, %214 : vector<8x128xf32>
    %216 = math.tanh %215 : vector<8x128xf32>
    %217 = arith.mulf %212, %216 : vector<8x128xf32>
    %c16_150 = arith.constant 16 : index
    %c0_151 = arith.constant 0 : index
    %218 = vector.load %arg14[%c16_150, %c0_151] : memref<64x128xf32, #tpu.memory_space<vmem>>, vector<8x128xf32>
    tpu.vector_store %arg14[%c16_150, %c0_151], %217 {strides = array<i32>} : memref<64x128xf32, #tpu.memory_space<vmem>>, vector<8x128xf32>,
    %c24_152 = arith.constant 24 : index
    %c0_153 = arith.constant 0 : index
    %219 = vector.load %arg15[%c24_152, %c0_153] : memref<64x512xf32, #tpu.memory_space<vmem>>, vector<8x512xf32>
    %220 = arith.truncf %217 : vector<8x128xf32> to vector<8x128xbf16>
    %c0_154 = arith.constant 0 : index
    %c0_155 = arith.constant 0 : index
    %221 = vector.load %arg5[%c0_154, %c0_155] : memref<128x512xbf16, #tpu.memory_space<vmem>>, vector<128x512xbf16>
    %cst_156 = arith.constant dense<0.000000e+00> : vector<8x512xf32>
    %222 = tpu.matmul %220, %221, %cst_156 {dimension_numbers = #tpu.dot_dimension_numbers<[1], [0], [0], [1], [0, 0, 1, 1], [], []>} : vector<8x128xbf16>, vector<128x512xbf16>, vector<8x512xf32> -> vector<8x512xf32>
    %223 = arith.addf %219, %222 : vector<8x512xf32>
    %224 = vector.extract_strided_slice %223 {offsets = [0, 0], sizes = [8, 128], strides = [1, 1]} : vector<8x512xf32> to vector<8x128xf32>
    %225 = arith.negf %224 : vector<8x128xf32>
    %226 = math.exp %225 : vector<8x128xf32>
    %cst_157 = arith.constant 1.000000e+00 : f32
    %227 = vector.broadcast %cst_157 : f32 to vector<8x128xf32>
    %228 = arith.addf %227, %226 : vector<8x128xf32>
    %229 = arith.divf %227, %228 : vector<8x128xf32>
    %230 = vector.extract_strided_slice %223 {offsets = [0, 128], sizes = [8, 128], strides = [1, 1]} : vector<8x512xf32> to vector<8x128xf32>
    %231 = arith.negf %230 : vector<8x128xf32>
    %232 = math.exp %231 : vector<8x128xf32>
    %cst_158 = arith.constant 1.000000e+00 : f32
    %233 = vector.broadcast %cst_158 : f32 to vector<8x128xf32>
    %234 = arith.addf %233, %232 : vector<8x128xf32>
    %235 = arith.divf %233, %234 : vector<8x128xf32>
    %236 = vector.extract_strided_slice %223 {offsets = [0, 256], sizes = [8, 128], strides = [1, 1]} : vector<8x512xf32> to vector<8x128xf32>
    %237 = math.tanh %236 : vector<8x128xf32>
    %238 = vector.extract_strided_slice %223 {offsets = [0, 384], sizes = [8, 128], strides = [1, 1]} : vector<8x512xf32> to vector<8x128xf32>
    %239 = arith.negf %238 : vector<8x128xf32>
    %240 = math.exp %239 : vector<8x128xf32>
    %cst_159 = arith.constant 1.000000e+00 : f32
    %241 = vector.broadcast %cst_159 : f32 to vector<8x128xf32>
    %242 = arith.addf %241, %240 : vector<8x128xf32>
    %243 = arith.divf %241, %242 : vector<8x128xf32>
    %244 = arith.mulf %235, %215 : vector<8x128xf32>
    %245 = arith.mulf %229, %237 : vector<8x128xf32>
    %246 = arith.addf %244, %245 : vector<8x128xf32>
    %247 = math.tanh %246 : vector<8x128xf32>
    %248 = arith.mulf %243, %247 : vector<8x128xf32>
    %c24_160 = arith.constant 24 : index
    %c0_161 = arith.constant 0 : index
    %249 = vector.load %arg14[%c24_160, %c0_161] : memref<64x128xf32, #tpu.memory_space<vmem>>, vector<8x128xf32>
    tpu.vector_store %arg14[%c24_160, %c0_161], %248 {strides = array<i32>} : memref<64x128xf32, #tpu.memory_space<vmem>>, vector<8x128xf32>,
    %c32_162 = arith.constant 32 : index
    %c0_163 = arith.constant 0 : index
    %250 = vector.load %arg15[%c32_162, %c0_163] : memref<64x512xf32, #tpu.memory_space<vmem>>, vector<8x512xf32>
    %251 = arith.truncf %248 : vector<8x128xf32> to vector<8x128xbf16>
    %c0_164 = arith.constant 0 : index
    %c0_165 = arith.constant 0 : index
    %252 = vector.load %arg5[%c0_164, %c0_165] : memref<128x512xbf16, #tpu.memory_space<vmem>>, vector<128x512xbf16>
    %cst_166 = arith.constant dense<0.000000e+00> : vector<8x512xf32>
    %253 = tpu.matmul %251, %252, %cst_166 {dimension_numbers = #tpu.dot_dimension_numbers<[1], [0], [0], [1], [0, 0, 1, 1], [], []>} : vector<8x128xbf16>, vector<128x512xbf16>, vector<8x512xf32> -> vector<8x512xf32>
    %254 = arith.addf %250, %253 : vector<8x512xf32>
    %255 = vector.extract_strided_slice %254 {offsets = [0, 0], sizes = [8, 128], strides = [1, 1]} : vector<8x512xf32> to vector<8x128xf32>
    %256 = arith.negf %255 : vector<8x128xf32>
    %257 = math.exp %256 : vector<8x128xf32>
    %cst_167 = arith.constant 1.000000e+00 : f32
    %258 = vector.broadcast %cst_167 : f32 to vector<8x128xf32>
    %259 = arith.addf %258, %257 : vector<8x128xf32>
    %260 = arith.divf %258, %259 : vector<8x128xf32>
    %261 = vector.extract_strided_slice %254 {offsets = [0, 128], sizes = [8, 128], strides = [1, 1]} : vector<8x512xf32> to vector<8x128xf32>
    %262 = arith.negf %261 : vector<8x128xf32>
    %263 = math.exp %262 : vector<8x128xf32>
    %cst_168 = arith.constant 1.000000e+00 : f32
    %264 = vector.broadcast %cst_168 : f32 to vector<8x128xf32>
    %265 = arith.addf %264, %263 : vector<8x128xf32>
    %266 = arith.divf %264, %265 : vector<8x128xf32>
    %267 = vector.extract_strided_slice %254 {offsets = [0, 256], sizes = [8, 128], strides = [1, 1]} : vector<8x512xf32> to vector<8x128xf32>
    %268 = math.tanh %267 : vector<8x128xf32>
    %269 = vector.extract_strided_slice %254 {offsets = [0, 384], sizes = [8, 128], strides = [1, 1]} : vector<8x512xf32> to vector<8x128xf32>
    %270 = arith.negf %269 : vector<8x128xf32>
    %271 = math.exp %270 : vector<8x128xf32>
    %cst_169 = arith.constant 1.000000e+00 : f32
    %272 = vector.broadcast %cst_169 : f32 to vector<8x128xf32>
    %273 = arith.addf %272, %271 : vector<8x128xf32>
    %274 = arith.divf %272, %273 : vector<8x128xf32>
    %275 = arith.mulf %266, %246 : vector<8x128xf32>
    %276 = arith.mulf %260, %268 : vector<8x128xf32>
    %277 = arith.addf %275, %276 : vector<8x128xf32>
    %278 = math.tanh %277 : vector<8x128xf32>
    %279 = arith.mulf %274, %278 : vector<8x128xf32>
    %c32_170 = arith.constant 32 : index
    %c0_171 = arith.constant 0 : index
    %280 = vector.load %arg14[%c32_170, %c0_171] : memref<64x128xf32, #tpu.memory_space<vmem>>, vector<8x128xf32>
    tpu.vector_store %arg14[%c32_170, %c0_171], %279 {strides = array<i32>} : memref<64x128xf32, #tpu.memory_space<vmem>>, vector<8x128xf32>,
    %c40_172 = arith.constant 40 : index
    %c0_173 = arith.constant 0 : index
    %281 = vector.load %arg15[%c40_172, %c0_173] : memref<64x512xf32, #tpu.memory_space<vmem>>, vector<8x512xf32>
    %282 = arith.truncf %279 : vector<8x128xf32> to vector<8x128xbf16>
    %c0_174 = arith.constant 0 : index
    %c0_175 = arith.constant 0 : index
    %283 = vector.load %arg5[%c0_174, %c0_175] : memref<128x512xbf16, #tpu.memory_space<vmem>>, vector<128x512xbf16>
    %cst_176 = arith.constant dense<0.000000e+00> : vector<8x512xf32>
    %284 = tpu.matmul %282, %283, %cst_176 {dimension_numbers = #tpu.dot_dimension_numbers<[1], [0], [0], [1], [0, 0, 1, 1], [], []>} : vector<8x128xbf16>, vector<128x512xbf16>, vector<8x512xf32> -> vector<8x512xf32>
    %285 = arith.addf %281, %284 : vector<8x512xf32>
    %286 = vector.extract_strided_slice %285 {offsets = [0, 0], sizes = [8, 128], strides = [1, 1]} : vector<8x512xf32> to vector<8x128xf32>
    %287 = arith.negf %286 : vector<8x128xf32>
    %288 = math.exp %287 : vector<8x128xf32>
    %cst_177 = arith.constant 1.000000e+00 : f32
    %289 = vector.broadcast %cst_177 : f32 to vector<8x128xf32>
    %290 = arith.addf %289, %288 : vector<8x128xf32>
    %291 = arith.divf %289, %290 : vector<8x128xf32>
    %292 = vector.extract_strided_slice %285 {offsets = [0, 128], sizes = [8, 128], strides = [1, 1]} : vector<8x512xf32> to vector<8x128xf32>
    %293 = arith.negf %292 : vector<8x128xf32>
    %294 = math.exp %293 : vector<8x128xf32>
    %cst_178 = arith.constant 1.000000e+00 : f32
    %295 = vector.broadcast %cst_178 : f32 to vector<8x128xf32>
    %296 = arith.addf %295, %294 : vector<8x128xf32>
    %297 = arith.divf %295, %296 : vector<8x128xf32>
    %298 = vector.extract_strided_slice %285 {offsets = [0, 256], sizes = [8, 128], strides = [1, 1]} : vector<8x512xf32> to vector<8x128xf32>
    %299 = math.tanh %298 : vector<8x128xf32>
    %300 = vector.extract_strided_slice %285 {offsets = [0, 384], sizes = [8, 128], strides = [1, 1]} : vector<8x512xf32> to vector<8x128xf32>
    %301 = arith.negf %300 : vector<8x128xf32>
    %302 = math.exp %301 : vector<8x128xf32>
    %cst_179 = arith.constant 1.000000e+00 : f32
    %303 = vector.broadcast %cst_179 : f32 to vector<8x128xf32>
    %304 = arith.addf %303, %302 : vector<8x128xf32>
    %305 = arith.divf %303, %304 : vector<8x128xf32>
    %306 = arith.mulf %297, %277 : vector<8x128xf32>
    %307 = arith.mulf %291, %299 : vector<8x128xf32>
    %308 = arith.addf %306, %307 : vector<8x128xf32>
    %309 = math.tanh %308 : vector<8x128xf32>
    %310 = arith.mulf %305, %309 : vector<8x128xf32>
    %c40_180 = arith.constant 40 : index
    %c0_181 = arith.constant 0 : index
    %311 = vector.load %arg14[%c40_180, %c0_181] : memref<64x128xf32, #tpu.memory_space<vmem>>, vector<8x128xf32>
    tpu.vector_store %arg14[%c40_180, %c0_181], %310 {strides = array<i32>} : memref<64x128xf32, #tpu.memory_space<vmem>>, vector<8x128xf32>,
    %c48_182 = arith.constant 48 : index
    %c0_183 = arith.constant 0 : index
    %312 = vector.load %arg15[%c48_182, %c0_183] : memref<64x512xf32, #tpu.memory_space<vmem>>, vector<8x512xf32>
    %313 = arith.truncf %310 : vector<8x128xf32> to vector<8x128xbf16>
    %c0_184 = arith.constant 0 : index
    %c0_185 = arith.constant 0 : index
    %314 = vector.load %arg5[%c0_184, %c0_185] : memref<128x512xbf16, #tpu.memory_space<vmem>>, vector<128x512xbf16>
    %cst_186 = arith.constant dense<0.000000e+00> : vector<8x512xf32>
    %315 = tpu.matmul %313, %314, %cst_186 {dimension_numbers = #tpu.dot_dimension_numbers<[1], [0], [0], [1], [0, 0, 1, 1], [], []>} : vector<8x128xbf16>, vector<128x512xbf16>, vector<8x512xf32> -> vector<8x512xf32>
    %316 = arith.addf %312, %315 : vector<8x512xf32>
    %317 = vector.extract_strided_slice %316 {offsets = [0, 0], sizes = [8, 128], strides = [1, 1]} : vector<8x512xf32> to vector<8x128xf32>
    %318 = arith.negf %317 : vector<8x128xf32>
    %319 = math.exp %318 : vector<8x128xf32>
    %cst_187 = arith.constant 1.000000e+00 : f32
    %320 = vector.broadcast %cst_187 : f32 to vector<8x128xf32>
    %321 = arith.addf %320, %319 : vector<8x128xf32>
    %322 = arith.divf %320, %321 : vector<8x128xf32>
    %323 = vector.extract_strided_slice %316 {offsets = [0, 128], sizes = [8, 128], strides = [1, 1]} : vector<8x512xf32> to vector<8x128xf32>
    %324 = arith.negf %323 : vector<8x128xf32>
    %325 = math.exp %324 : vector<8x128xf32>
    %cst_188 = arith.constant 1.000000e+00 : f32
    %326 = vector.broadcast %cst_188 : f32 to vector<8x128xf32>
    %327 = arith.addf %326, %325 : vector<8x128xf32>
    %328 = arith.divf %326, %327 : vector<8x128xf32>
    %329 = vector.extract_strided_slice %316 {offsets = [0, 256], sizes = [8, 128], strides = [1, 1]} : vector<8x512xf32> to vector<8x128xf32>
    %330 = math.tanh %329 : vector<8x128xf32>
    %331 = vector.extract_strided_slice %316 {offsets = [0, 384], sizes = [8, 128], strides = [1, 1]} : vector<8x512xf32> to vector<8x128xf32>
    %332 = arith.negf %331 : vector<8x128xf32>
    %333 = math.exp %332 : vector<8x128xf32>
    %cst_189 = arith.constant 1.000000e+00 : f32
    %334 = vector.broadcast %cst_189 : f32 to vector<8x128xf32>
    %335 = arith.addf %334, %333 : vector<8x128xf32>
    %336 = arith.divf %334, %335 : vector<8x128xf32>
    %337 = arith.mulf %328, %308 : vector<8x128xf32>
    %338 = arith.mulf %322, %330 : vector<8x128xf32>
    %339 = arith.addf %337, %338 : vector<8x128xf32>
    %340 = math.tanh %339 : vector<8x128xf32>
    %341 = arith.mulf %336, %340 : vector<8x128xf32>
    %c48_190 = arith.constant 48 : index
    %c0_191 = arith.constant 0 : index
    %342 = vector.load %arg14[%c48_190, %c0_191] : memref<64x128xf32, #tpu.memory_space<vmem>>, vector<8x128xf32>
    tpu.vector_store %arg14[%c48_190, %c0_191], %341 {strides = array<i32>} : memref<64x128xf32, #tpu.memory_space<vmem>>, vector<8x128xf32>,
    %c56_192 = arith.constant 56 : index
    %c0_193 = arith.constant 0 : index
    %343 = vector.load %arg15[%c56_192, %c0_193] : memref<64x512xf32, #tpu.memory_space<vmem>>, vector<8x512xf32>
    %344 = arith.truncf %341 : vector<8x128xf32> to vector<8x128xbf16>
    %c0_194 = arith.constant 0 : index
    %c0_195 = arith.constant 0 : index
    %345 = vector.load %arg5[%c0_194, %c0_195] : memref<128x512xbf16, #tpu.memory_space<vmem>>, vector<128x512xbf16>
    %cst_196 = arith.constant dense<0.000000e+00> : vector<8x512xf32>
    %346 = tpu.matmul %344, %345, %cst_196 {dimension_numbers = #tpu.dot_dimension_numbers<[1], [0], [0], [1], [0, 0, 1, 1], [], []>} : vector<8x128xbf16>, vector<128x512xbf16>, vector<8x512xf32> -> vector<8x512xf32>
    %347 = arith.addf %343, %346 : vector<8x512xf32>
    %348 = vector.extract_strided_slice %347 {offsets = [0, 0], sizes = [8, 128], strides = [1, 1]} : vector<8x512xf32> to vector<8x128xf32>
    %349 = arith.negf %348 : vector<8x128xf32>
    %350 = math.exp %349 : vector<8x128xf32>
    %cst_197 = arith.constant 1.000000e+00 : f32
    %351 = vector.broadcast %cst_197 : f32 to vector<8x128xf32>
    %352 = arith.addf %351, %350 : vector<8x128xf32>
    %353 = arith.divf %351, %352 : vector<8x128xf32>
    %354 = vector.extract_strided_slice %347 {offsets = [0, 128], sizes = [8, 128], strides = [1, 1]} : vector<8x512xf32> to vector<8x128xf32>
    %355 = arith.negf %354 : vector<8x128xf32>
    %356 = math.exp %355 : vector<8x128xf32>
    %cst_198 = arith.constant 1.000000e+00 : f32
    %357 = vector.broadcast %cst_198 : f32 to vector<8x128xf32>
    %358 = arith.addf %357, %356 : vector<8x128xf32>
    %359 = arith.divf %357, %358 : vector<8x128xf32>
    %360 = vector.extract_strided_slice %347 {offsets = [0, 256], sizes = [8, 128], strides = [1, 1]} : vector<8x512xf32> to vector<8x128xf32>
    %361 = math.tanh %360 : vector<8x128xf32>
    %362 = vector.extract_strided_slice %347 {offsets = [0, 384], sizes = [8, 128], strides = [1, 1]} : vector<8x512xf32> to vector<8x128xf32>
    %363 = arith.negf %362 : vector<8x128xf32>
    %364 = math.exp %363 : vector<8x128xf32>
    %cst_199 = arith.constant 1.000000e+00 : f32
    %365 = vector.broadcast %cst_199 : f32 to vector<8x128xf32>
    %366 = arith.addf %365, %364 : vector<8x128xf32>
    %367 = arith.divf %365, %366 : vector<8x128xf32>
    %368 = arith.mulf %359, %339 : vector<8x128xf32>
    %369 = arith.mulf %353, %361 : vector<8x128xf32>
    %370 = arith.addf %368, %369 : vector<8x128xf32>
    %371 = math.tanh %370 : vector<8x128xf32>
    %372 = arith.mulf %367, %371 : vector<8x128xf32>
    %c56_200 = arith.constant 56 : index
    %c0_201 = arith.constant 0 : index
    %373 = vector.load %arg14[%c56_200, %c0_201] : memref<64x128xf32, #tpu.memory_space<vmem>>, vector<8x128xf32>
    tpu.vector_store %arg14[%c56_200, %c0_201], %372 {strides = array<i32>} : memref<64x128xf32, #tpu.memory_space<vmem>>, vector<8x128xf32>,
    %c0_202 = arith.constant 0 : index
    %c0_203 = arith.constant 0 : index
    %374 = vector.load %arg14[%c0_202, %c0_203] : memref<64x128xf32, #tpu.memory_space<vmem>>, vector<64x128xf32>
    %375 = arith.truncf %374 : vector<64x128xf32> to vector<64x128xbf16>
    %c0_204 = arith.constant 0 : index
    %c0_205 = arith.constant 0 : index
    %376 = vector.load %arg7[%c0_204, %c0_205] : memref<128x512xbf16, #tpu.memory_space<vmem>>, vector<128x512xbf16>
    %cst_206 = arith.constant dense<0.000000e+00> : vector<64x512xf32>
    %377 = tpu.matmul %375, %376, %cst_206 {dimension_numbers = #tpu.dot_dimension_numbers<[1], [0], [0], [1], [0, 0, 1, 1], [], []>} : vector<64x128xbf16>, vector<128x512xbf16>, vector<64x512xf32> -> vector<64x512xf32>
    %c0_207 = arith.constant 0 : index
    %c0_208 = arith.constant 0 : index
    %378 = vector.load %arg9[%c0_207, %c0_208] : memref<1x512xf32, #tpu.memory_space<vmem>>, vector<1x512xf32>
    %379 = vector.broadcast %378 : vector<1x512xf32> to vector<64x512xf32>
    %380 = arith.addf %377, %379 : vector<64x512xf32>
    %c0_209 = arith.constant 0 : index
    %c0_210 = arith.constant 0 : index
    %381 = vector.load %arg15[%c0_209, %c0_210] : memref<64x512xf32, #tpu.memory_space<vmem>>, vector<64x512xf32>
    tpu.vector_store %arg15[%c0_209, %c0_210], %380 {strides = array<i32>} : memref<64x512xf32, #tpu.memory_space<vmem>>, vector<64x512xf32>,
    %cst_211 = arith.constant 0.000000e+00 : f32
    %382 = vector.broadcast %cst_211 : f32 to vector<8x128xf32>
    %cst_212 = arith.constant 0.000000e+00 : f32
    %383 = vector.broadcast %cst_212 : f32 to vector<8x128xf32>
    %c0_213 = arith.constant 0 : index
    %c0_214 = arith.constant 0 : index
    %384 = vector.load %arg15[%c0_213, %c0_214] : memref<64x512xf32, #tpu.memory_space<vmem>>, vector<8x512xf32>
    %385 = arith.truncf %382 : vector<8x128xf32> to vector<8x128xbf16>
    %c0_215 = arith.constant 0 : index
    %c0_216 = arith.constant 0 : index
    %386 = vector.load %arg8[%c0_215, %c0_216] : memref<128x512xbf16, #tpu.memory_space<vmem>>, vector<128x512xbf16>
    %cst_217 = arith.constant dense<0.000000e+00> : vector<8x512xf32>
    %387 = tpu.matmul %385, %386, %cst_217 {dimension_numbers = #tpu.dot_dimension_numbers<[1], [0], [0], [1], [0, 0, 1, 1], [], []>} : vector<8x128xbf16>, vector<128x512xbf16>, vector<8x512xf32> -> vector<8x512xf32>
    %388 = arith.addf %384, %387 : vector<8x512xf32>
    %389 = vector.extract_strided_slice %388 {offsets = [0, 0], sizes = [8, 128], strides = [1, 1]} : vector<8x512xf32> to vector<8x128xf32>
    %390 = arith.negf %389 : vector<8x128xf32>
    %391 = math.exp %390 : vector<8x128xf32>
    %cst_218 = arith.constant 1.000000e+00 : f32
    %392 = vector.broadcast %cst_218 : f32 to vector<8x128xf32>
    %393 = arith.addf %392, %391 : vector<8x128xf32>
    %394 = arith.divf %392, %393 : vector<8x128xf32>
    %395 = vector.extract_strided_slice %388 {offsets = [0, 128], sizes = [8, 128], strides = [1, 1]} : vector<8x512xf32> to vector<8x128xf32>
    %396 = arith.negf %395 : vector<8x128xf32>
    %397 = math.exp %396 : vector<8x128xf32>
    %cst_219 = arith.constant 1.000000e+00 : f32
    %398 = vector.broadcast %cst_219 : f32 to vector<8x128xf32>
    %399 = arith.addf %398, %397 : vector<8x128xf32>
    %400 = arith.divf %398, %399 : vector<8x128xf32>
    %401 = vector.extract_strided_slice %388 {offsets = [0, 256], sizes = [8, 128], strides = [1, 1]} : vector<8x512xf32> to vector<8x128xf32>
    %402 = math.tanh %401 : vector<8x128xf32>
    %403 = vector.extract_strided_slice %388 {offsets = [0, 384], sizes = [8, 128], strides = [1, 1]} : vector<8x512xf32> to vector<8x128xf32>
    %404 = arith.negf %403 : vector<8x128xf32>
    %405 = math.exp %404 : vector<8x128xf32>
    %cst_220 = arith.constant 1.000000e+00 : f32
    %406 = vector.broadcast %cst_220 : f32 to vector<8x128xf32>
    %407 = arith.addf %406, %405 : vector<8x128xf32>
    %408 = arith.divf %406, %407 : vector<8x128xf32>
    %409 = arith.mulf %400, %383 : vector<8x128xf32>
    %410 = arith.mulf %394, %402 : vector<8x128xf32>
    %411 = arith.addf %409, %410 : vector<8x128xf32>
    %412 = math.tanh %411 : vector<8x128xf32>
    %413 = arith.mulf %408, %412 : vector<8x128xf32>
    %c0_221 = arith.constant 0 : index
    %c0_222 = arith.constant 0 : index
    %414 = vector.load %arg14[%c0_221, %c0_222] : memref<64x128xf32, #tpu.memory_space<vmem>>, vector<8x128xf32>
    tpu.vector_store %arg14[%c0_221, %c0_222], %413 {strides = array<i32>} : memref<64x128xf32, #tpu.memory_space<vmem>>, vector<8x128xf32>,
    %c8_223 = arith.constant 8 : index
    %c0_224 = arith.constant 0 : index
    %415 = vector.load %arg15[%c8_223, %c0_224] : memref<64x512xf32, #tpu.memory_space<vmem>>, vector<8x512xf32>
    %416 = arith.truncf %413 : vector<8x128xf32> to vector<8x128xbf16>
    %c0_225 = arith.constant 0 : index
    %c0_226 = arith.constant 0 : index
    %417 = vector.load %arg8[%c0_225, %c0_226] : memref<128x512xbf16, #tpu.memory_space<vmem>>, vector<128x512xbf16>
    %cst_227 = arith.constant dense<0.000000e+00> : vector<8x512xf32>
    %418 = tpu.matmul %416, %417, %cst_227 {dimension_numbers = #tpu.dot_dimension_numbers<[1], [0], [0], [1], [0, 0, 1, 1], [], []>} : vector<8x128xbf16>, vector<128x512xbf16>, vector<8x512xf32> -> vector<8x512xf32>
    %419 = arith.addf %415, %418 : vector<8x512xf32>
    %420 = vector.extract_strided_slice %419 {offsets = [0, 0], sizes = [8, 128], strides = [1, 1]} : vector<8x512xf32> to vector<8x128xf32>
    %421 = arith.negf %420 : vector<8x128xf32>
    %422 = math.exp %421 : vector<8x128xf32>
    %cst_228 = arith.constant 1.000000e+00 : f32
    %423 = vector.broadcast %cst_228 : f32 to vector<8x128xf32>
    %424 = arith.addf %423, %422 : vector<8x128xf32>
    %425 = arith.divf %423, %424 : vector<8x128xf32>
    %426 = vector.extract_strided_slice %419 {offsets = [0, 128], sizes = [8, 128], strides = [1, 1]} : vector<8x512xf32> to vector<8x128xf32>
    %427 = arith.negf %426 : vector<8x128xf32>
    %428 = math.exp %427 : vector<8x128xf32>
    %cst_229 = arith.constant 1.000000e+00 : f32
    %429 = vector.broadcast %cst_229 : f32 to vector<8x128xf32>
    %430 = arith.addf %429, %428 : vector<8x128xf32>
    %431 = arith.divf %429, %430 : vector<8x128xf32>
    %432 = vector.extract_strided_slice %419 {offsets = [0, 256], sizes = [8, 128], strides = [1, 1]} : vector<8x512xf32> to vector<8x128xf32>
    %433 = math.tanh %432 : vector<8x128xf32>
    %434 = vector.extract_strided_slice %419 {offsets = [0, 384], sizes = [8, 128], strides = [1, 1]} : vector<8x512xf32> to vector<8x128xf32>
    %435 = arith.negf %434 : vector<8x128xf32>
    %436 = math.exp %435 : vector<8x128xf32>
    %cst_230 = arith.constant 1.000000e+00 : f32
    %437 = vector.broadcast %cst_230 : f32 to vector<8x128xf32>
    %438 = arith.addf %437, %436 : vector<8x128xf32>
    %439 = arith.divf %437, %438 : vector<8x128xf32>
    %440 = arith.mulf %431, %411 : vector<8x128xf32>
    %441 = arith.mulf %425, %433 : vector<8x128xf32>
    %442 = arith.addf %440, %441 : vector<8x128xf32>
    %443 = math.tanh %442 : vector<8x128xf32>
    %444 = arith.mulf %439, %443 : vector<8x128xf32>
    %c8_231 = arith.constant 8 : index
    %c0_232 = arith.constant 0 : index
    %445 = vector.load %arg14[%c8_231, %c0_232] : memref<64x128xf32, #tpu.memory_space<vmem>>, vector<8x128xf32>
    tpu.vector_store %arg14[%c8_231, %c0_232], %444 {strides = array<i32>} : memref<64x128xf32, #tpu.memory_space<vmem>>, vector<8x128xf32>,
    %c16_233 = arith.constant 16 : index
    %c0_234 = arith.constant 0 : index
    %446 = vector.load %arg15[%c16_233, %c0_234] : memref<64x512xf32, #tpu.memory_space<vmem>>, vector<8x512xf32>
    %447 = arith.truncf %444 : vector<8x128xf32> to vector<8x128xbf16>
    %c0_235 = arith.constant 0 : index
    %c0_236 = arith.constant 0 : index
    %448 = vector.load %arg8[%c0_235, %c0_236] : memref<128x512xbf16, #tpu.memory_space<vmem>>, vector<128x512xbf16>
    %cst_237 = arith.constant dense<0.000000e+00> : vector<8x512xf32>
    %449 = tpu.matmul %447, %448, %cst_237 {dimension_numbers = #tpu.dot_dimension_numbers<[1], [0], [0], [1], [0, 0, 1, 1], [], []>} : vector<8x128xbf16>, vector<128x512xbf16>, vector<8x512xf32> -> vector<8x512xf32>
    %450 = arith.addf %446, %449 : vector<8x512xf32>
    %451 = vector.extract_strided_slice %450 {offsets = [0, 0], sizes = [8, 128], strides = [1, 1]} : vector<8x512xf32> to vector<8x128xf32>
    %452 = arith.negf %451 : vector<8x128xf32>
    %453 = math.exp %452 : vector<8x128xf32>
    %cst_238 = arith.constant 1.000000e+00 : f32
    %454 = vector.broadcast %cst_238 : f32 to vector<8x128xf32>
    %455 = arith.addf %454, %453 : vector<8x128xf32>
    %456 = arith.divf %454, %455 : vector<8x128xf32>
    %457 = vector.extract_strided_slice %450 {offsets = [0, 128], sizes = [8, 128], strides = [1, 1]} : vector<8x512xf32> to vector<8x128xf32>
    %458 = arith.negf %457 : vector<8x128xf32>
    %459 = math.exp %458 : vector<8x128xf32>
    %cst_239 = arith.constant 1.000000e+00 : f32
    %460 = vector.broadcast %cst_239 : f32 to vector<8x128xf32>
    %461 = arith.addf %460, %459 : vector<8x128xf32>
    %462 = arith.divf %460, %461 : vector<8x128xf32>
    %463 = vector.extract_strided_slice %450 {offsets = [0, 256], sizes = [8, 128], strides = [1, 1]} : vector<8x512xf32> to vector<8x128xf32>
    %464 = math.tanh %463 : vector<8x128xf32>
    %465 = vector.extract_strided_slice %450 {offsets = [0, 384], sizes = [8, 128], strides = [1, 1]} : vector<8x512xf32> to vector<8x128xf32>
    %466 = arith.negf %465 : vector<8x128xf32>
    %467 = math.exp %466 : vector<8x128xf32>
    %cst_240 = arith.constant 1.000000e+00 : f32
    %468 = vector.broadcast %cst_240 : f32 to vector<8x128xf32>
    %469 = arith.addf %468, %467 : vector<8x128xf32>
    %470 = arith.divf %468, %469 : vector<8x128xf32>
    %471 = arith.mulf %462, %442 : vector<8x128xf32>
    %472 = arith.mulf %456, %464 : vector<8x128xf32>
    %473 = arith.addf %471, %472 : vector<8x128xf32>
    %474 = math.tanh %473 : vector<8x128xf32>
    %475 = arith.mulf %470, %474 : vector<8x128xf32>
    %c16_241 = arith.constant 16 : index
    %c0_242 = arith.constant 0 : index
    %476 = vector.load %arg14[%c16_241, %c0_242] : memref<64x128xf32, #tpu.memory_space<vmem>>, vector<8x128xf32>
    tpu.vector_store %arg14[%c16_241, %c0_242], %475 {strides = array<i32>} : memref<64x128xf32, #tpu.memory_space<vmem>>, vector<8x128xf32>,
    %c24_243 = arith.constant 24 : index
    %c0_244 = arith.constant 0 : index
    %477 = vector.load %arg15[%c24_243, %c0_244] : memref<64x512xf32, #tpu.memory_space<vmem>>, vector<8x512xf32>
    %478 = arith.truncf %475 : vector<8x128xf32> to vector<8x128xbf16>
    %c0_245 = arith.constant 0 : index
    %c0_246 = arith.constant 0 : index
    %479 = vector.load %arg8[%c0_245, %c0_246] : memref<128x512xbf16, #tpu.memory_space<vmem>>, vector<128x512xbf16>
    %cst_247 = arith.constant dense<0.000000e+00> : vector<8x512xf32>
    %480 = tpu.matmul %478, %479, %cst_247 {dimension_numbers = #tpu.dot_dimension_numbers<[1], [0], [0], [1], [0, 0, 1, 1], [], []>} : vector<8x128xbf16>, vector<128x512xbf16>, vector<8x512xf32> -> vector<8x512xf32>
    %481 = arith.addf %477, %480 : vector<8x512xf32>
    %482 = vector.extract_strided_slice %481 {offsets = [0, 0], sizes = [8, 128], strides = [1, 1]} : vector<8x512xf32> to vector<8x128xf32>
    %483 = arith.negf %482 : vector<8x128xf32>
    %484 = math.exp %483 : vector<8x128xf32>
    %cst_248 = arith.constant 1.000000e+00 : f32
    %485 = vector.broadcast %cst_248 : f32 to vector<8x128xf32>
    %486 = arith.addf %485, %484 : vector<8x128xf32>
    %487 = arith.divf %485, %486 : vector<8x128xf32>
    %488 = vector.extract_strided_slice %481 {offsets = [0, 128], sizes = [8, 128], strides = [1, 1]} : vector<8x512xf32> to vector<8x128xf32>
    %489 = arith.negf %488 : vector<8x128xf32>
    %490 = math.exp %489 : vector<8x128xf32>
    %cst_249 = arith.constant 1.000000e+00 : f32
    %491 = vector.broadcast %cst_249 : f32 to vector<8x128xf32>
    %492 = arith.addf %491, %490 : vector<8x128xf32>
    %493 = arith.divf %491, %492 : vector<8x128xf32>
    %494 = vector.extract_strided_slice %481 {offsets = [0, 256], sizes = [8, 128], strides = [1, 1]} : vector<8x512xf32> to vector<8x128xf32>
    %495 = math.tanh %494 : vector<8x128xf32>
    %496 = vector.extract_strided_slice %481 {offsets = [0, 384], sizes = [8, 128], strides = [1, 1]} : vector<8x512xf32> to vector<8x128xf32>
    %497 = arith.negf %496 : vector<8x128xf32>
    %498 = math.exp %497 : vector<8x128xf32>
    %cst_250 = arith.constant 1.000000e+00 : f32
    %499 = vector.broadcast %cst_250 : f32 to vector<8x128xf32>
    %500 = arith.addf %499, %498 : vector<8x128xf32>
    %501 = arith.divf %499, %500 : vector<8x128xf32>
    %502 = arith.mulf %493, %473 : vector<8x128xf32>
    %503 = arith.mulf %487, %495 : vector<8x128xf32>
    %504 = arith.addf %502, %503 : vector<8x128xf32>
    %505 = math.tanh %504 : vector<8x128xf32>
    %506 = arith.mulf %501, %505 : vector<8x128xf32>
    %c24_251 = arith.constant 24 : index
    %c0_252 = arith.constant 0 : index
    %507 = vector.load %arg14[%c24_251, %c0_252] : memref<64x128xf32, #tpu.memory_space<vmem>>, vector<8x128xf32>
    tpu.vector_store %arg14[%c24_251, %c0_252], %506 {strides = array<i32>} : memref<64x128xf32, #tpu.memory_space<vmem>>, vector<8x128xf32>,
    %c32_253 = arith.constant 32 : index
    %c0_254 = arith.constant 0 : index
    %508 = vector.load %arg15[%c32_253, %c0_254] : memref<64x512xf32, #tpu.memory_space<vmem>>, vector<8x512xf32>
    %509 = arith.truncf %506 : vector<8x128xf32> to vector<8x128xbf16>
    %c0_255 = arith.constant 0 : index
    %c0_256 = arith.constant 0 : index
    %510 = vector.load %arg8[%c0_255, %c0_256] : memref<128x512xbf16, #tpu.memory_space<vmem>>, vector<128x512xbf16>
    %cst_257 = arith.constant dense<0.000000e+00> : vector<8x512xf32>
    %511 = tpu.matmul %509, %510, %cst_257 {dimension_numbers = #tpu.dot_dimension_numbers<[1], [0], [0], [1], [0, 0, 1, 1], [], []>} : vector<8x128xbf16>, vector<128x512xbf16>, vector<8x512xf32> -> vector<8x512xf32>
    %512 = arith.addf %508, %511 : vector<8x512xf32>
    %513 = vector.extract_strided_slice %512 {offsets = [0, 0], sizes = [8, 128], strides = [1, 1]} : vector<8x512xf32> to vector<8x128xf32>
    %514 = arith.negf %513 : vector<8x128xf32>
    %515 = math.exp %514 : vector<8x128xf32>
    %cst_258 = arith.constant 1.000000e+00 : f32
    %516 = vector.broadcast %cst_258 : f32 to vector<8x128xf32>
    %517 = arith.addf %516, %515 : vector<8x128xf32>
    %518 = arith.divf %516, %517 : vector<8x128xf32>
    %519 = vector.extract_strided_slice %512 {offsets = [0, 128], sizes = [8, 128], strides = [1, 1]} : vector<8x512xf32> to vector<8x128xf32>
    %520 = arith.negf %519 : vector<8x128xf32>
    %521 = math.exp %520 : vector<8x128xf32>
    %cst_259 = arith.constant 1.000000e+00 : f32
    %522 = vector.broadcast %cst_259 : f32 to vector<8x128xf32>
    %523 = arith.addf %522, %521 : vector<8x128xf32>
    %524 = arith.divf %522, %523 : vector<8x128xf32>
    %525 = vector.extract_strided_slice %512 {offsets = [0, 256], sizes = [8, 128], strides = [1, 1]} : vector<8x512xf32> to vector<8x128xf32>
    %526 = math.tanh %525 : vector<8x128xf32>
    %527 = vector.extract_strided_slice %512 {offsets = [0, 384], sizes = [8, 128], strides = [1, 1]} : vector<8x512xf32> to vector<8x128xf32>
    %528 = arith.negf %527 : vector<8x128xf32>
    %529 = math.exp %528 : vector<8x128xf32>
    %cst_260 = arith.constant 1.000000e+00 : f32
    %530 = vector.broadcast %cst_260 : f32 to vector<8x128xf32>
    %531 = arith.addf %530, %529 : vector<8x128xf32>
    %532 = arith.divf %530, %531 : vector<8x128xf32>
    %533 = arith.mulf %524, %504 : vector<8x128xf32>
    %534 = arith.mulf %518, %526 : vector<8x128xf32>
    %535 = arith.addf %533, %534 : vector<8x128xf32>
    %536 = math.tanh %535 : vector<8x128xf32>
    %537 = arith.mulf %532, %536 : vector<8x128xf32>
    %c32_261 = arith.constant 32 : index
    %c0_262 = arith.constant 0 : index
    %538 = vector.load %arg14[%c32_261, %c0_262] : memref<64x128xf32, #tpu.memory_space<vmem>>, vector<8x128xf32>
    tpu.vector_store %arg14[%c32_261, %c0_262], %537 {strides = array<i32>} : memref<64x128xf32, #tpu.memory_space<vmem>>, vector<8x128xf32>,
    %c40_263 = arith.constant 40 : index
    %c0_264 = arith.constant 0 : index
    %539 = vector.load %arg15[%c40_263, %c0_264] : memref<64x512xf32, #tpu.memory_space<vmem>>, vector<8x512xf32>
    %540 = arith.truncf %537 : vector<8x128xf32> to vector<8x128xbf16>
    %c0_265 = arith.constant 0 : index
    %c0_266 = arith.constant 0 : index
    %541 = vector.load %arg8[%c0_265, %c0_266] : memref<128x512xbf16, #tpu.memory_space<vmem>>, vector<128x512xbf16>
    %cst_267 = arith.constant dense<0.000000e+00> : vector<8x512xf32>
    %542 = tpu.matmul %540, %541, %cst_267 {dimension_numbers = #tpu.dot_dimension_numbers<[1], [0], [0], [1], [0, 0, 1, 1], [], []>} : vector<8x128xbf16>, vector<128x512xbf16>, vector<8x512xf32> -> vector<8x512xf32>
    %543 = arith.addf %539, %542 : vector<8x512xf32>
    %544 = vector.extract_strided_slice %543 {offsets = [0, 0], sizes = [8, 128], strides = [1, 1]} : vector<8x512xf32> to vector<8x128xf32>
    %545 = arith.negf %544 : vector<8x128xf32>
    %546 = math.exp %545 : vector<8x128xf32>
    %cst_268 = arith.constant 1.000000e+00 : f32
    %547 = vector.broadcast %cst_268 : f32 to vector<8x128xf32>
    %548 = arith.addf %547, %546 : vector<8x128xf32>
    %549 = arith.divf %547, %548 : vector<8x128xf32>
    %550 = vector.extract_strided_slice %543 {offsets = [0, 128], sizes = [8, 128], strides = [1, 1]} : vector<8x512xf32> to vector<8x128xf32>
    %551 = arith.negf %550 : vector<8x128xf32>
    %552 = math.exp %551 : vector<8x128xf32>
    %cst_269 = arith.constant 1.000000e+00 : f32
    %553 = vector.broadcast %cst_269 : f32 to vector<8x128xf32>
    %554 = arith.addf %553, %552 : vector<8x128xf32>
    %555 = arith.divf %553, %554 : vector<8x128xf32>
    %556 = vector.extract_strided_slice %543 {offsets = [0, 256], sizes = [8, 128], strides = [1, 1]} : vector<8x512xf32> to vector<8x128xf32>
    %557 = math.tanh %556 : vector<8x128xf32>
    %558 = vector.extract_strided_slice %543 {offsets = [0, 384], sizes = [8, 128], strides = [1, 1]} : vector<8x512xf32> to vector<8x128xf32>
    %559 = arith.negf %558 : vector<8x128xf32>
    %560 = math.exp %559 : vector<8x128xf32>
    %cst_270 = arith.constant 1.000000e+00 : f32
    %561 = vector.broadcast %cst_270 : f32 to vector<8x128xf32>
    %562 = arith.addf %561, %560 : vector<8x128xf32>
    %563 = arith.divf %561, %562 : vector<8x128xf32>
    %564 = arith.mulf %555, %535 : vector<8x128xf32>
    %565 = arith.mulf %549, %557 : vector<8x128xf32>
    %566 = arith.addf %564, %565 : vector<8x128xf32>
    %567 = math.tanh %566 : vector<8x128xf32>
    %568 = arith.mulf %563, %567 : vector<8x128xf32>
    %c40_271 = arith.constant 40 : index
    %c0_272 = arith.constant 0 : index
    %569 = vector.load %arg14[%c40_271, %c0_272] : memref<64x128xf32, #tpu.memory_space<vmem>>, vector<8x128xf32>
    tpu.vector_store %arg14[%c40_271, %c0_272], %568 {strides = array<i32>} : memref<64x128xf32, #tpu.memory_space<vmem>>, vector<8x128xf32>,
    %c48_273 = arith.constant 48 : index
    %c0_274 = arith.constant 0 : index
    %570 = vector.load %arg15[%c48_273, %c0_274] : memref<64x512xf32, #tpu.memory_space<vmem>>, vector<8x512xf32>
    %571 = arith.truncf %568 : vector<8x128xf32> to vector<8x128xbf16>
    %c0_275 = arith.constant 0 : index
    %c0_276 = arith.constant 0 : index
    %572 = vector.load %arg8[%c0_275, %c0_276] : memref<128x512xbf16, #tpu.memory_space<vmem>>, vector<128x512xbf16>
    %cst_277 = arith.constant dense<0.000000e+00> : vector<8x512xf32>
    %573 = tpu.matmul %571, %572, %cst_277 {dimension_numbers = #tpu.dot_dimension_numbers<[1], [0], [0], [1], [0, 0, 1, 1], [], []>} : vector<8x128xbf16>, vector<128x512xbf16>, vector<8x512xf32> -> vector<8x512xf32>
    %574 = arith.addf %570, %573 : vector<8x512xf32>
    %575 = vector.extract_strided_slice %574 {offsets = [0, 0], sizes = [8, 128], strides = [1, 1]} : vector<8x512xf32> to vector<8x128xf32>
    %576 = arith.negf %575 : vector<8x128xf32>
    %577 = math.exp %576 : vector<8x128xf32>
    %cst_278 = arith.constant 1.000000e+00 : f32
    %578 = vector.broadcast %cst_278 : f32 to vector<8x128xf32>
    %579 = arith.addf %578, %577 : vector<8x128xf32>
    %580 = arith.divf %578, %579 : vector<8x128xf32>
    %581 = vector.extract_strided_slice %574 {offsets = [0, 128], sizes = [8, 128], strides = [1, 1]} : vector<8x512xf32> to vector<8x128xf32>
    %582 = arith.negf %581 : vector<8x128xf32>
    %583 = math.exp %582 : vector<8x128xf32>
    %cst_279 = arith.constant 1.000000e+00 : f32
    %584 = vector.broadcast %cst_279 : f32 to vector<8x128xf32>
    %585 = arith.addf %584, %583 : vector<8x128xf32>
    %586 = arith.divf %584, %585 : vector<8x128xf32>
    %587 = vector.extract_strided_slice %574 {offsets = [0, 256], sizes = [8, 128], strides = [1, 1]} : vector<8x512xf32> to vector<8x128xf32>
    %588 = math.tanh %587 : vector<8x128xf32>
    %589 = vector.extract_strided_slice %574 {offsets = [0, 384], sizes = [8, 128], strides = [1, 1]} : vector<8x512xf32> to vector<8x128xf32>
    %590 = arith.negf %589 : vector<8x128xf32>
    %591 = math.exp %590 : vector<8x128xf32>
    %cst_280 = arith.constant 1.000000e+00 : f32
    %592 = vector.broadcast %cst_280 : f32 to vector<8x128xf32>
    %593 = arith.addf %592, %591 : vector<8x128xf32>
    %594 = arith.divf %592, %593 : vector<8x128xf32>
    %595 = arith.mulf %586, %566 : vector<8x128xf32>
    %596 = arith.mulf %580, %588 : vector<8x128xf32>
    %597 = arith.addf %595, %596 : vector<8x128xf32>
    %598 = math.tanh %597 : vector<8x128xf32>
    %599 = arith.mulf %594, %598 : vector<8x128xf32>
    %c48_281 = arith.constant 48 : index
    %c0_282 = arith.constant 0 : index
    %600 = vector.load %arg14[%c48_281, %c0_282] : memref<64x128xf32, #tpu.memory_space<vmem>>, vector<8x128xf32>
    tpu.vector_store %arg14[%c48_281, %c0_282], %599 {strides = array<i32>} : memref<64x128xf32, #tpu.memory_space<vmem>>, vector<8x128xf32>,
    %c56_283 = arith.constant 56 : index
    %c0_284 = arith.constant 0 : index
    %601 = vector.load %arg15[%c56_283, %c0_284] : memref<64x512xf32, #tpu.memory_space<vmem>>, vector<8x512xf32>
    %602 = arith.truncf %599 : vector<8x128xf32> to vector<8x128xbf16>
    %c0_285 = arith.constant 0 : index
    %c0_286 = arith.constant 0 : index
    %603 = vector.load %arg8[%c0_285, %c0_286] : memref<128x512xbf16, #tpu.memory_space<vmem>>, vector<128x512xbf16>
    %cst_287 = arith.constant dense<0.000000e+00> : vector<8x512xf32>
    %604 = tpu.matmul %602, %603, %cst_287 {dimension_numbers = #tpu.dot_dimension_numbers<[1], [0], [0], [1], [0, 0, 1, 1], [], []>} : vector<8x128xbf16>, vector<128x512xbf16>, vector<8x512xf32> -> vector<8x512xf32>
    %605 = arith.addf %601, %604 : vector<8x512xf32>
    %606 = vector.extract_strided_slice %605 {offsets = [0, 0], sizes = [8, 128], strides = [1, 1]} : vector<8x512xf32> to vector<8x128xf32>
    %607 = arith.negf %606 : vector<8x128xf32>
    %608 = math.exp %607 : vector<8x128xf32>
    %cst_288 = arith.constant 1.000000e+00 : f32
    %609 = vector.broadcast %cst_288 : f32 to vector<8x128xf32>
    %610 = arith.addf %609, %608 : vector<8x128xf32>
    %611 = arith.divf %609, %610 : vector<8x128xf32>
    %612 = vector.extract_strided_slice %605 {offsets = [0, 128], sizes = [8, 128], strides = [1, 1]} : vector<8x512xf32> to vector<8x128xf32>
    %613 = arith.negf %612 : vector<8x128xf32>
    %614 = math.exp %613 : vector<8x128xf32>
    %cst_289 = arith.constant 1.000000e+00 : f32
    %615 = vector.broadcast %cst_289 : f32 to vector<8x128xf32>
    %616 = arith.addf %615, %614 : vector<8x128xf32>
    %617 = arith.divf %615, %616 : vector<8x128xf32>
    %618 = vector.extract_strided_slice %605 {offsets = [0, 256], sizes = [8, 128], strides = [1, 1]} : vector<8x512xf32> to vector<8x128xf32>
    %619 = math.tanh %618 : vector<8x128xf32>
    %620 = vector.extract_strided_slice %605 {offsets = [0, 384], sizes = [8, 128], strides = [1, 1]} : vector<8x512xf32> to vector<8x128xf32>
    %621 = arith.negf %620 : vector<8x128xf32>
    %622 = math.exp %621 : vector<8x128xf32>
    %cst_290 = arith.constant 1.000000e+00 : f32
    %623 = vector.broadcast %cst_290 : f32 to vector<8x128xf32>
    %624 = arith.addf %623, %622 : vector<8x128xf32>
    %625 = arith.divf %623, %624 : vector<8x128xf32>
    %626 = arith.mulf %617, %597 : vector<8x128xf32>
    %627 = arith.mulf %611, %619 : vector<8x128xf32>
    %628 = arith.addf %626, %627 : vector<8x128xf32>
    %629 = math.tanh %628 : vector<8x128xf32>
    %630 = arith.mulf %625, %629 : vector<8x128xf32>
    %c56_291 = arith.constant 56 : index
    %c0_292 = arith.constant 0 : index
    %631 = vector.load %arg14[%c56_291, %c0_292] : memref<64x128xf32, #tpu.memory_space<vmem>>, vector<8x128xf32>
    tpu.vector_store %arg14[%c56_291, %c0_292], %630 {strides = array<i32>} : memref<64x128xf32, #tpu.memory_space<vmem>>, vector<8x128xf32>,
    %c0_293 = arith.constant 0 : index
    %c0_294 = arith.constant 0 : index
    %632 = vector.load %arg14[%c0_293, %c0_294] : memref<64x128xf32, #tpu.memory_space<vmem>>, vector<64x128xf32>
    %633 = arith.truncf %632 : vector<64x128xf32> to vector<64x128xbf16>
    %c0_295 = arith.constant 0 : index
    %c0_296 = arith.constant 0 : index
    %634 = vector.load %arg10[%c0_295, %c0_296] : memref<128x128xbf16, #tpu.memory_space<vmem>>, vector<128x128xbf16>
    %cst_297 = arith.constant dense<0.000000e+00> : vector<64x128xf32>
    %635 = tpu.matmul %633, %634, %cst_297 {dimension_numbers = #tpu.dot_dimension_numbers<[1], [0], [0], [1], [0, 0, 1, 1], [], []>} : vector<64x128xbf16>, vector<128x128xbf16>, vector<64x128xf32> -> vector<64x128xf32>
    %c0_298 = arith.constant 0 : index
    %c0_299 = arith.constant 0 : index
    %636 = vector.load %arg11[%c0_298, %c0_299] : memref<1x128xf32, #tpu.memory_space<vmem>>, vector<1x128xf32>
    %637 = vector.broadcast %636 : vector<1x128xf32> to vector<64x128xf32>
    %638 = arith.addf %635, %637 : vector<64x128xf32>
    %c0_300 = arith.constant 0 : index
    %c0_301 = arith.constant 0 : index
    %639 = vector.load %arg12[%c0_300, %c0_301] : memref<64x128xf32, #tpu.memory_space<vmem>>, vector<64x128xf32>
    tpu.vector_store %arg12[%c0_300, %c0_301], %638 {strides = array<i32>} : memref<64x128xf32, #tpu.memory_space<vmem>>, vector<64x128xf32>,
    return
  }
  func.func @transform_0(%arg0: i32, %arg1: memref<4x7xi32, #tpu.memory_space<smem>>) -> (i32, i32) {
    %c0_i32 = arith.constant 0 : i32
    %c0_i32_0 = arith.constant 0 : i32
    %c0_i32_1 = arith.constant 0 : i32
    return %c0_i32, %c0_i32_0 : i32, i32
  }
  func.func @transform_1(%arg0: i32, %arg1: memref<4x7xi32, #tpu.memory_space<smem>>) -> (i32, i32) {
    %c0_i32 = arith.constant 0 : i32
    %c0_i32_0 = arith.constant 0 : i32
    %c0_i32_1 = arith.constant 0 : i32
    return %c0_i32, %c0_i32_0 : i32, i32
  }
  func.func @transform_2(%arg0: i32, %arg1: memref<4x7xi32, #tpu.memory_space<smem>>) -> (i32, i32) {
    %c0_i32 = arith.constant 0 : i32
    %c0_i32_0 = arith.constant 0 : i32
    %c0_i32_1 = arith.constant 0 : i32
    return %c0_i32, %c0_i32_0 : i32, i32
  }
  func.func @transform_3(%arg0: i32, %arg1: memref<4x7xi32, #tpu.memory_space<smem>>) -> (i32, i32) {
    %c0_i32 = arith.constant 0 : i32
    %c0_i32_0 = arith.constant 0 : i32
    %c0_i32_1 = arith.constant 0 : i32
    return %c0_i32, %c0_i32_0 : i32, i32
  }
  func.func @transform_4(%arg0: i32, %arg1: memref<4x7xi32, #tpu.memory_space<smem>>) -> (i32, i32) {
    %c0_i32 = arith.constant 0 : i32
    %c0_i32_0 = arith.constant 0 : i32
    %c0_i32_1 = arith.constant 0 : i32
    return %c0_i32, %c0_i32_0 : i32, i32
  }
  func.func @transform_5(%arg0: i32, %arg1: memref<4x7xi32, #tpu.memory_space<smem>>) -> (i32, i32) {
    %c0_i32 = arith.constant 0 : i32
    %c0_i32_0 = arith.constant 0 : i32
    %c0_i32_1 = arith.constant 0 : i32
    return %c0_i32, %c0_i32_0 : i32, i32
  }
  func.func @transform_6(%arg0: i32, %arg1: memref<4x7xi32, #tpu.memory_space<smem>>) -> (i32, i32) {
    %c0_i32 = arith.constant 0 : i32
    %c0_i32_0 = arith.constant 0 : i32
    %c0_i32_1 = arith.constant 0 : i32
    return %c0_i32, %c0_i32_0 : i32, i32
  }
  func.func @transform_7(%arg0: i32, %arg1: memref<4x7xi32, #tpu.memory_space<smem>>) -> (i32, i32) {
    %c0_i32 = arith.constant 0 : i32
    %c0_i32_0 = arith.constant 0 : i32
    %c0_i32_1 = arith.constant 0 : i32
    return %c0_i32, %c0_i32_0 : i32, i32
  }
  func.func @transform_8(%arg0: i32, %arg1: memref<4x7xi32, #tpu.memory_space<smem>>) -> (i32, i32) {
    %c0_i32 = arith.constant 0 : i32
    %c0_i32_0 = arith.constant 0 : i32
    %c0_i32_1 = arith.constant 0 : i32
    return %c0_i32, %c0_i32_0 : i32, i32
  }
  func.func @transform_9(%arg0: i32, %arg1: memref<4x7xi32, #tpu.memory_space<smem>>) -> (i32, i32) {
    %c0_i32 = arith.constant 0 : i32
    %c0_i32_0 = arith.constant 0 : i32
    %c0_i32_1 = arith.constant 0 : i32
    return %c0_i32, %c0_i32_0 : i32, i32
  }
  func.func @transform_10(%arg0: i32, %arg1: memref<4x7xi32, #tpu.memory_space<smem>>) -> (i32, i32) {
    %c0_i32 = arith.constant 0 : i32
    %c0_i32_0 = arith.constant 0 : i32
    %c0_i32_1 = arith.constant 0 : i32
    return %c0_i32, %c0_i32_0 : i32, i32
  }
}

</mosaic_0001>

<llo_original>
// kernel: tpu_custom_call.1
$region0: #{tpu_custom_call.1}
  #allocation0 [shape = 'u32[]', space=smem, size = 0x4, offset = 0x4, fixed_abs, tag = 'smem constant byte address 0x4 - core index']
  #allocation1 [shape = 'u32[72,128]{1,0:T(1,128)}', space=vmem, size = 0x9000, scoped, tag = 'internal scratch']
  #allocation2 [shape = 'f32[64,128]{1,0:T(8,128)}', space=vmem, size = 0x8000, scoped, tag = 'scratch operand']
  #allocation3 [shape = 'f32[64,128]{1,0:T(8,128)}', space=vmem, size = 0x8000, scoped, tag = 'scratch operand']
  #allocation4 [shape = 'f32[64,512]{1,0:T(8,128)}', space=vmem, size = 0x20000, scoped, tag = 'scratch operand']
  #allocation5 [shape = 's32[1]{0}', space=sflag, size = 0x4, scoped, tag = 'scoped memory for tpu_custom_call.1']
  #allocation6 [shape = 'u8[2048]{0}', space=smem, size = 0x800, scoped, tag = 'prefetched SMEM operand 0']
  %s0 = inlined_call_operand.hbm [shape: s32[4,7], index: 0, kind: input, shape index: {}]
  %s1 = inlined_call_operand.hbm [shape: f32[8,128], index: 1, kind: input, shape index: {}]
  %s2 = inlined_call_operand.hbm [shape: f32[56,128], index: 2, kind: input, shape index: {}]
  %s3 = inlined_call_operand.hbm [shape: bf16[128,512], index: 3, kind: input, shape index: {}]
  %s4 = inlined_call_operand.hbm [shape: bf16[128,512], index: 4, kind: input, shape index: {}]
  %s5 = inlined_call_operand.vmem [shape: f32[1,512], index: 5, kind: input, shape index: {}]
  %s6 = inlined_call_operand.hbm [shape: bf16[128,512], index: 6, kind: input, shape index: {}]
  %s7 = inlined_call_operand.hbm [shape: bf16[128,512], index: 7, kind: input, shape index: {}]
  %s8 = inlined_call_operand.hbm [shape: f32[1,512], index: 8, kind: input, shape index: {}]
  %s9 = inlined_call_operand.hbm [shape: bf16[128,128], index: 9, kind: input, shape index: {}]
  %s10 = inlined_call_operand.vmem [shape: f32[1,128], index: 10, kind: input, shape index: {}]
  %s11 = inlined_call_operand.hbm [shape: f32[64,128], index: 11, kind: output, shape index: {}]
  %s12 = sld [smem:[#allocation0]]
  $region82: #{tpu_custom_call.1} parent=0
    _
  %s14 = ssub.s32 1, %s12
  %s15 = scalar_select 0, %s14, %s12
  %s17 = sshll.u32 %s0, 4
  %s18 = int_to_ptr.hbm [resolvable:$true] %s17
  %20 = dma.hbm_to_smem %s18, 64, [#allocation6], [#allocation5]
  %22 = dma.done [#allocation5], 64
  %23 = sfence
  $region1: #{tpu_custom_call.1} parent=0
    #allocation7 [shape = 'u8[4096]{0}', space=vmem, size = 0x1000, scoped, tag = 'input window, operand 1, single buffered']
    #allocation8 [shape = 's32[1]{0}', space=sflag, size = 0x4, scoped, tag = 'scoped memory for tpu_custom_call.1']
    #allocation9 [shape = 's32[1]{0}', space=sflag, size = 0x4, scoped, tag = 'scoped memory for tpu_custom_call.1']
    #allocation10 [shape = 'u8[28672]{0}', space=vmem, size = 0x7000, scoped, tag = 'input window, operand 2, single buffered']
    #allocation11 [shape = 's32[1]{0}', space=sflag, size = 0x4, scoped, tag = 'scoped memory for tpu_custom_call.1']
    #allocation12 [shape = 'u8[131072]{0}', space=vmem, size = 0x20000, scoped, tag = 'input window, operand 3, single buffered']
    #allocation13 [shape = 'u8[131072]{0}', space=vmem, size = 0x20000, scoped, tag = 'input window, operand 4, single buffered']
    #allocation14 [shape = 's32[1]{0}', space=sflag, size = 0x4, scoped, tag = 'scoped memory for tpu_custom_call.1']
    #allocation15 [shape = 'u8[131072]{0}', space=vmem, size = 0x20000, scoped, tag = 'input window, operand 6, single buffered']
    #allocation16 [shape = 'u8[131072]{0}', space=vmem, size = 0x20000, scoped, tag = 'input window, operand 7, single buffered']
    #allocation17 [shape = 's32[1]{0}', space=sflag, size = 0x4, scoped, tag = 'scoped memory for tpu_custom_call.1']
    #allocation18 [shape = 'u8[2048]{0}', space=vmem, size = 0x800, scoped, tag = 'input window, operand 8, single buffered']
    #allocation19 [shape = 'u8[32768]{0}', space=vmem, size = 0x8000, scoped, tag = 'input window, operand 9, single buffered']
    #allocation20 [shape = 's32[1]{0}', space=sflag, size = 0x4, scoped, tag = 'scoped memory for tpu_custom_call.1']
    #allocation21 [shape = 'u8[32768]{0}', space=vmem, size = 0x8000, scoped, tag = 'output window, operand 0, single buffered']
    %24 = vsyncpa [#allocation8], 0
    %25 = vsyncpa [#allocation11], 0
    %26 = vsyncpa [#allocation14], 0
    %27 = vsyncpa [#allocation17], 0
    %28 = vsyncpa [#allocation20], 0
    %29 = vsyncpa [#allocation9], 0
    // Predicated region
    $region2: #{tpu_custom_call.1} parent=1 // pred_check
      _
    $region3: #{tpu_custom_call.1} parent=1 // pred_check_branch
      %31 = sbr.rel (0) target = $region5
    $region4: #{tpu_custom_call.1} parent=1 // pred_region
      %33 = vsyncadd [#allocation8], 0
      %s35 = sshll.u32 %s1, 4
      %s36 = int_to_ptr.hbm [resolvable:$true] %s35
      %s37 = sshll.u32 [#allocation7], 4
      %s38 = int_to_ptr.vmem [resolvable:$true] %s37
      %40 = dma.hbm_to_vmem [thread:$0]  %s36, 128, %s38, [#allocation8]
    $region5: #{tpu_custom_call.1} parent=1 // pred_fallthru
      _
    // Predicated region
    $region6: #{tpu_custom_call.1} parent=1 // pred_check
      _
    $region7: #{tpu_custom_call.1} parent=1 // pred_check_branch
      %42 = sbr.rel (0) target = $region9
    $region8: #{tpu_custom_call.1} parent=1 // pred_region
      %44 = vsyncadd [#allocation11], 0
      %s45 = sshll.u32 %s2, 4
      %s46 = int_to_ptr.hbm [resolvable:$true] %s45
      %s47 = sshll.u32 [#allocation10], 4
      %s48 = int_to_ptr.vmem [resolvable:$true] %s47
      %53 = dma.hbm_to_vmem [thread:$0]  %s46, 896, %s48, [#allocation11], 128, 128, 8
    $region9: #{tpu_custom_call.1} parent=1 // pred_fallthru
      _
    // Predicated region
    $region10: #{tpu_custom_call.1} parent=1 // pred_check
      _
    $region11: #{tpu_custom_call.1} parent=1 // pred_check_branch
      %55 = sbr.rel (0) target = $region13
    $region12: #{tpu_custom_call.1} parent=1 // pred_region
      %57 = vsyncadd [#allocation11], 0
      %s58 = sshll.u32 %s3, 4
      %s59 = int_to_ptr.hbm [resolvable:$true] %s58
      %s60 = sshll.u32 [#allocation12], 4
      %s61 = int_to_ptr.vmem [resolvable:$true] %s60
      %66 = dma.hbm_to_vmem [thread:$0]  %s59, 4096, %s61, [#allocation11], 256, 256, 16
    $region13: #{tpu_custom_call.1} parent=1 // pred_fallthru
      _
    // Predicated region
    $region14: #{tpu_custom_call.1} parent=1 // pred_check
      _
    $region15: #{tpu_custom_call.1} parent=1 // pred_check_branch
      %68 = sbr.rel (0) target = $region17
    $region16: #{tpu_custom_call.1} parent=1 // pred_region
      %70 = vsyncadd [#allocation14], 0
      %s71 = sshll.u32 %s4, 4
      %s72 = int_to_ptr.hbm [resolvable:$true] %s71
      %s73 = sshll.u32 [#allocation13], 4
      %s74 = int_to_ptr.vmem [resolvable:$true] %s73
      %79 = dma.hbm_to_vmem [thread:$0]  %s72, 4096, %s74, [#allocation14], 256, 256, 16
    $region17: #{tpu_custom_call.1} parent=1 // pred_fallthru
      _
    // Predicated region
    $region18: #{tpu_custom_call.1} parent=1 // pred_check
      _
    $region19: #{tpu_custom_call.1} parent=1 // pred_check_branch
      %81 = sbr.rel (0) target = $region21
    $region20: #{tpu_custom_call.1} parent=1 // pred_region
      _
    $region21: #{tpu_custom_call.1} parent=1 // pred_fallthru
      _
    // Predicated region
    $region22: #{tpu_custom_call.1} parent=1 // pred_check
      _
    $region23: #{tpu_custom_call.1} parent=1 // pred_check_branch
      %83 = sbr.rel (0) target = $region25
    $region24: #{tpu_custom_call.1} parent=1 // pred_region
      %85 = vsyncadd [#allocation14], 0
      %s86 = sshll.u32 %s6, 4
      %s87 = int_to_ptr.hbm [resolvable:$true] %s86
      %s88 = sshll.u32 [#allocation15], 4
      %s89 = int_to_ptr.vmem [resolvable:$true] %s88
      %94 = dma.hbm_to_vmem [thread:$0]  %s87, 4096, %s89, [#allocation14], 256, 256, 16
    $region25: #{tpu_custom_call.1} parent=1 // pred_fallthru
      _
    // Predicated region
    $region26: #{tpu_custom_call.1} parent=1 // pred_check
      _
    $region27: #{tpu_custom_call.1} parent=1 // pred_check_branch
      %96 = sbr.rel (0) target = $region29
    $region28: #{tpu_custom_call.1} parent=1 // pred_region
      %98 = vsyncadd [#allocation17], 0
      %s99 = sshll.u32 %s7, 4
      %s100 = int_to_ptr.hbm [resolvable:$true] %s99
      %s101 = sshll.u32 [#allocation16], 4
      %s102 = int_to_ptr.vmem [resolvable:$true] %s101
      %107 = dma.hbm_to_vmem [thread:$0]  %s100, 4096, %s102, [#allocation17], 256, 256, 16
    $region29: #{tpu_custom_call.1} parent=1 // pred_fallthru
      _
    // Predicated region
    $region30: #{tpu_custom_call.1} parent=1 // pred_check
      _
    $region31: #{tpu_custom_call.1} parent=1 // pred_check_branch
      %109 = sbr.rel (0) target = $region33
    $region32: #{tpu_custom_call.1} parent=1 // pred_region
      %111 = vsyncadd [#allocation17], 0
      %s113 = sshll.u32 %s8, 4
      %s114 = int_to_ptr.hbm [resolvable:$true] %s113
      %s115 = sshll.u32 [#allocation18], 4
      %s116 = int_to_ptr.vmem [resolvable:$true] %s115
      %118 = dma.hbm_to_vmem [thread:$0]  %s114, 64, %s116, [#allocation17]
    $region33: #{tpu_custom_call.1} parent=1 // pred_fallthru
      _
    // Predicated region
    $region34: #{tpu_custom_call.1} parent=1 // pred_check
      _
    $region35: #{tpu_custom_call.1} parent=1 // pred_check_branch
      %120 = sbr.rel (0) target = $region37
    $region36: #{tpu_custom_call.1} parent=1 // pred_region
      %122 = vsyncadd [#allocation20], 0
      %s123 = sshll.u32 %s9, 4
      %s124 = int_to_ptr.hbm [resolvable:$true] %s123
      %s125 = sshll.u32 [#allocation19], 4
      %s126 = int_to_ptr.vmem [resolvable:$true] %s125
      %131 = dma.hbm_to_vmem [thread:$0]  %s124, 1024, %s126, [#allocation20], 64, 64, 4
    $region37: #{tpu_custom_call.1} parent=1 // pred_fallthru
      _
    // Predicated region
    $region38: #{tpu_custom_call.1} parent=1 // pred_check
      _
    $region39: #{tpu_custom_call.1} parent=1 // pred_check_branch
      %133 = sbr.rel (0) target = $region41
    $region40: #{tpu_custom_call.1} parent=1 // pred_region
      _
    $region41: #{tpu_custom_call.1} parent=1 // pred_fallthru
      _
    // Predicated region
    $region42: #{tpu_custom_call.1} parent=1 // pred_check
      _
    $region43: #{tpu_custom_call.1} parent=1 // pred_check_branch
      %135 = sbr.rel (0) target = $region45
    $region44: #{tpu_custom_call.1} parent=1 // pred_region
      %137 = dma.done [#allocation8], 128
    $region45: #{tpu_custom_call.1} parent=1 // pred_fallthru
      _
    // Predicated region
    $region46: #{tpu_custom_call.1} parent=1 // pred_check
      _
    $region47: #{tpu_custom_call.1} parent=1 // pred_check_branch
      %139 = sbr.rel (0) target = $region49
    $region48: #{tpu_custom_call.1} parent=1 // pred_region
      %141 = dma.done [#allocation11], 896
    $region49: #{tpu_custom_call.1} parent=1 // pred_fallthru
      _
    // Predicated region
    $region50: #{tpu_custom_call.1} parent=1 // pred_check
      _
    $region51: #{tpu_custom_call.1} parent=1 // pred_check_branch
      %143 = sbr.rel (0) target = $region53
    $region52: #{tpu_custom_call.1} parent=1 // pred_region
      %145 = dma.done [#allocation11], 4096
    $region53: #{tpu_custom_call.1} parent=1 // pred_fallthru
      _
    // Predicated region
    $region54: #{tpu_custom_call.1} parent=1 // pred_check
      _
    $region55: #{tpu_custom_call.1} parent=1 // pred_check_branch
      %147 = sbr.rel (0) target = $region57
    $region56: #{tpu_custom_call.1} parent=1 // pred_region
      %149 = dma.done [#allocation14], 4096
    $region57: #{tpu_custom_call.1} parent=1 // pred_fallthru
      _
    // Predicated region
    $region58: #{tpu_custom_call.1} parent=1 // pred_check
      _
    $region59: #{tpu_custom_call.1} parent=1 // pred_check_branch
      %151 = sbr.rel (0) target = $region61
    $region60: #{tpu_custom_call.1} parent=1 // pred_region
      %153 = dma.done [#allocation14], 4096
    $region61: #{tpu_custom_call.1} parent=1 // pred_fallthru
      _
    // Predicated region
    $region62: #{tpu_custom_call.1} parent=1 // pred_check
      _
    $region63: #{tpu_custom_call.1} parent=1 // pred_check_branch
      %155 = sbr.rel (0) target = $region65
    $region64: #{tpu_custom_call.1} parent=1 // pred_region
      %157 = dma.done [#allocation17], 4096
    $region65: #{tpu_custom_call.1} parent=1 // pred_fallthru
      _
    // Predicated region
    $region66: #{tpu_custom_call.1} parent=1 // pred_check
      _
    $region67: #{tpu_custom_call.1} parent=1 // pred_check_branch
      %159 = sbr.rel (0) target = $region69
    $region68: #{tpu_custom_call.1} parent=1 // pred_region
      %161 = dma.done [#allocation17], 64
    $region69: #{tpu_custom_call.1} parent=1 // pred_fallthru
      _
    // Predicated region
    $region70: #{tpu_custom_call.1} parent=1 // pred_check
      _
    $region71: #{tpu_custom_call.1} parent=1 // pred_check_branch
      %163 = sbr.rel (0) target = $region73
    $region72: #{tpu_custom_call.1} parent=1 // pred_region
      %165 = dma.done [#allocation20], 1024
    $region73: #{tpu_custom_call.1} parent=1 // pred_fallthru
      _
    %167 = vst [vmem:[#allocation2] sm:$0xff] 0.0
    %168 = vst [vmem:[#allocation2 + $0x8] sm:$0xff] 0.0
    %169 = vst [vmem:[#allocation2 + $0x10] sm:$0xff] 0.0
    %170 = vst [vmem:[#allocation2 + $0x18] sm:$0xff] 0.0
    %171 = vst [vmem:[#allocation2 + $0x20] sm:$0xff] 0.0
    %172 = vst [vmem:[#allocation2 + $0x28] sm:$0xff] 0.0
    %173 = vst [vmem:[#allocation2 + $0x30] sm:$0xff] 0.0
    %174 = vst [vmem:[#allocation2 + $0x38] sm:$0xff] 0.0
    %v175 = vld [vmem:[#allocation7] sm:$0xff]
    %176 = vst [vmem:[#allocation2] sm:$0xff] %v175
    %s177 = sld [smem:[#allocation6]]
    %s178 = scalar_lea.vmem [#allocation10], %s177
    %v179 = vld [vmem:[%s178] sm:$0x1]
    %180 = vst [vmem:[#allocation2 + $0x8] sm:$0x1] %v179
    %s181 = sld [smem:[#allocation6 + $0x80]]
    %s182 = scalar_lea.vmem [#allocation10], %s181
    %v183 = vld [vmem:[%s182] sm:$0x1]
    %184 = vst [vmem:[#allocation2 + $0x9] sm:$0x1] %v183
    %s185 = sld [smem:[#allocation6 + $0x100]]
    %s186 = scalar_lea.vmem [#allocation10], %s185
    %v187 = vld [vmem:[%s186] sm:$0x1]
    %188 = vst [vmem:[#allocation2 + $0xa] sm:$0x1] %v187
    %s189 = sld [smem:[#allocation6 + $0x180]]
    %s190 = scalar_lea.vmem [#allocation10], %s189
    %v191 = vld [vmem:[%s190] sm:$0x1]
    %192 = vst [vmem:[#allocation2 + $0xb] sm:$0x1] %v191
    %s193 = sld [smem:[#allocation6 + $0x1]]
    %s194 = scalar_lea.vmem [#allocation10], %s193
    %v195 = vld [vmem:[%s194] sm:$0x1]
    %196 = vst [vmem:[#allocation2 + $0x10] sm:$0x1] %v195
    %s197 = sld [smem:[#allocation6 + $0x81]]
    %s198 = scalar_lea.vmem [#allocation10], %s197
    %v199 = vld [vmem:[%s198] sm:$0x1]
    %200 = vst [vmem:[#allocation2 + $0x11] sm:$0x1] %v199
    %s201 = sld [smem:[#allocation6 + $0x101]]
    %s202 = scalar_lea.vmem [#allocation10], %s201
    %v203 = vld [vmem:[%s202] sm:$0x1]
    %204 = vst [vmem:[#allocation2 + $0x12] sm:$0x1] %v203
    %s205 = sld [smem:[#allocation6 + $0x181]]
    %s206 = scalar_lea.vmem [#allocation10], %s205
    %v207 = vld [vmem:[%s206] sm:$0x1]
    %208 = vst [vmem:[#allocation2 + $0x13] sm:$0x1] %v207
    %s209 = sld [smem:[#allocation6 + $0x2]]
    %s210 = scalar_lea.vmem [#allocation10], %s209
    %v211 = vld [vmem:[%s210] sm:$0x1]
    %212 = vst [vmem:[#allocation2 + $0x18] sm:$0x1] %v211
    %s213 = sld [smem:[#allocation6 + $0x82]]
    %s214 = scalar_lea.vmem [#allocation10], %s213
    %v215 = vld [vmem:[%s214] sm:$0x1]
    %216 = vst [vmem:[#allocation2 + $0x19] sm:$0x1] %v215
    %s217 = sld [smem:[#allocation6 + $0x102]]
    %s218 = scalar_lea.vmem [#allocation10], %s217
    %v219 = vld [vmem:[%s218] sm:$0x1]
    %220 = vst [vmem:[#allocation2 + $0x1a] sm:$0x1] %v219
    %s221 = sld [smem:[#allocation6 + $0x182]]
    %s222 = scalar_lea.vmem [#allocation10], %s221
    %v223 = vld [vmem:[%s222] sm:$0x1]
    %224 = vst [vmem:[#allocation2 + $0x1b] sm:$0x1] %v223
    %s225 = sld [smem:[#allocation6 + $0x3]]
    %s226 = scalar_lea.vmem [#allocation10], %s225
    %v227 = vld [vmem:[%s226] sm:$0x1]
    %228 = vst [vmem:[#allocation2 + $0x20] sm:$0x1] %v227
    %s229 = sld [smem:[#allocation6 + $0x83]]
    %s230 = scalar_lea.vmem [#allocation10], %s229
    %v231 = vld [vmem:[%s230] sm:$0x1]
    %232 = vst [vmem:[#allocation2 + $0x21] sm:$0x1] %v231
    %s233 = sld [smem:[#allocation6 + $0x103]]
    %s234 = scalar_lea.vmem [#allocation10], %s233
    %v235 = vld [vmem:[%s234] sm:$0x1]
    %236 = vst [vmem:[#allocation2 + $0x22] sm:$0x1] %v235
    %s237 = sld [smem:[#allocation6 + $0x183]]
    %s238 = scalar_lea.vmem [#allocation10], %s237
    %v239 = vld [vmem:[%s238] sm:$0x1]
    %240 = vst [vmem:[#allocation2 + $0x23] sm:$0x1] %v239
    %s241 = sld [smem:[#allocation6 + $0x4]]
    %s242 = scalar_lea.vmem [#allocation10], %s241
    %v243 = vld [vmem:[%s242] sm:$0x1]
    %244 = vst [vmem:[#allocation2 + $0x28] sm:$0x1] %v243
    %s245 = sld [smem:[#allocation6 + $0x84]]
    %s246 = scalar_lea.vmem [#allocation10], %s245
    %v247 = vld [vmem:[%s246] sm:$0x1]
    %248 = vst [vmem:[#allocation2 + $0x29] sm:$0x1] %v247
    %s249 = sld [smem:[#allocation6 + $0x104]]
    %s250 = scalar_lea.vmem [#allocation10], %s249
    %v251 = vld [vmem:[%s250] sm:$0x1]
    %252 = vst [vmem:[#allocation2 + $0x2a] sm:$0x1] %v251
    %s253 = sld [smem:[#allocation6 + $0x184]]
    %s254 = scalar_lea.vmem [#allocation10], %s253
    %v255 = vld [vmem:[%s254] sm:$0x1]
    %256 = vst [vmem:[#allocation2 + $0x2b] sm:$0x1] %v255
    %s257 = sld [smem:[#allocation6 + $0x5]]
    %s258 = scalar_lea.vmem [#allocation10], %s257
    %v259 = vld [vmem:[%s258] sm:$0x1]
    %260 = vst [vmem:[#allocation2 + $0x30] sm:$0x1] %v259
    %s261 = sld [smem:[#allocation6 + $0x85]]
    %s262 = scalar_lea.vmem [#allocation10], %s261
    %v263 = vld [vmem:[%s262] sm:$0x1]
    %264 = vst [vmem:[#allocation2 + $0x31] sm:$0x1] %v263
    %s265 = sld [smem:[#allocation6 + $0x105]]
    %s266 = scalar_lea.vmem [#allocation10], %s265
    %v267 = vld [vmem:[%s266] sm:$0x1]
    %268 = vst [vmem:[#allocation2 + $0x32] sm:$0x1] %v267
    %s269 = sld [smem:[#allocation6 + $0x185]]
    %s270 = scalar_lea.vmem [#allocation10], %s269
    %v271 = vld [vmem:[%s270] sm:$0x1]
    %272 = vst [vmem:[#allocation2 + $0x33] sm:$0x1] %v271
    %s273 = sld [smem:[#allocation6 + $0x6]]
    %s274 = scalar_lea.vmem [#allocation10], %s273
    %v275 = vld [vmem:[%s274] sm:$0x1]
    %276 = vst [vmem:[#allocation2 + $0x38] sm:$0x1] %v275
    %s277 = sld [smem:[#allocation6 + $0x86]]
    %s278 = scalar_lea.vmem [#allocation10], %s277
    %v279 = vld [vmem:[%s278] sm:$0x1]
    %280 = vst [vmem:[#allocation2 + $0x39] sm:$0x1] %v279
    %s281 = sld [smem:[#allocation6 + $0x106]]
    %s282 = scalar_lea.vmem [#allocation10], %s281
    %v283 = vld [vmem:[%s282] sm:$0x1]
    %284 = vst [vmem:[#allocation2 + $0x3a] sm:$0x1] %v283
    %s285 = sld [smem:[#allocation6 + $0x186]]
    %s286 = scalar_lea.vmem [#allocation10], %s285
    %v287 = vld [vmem:[%s286] sm:$0x1]
    %288 = vst [vmem:[#allocation2 + $0x3b] sm:$0x1] %v287
    %v289 = vld [vmem:[#allocation2] sm:$0xff]
    %v290 = vld [vmem:[#allocation2 + $0x8] sm:$0xff]
    %v291 = vld [vmem:[#allocation2 + $0x10] sm:$0xff]
    %v292 = vld [vmem:[#allocation2 + $0x18] sm:$0xff]
    %v293 = vld [vmem:[#allocation2 + $0x20] sm:$0xff]
    %v294 = vld [vmem:[#allocation2 + $0x28] sm:$0xff]
    %v295 = vld [vmem:[#allocation2 + $0x30] sm:$0xff]
    %v296 = vld [vmem:[#allocation2 + $0x38] sm:$0xff]
    %v297 = vpack.c.bf16 %v290, %v289
    %v298 = vpack.c.bf16 %v292, %v291
    %v299 = vpack.c.bf16 %v294, %v293
    %v300 = vpack.c.bf16 %v296, %v295
    %v301 = vld [vmem:[#allocation12] sm:$0xff]
    %v302 = vld [vmem:[#allocation12 + $0x8] sm:$0xff]
    %v303 = vld [vmem:[#allocation12 + $0x10] sm:$0xff]
    %v304 = vld [vmem:[#allocation12 + $0x18] sm:$0xff]
    %v305 = vld [vmem:[#allocation12 + $0x20] sm:$0xff]
    %v306 = vld [vmem:[#allocation12 + $0x28] sm:$0xff]
    %v307 = vld [vmem:[#allocation12 + $0x30] sm:$0xff]
    %v308 = vld [vmem:[#allocation12 + $0x38] sm:$0xff]
    %v309 = vld [vmem:[#allocation12 + $0x40] sm:$0xff]
    %v310 = vld [vmem:[#allocation12 + $0x48] sm:$0xff]
    %v311 = vld [vmem:[#allocation12 + $0x50] sm:$0xff]
    %v312 = vld [vmem:[#allocation12 + $0x58] sm:$0xff]
    %v313 = vld [vmem:[#allocation12 + $0x60] sm:$0xff]
    %v314 = vld [vmem:[#allocation12 + $0x68] sm:$0xff]
    %v315 = vld [vmem:[#allocation12 + $0x70] sm:$0xff]
    %v316 = vld [vmem:[#allocation12 + $0x78] sm:$0xff]
    %v317 = vld [vmem:[#allocation12 + $0x80] sm:$0xff]
    %v318 = vld [vmem:[#allocation12 + $0x88] sm:$0xff]
    %v319 = vld [vmem:[#allocation12 + $0x90] sm:$0xff]
    %v320 = vld [vmem:[#allocation12 + $0x98] sm:$0xff]
    %v321 = vld [vmem:[#allocation12 + $0xa0] sm:$0xff]
    %v322 = vld [vmem:[#allocation12 + $0xa8] sm:$0xff]
    %v323 = vld [vmem:[#allocation12 + $0xb0] sm:$0xff]
    %v324 = vld [vmem:[#allocation12 + $0xb8] sm:$0xff]
    %v325 = vld [vmem:[#allocation12 + $0xc0] sm:$0xff]
    %v326 = vld [vmem:[#allocation12 + $0xc8] sm:$0xff]
    %v327 = vld [vmem:[#allocation12 + $0xd0] sm:$0xff]
    %v328 = vld [vmem:[#allocation12 + $0xd8] sm:$0xff]
    %v329 = vld [vmem:[#allocation12 + $0xe0] sm:$0xff]
    %v330 = vld [vmem:[#allocation12 + $0xe8] sm:$0xff]
    %v331 = vld [vmem:[#allocation12 + $0xf0] sm:$0xff]
    %v332 = vld [vmem:[#allocation12 + $0xf8] sm:$0xff]
    %v333 = vld [vmem:[%s5] sm:$0xf]
    %v335 = vperm.slane %v333, 0
    %v336 = vperm.slane %v333, 1
    %v337 = vperm.slane %v333, 2
    %v338 = vperm.slane %v333, 3
    %v375 = vunpack.c.l.b16 %v301
    %v376 = vunpack.c.h.b16 %v301
    %v377 = vunpack.c.l.b16 %v302
    %v378 = vunpack.c.h.b16 %v302
    %v379 = vunpack.c.l.b16 %v303
    %v380 = vunpack.c.h.b16 %v303
    %v381 = vunpack.c.l.b16 %v304
    %v382 = vunpack.c.h.b16 %v304
    %v383 = vunpack.c.l.b16 %v305
    %v384 = vunpack.c.h.b16 %v305
    %v385 = vunpack.c.l.b16 %v306
    %v386 = vunpack.c.h.b16 %v306
    %v387 = vunpack.c.l.b16 %v307
    %v388 = vunpack.c.h.b16 %v307
    %v389 = vunpack.c.l.b16 %v308
    %v390 = vunpack.c.h.b16 %v308
    %v391 = vunpack.c.l.b16 %v309
    %v392 = vunpack.c.h.b16 %v309
    %v393 = vunpack.c.l.b16 %v310
    %v394 = vunpack.c.h.b16 %v310
    %v395 = vunpack.c.l.b16 %v311
    %v396 = vunpack.c.h.b16 %v311
    %v397 = vunpack.c.l.b16 %v312
    %v398 = vunpack.c.h.b16 %v312
    %v399 = vunpack.c.l.b16 %v313
    %v400 = vunpack.c.h.b16 %v313
    %v401 = vunpack.c.l.b16 %v314
    %v402 = vunpack.c.h.b16 %v314
    %v403 = vunpack.c.l.b16 %v315
    %v404 = vunpack.c.h.b16 %v315
    %v405 = vunpack.c.l.b16 %v316
    %v406 = vunpack.c.h.b16 %v316
    %v407 = vunpack.c.l.b16 %v317
    %v408 = vunpack.c.h.b16 %v317
    %v409 = vunpack.c.l.b16 %v318
    %v410 = vunpack.c.h.b16 %v318
    %v411 = vunpack.c.l.b16 %v319
    %v412 = vunpack.c.h.b16 %v319
    %v413 = vunpack.c.l.b16 %v320
    %v414 = vunpack.c.h.b16 %v320
    %v415 = vunpack.c.l.b16 %v321
    %v416 = vunpack.c.h.b16 %v321
    %v417 = vunpack.c.l.b16 %v322
    %v418 = vunpack.c.h.b16 %v322
    %v419 = vunpack.c.l.b16 %v323
    %v420 = vunpack.c.h.b16 %v323
    %v421 = vunpack.c.l.b16 %v324
    %v422 = vunpack.c.h.b16 %v324
    %v423 = vunpack.c.l.b16 %v325
    %v424 = vunpack.c.h.b16 %v325
    %v425 = vunpack.c.l.b16 %v326
    %v426 = vunpack.c.h.b16 %v326
    %v427 = vunpack.c.l.b16 %v327
    %v428 = vunpack.c.h.b16 %v327
    %v429 = vunpack.c.l.b16 %v328
    %v430 = vunpack.c.h.b16 %v328
    %v431 = vunpack.c.l.b16 %v329
    %v432 = vunpack.c.h.b16 %v329
    %v433 = vunpack.c.l.b16 %v330
    %v434 = vunpack.c.h.b16 %v330
    %v435 = vunpack.c.l.b16 %v331
    %v436 = vunpack.c.h.b16 %v331
    %v437 = vunpack.c.l.b16 %v332
    %v438 = vunpack.c.h.b16 %v332
    %v439 = vpack.c.b16 %v379, %v375
    %v440 = vpack.c.b16 %v380, %v376
    %v441 = vpack.c.b16 %v381, %v377
    %v442 = vpack.c.b16 %v382, %v378
    %v443 = vpack.c.b16 %v387, %v383
    %v444 = vpack.c.b16 %v388, %v384
    %v445 = vpack.c.b16 %v389, %v385
    %v446 = vpack.c.b16 %v390, %v386
    %v447 = vpack.c.b16 %v395, %v391
    %v448 = vpack.c.b16 %v396, %v392
    %v449 = vpack.c.b16 %v397, %v393
    %v450 = vpack.c.b16 %v398, %v394
    %v451 = vpack.c.b16 %v403, %v399
    %v452 = vpack.c.b16 %v404, %v400
    %v453 = vpack.c.b16 %v405, %v401
    %v454 = vpack.c.b16 %v406, %v402
    %v455 = vpack.c.b16 %v411, %v407
    %v456 = vpack.c.b16 %v412, %v408
    %v457 = vpack.c.b16 %v413, %v409
    %v458 = vpack.c.b16 %v414, %v410
    %v459 = vpack.c.b16 %v419, %v415
    %v460 = vpack.c.b16 %v420, %v416
    %v461 = vpack.c.b16 %v421, %v417
    %v462 = vpack.c.b16 %v422, %v418
    %v463 = vpack.c.b16 %v427, %v423
    %v464 = vpack.c.b16 %v428, %v424
    %v465 = vpack.c.b16 %v429, %v425
    %v466 = vpack.c.b16 %v430, %v426
    %v467 = vpack.c.b16 %v435, %v431
    %v468 = vpack.c.b16 %v436, %v432
    %v469 = vpack.c.b16 %v437, %v433
    %v470 = vpack.c.b16 %v438, %v434
    %503 = vmatpush.bf16.msra.mxu0 %v467
    %504 = vmatpush.bf16.msra.mxu0 %v463
    %505 = vmatpush.bf16.msra.mxu0 %v459
    %506 = vmatpush.bf16.msra.mxu0 %v455
    %507 = vmatpush.bf16.msra.mxu0 %v451
    %508 = vmatpush.bf16.msra.mxu0 %v447
    %509 = vmatpush.bf16.msra.mxu0 %v443
    %510 = vmatpush.bf16.msra.mxu0 %v439
    %511 = vmatmul.bf16.gmra.mxu0 %v297
    %v512 = vpop.f32.mrf.mxu0
    %v513 = vadd.f32 %v335, %v512
    %v514 = vpop.f32.mrf.mxu0
    %v515 = vadd.f32 %v335, %v514
    %516 = vmatmul.bf16.gmra.mxu0 %v298
    %v517 = vpop.f32.mrf.mxu0
    %v518 = vadd.f32 %v335, %v517
    %v519 = vpop.f32.mrf.mxu0
    %v520 = vadd.f32 %v335, %v519
    %521 = vmatmul.bf16.gmra.mxu0 %v299
    %v522 = vpop.f32.mrf.mxu0
    %v523 = vadd.f32 %v335, %v522
    %v524 = vpop.f32.mrf.mxu0
    %v525 = vadd.f32 %v335, %v524
    %526 = vmatmul.bf16.gmra.mxu0 %v300
    %v527 = vpop.f32.mrf.mxu0
    %v528 = vadd.f32 %v335, %v527
    %v529 = vpop.f32.mrf.mxu0
    %v530 = vadd.f32 %v335, %v529
    %531 = vdwg.mxu0
    %532 = vmatpush.bf16.msra.mxu0 %v468
    %533 = vmatpush.bf16.msra.mxu0 %v464
    %534 = vmatpush.bf16.msra.mxu0 %v460
    %535 = vmatpush.bf16.msra.mxu0 %v456
    %536 = vmatpush.bf16.msra.mxu0 %v452
    %537 = vmatpush.bf16.msra.mxu0 %v448
    %538 = vmatpush.bf16.msra.mxu0 %v444
    %539 = vmatpush.bf16.msra.mxu0 %v440
    %540 = vmatmul.bf16.gmra.mxu0 %v297
    %v541 = vpop.f32.mrf.mxu0
    %v542 = vadd.f32 %v336, %v541
    %v543 = vpop.f32.mrf.mxu0
    %v544 = vadd.f32 %v336, %v543
    %545 = vmatmul.bf16.gmra.mxu0 %v298
    %v546 = vpop.f32.mrf.mxu0
    %v547 = vadd.f32 %v336, %v546
    %v548 = vpop.f32.mrf.mxu0
    %v549 = vadd.f32 %v336, %v548
    %550 = vmatmul.bf16.gmra.mxu0 %v299
    %v551 = vpop.f32.mrf.mxu0
    %v552 = vadd.f32 %v336, %v551
    %v553 = vpop.f32.mrf.mxu0
    %v554 = vadd.f32 %v336, %v553
    %555 = vmatmul.bf16.gmra.mxu0 %v300
    %v556 = vpop.f32.mrf.mxu0
    %v557 = vadd.f32 %v336, %v556
    %v558 = vpop.f32.mrf.mxu0
    %v559 = vadd.f32 %v336, %v558
    %560 = vdwg.mxu0
    %561 = vmatpush.bf16.msra.mxu0 %v469
    %562 = vmatpush.bf16.msra.mxu0 %v465
    %563 = vmatpush.bf16.msra.mxu0 %v461
    %564 = vmatpush.bf16.msra.mxu0 %v457
    %565 = vmatpush.bf16.msra.mxu0 %v453
    %566 = vmatpush.bf16.msra.mxu0 %v449
    %567 = vmatpush.bf16.msra.mxu0 %v445
    %568 = vmatpush.bf16.msra.mxu0 %v441
    %569 = vmatmul.bf16.gmra.mxu0 %v297
    %v570 = vpop.f32.mrf.mxu0
    %v571 = vadd.f32 %v337, %v570
    %v572 = vpop.f32.mrf.mxu0
    %v573 = vadd.f32 %v337, %v572
    %574 = vmatmul.bf16.gmra.mxu0 %v298
    %v575 = vpop.f32.mrf.mxu0
    %v576 = vadd.f32 %v337, %v575
    %v577 = vpop.f32.mrf.mxu0
    %v578 = vadd.f32 %v337, %v577
    %579 = vmatmul.bf16.gmra.mxu0 %v299
    %v580 = vpop.f32.mrf.mxu0
    %v581 = vadd.f32 %v337, %v580
    %v582 = vpop.f32.mrf.mxu0
    %v583 = vadd.f32 %v337, %v582
    %584 = vmatmul.bf16.gmra.mxu0 %v300
    %v585 = vpop.f32.mrf.mxu0
    %v586 = vadd.f32 %v337, %v585
    %v587 = vpop.f32.mrf.mxu0
    %v588 = vadd.f32 %v337, %v587
    %589 = vdwg.mxu0
    %590 = vmatpush.bf16.msra.mxu0 %v470
    %591 = vmatpush.bf16.msra.mxu0 %v466
    %592 = vmatpush.bf16.msra.mxu0 %v462
    %593 = vmatpush.bf16.msra.mxu0 %v458
    %594 = vmatpush.bf16.msra.mxu0 %v454
    %595 = vmatpush.bf16.msra.mxu0 %v450
    %596 = vmatpush.bf16.msra.mxu0 %v446
    %597 = vmatpush.bf16.msra.mxu0 %v442
    %598 = vmatmul.bf16.gmra.mxu0 %v297
    %v599 = vpop.f32.mrf.mxu0
    %v600 = vadd.f32 %v338, %v599
    %v601 = vpop.f32.mrf.mxu0
    %v602 = vadd.f32 %v338, %v601
    %603 = vmatmul.bf16.gmra.mxu0 %v298
    %v604 = vpop.f32.mrf.mxu0
    %v605 = vadd.f32 %v338, %v604
    %v606 = vpop.f32.mrf.mxu0
    %v607 = vadd.f32 %v338, %v606
    %608 = vmatmul.bf16.gmra.mxu0 %v299
    %v609 = vpop.f32.mrf.mxu0
    %v610 = vadd.f32 %v338, %v609
    %v611 = vpop.f32.mrf.mxu0
    %v612 = vadd.f32 %v338, %v611
    %613 = vmatmul.bf16.gmra.mxu0 %v300
    %v614 = vpop.f32.mrf.mxu0
    %v615 = vadd.f32 %v338, %v614
    %v616 = vpop.f32.mrf.mxu0
    %v617 = vadd.f32 %v338, %v616
    %618 = vdwg.mxu0
    %619 = vst [vmem:[#allocation4] sm:$0xff] %v513
    %620 = vst [vmem:[#allocation4 + $0x8] sm:$0xff] %v542
    %621 = vst [vmem:[#allocation4 + $0x10] sm:$0xff] %v571
    %622 = vst [vmem:[#allocation4 + $0x18] sm:$0xff] %v600
    %623 = vst [vmem:[#allocation4 + $0x20] sm:$0xff] %v515
    %624 = vst [vmem:[#allocation4 + $0x28] sm:$0xff] %v544
    %625 = vst [vmem:[#allocation4 + $0x30] sm:$0xff] %v573
    %626 = vst [vmem:[#allocation4 + $0x38] sm:$0xff] %v602
    %627 = vst [vmem:[#allocation4 + $0x40] sm:$0xff] %v518
    %628 = vst [vmem:[#allocation4 + $0x48] sm:$0xff] %v547
    %629 = vst [vmem:[#allocation4 + $0x50] sm:$0xff] %v576
    %630 = vst [vmem:[#allocation4 + $0x58] sm:$0xff] %v605
    %631 = vst [vmem:[#allocation4 + $0x60] sm:$0xff] %v520
    %632 = vst [vmem:[#allocation4 + $0x68] sm:$0xff] %v549
    %633 = vst [vmem:[#allocation4 + $0x70] sm:$0xff] %v578
    %634 = vst [vmem:[#allocation4 + $0x78] sm:$0xff] %v607
    %635 = vst [vmem:[#allocation4 + $0x80] sm:$0xff] %v523
    %636 = vst [vmem:[#allocation4 + $0x88] sm:$0xff] %v552
    %637 = vst [vmem:[#allocation4 + $0x90] sm:$0xff] %v581
    %638 = vst [vmem:[#allocation4 + $0x98] sm:$0xff] %v610
    %639 = vst [vmem:[#allocation4 + $0xa0] sm:$0xff] %v525
    %640 = vst [vmem:[#allocation4 + $0xa8] sm:$0xff] %v554
    %641 = vst [vmem:[#allocation4 + $0xb0] sm:$0xff] %v583
    %642 = vst [vmem:[#allocation4 + $0xb8] sm:$0xff] %v612
    %643 = vst [vmem:[#allocation4 + $0xc0] sm:$0xff] %v528
    %644 = vst [vmem:[#allocation4 + $0xc8] sm:$0xff] %v557
    %645 = vst [vmem:[#allocation4 + $0xd0] sm:$0xff] %v586
    %646 = vst [vmem:[#allocation4 + $0xd8] sm:$0xff] %v615
    %647 = vst [vmem:[#allocation4 + $0xe0] sm:$0xff] %v530
    %648 = vst [vmem:[#allocation4 + $0xe8] sm:$0xff] %v559
    %649 = vst [vmem:[#allocation4 + $0xf0] sm:$0xff] %v588
    %650 = vst [vmem:[#allocation4 + $0xf8] sm:$0xff] %v617
    %v651 = vld [vmem:[#allocation4] sm:$0xff]
    %v652 = vld [vmem:[#allocation4 + $0x8] sm:$0xff]
    %v653 = vld [vmem:[#allocation4 + $0x10] sm:$0xff]
    %v654 = vld [vmem:[#allocation4 + $0x18] sm:$0xff]
    %v655 = vld [vmem:[#allocation13] sm:$0xff]
    %v656 = vld [vmem:[#allocation13 + $0x8] sm:$0xff]
    %v657 = vld [vmem:[#allocation13 + $0x10] sm:$0xff]
    %v658 = vld [vmem:[#allocation13 + $0x18] sm:$0xff]
    %v659 = vld [vmem:[#allocation13 + $0x20] sm:$0xff]
    %v660 = vld [vmem:[#allocation13 + $0x28] sm:$0xff]
    %v661 = vld [vmem:[#allocation13 + $0x30] sm:$0xff]
    %v662 = vld [vmem:[#allocation13 + $0x38] sm:$0xff]
    %v663 = vld [vmem:[#allocation13 + $0x40] sm:$0xff]
    %v664 = vld [vmem:[#allocation13 + $0x48] sm:$0xff]
    %v665 = vld [vmem:[#allocation13 + $0x50] sm:$0xff]
    %v666 = vld [vmem:[#allocation13 + $0x58] sm:$0xff]
    %v667 = vld [vmem:[#allocation13 + $0x60] sm:$0xff]
    %v668 = vld [vmem:[#allocation13 + $0x68] sm:$0xff]
    %v669 = vld [vmem:[#allocation13 + $0x70] sm:$0xff]
    %v670 = vld [vmem:[#allocation13 + $0x78] sm:$0xff]
    %v671 = vld [vmem:[#allocation13 + $0x80] sm:$0xff]
    %v672 = vld [vmem:[#allocation13 + $0x88] sm:$0xff]
    %v673 = vld [vmem:[#allocation13 + $0x90] sm:$0xff]
    %v674 = vld [vmem:[#allocation13 + $0x98] sm:$0xff]
    %v675 = vld [vmem:[#allocation13 + $0xa0] sm:$0xff]
    %v676 = vld [vmem:[#allocation13 + $0xa8] sm:$0xff]
    %v677 = vld [vmem:[#allocation13 + $0xb0] sm:$0xff]
    %v678 = vld [vmem:[#allocation13 + $0xb8] sm:$0xff]
    %v679 = vld [vmem:[#allocation13 + $0xc0] sm:$0xff]
    %v680 = vld [vmem:[#allocation13 + $0xc8] sm:$0xff]
    %v681 = vld [vmem:[#allocation13 + $0xd0] sm:$0xff]
    %v682 = vld [vmem:[#allocation13 + $0xd8] sm:$0xff]
    %v683 = vld [vmem:[#allocation13 + $0xe0] sm:$0xff]
    %v684 = vld [vmem:[#allocation13 + $0xe8] sm:$0xff]
    %v685 = vld [vmem:[#allocation13 + $0xf0] sm:$0xff]
    %v686 = vld [vmem:[#allocation13 + $0xf8] sm:$0xff]
    %v719 = vunpack.c.l.b16 %v655
    %v720 = vunpack.c.h.b16 %v655
    %v721 = vunpack.c.l.b16 %v656
    %v722 = vunpack.c.h.b16 %v656
    %v723 = vunpack.c.l.b16 %v657
    %v724 = vunpack.c.h.b16 %v657
    %v725 = vunpack.c.l.b16 %v658
    %v726 = vunpack.c.h.b16 %v658
    %v727 = vunpack.c.l.b16 %v659
    %v728 = vunpack.c.h.b16 %v659
    %v729 = vunpack.c.l.b16 %v660
    %v730 = vunpack.c.h.b16 %v660
    %v731 = vunpack.c.l.b16 %v661
    %v732 = vunpack.c.h.b16 %v661
    %v733 = vunpack.c.l.b16 %v662
    %v734 = vunpack.c.h.b16 %v662
    %v735 = vunpack.c.l.b16 %v663
    %v736 = vunpack.c.h.b16 %v663
    %v737 = vunpack.c.l.b16 %v664
    %v738 = vunpack.c.h.b16 %v664
    %v739 = vunpack.c.l.b16 %v665
    %v740 = vunpack.c.h.b16 %v665
    %v741 = vunpack.c.l.b16 %v666
    %v742 = vunpack.c.h.b16 %v666
    %v743 = vunpack.c.l.b16 %v667
    %v744 = vunpack.c.h.b16 %v667
    %v745 = vunpack.c.l.b16 %v668
    %v746 = vunpack.c.h.b16 %v668
    %v747 = vunpack.c.l.b16 %v669
    %v748 = vunpack.c.h.b16 %v669
    %v749 = vunpack.c.l.b16 %v670
    %v750 = vunpack.c.h.b16 %v670
    %v751 = vunpack.c.l.b16 %v671
    %v752 = vunpack.c.h.b16 %v671
    %v753 = vunpack.c.l.b16 %v672
    %v754 = vunpack.c.h.b16 %v672
    %v755 = vunpack.c.l.b16 %v673
    %v756 = vunpack.c.h.b16 %v673
    %v757 = vunpack.c.l.b16 %v674
    %v758 = vunpack.c.h.b16 %v674
    %v759 = vunpack.c.l.b16 %v675
    %v760 = vunpack.c.h.b16 %v675
    %v761 = vunpack.c.l.b16 %v676
    %v762 = vunpack.c.h.b16 %v676
    %v763 = vunpack.c.l.b16 %v677
    %v764 = vunpack.c.h.b16 %v677
    %v765 = vunpack.c.l.b16 %v678
    %v766 = vunpack.c.h.b16 %v678
    %v767 = vunpack.c.l.b16 %v679
    %v768 = vunpack.c.h.b16 %v679
    %v769 = vunpack.c.l.b16 %v680
    %v770 = vunpack.c.h.b16 %v680
    %v771 = vunpack.c.l.b16 %v681
    %v772 = vunpack.c.h.b16 %v681
    %v773 = vunpack.c.l.b16 %v682
    %v774 = vunpack.c.h.b16 %v682
    %v775 = vunpack.c.l.b16 %v683
    %v776 = vunpack.c.h.b16 %v683
    %v777 = vunpack.c.l.b16 %v684
    %v778 = vunpack.c.h.b16 %v684
    %v779 = vunpack.c.l.b16 %v685
    %v780 = vunpack.c.h.b16 %v685
    %v781 = vunpack.c.l.b16 %v686
    %v782 = vunpack.c.h.b16 %v686
    %v783 = vpack.c.b16 %v723, %v719
    %v784 = vpack.c.b16 %v724, %v720
    %v785 = vpack.c.b16 %v725, %v721
    %v786 = vpack.c.b16 %v726, %v722
    %v787 = vpack.c.b16 %v731, %v727
    %v788 = vpack.c.b16 %v732, %v728
    %v789 = vpack.c.b16 %v733, %v729
    %v790 = vpack.c.b16 %v734, %v730
    %v791 = vpack.c.b16 %v739, %v735
    %v792 = vpack.c.b16 %v740, %v736
    %v793 = vpack.c.b16 %v741, %v737
    %v794 = vpack.c.b16 %v742, %v738
    %v795 = vpack.c.b16 %v747, %v743
    %v796 = vpack.c.b16 %v748, %v744
    %v797 = vpack.c.b16 %v749, %v745
    %v798 = vpack.c.b16 %v750, %v746
    %v799 = vpack.c.b16 %v755, %v751
    %v800 = vpack.c.b16 %v756, %v752
    %v801 = vpack.c.b16 %v757, %v753
    %v802 = vpack.c.b16 %v758, %v754
    %v803 = vpack.c.b16 %v763, %v759
    %v804 = vpack.c.b16 %v764, %v760
    %v805 = vpack.c.b16 %v765, %v761
    %v806 = vpack.c.b16 %v766, %v762
    %v807 = vpack.c.b16 %v771, %v767
    %v808 = vpack.c.b16 %v772, %v768
    %v809 = vpack.c.b16 %v773, %v769
    %v810 = vpack.c.b16 %v774, %v770
    %v811 = vpack.c.b16 %v779, %v775
    %v812 = vpack.c.b16 %v780, %v776
    %v813 = vpack.c.b16 %v781, %v777
    %v814 = vpack.c.b16 %v782, %v778
    %847 = vmatpush.bf16.msra.mxu0 %v811
    %848 = vmatpush.bf16.msra.mxu0 %v807
    %849 = vmatpush.bf16.msra.mxu0 %v803
    %850 = vmatpush.bf16.msra.mxu0 %v799
    %851 = vmatpush.bf16.msra.mxu0 %v795
    %852 = vmatpush.bf16.msra.mxu0 %v791
    %853 = vmatpush.bf16.msra.mxu0 %v787
    %854 = vmatpush.bf16.msra.mxu0 %v783
    %855 = vmatmul.bf16.gmra.mxu0 0
    %v856 = vpop.f32.mrf.mxu0
    %v857 = vadd.f32 0.0, %v856
    %v858 = vpop.f32.mrf.mxu0
    %859 = vdwg.mxu0
    %860 = vmatpush.bf16.msra.mxu0 %v812
    %861 = vmatpush.bf16.msra.mxu0 %v808
    %862 = vmatpush.bf16.msra.mxu0 %v804
    %863 = vmatpush.bf16.msra.mxu0 %v800
    %864 = vmatpush.bf16.msra.mxu0 %v796
    %865 = vmatpush.bf16.msra.mxu0 %v792
    %866 = vmatpush.bf16.msra.mxu0 %v788
    %867 = vmatpush.bf16.msra.mxu0 %v784
    %868 = vmatmul.bf16.gmra.mxu0 0
    %v869 = vpop.f32.mrf.mxu0
    %v870 = vadd.f32 0.0, %v869
    %v871 = vpop.f32.mrf.mxu0
    %872 = vdwg.mxu0
    %873 = vmatpush.bf16.msra.mxu0 %v813
    %874 = vmatpush.bf16.msra.mxu0 %v809
    %875 = vmatpush.bf16.msra.mxu0 %v805
    %876 = vmatpush.bf16.msra.mxu0 %v801
    %877 = vmatpush.bf16.msra.mxu0 %v797
    %878 = vmatpush.bf16.msra.mxu0 %v793
    %879 = vmatpush.bf16.msra.mxu0 %v789
    %880 = vmatpush.bf16.msra.mxu0 %v785
    %881 = vmatmul.bf16.gmra.mxu0 0
    %v882 = vpop.f32.mrf.mxu0
    %v883 = vadd.f32 0.0, %v882
    %v884 = vpop.f32.mrf.mxu0
    %885 = vdwg.mxu0
    %886 = vmatpush.bf16.msra.mxu0 %v814
    %887 = vmatpush.bf16.msra.mxu0 %v810
    %888 = vmatpush.bf16.msra.mxu0 %v806
    %889 = vmatpush.bf16.msra.mxu0 %v802
    %890 = vmatpush.bf16.msra.mxu0 %v798
    %891 = vmatpush.bf16.msra.mxu0 %v794
    %892 = vmatpush.bf16.msra.mxu0 %v790
    %893 = vmatpush.bf16.msra.mxu0 %v786
    %894 = vmatmul.bf16.gmra.mxu0 0
    %v895 = vpop.f32.mrf.mxu0
    %v896 = vadd.f32 0.0, %v895
    %v897 = vpop.f32.mrf.mxu0
    %898 = vdwg.mxu0
    %v899 = vadd.f32 %v651, %v857
    %v900 = vadd.f32 %v652, %v870
    %v901 = vadd.f32 %v653, %v883
    %v902 = vadd.f32 %v654, %v896
    %v903 = vxor.u32 %v899, 2147483648
    %v904 = vmul.f32 %v903, 1.442695
    %v905 = vpow.pop %v904
    %v906 = vadd.f32 %v905, 1.0
    %v907 = vrcp.pop %v906
    %v908 = vmul.f32 %v906, %v907
    %v909 = vsub.f32 1.0, %v908
    %v910 = vmul.f32 %v907, %v909
    %v911 = vadd.f32 %v907, %v910
    %vm912 = vweird.f32 %v906
    %vm913 = vweird.f32 %v907
    %vm914 = vmor %vm912, %vm913
    %v915 = vsel %vm914, %v907, %v911
    %v916 = vand.u32 2147483647, %v906
    %vm917 = vcmp.eq.f32.partialorder %v916, 8.507059e+37
    %v918 = vand.u32 %v906, 2147483648
    %v919 = vor.u32 1.1754944e-38, %v918
    %v920 = vsel %vm917, %v919, %v915
    %v921 = vmul.f32 1.0, %v920
    %v922 = vxor.u32 %v900, 2147483648
    %v923 = vmul.f32 %v922, 1.442695
    %v924 = vpow.pop %v923
    %v925 = vadd.f32 %v924, 1.0
    %v926 = vrcp.pop %v925
    %v927 = vmul.f32 %v925, %v926
    %v928 = vsub.f32 1.0, %v927
    %v929 = vmul.f32 %v926, %v928
    %v930 = vadd.f32 %v926, %v929
    %vm931 = vweird.f32 %v925
    %vm932 = vweird.f32 %v926
    %vm933 = vmor %vm931, %vm932
    %v934 = vsel %vm933, %v926, %v930
    %v935 = vand.u32 2147483647, %v925
    %vm936 = vcmp.eq.f32.partialorder %v935, 8.507059e+37
    %v937 = vand.u32 %v925, 2147483648
    %v938 = vor.u32 1.1754944e-38, %v937
    %v939 = vsel %vm936, %v938, %v934
    %v940 = vmul.f32 1.0, %v939
    %v941 = vtanh.pop %v901
    %v942 = vxor.u32 %v902, 2147483648
    %v943 = vmul.f32 %v942, 1.442695
    %v944 = vpow.pop %v943
    %v945 = vadd.f32 %v944, 1.0
    %v946 = vrcp.pop %v945
    %v947 = vmul.f32 %v945, %v946
    %v948 = vsub.f32 1.0, %v947
    %v949 = vmul.f32 %v946, %v948
    %v950 = vadd.f32 %v946, %v949
    %vm951 = vweird.f32 %v945
    %vm952 = vweird.f32 %v946
    %vm953 = vmor %vm951, %vm952
    %v954 = vsel %vm953, %v946, %v950
    %v955 = vand.u32 2147483647, %v945
    %vm956 = vcmp.eq.f32.partialorder %v955, 8.507059e+37
    %v957 = vand.u32 %v945, 2147483648
    %v958 = vor.u32 1.1754944e-38, %v957
    %v959 = vsel %vm956, %v958, %v954
    %v960 = vmul.f32 1.0, %v959
    %v961 = vmul.f32 %v940, 0.0
    %v962 = vmul.f32 %v921, %v941
    %v963 = vadd.f32 %v961, %v962
    %v964 = vtanh.pop %v963
    %v965 = vmul.f32 %v960, %v964
    %966 = vst [vmem:[#allocation3] sm:$0xff] %v965
    %v967 = vld [vmem:[#allocation4 + $0x20] sm:$0xff]
    %v968 = vld [vmem:[#allocation4 + $0x28] sm:$0xff]
    %v969 = vld [vmem:[#allocation4 + $0x30] sm:$0xff]
    %v970 = vld [vmem:[#allocation4 + $0x38] sm:$0xff]
    %v971 = vpack.c.bf16 %v965, %v965
    %v972 = vld [vmem:[#allocation13] sm:$0xff]
    %v973 = vld [vmem:[#allocation13 + $0x8] sm:$0xff]
    %v974 = vld [vmem:[#allocation13 + $0x10] sm:$0xff]
    %v975 = vld [vmem:[#allocation13 + $0x18] sm:$0xff]
    %v976 = vld [vmem:[#allocation13 + $0x20] sm:$0xff]
    %v977 = vld [vmem:[#allocation13 + $0x28] sm:$0xff]
    %v978 = vld [vmem:[#allocation13 + $0x30] sm:$0xff]
    %v979 = vld [vmem:[#allocation13 + $0x38] sm:$0xff]
    %v980 = vld [vmem:[#allocation13 + $0x40] sm:$0xff]
    %v981 = vld [vmem:[#allocation13 + $0x48] sm:$0xff]
    %v982 = vld [vmem:[#allocation13 + $0x50] sm:$0xff]
    %v983 = vld [vmem:[#allocation13 + $0x58] sm:$0xff]
    %v984 = vld [vmem:[#allocation13 + $0x60] sm:$0xff]
    %v985 = vld [vmem:[#allocation13 + $0x68] sm:$0xff]
    %v986 = vld [vmem:[#allocation13 + $0x70] sm:$0xff]
    %v987 = vld [vmem:[#allocation13 + $0x78] sm:$0xff]
    %v988 = vld [vmem:[#allocation13 + $0x80] sm:$0xff]
    %v989 = vld [vmem:[#allocation13 + $0x88] sm:$0xff]
    %v990 = vld [vmem:[#allocation13 + $0x90] sm:$0xff]
    %v991 = vld [vmem:[#allocation13 + $0x98] sm:$0xff]
    %v992 = vld [vmem:[#allocation13 + $0xa0] sm:$0xff]
    %v993 = vld [vmem:[#allocation13 + $0xa8] sm:$0xff]
    %v994 = vld [vmem:[#allocation13 + $0xb0] sm:$0xff]
    %v995 = vld [vmem:[#allocation13 + $0xb8] sm:$0xff]
    %v996 = vld [vmem:[#allocation13 + $0xc0] sm:$0xff]
    %v997 = vld [vmem:[#allocation13 + $0xc8] sm:$0xff]
    %v998 = vld [vmem:[#allocation13 + $0xd0] sm:$0xff]
    %v999 = vld [vmem:[#allocation13 + $0xd8] sm:$0xff]
    %v1000 = vld [vmem:[#allocation13 + $0xe0] sm:$0xff]
    %v1001 = vld [vmem:[#allocation13 + $0xe8] sm:$0xff]
    %v1002 = vld [vmem:[#allocation13 + $0xf0] sm:$0xff]
    %v1003 = vld [vmem:[#allocation13 + $0xf8] sm:$0xff]
    %v1036 = vunpack.c.l.b16 %v972
    %v1037 = vunpack.c.h.b16 %v972
    %v1038 = vunpack.c.l.b16 %v973
    %v1039 = vunpack.c.h.b16 %v973
    %v1040 = vunpack.c.l.b16 %v974
    %v1041 = vunpack.c.h.b16 %v974
    %v1042 = vunpack.c.l.b16 %v975
    %v1043 = vunpack.c.h.b16 %v975
    %v1044 = vunpack.c.l.b16 %v976
    %v1045 = vunpack.c.h.b16 %v976
    %v1046 = vunpack.c.l.b16 %v977
    %v1047 = vunpack.c.h.b16 %v977
    %v1048 = vunpack.c.l.b16 %v978
    %v1049 = vunpack.c.h.b16 %v978
    %v1050 = vunpack.c.l.b16 %v979
    %v1051 = vunpack.c.h.b16 %v979
    %v1052 = vunpack.c.l.b16 %v980
    %v1053 = vunpack.c.h.b16 %v980
    %v1054 = vunpack.c.l.b16 %v981
    %v1055 = vunpack.c.h.b16 %v981
    %v1056 = vunpack.c.l.b16 %v982
    %v1057 = vunpack.c.h.b16 %v982
    %v1058 = vunpack.c.l.b16 %v983
    %v1059 = vunpack.c.h.b16 %v983
    %v1060 = vunpack.c.l.b16 %v984
    %v1061 = vunpack.c.h.b16 %v984
    %v1062 = vunpack.c.l.b16 %v985
    %v1063 = vunpack.c.h.b16 %v985
    %v1064 = vunpack.c.l.b16 %v986
    %v1065 = vunpack.c.h.b16 %v986
    %v1066 = vunpack.c.l.b16 %v987
    %v1067 = vunpack.c.h.b16 %v987
    %v1068 = vunpack.c.l.b16 %v988
    %v1069 = vunpack.c.h.b16 %v988
    %v1070 = vunpack.c.l.b16 %v989
    %v1071 = vunpack.c.h.b16 %v989
    %v1072 = vunpack.c.l.b16 %v990
    %v1073 = vunpack.c.h.b16 %v990
    %v1074 = vunpack.c.l.b16 %v991
    %v1075 = vunpack.c.h.b16 %v991
    %v1076 = vunpack.c.l.b16 %v992
    %v1077 = vunpack.c.h.b16 %v992
    %v1078 = vunpack.c.l.b16 %v993
    %v1079 = vunpack.c.h.b16 %v993
    %v1080 = vunpack.c.l.b16 %v994
    %v1081 = vunpack.c.h.b16 %v994
    %v1082 = vunpack.c.l.b16 %v995
    %v1083 = vunpack.c.h.b16 %v995
    %v1084 = vunpack.c.l.b16 %v996
    %v1085 = vunpack.c.h.b16 %v996
    %v1086 = vunpack.c.l.b16 %v997
    %v1087 = vunpack.c.h.b16 %v997
    %v1088 = vunpack.c.l.b16 %v998
    %v1089 = vunpack.c.h.b16 %v998
    %v1090 = vunpack.c.l.b16 %v999
    %v1091 = vunpack.c.h.b16 %v999
    %v1092 = vunpack.c.l.b16 %v1000
    %v1093 = vunpack.c.h.b16 %v1000
    %v1094 = vunpack.c.l.b16 %v1001
    %v1095 = vunpack.c.h.b16 %v1001
    %v1096 = vunpack.c.l.b16 %v1002
    %v1097 = vunpack.c.h.b16 %v1002
    %v1098 = vunpack.c.l.b16 %v1003
    %v1099 = vunpack.c.h.b16 %v1003
    %v1100 = vpack.c.b16 %v1040, %v1036
    %v1101 = vpack.c.b16 %v1041, %v1037
    %v1102 = vpack.c.b16 %v1042, %v1038
    %v1103 = vpack.c.b16 %v1043, %v1039
    %v1104 = vpack.c.b16 %v1048, %v1044
    %v1105 = vpack.c.b16 %v1049, %v1045
    %v1106 = vpack.c.b16 %v1050, %v1046
    %v1107 = vpack.c.b16 %v1051, %v1047
    %v1108 = vpack.c.b16 %v1056, %v1052
    %v1109 = vpack.c.b16 %v1057, %v1053
    %v1110 = vpack.c.b16 %v1058, %v1054
    %v1111 = vpack.c.b16 %v1059, %v1055
    %v1112 = vpack.c.b16 %v1064, %v1060
    %v1113 = vpack.c.b16 %v1065, %v1061
    %v1114 = vpack.c.b16 %v1066, %v1062
    %v1115 = vpack.c.b16 %v1067, %v1063
    %v1116 = vpack.c.b16 %v1072, %v1068
    %v1117 = vpack.c.b16 %v1073, %v1069
    %v1118 = vpack.c.b16 %v1074, %v1070
    %v1119 = vpack.c.b16 %v1075, %v1071
    %v1120 = vpack.c.b16 %v1080, %v1076
    %v1121 = vpack.c.b16 %v1081, %v1077
    %v1122 = vpack.c.b16 %v1082, %v1078
    %v1123 = vpack.c.b16 %v1083, %v1079
    %v1124 = vpack.c.b16 %v1088, %v1084
    %v1125 = vpack.c.b16 %v1089, %v1085
    %v1126 = vpack.c.b16 %v1090, %v1086
    %v1127 = vpack.c.b16 %v1091, %v1087
    %v1128 = vpack.c.b16 %v1096, %v1092
    %v1129 = vpack.c.b16 %v1097, %v1093
    %v1130 = vpack.c.b16 %v1098, %v1094
    %v1131 = vpack.c.b16 %v1099, %v1095
    %1164 = vmatpush.bf16.msra.mxu0 %v1128
    %1165 = vmatpush.bf16.msra.mxu0 %v1124
    %1166 = vmatpush.bf16.msra.mxu0 %v1120
    %1167 = vmatpush.bf16.msra.mxu0 %v1116
    %1168 = vmatpush.bf16.msra.mxu0 %v1112
    %1169 = vmatpush.bf16.msra.mxu0 %v1108
    %1170 = vmatpush.bf16.msra.mxu0 %v1104
    %1171 = vmatpush.bf16.msra.mxu0 %v1100
    %1172 = vmatmul.bf16.gmra.mxu0 %v971
    %v1173 = vpop.f32.mrf.mxu0
    %v1174 = vadd.f32 0.0, %v1173
    %v1175 = vpop.f32.mrf.mxu0
    %1176 = vdwg.mxu0
    %1177 = vmatpush.bf16.msra.mxu0 %v1129
    %1178 = vmatpush.bf16.msra.mxu0 %v1125
    %1179 = vmatpush.bf16.msra.mxu0 %v1121
    %1180 = vmatpush.bf16.msra.mxu0 %v1117
    %1181 = vmatpush.bf16.msra.mxu0 %v1113
    %1182 = vmatpush.bf16.msra.mxu0 %v1109
    %1183 = vmatpush.bf16.msra.mxu0 %v1105
    %1184 = vmatpush.bf16.msra.mxu0 %v1101
    %1185 = vmatmul.bf16.gmra.mxu0 %v971
    %v1186 = vpop.f32.mrf.mxu0
    %v1187 = vadd.f32 0.0, %v1186
    %v1188 = vpop.f32.mrf.mxu0
    %1189 = vdwg.mxu0
    %1190 = vmatpush.bf16.msra.mxu0 %v1130
    %1191 = vmatpush.bf16.msra.mxu0 %v1126
    %1192 = vmatpush.bf16.msra.mxu0 %v1122
    %1193 = vmatpush.bf16.msra.mxu0 %v1118
    %1194 = vmatpush.bf16.msra.mxu0 %v1114
    %1195 = vmatpush.bf16.msra.mxu0 %v1110
    %1196 = vmatpush.bf16.msra.mxu0 %v1106
    %1197 = vmatpush.bf16.msra.mxu0 %v1102
    %1198 = vmatmul.bf16.gmra.mxu0 %v971
    %v1199 = vpop.f32.mrf.mxu0
    %v1200 = vadd.f32 0.0, %v1199
    %v1201 = vpop.f32.mrf.mxu0
    %1202 = vdwg.mxu0
    %1203 = vmatpush.bf16.msra.mxu0 %v1131
    %1204 = vmatpush.bf16.msra.mxu0 %v1127
    %1205 = vmatpush.bf16.msra.mxu0 %v1123
    %1206 = vmatpush.bf16.msra.mxu0 %v1119
    %1207 = vmatpush.bf16.msra.mxu0 %v1115
    %1208 = vmatpush.bf16.msra.mxu0 %v1111
    %1209 = vmatpush.bf16.msra.mxu0 %v1107
    %1210 = vmatpush.bf16.msra.mxu0 %v1103
    %1211 = vmatmul.bf16.gmra.mxu0 %v971
    %v1212 = vpop.f32.mrf.mxu0
    %v1213 = vadd.f32 0.0, %v1212
    %v1214 = vpop.f32.mrf.mxu0
    %1215 = vdwg.mxu0
    %v1216 = vadd.f32 %v967, %v1174
    %v1217 = vadd.f32 %v968, %v1187
    %v1218 = vadd.f32 %v969, %v1200
    %v1219 = vadd.f32 %v970, %v1213
    %v1220 = vxor.u32 %v1216, 2147483648
    %v1221 = vmul.f32 %v1220, 1.442695
    %v1222 = vpow.pop %v1221
    %v1223 = vadd.f32 %v1222, 1.0
    %v1224 = vrcp.pop %v1223
    %v1225 = vmul.f32 %v1223, %v1224
    %v1226 = vsub.f32 1.0, %v1225
    %v1227 = vmul.f32 %v1224, %v1226
    %v1228 = vadd.f32 %v1224, %v1227
    %vm1229 = vweird.f32 %v1223
    %vm1230 = vweird.f32 %v1224
    %vm1231 = vmor %vm1229, %vm1230
    %v1232 = vsel %vm1231, %v1224, %v1228
    %v1233 = vand.u32 2147483647, %v1223
    %vm1234 = vcmp.eq.f32.partialorder %v1233, 8.507059e+37
    %v1235 = vand.u32 %v1223, 2147483648
    %v1236 = vor.u32 1.1754944e-38, %v1235
    %v1237 = vsel %vm1234, %v1236, %v1232
    %v1238 = vmul.f32 1.0, %v1237
    %v1239 = vxor.u32 %v1217, 2147483648
    %v1240 = vmul.f32 %v1239, 1.442695
    %v1241 = vpow.pop %v1240
    %v1242 = vadd.f32 %v1241, 1.0
    %v1243 = vrcp.pop %v1242
    %v1244 = vmul.f32 %v1242, %v1243
    %v1245 = vsub.f32 1.0, %v1244
    %v1246 = vmul.f32 %v1243, %v1245
    %v1247 = vadd.f32 %v1243, %v1246
    %vm1248 = vweird.f32 %v1242
    %vm1249 = vweird.f32 %v1243
    %vm1250 = vmor %vm1248, %vm1249
    %v1251 = vsel %vm1250, %v1243, %v1247
    %v1252 = vand.u32 2147483647, %v1242
    %vm1253 = vcmp.eq.f32.partialorder %v1252, 8.507059e+37
    %v1254 = vand.u32 %v1242, 2147483648
    %v1255 = vor.u32 1.1754944e-38, %v1254
    %v1256 = vsel %vm1253, %v1255, %v1251
    %v1257 = vmul.f32 1.0, %v1256
    %v1258 = vtanh.pop %v1218
    %v1259 = vxor.u32 %v1219, 2147483648
    %v1260 = vmul.f32 %v1259, 1.442695
    %v1261 = vpow.pop %v1260
    %v1262 = vadd.f32 %v1261, 1.0
    %v1263 = vrcp.pop %v1262
    %v1264 = vmul.f32 %v1262, %v1263
    %v1265 = vsub.f32 1.0, %v1264
    %v1266 = vmul.f32 %v1263, %v1265
    %v1267 = vadd.f32 %v1263, %v1266
    %vm1268 = vweird.f32 %v1262
    %vm1269 = vweird.f32 %v1263
    %vm1270 = vmor %vm1268, %vm1269
    %v1271 = vsel %vm1270, %v1263, %v1267
    %v1272 = vand.u32 2147483647, %v1262
    %vm1273 = vcmp.eq.f32.partialorder %v1272, 8.507059e+37
    %v1274 = vand.u32 %v1262, 2147483648
    %v1275 = vor.u32 1.1754944e-38, %v1274
    %v1276 = vsel %vm1273, %v1275, %v1271
    %v1277 = vmul.f32 1.0, %v1276
    %v1278 = vmul.f32 %v1257, %v963
    %v1279 = vmul.f32 %v1238, %v1258
    %v1280 = vadd.f32 %v1278, %v1279
    %v1281 = vtanh.pop %v1280
    %v1282 = vmul.f32 %v1277, %v1281
    %1283 = vst [vmem:[#allocation3 + $0x8] sm:$0xff] %v1282
    %v1284 = vld [vmem:[#allocation4 + $0x40] sm:$0xff]
    %v1285 = vld [vmem:[#allocation4 + $0x48] sm:$0xff]
    %v1286 = vld [vmem:[#allocation4 + $0x50] sm:$0xff]
    %v1287 = vld [vmem:[#allocation4 + $0x58] sm:$0xff]
    %v1288 = vpack.c.bf16 %v1282, %v1282
    %v1289 = vld [vmem:[#allocation13] sm:$0xff]
    %v1290 = vld [vmem:[#allocation13 + $0x8] sm:$0xff]
    %v1291 = vld [vmem:[#allocation13 + $0x10] sm:$0xff]
    %v1292 = vld [vmem:[#allocation13 + $0x18] sm:$0xff]
    %v1293 = vld [vmem:[#allocation13 + $0x20] sm:$0xff]
    %v1294 = vld [vmem:[#allocation13 + $0x28] sm:$0xff]
    %v1295 = vld [vmem:[#allocation13 + $0x30] sm:$0xff]
    %v1296 = vld [vmem:[#allocation13 + $0x38] sm:$0xff]
    %v1297 = vld [vmem:[#allocation13 + $0x40] sm:$0xff]
    %v1298 = vld [vmem:[#allocation13 + $0x48] sm:$0xff]
    %v1299 = vld [vmem:[#allocation13 + $0x50] sm:$0xff]
    %v1300 = vld [vmem:[#allocation13 + $0x58] sm:$0xff]
    %v1301 = vld [vmem:[#allocation13 + $0x60] sm:$0xff]
    %v1302 = vld [vmem:[#allocation13 + $0x68] sm:$0xff]
    %v1303 = vld [vmem:[#allocation13 + $0x70] sm:$0xff]
    %v1304 = vld [vmem:[#allocation13 + $0x78] sm:$0xff]
    %v1305 = vld [vmem:[#allocation13 + $0x80] sm:$0xff]
    %v1306 = vld [vmem:[#allocation13 + $0x88] sm:$0xff]
    %v1307 = vld [vmem:[#allocation13 + $0x90] sm:$0xff]
    %v1308 = vld [vmem:[#allocation13 + $0x98] sm:$0xff]
    %v1309 = vld [vmem:[#allocation13 + $0xa0] sm:$0xff]
    %v1310 = vld [vmem:[#allocation13 + $0xa8] sm:$0xff]
    %v1311 = vld [vmem:[#allocation13 + $0xb0] sm:$0xff]
    %v1312 = vld [vmem:[#allocation13 + $0xb8] sm:$0xff]
    %v1313 = vld [vmem:[#allocation13 + $0xc0] sm:$0xff]
    %v1314 = vld [vmem:[#allocation13 + $0xc8] sm:$0xff]
    %v1315 = vld [vmem:[#allocation13 + $0xd0] sm:$0xff]
    %v1316 = vld [vmem:[#allocation13 + $0xd8] sm:$0xff]
    %v1317 = vld [vmem:[#allocation13 + $0xe0] sm:$0xff]
    %v1318 = vld [vmem:[#allocation13 + $0xe8] sm:$0xff]
    %v1319 = vld [vmem:[#allocation13 + $0xf0] sm:$0xff]
    %v1320 = vld [vmem:[#allocation13 + $0xf8] sm:$0xff]
    %v1353 = vunpack.c.l.b16 %v1289
    %v1354 = vunpack.c.h.b16 %v1289
    %v1355 = vunpack.c.l.b16 %v1290
    %v1356 = vunpack.c.h.b16 %v1290
    %v1357 = vunpack.c.l.b16 %v1291
    %v1358 = vunpack.c.h.b16 %v1291
    %v1359 = vunpack.c.l.b16 %v1292
    %v1360 = vunpack.c.h.b16 %v1292
    %v1361 = vunpack.c.l.b16 %v1293
    %v1362 = vunpack.c.h.b16 %v1293
    %v1363 = vunpack.c.l.b16 %v1294
    %v1364 = vunpack.c.h.b16 %v1294
    %v1365 = vunpack.c.l.b16 %v1295
    %v1366 = vunpack.c.h.b16 %v1295
    %v1367 = vunpack.c.l.b16 %v1296
    %v1368 = vunpack.c.h.b16 %v1296
    %v1369 = vunpack.c.l.b16 %v1297
    %v1370 = vunpack.c.h.b16 %v1297
    %v1371 = vunpack.c.l.b16 %v1298
    %v1372 = vunpack.c.h.b16 %v1298
    %v1373 = vunpack.c.l.b16 %v1299
    %v1374 = vunpack.c.h.b16 %v1299
    %v1375 = vunpack.c.l.b16 %v1300
    %v1376 = vunpack.c.h.b16 %v1300
    %v1377 = vunpack.c.l.b16 %v1301
    %v1378 = vunpack.c.h.b16 %v1301
    %v1379 = vunpack.c.l.b16 %v1302
    %v1380 = vunpack.c.h.b16 %v1302
    %v1381 = vunpack.c.l.b16 %v1303
    %v1382 = vunpack.c.h.b16 %v1303
    %v1383 = vunpack.c.l.b16 %v1304
    %v1384 = vunpack.c.h.b16 %v1304
    %v1385 = vunpack.c.l.b16 %v1305
    %v1386 = vunpack.c.h.b16 %v1305
    %v1387 = vunpack.c.l.b16 %v1306
    %v1388 = vunpack.c.h.b16 %v1306
    %v1389 = vunpack.c.l.b16 %v1307
    %v1390 = vunpack.c.h.b16 %v1307
    %v1391 = vunpack.c.l.b16 %v1308
    %v1392 = vunpack.c.h.b16 %v1308
    %v1393 = vunpack.c.l.b16 %v1309
    %v1394 = vunpack.c.h.b16 %v1309
    %v1395 = vunpack.c.l.b16 %v1310
    %v1396 = vunpack.c.h.b16 %v1310
    %v1397 = vunpack.c.l.b16 %v1311
    %v1398 = vunpack.c.h.b16 %v1311
    %v1399 = vunpack.c.l.b16 %v1312
    %v1400 = vunpack.c.h.b16 %v1312
    %v1401 = vunpack.c.l.b16 %v1313
    %v1402 = vunpack.c.h.b16 %v1313
    %v1403 = vunpack.c.l.b16 %v1314
    %v1404 = vunpack.c.h.b16 %v1314
    %v1405 = vunpack.c.l.b16 %v1315
    %v1406 = vunpack.c.h.b16 %v1315
    %v1407 = vunpack.c.l.b16 %v1316
    %v1408 = vunpack.c.h.b16 %v1316
    %v1409 = vunpack.c.l.b16 %v1317
    %v1410 = vunpack.c.h.b16 %v1317
    %v1411 = vunpack.c.l.b16 %v1318
    %v1412 = vunpack.c.h.b16 %v1318
    %v1413 = vunpack.c.l.b16 %v1319
    %v1414 = vunpack.c.h.b16 %v1319
    %v1415 = vunpack.c.l.b16 %v1320
    %v1416 = vunpack.c.h.b16 %v1320
    %v1417 = vpack.c.b16 %v1357, %v1353
    %v1418 = vpack.c.b16 %v1358, %v1354
    %v1419 = vpack.c.b16 %v1359, %v1355
    %v1420 = vpack.c.b16 %v1360, %v1356
    %v1421 = vpack.c.b16 %v1365, %v1361
    %v1422 = vpack.c.b16 %v1366, %v1362
    %v1423 = vpack.c.b16 %v1367, %v1363
    %v1424 = vpack.c.b16 %v1368, %v1364
    %v1425 = vpack.c.b16 %v1373, %v1369
    %v1426 = vpack.c.b16 %v1374, %v1370
    %v1427 = vpack.c.b16 %v1375, %v1371
    %v1428 = vpack.c.b16 %v1376, %v1372
    %v1429 = vpack.c.b16 %v1381, %v1377
    %v1430 = vpack.c.b16 %v1382, %v1378
    %v1431 = vpack.c.b16 %v1383, %v1379
    %v1432 = vpack.c.b16 %v1384, %v1380
    %v1433 = vpack.c.b16 %v1389, %v1385
    %v1434 = vpack.c.b16 %v1390, %v1386
    %v1435 = vpack.c.b16 %v1391, %v1387
    %v1436 = vpack.c.b16 %v1392, %v1388
    %v1437 = vpack.c.b16 %v1397, %v1393
    %v1438 = vpack.c.b16 %v1398, %v1394
    %v1439 = vpack.c.b16 %v1399, %v1395
    %v1440 = vpack.c.b16 %v1400, %v1396
    %v1441 = vpack.c.b16 %v1405, %v1401
    %v1442 = vpack.c.b16 %v1406, %v1402
    %v1443 = vpack.c.b16 %v1407, %v1403
    %v1444 = vpack.c.b16 %v1408, %v1404
    %v1445 = vpack.c.b16 %v1413, %v1409
    %v1446 = vpack.c.b16 %v1414, %v1410
    %v1447 = vpack.c.b16 %v1415, %v1411
    %v1448 = vpack.c.b16 %v1416, %v1412
    %1481 = vmatpush.bf16.msra.mxu0 %v1445
    %1482 = vmatpush.bf16.msra.mxu0 %v1441
    %1483 = vmatpush.bf16.msra.mxu0 %v1437
    %1484 = vmatpush.bf16.msra.mxu0 %v1433
    %1485 = vmatpush.bf16.msra.mxu0 %v1429
    %1486 = vmatpush.bf16.msra.mxu0 %v1425
    %1487 = vmatpush.bf16.msra.mxu0 %v1421
    %1488 = vmatpush.bf16.msra.mxu0 %v1417
    %1489 = vmatmul.bf16.gmra.mxu0 %v1288
    %v1490 = vpop.f32.mrf.mxu0
    %v1491 = vadd.f32 0.0, %v1490
    %v1492 = vpop.f32.mrf.mxu0
    %1493 = vdwg.mxu0
    %1494 = vmatpush.bf16.msra.mxu0 %v1446
    %1495 = vmatpush.bf16.msra.mxu0 %v1442
    %1496 = vmatpush.bf16.msra.mxu0 %v1438
    %1497 = vmatpush.bf16.msra.mxu0 %v1434
    %1498 = vmatpush.bf16.msra.mxu0 %v1430
    %1499 = vmatpush.bf16.msra.mxu0 %v1426
    %1500 = vmatpush.bf16.msra.mxu0 %v1422
    %1501 = vmatpush.bf16.msra.mxu0 %v1418
    %1502 = vmatmul.bf16.gmra.mxu0 %v1288
    %v1503 = vpop.f32.mrf.mxu0
    %v1504 = vadd.f32 0.0, %v1503
    %v1505 = vpop.f32.mrf.mxu0
    %1506 = vdwg.mxu0
    %1507 = vmatpush.bf16.msra.mxu0 %v1447
    %1508 = vmatpush.bf16.msra.mxu0 %v1443
    %1509 = vmatpush.bf16.msra.mxu0 %v1439
    %1510 = vmatpush.bf16.msra.mxu0 %v1435
    %1511 = vmatpush.bf16.msra.mxu0 %v1431
    %1512 = vmatpush.bf16.msra.mxu0 %v1427
    %1513 = vmatpush.bf16.msra.mxu0 %v1423
    %1514 = vmatpush.bf16.msra.mxu0 %v1419
    %1515 = vmatmul.bf16.gmra.mxu0 %v1288
    %v1516 = vpop.f32.mrf.mxu0
    %v1517 = vadd.f32 0.0, %v1516
    %v1518 = vpop.f32.mrf.mxu0
    %1519 = vdwg.mxu0
    %1520 = vmatpush.bf16.msra.mxu0 %v1448
    %1521 = vmatpush.bf16.msra.mxu0 %v1444
    %1522 = vmatpush.bf16.msra.mxu0 %v1440
    %1523 = vmatpush.bf16.msra.mxu0 %v1436
    %1524 = vmatpush.bf16.msra.mxu0 %v1432
    %1525 = vmatpush.bf16.msra.mxu0 %v1428
    %1526 = vmatpush.bf16.msra.mxu0 %v1424
    %1527 = vmatpush.bf16.msra.mxu0 %v1420
    %1528 = vmatmul.bf16.gmra.mxu0 %v1288
    %v1529 = vpop.f32.mrf.mxu0
    %v1530 = vadd.f32 0.0, %v1529
    %v1531 = vpop.f32.mrf.mxu0
    %1532 = vdwg.mxu0
    %v1533 = vadd.f32 %v1284, %v1491
    %v1534 = vadd.f32 %v1285, %v1504
    %v1535 = vadd.f32 %v1286, %v1517
    %v1536 = vadd.f32 %v1287, %v1530
    %v1537 = vxor.u32 %v1533, 2147483648
    %v1538 = vmul.f32 %v1537, 1.442695
    %v1539 = vpow.pop %v1538
    %v1540 = vadd.f32 %v1539, 1.0
    %v1541 = vrcp.pop %v1540
    %v1542 = vmul.f32 %v1540, %v1541
    %v1543 = vsub.f32 1.0, %v1542
    %v1544 = vmul.f32 %v1541, %v1543
    %v1545 = vadd.f32 %v1541, %v1544
    %vm1546 = vweird.f32 %v1540
    %vm1547 = vweird.f32 %v1541
    %vm1548 = vmor %vm1546, %vm1547
    %v1549 = vsel %vm1548, %v1541, %v1545
    %v1550 = vand.u32 2147483647, %v1540
    %vm1551 = vcmp.eq.f32.partialorder %v1550, 8.507059e+37
    %v1552 = vand.u32 %v1540, 2147483648
    %v1553 = vor.u32 1.1754944e-38, %v1552
    %v1554 = vsel %vm1551, %v1553, %v1549
    %v1555 = vmul.f32 1.0, %v1554
    %v1556 = vxor.u32 %v1534, 2147483648
    %v1557 = vmul.f32 %v1556, 1.442695
    %v1558 = vpow.pop %v1557
    %v1559 = vadd.f32 %v1558, 1.0
    %v1560 = vrcp.pop %v1559
    %v1561 = vmul.f32 %v1559, %v1560
    %v1562 = vsub.f32 1.0, %v1561
    %v1563 = vmul.f32 %v1560, %v1562
    %v1564 = vadd.f32 %v1560, %v1563
    %vm1565 = vweird.f32 %v1559
    %vm1566 = vweird.f32 %v1560
    %vm1567 = vmor %vm1565, %vm1566
    %v1568 = vsel %vm1567, %v1560, %v1564
    %v1569 = vand.u32 2147483647, %v1559
    %vm1570 = vcmp.eq.f32.partialorder %v1569, 8.507059e+37
    %v1571 = vand.u32 %v1559, 2147483648
    %v1572 = vor.u32 1.1754944e-38, %v1571
    %v1573 = vsel %vm1570, %v1572, %v1568
    %v1574 = vmul.f32 1.0, %v1573
    %v1575 = vtanh.pop %v1535
    %v1576 = vxor.u32 %v1536, 2147483648
    %v1577 = vmul.f32 %v1576, 1.442695
    %v1578 = vpow.pop %v1577
    %v1579 = vadd.f32 %v1578, 1.0
    %v1580 = vrcp.pop %v1579
    %v1581 = vmul.f32 %v1579, %v1580
    %v1582 = vsub.f32 1.0, %v1581
    %v1583 = vmul.f32 %v1580, %v1582
    %v1584 = vadd.f32 %v1580, %v1583
    %vm1585 = vweird.f32 %v1579
    %vm1586 = vweird.f32 %v1580
    %vm1587 = vmor %vm1585, %vm1586
    %v1588 = vsel %vm1587, %v1580, %v1584
    %v1589 = vand.u32 2147483647, %v1579
    %vm1590 = vcmp.eq.f32.partialorder %v1589, 8.507059e+37
    %v1591 = vand.u32 %v1579, 2147483648
    %v1592 = vor.u32 1.1754944e-38, %v1591
    %v1593 = vsel %vm1590, %v1592, %v1588
    %v1594 = vmul.f32 1.0, %v1593
    %v1595 = vmul.f32 %v1574, %v1280
    %v1596 = vmul.f32 %v1555, %v1575
    %v1597 = vadd.f32 %v1595, %v1596
    %v1598 = vtanh.pop %v1597
    %v1599 = vmul.f32 %v1594, %v1598
    %1600 = vst [vmem:[#allocation3 + $0x10] sm:$0xff] %v1599
    %v1601 = vld [vmem:[#allocation4 + $0x60] sm:$0xff]
    %v1602 = vld [vmem:[#allocation4 + $0x68] sm:$0xff]
    %v1603 = vld [vmem:[#allocation4 + $0x70] sm:$0xff]
    %v1604 = vld [vmem:[#allocation4 + $0x78] sm:$0xff]
    %v1605 = vpack.c.bf16 %v1599, %v1599
    %v1606 = vld [vmem:[#allocation13] sm:$0xff]
    %v1607 = vld [vmem:[#allocation13 + $0x8] sm:$0xff]
    %v1608 = vld [vmem:[#allocation13 + $0x10] sm:$0xff]
    %v1609 = vld [vmem:[#allocation13 + $0x18] sm:$0xff]
    %v1610 = vld [vmem:[#allocation13 + $0x20] sm:$0xff]
    %v1611 = vld [vmem:[#allocation13 + $0x28] sm:$0xff]
    %v1612 = vld [vmem:[#allocation13 + $0x30] sm:$0xff]
    %v1613 = vld [vmem:[#allocation13 + $0x38] sm:$0xff]
    %v1614 = vld [vmem:[#allocation13 + $0x40] sm:$0xff]
    %v1615 = vld [vmem:[#allocation13 + $0x48] sm:$0xff]
    %v1616 = vld [vmem:[#allocation13 + $0x50] sm:$0xff]
    %v1617 = vld [vmem:[#allocation13 + $0x58] sm:$0xff]
    %v1618 = vld [vmem:[#allocation13 + $0x60] sm:$0xff]
    %v1619 = vld [vmem:[#allocation13 + $0x68] sm:$0xff]
    %v1620 = vld [vmem:[#allocation13 + $0x70] sm:$0xff]
    %v1621 = vld [vmem:[#allocation13 + $0x78] sm:$0xff]
    %v1622 = vld [vmem:[#allocation13 + $0x80] sm:$0xff]
    %v1623 = vld [vmem:[#allocation13 + $0x88] sm:$0xff]
    %v1624 = vld [vmem:[#allocation13 + $0x90] sm:$0xff]
    %v1625 = vld [vmem:[#allocation13 + $0x98] sm:$0xff]
    %v1626 = vld [vmem:[#allocation13 + $0xa0] sm:$0xff]
    %v1627 = vld [vmem:[#allocation13 + $0xa8] sm:$0xff]
    %v1628 = vld [vmem:[#allocation13 + $0xb0] sm:$0xff]
    %v1629 = vld [vmem:[#allocation13 + $0xb8] sm:$0xff]
    %v1630 = vld [vmem:[#allocation13 + $0xc0] sm:$0xff]
    %v1631 = vld [vmem:[#allocation13 + $0xc8] sm:$0xff]
    %v1632 = vld [vmem:[#allocation13 + $0xd0] sm:$0xff]
    %v1633 = vld [vmem:[#allocation13 + $0xd8] sm:$0xff]
    %v1634 = vld [vmem:[#allocation13 + $0xe0] sm:$0xff]
    %v1635 = vld [vmem:[#allocation13 + $0xe8] sm:$0xff]
    %v1636 = vld [vmem:[#allocation13 + $0xf0] sm:$0xff]
    %v1637 = vld [vmem:[#allocation13 + $0xf8] sm:$0xff]
    %v1670 = vunpack.c.l.b16 %v1606
    %v1671 = vunpack.c.h.b16 %v1606
    %v1672 = vunpack.c.l.b16 %v1607
    %v1673 = vunpack.c.h.b16 %v1607
    %v1674 = vunpack.c.l.b16 %v1608
    %v1675 = vunpack.c.h.b16 %v1608
    %v1676 = vunpack.c.l.b16 %v1609
    %v1677 = vunpack.c.h.b16 %v1609
    %v1678 = vunpack.c.l.b16 %v1610
    %v1679 = vunpack.c.h.b16 %v1610
    %v1680 = vunpack.c.l.b16 %v1611
    %v1681 = vunpack.c.h.b16 %v1611
    %v1682 = vunpack.c.l.b16 %v1612
    %v1683 = vunpack.c.h.b16 %v1612
    %v1684 = vunpack.c.l.b16 %v1613
    %v1685 = vunpack.c.h.b16 %v1613
    %v1686 = vunpack.c.l.b16 %v1614
    %v1687 = vunpack.c.h.b16 %v1614
    %v1688 = vunpack.c.l.b16 %v1615
    %v1689 = vunpack.c.h.b16 %v1615
    %v1690 = vunpack.c.l.b16 %v1616
    %v1691 = vunpack.c.h.b16 %v1616
    %v1692 = vunpack.c.l.b16 %v1617
    %v1693 = vunpack.c.h.b16 %v1617
    %v1694 = vunpack.c.l.b16 %v1618
    %v1695 = vunpack.c.h.b16 %v1618
    %v1696 = vunpack.c.l.b16 %v1619
    %v1697 = vunpack.c.h.b16 %v1619
    %v1698 = vunpack.c.l.b16 %v1620
    %v1699 = vunpack.c.h.b16 %v1620
    %v1700 = vunpack.c.l.b16 %v1621
    %v1701 = vunpack.c.h.b16 %v1621
    %v1702 = vunpack.c.l.b16 %v1622
    %v1703 = vunpack.c.h.b16 %v1622
    %v1704 = vunpack.c.l.b16 %v1623
    %v1705 = vunpack.c.h.b16 %v1623
    %v1706 = vunpack.c.l.b16 %v1624
    %v1707 = vunpack.c.h.b16 %v1624
    %v1708 = vunpack.c.l.b16 %v1625
    %v1709 = vunpack.c.h.b16 %v1625
    %v1710 = vunpack.c.l.b16 %v1626
    %v1711 = vunpack.c.h.b16 %v1626
    %v1712 = vunpack.c.l.b16 %v1627
    %v1713 = vunpack.c.h.b16 %v1627
    %v1714 = vunpack.c.l.b16 %v1628
    %v1715 = vunpack.c.h.b16 %v1628
    %v1716 = vunpack.c.l.b16 %v1629
    %v1717 = vunpack.c.h.b16 %v1629
    %v1718 = vunpack.c.l.b16 %v1630
    %v1719 = vunpack.c.h.b16 %v1630
    %v1720 = vunpack.c.l.b16 %v1631
    %v1721 = vunpack.c.h.b16 %v1631
    %v1722 = vunpack.c.l.b16 %v1632
    %v1723 = vunpack.c.h.b16 %v1632
    %v1724 = vunpack.c.l.b16 %v1633
    %v1725 = vunpack.c.h.b16 %v1633
    %v1726 = vunpack.c.l.b16 %v1634
    %v1727 = vunpack.c.h.b16 %v1634
    %v1728 = vunpack.c.l.b16 %v1635
    %v1729 = vunpack.c.h.b16 %v1635
    %v1730 = vunpack.c.l.b16 %v1636
    %v1731 = vunpack.c.h.b16 %v1636
    %v1732 = vunpack.c.l.b16 %v1637
    %v1733 = vunpack.c.h.b16 %v1637
    %v1734 = vpack.c.b16 %v1674, %v1670
    %v1735 = vpack.c.b16 %v1675, %v1671
    %v1736 = vpack.c.b16 %v1676, %v1672
    %v1737 = vpack.c.b16 %v1677, %v1673
    %v1738 = vpack.c.b16 %v1682, %v1678
    %v1739 = vpack.c.b16 %v1683, %v1679
    %v1740 = vpack.c.b16 %v1684, %v1680
    %v1741 = vpack.c.b16 %v1685, %v1681
    %v1742 = vpack.c.b16 %v1690, %v1686
    %v1743 = vpack.c.b16 %v1691, %v1687
    %v1744 = vpack.c.b16 %v1692, %v1688
    %v1745 = vpack.c.b16 %v1693, %v1689
    %v1746 = vpack.c.b16 %v1698, %v1694
    %v1747 = vpack.c.b16 %v1699, %v1695
    %v1748 = vpack.c.b16 %v1700, %v1696
    %v1749 = vpack.c.b16 %v1701, %v1697
    %v1750 = vpack.c.b16 %v1706, %v1702
    %v1751 = vpack.c.b16 %v1707, %v1703
    %v1752 = vpack.c.b16 %v1708, %v1704
    %v1753 = vpack.c.b16 %v1709, %v1705
    %v1754 = vpack.c.b16 %v1714, %v1710
    %v1755 = vpack.c.b16 %v1715, %v1711
    %v1756 = vpack.c.b16 %v1716, %v1712
    %v1757 = vpack.c.b16 %v1717, %v1713
    %v1758 = vpack.c.b16 %v1722, %v1718
    %v1759 = vpack.c.b16 %v1723, %v1719
    %v1760 = vpack.c.b16 %v1724, %v1720
    %v1761 = vpack.c.b16 %v1725, %v1721
    %v1762 = vpack.c.b16 %v1730, %v1726
    %v1763 = vpack.c.b16 %v1731, %v1727
    %v1764 = vpack.c.b16 %v1732, %v1728
    %v1765 = vpack.c.b16 %v1733, %v1729
    %1798 = vmatpush.bf16.msra.mxu0 %v1762
    %1799 = vmatpush.bf16.msra.mxu0 %v1758
    %1800 = vmatpush.bf16.msra.mxu0 %v1754
    %1801 = vmatpush.bf16.msra.mxu0 %v1750
    %1802 = vmatpush.bf16.msra.mxu0 %v1746
    %1803 = vmatpush.bf16.msra.mxu0 %v1742
    %1804 = vmatpush.bf16.msra.mxu0 %v1738
    %1805 = vmatpush.bf16.msra.mxu0 %v1734
    %1806 = vmatmul.bf16.gmra.mxu0 %v1605
    %v1807 = vpop.f32.mrf.mxu0
    %v1808 = vadd.f32 0.0, %v1807
    %v1809 = vpop.f32.mrf.mxu0
    %1810 = vdwg.mxu0
    %1811 = vmatpush.bf16.msra.mxu0 %v1763
    %1812 = vmatpush.bf16.msra.mxu0 %v1759
    %1813 = vmatpush.bf16.msra.mxu0 %v1755
    %1814 = vmatpush.bf16.msra.mxu0 %v1751
    %1815 = vmatpush.bf16.msra.mxu0 %v1747
    %1816 = vmatpush.bf16.msra.mxu0 %v1743
    %1817 = vmatpush.bf16.msra.mxu0 %v1739
    %1818 = vmatpush.bf16.msra.mxu0 %v1735
    %1819 = vmatmul.bf16.gmra.mxu0 %v1605
    %v1820 = vpop.f32.mrf.mxu0
    %v1821 = vadd.f32 0.0, %v1820
    %v1822 = vpop.f32.mrf.mxu0
    %1823 = vdwg.mxu0
    %1824 = vmatpush.bf16.msra.mxu0 %v1764
    %1825 = vmatpush.bf16.msra.mxu0 %v1760
    %1826 = vmatpush.bf16.msra.mxu0 %v1756
    %1827 = vmatpush.bf16.msra.mxu0 %v1752
    %1828 = vmatpush.bf16.msra.mxu0 %v1748
    %1829 = vmatpush.bf16.msra.mxu0 %v1744
    %1830 = vmatpush.bf16.msra.mxu0 %v1740
    %1831 = vmatpush.bf16.msra.mxu0 %v1736
    %1832 = vmatmul.bf16.gmra.mxu0 %v1605
    %v1833 = vpop.f32.mrf.mxu0
    %v1834 = vadd.f32 0.0, %v1833
    %v1835 = vpop.f32.mrf.mxu0
    %1836 = vdwg.mxu0
    %1837 = vmatpush.bf16.msra.mxu0 %v1765
    %1838 = vmatpush.bf16.msra.mxu0 %v1761
    %1839 = vmatpush.bf16.msra.mxu0 %v1757
    %1840 = vmatpush.bf16.msra.mxu0 %v1753
    %1841 = vmatpush.bf16.msra.mxu0 %v1749
    %1842 = vmatpush.bf16.msra.mxu0 %v1745
    %1843 = vmatpush.bf16.msra.mxu0 %v1741
    %1844 = vmatpush.bf16.msra.mxu0 %v1737
    %1845 = vmatmul.bf16.gmra.mxu0 %v1605
    %v1846 = vpop.f32.mrf.mxu0
    %v1847 = vadd.f32 0.0, %v1846
    %v1848 = vpop.f32.mrf.mxu0
    %1849 = vdwg.mxu0
    %v1850 = vadd.f32 %v1601, %v1808
    %v1851 = vadd.f32 %v1602, %v1821
    %v1852 = vadd.f32 %v1603, %v1834
    %v1853 = vadd.f32 %v1604, %v1847
    %v1854 = vxor.u32 %v1850, 2147483648
    %v1855 = vmul.f32 %v1854, 1.442695
    %v1856 = vpow.pop %v1855
    %v1857 = vadd.f32 %v1856, 1.0
    %v1858 = vrcp.pop %v1857
    %v1859 = vmul.f32 %v1857, %v1858
    %v1860 = vsub.f32 1.0, %v1859
    %v1861 = vmul.f32 %v1858, %v1860
    %v1862 = vadd.f32 %v1858, %v1861
    %vm1863 = vweird.f32 %v1857
    %vm1864 = vweird.f32 %v1858
    %vm1865 = vmor %vm1863, %vm1864
    %v1866 = vsel %vm1865, %v1858, %v1862
    %v1867 = vand.u32 2147483647, %v1857
    %vm1868 = vcmp.eq.f32.partialorder %v1867, 8.507059e+37
    %v1869 = vand.u32 %v1857, 2147483648
    %v1870 = vor.u32 1.1754944e-38, %v1869
    %v1871 = vsel %vm1868, %v1870, %v1866
    %v1872 = vmul.f32 1.0, %v1871
    %v1873 = vxor.u32 %v1851, 2147483648
    %v1874 = vmul.f32 %v1873, 1.442695
    %v1875 = vpow.pop %v1874
    %v1876 = vadd.f32 %v1875, 1.0
    %v1877 = vrcp.pop %v1876
    %v1878 = vmul.f32 %v1876, %v1877
    %v1879 = vsub.f32 1.0, %v1878
    %v1880 = vmul.f32 %v1877, %v1879
    %v1881 = vadd.f32 %v1877, %v1880
    %vm1882 = vweird.f32 %v1876
    %vm1883 = vweird.f32 %v1877
    %vm1884 = vmor %vm1882, %vm1883
    %v1885 = vsel %vm1884, %v1877, %v1881
    %v1886 = vand.u32 2147483647, %v1876
    %vm1887 = vcmp.eq.f32.partialorder %v1886, 8.507059e+37
    %v1888 = vand.u32 %v1876, 2147483648
    %v1889 = vor.u32 1.1754944e-38, %v1888
    %v1890 = vsel %vm1887, %v1889, %v1885
    %v1891 = vmul.f32 1.0, %v1890
    %v1892 = vtanh.pop %v1852
    %v1893 = vxor.u32 %v1853, 2147483648
    %v1894 = vmul.f32 %v1893, 1.442695
    %v1895 = vpow.pop %v1894
    %v1896 = vadd.f32 %v1895, 1.0
    %v1897 = vrcp.pop %v1896
    %v1898 = vmul.f32 %v1896, %v1897
    %v1899 = vsub.f32 1.0, %v1898
    %v1900 = vmul.f32 %v1897, %v1899
    %v1901 = vadd.f32 %v1897, %v1900
    %vm1902 = vweird.f32 %v1896
    %vm1903 = vweird.f32 %v1897
    %vm1904 = vmor %vm1902, %vm1903
    %v1905 = vsel %vm1904, %v1897, %v1901
    %v1906 = vand.u32 2147483647, %v1896
    %vm1907 = vcmp.eq.f32.partialorder %v1906, 8.507059e+37
    %v1908 = vand.u32 %v1896, 2147483648
    %v1909 = vor.u32 1.1754944e-38, %v1908
    %v1910 = vsel %vm1907, %v1909, %v1905
    %v1911 = vmul.f32 1.0, %v1910
    %v1912 = vmul.f32 %v1891, %v1597
    %v1913 = vmul.f32 %v1872, %v1892
    %v1914 = vadd.f32 %v1912, %v1913
    %v1915 = vtanh.pop %v1914
    %v1916 = vmul.f32 %v1911, %v1915
    %1917 = vst [vmem:[#allocation3 + $0x18] sm:$0xff] %v1916
    %v1918 = vld [vmem:[#allocation4 + $0x80] sm:$0xff]
    %v1919 = vld [vmem:[#allocation4 + $0x88] sm:$0xff]
    %v1920 = vld [vmem:[#allocation4 + $0x90] sm:$0xff]
    %v1921 = vld [vmem:[#allocation4 + $0x98] sm:$0xff]
    %v1922 = vpack.c.bf16 %v1916, %v1916
    %v1923 = vld [vmem:[#allocation13] sm:$0xff]
    %v1924 = vld [vmem:[#allocation13 + $0x8] sm:$0xff]
    %v1925 = vld [vmem:[#allocation13 + $0x10] sm:$0xff]
    %v1926 = vld [vmem:[#allocation13 + $0x18] sm:$0xff]
    %v1927 = vld [vmem:[#allocation13 + $0x20] sm:$0xff]
    %v1928 = vld [vmem:[#allocation13 + $0x28] sm:$0xff]
    %v1929 = vld [vmem:[#allocation13 + $0x30] sm:$0xff]
    %v1930 = vld [vmem:[#allocation13 + $0x38] sm:$0xff]
    %v1931 = vld [vmem:[#allocation13 + $0x40] sm:$0xff]
    %v1932 = vld [vmem:[#allocation13 + $0x48] sm:$0xff]
    %v1933 = vld [vmem:[#allocation13 + $0x50] sm:$0xff]
    %v1934 = vld [vmem:[#allocation13 + $0x58] sm:$0xff]
    %v1935 = vld [vmem:[#allocation13 + $0x60] sm:$0xff]
    %v1936 = vld [vmem:[#allocation13 + $0x68] sm:$0xff]
    %v1937 = vld [vmem:[#allocation13 + $0x70] sm:$0xff]
    %v1938 = vld [vmem:[#allocation13 + $0x78] sm:$0xff]
    %v1939 = vld [vmem:[#allocation13 + $0x80] sm:$0xff]
    %v1940 = vld [vmem:[#allocation13 + $0x88] sm:$0xff]
    %v1941 = vld [vmem:[#allocation13 + $0x90] sm:$0xff]
    %v1942 = vld [vmem:[#allocation13 + $0x98] sm:$0xff]
    %v1943 = vld [vmem:[#allocation13 + $0xa0] sm:$0xff]
    %v1944 = vld [vmem:[#allocation13 + $0xa8] sm:$0xff]
    %v1945 = vld [vmem:[#allocation13 + $0xb0] sm:$0xff]
    %v1946 = vld [vmem:[#allocation13 + $0xb8] sm:$0xff]
    %v1947 = vld [vmem:[#allocation13 + $0xc0] sm:$0xff]
    %v1948 = vld [vmem:[#allocation13 + $0xc8] sm:$0xff]
    %v1949 = vld [vmem:[#allocation13 + $0xd0] sm:$0xff]
    %v1950 = vld [vmem:[#allocation13 + $0xd8] sm:$0xff]
    %v1951 = vld [vmem:[#allocation13 + $0xe0] sm:$0xff]
    %v1952 = vld [vmem:[#allocation13 + $0xe8] sm:$0xff]
    %v1953 = vld [vmem:[#allocation13 + $0xf0] sm:$0xff]
    %v1954 = vld [vmem:[#allocation13 + $0xf8] sm:$0xff]
    %v1987 = vunpack.c.l.b16 %v1923
    %v1988 = vunpack.c.h.b16 %v1923
    %v1989 = vunpack.c.l.b16 %v1924
    %v1990 = vunpack.c.h.b16 %v1924
    %v1991 = vunpack.c.l.b16 %v1925
    %v1992 = vunpack.c.h.b16 %v1925
    %v1993 = vunpack.c.l.b16 %v1926
    %v1994 = vunpack.c.h.b16 %v1926
    %v1995 = vunpack.c.l.b16 %v1927
    %v1996 = vunpack.c.h.b16 %v1927
    %v1997 = vunpack.c.l.b16 %v1928
    %v1998 = vunpack.c.h.b16 %v1928
    %v1999 = vunpack.c.l.b16 %v1929
    %v2000 = vunpack.c.h.b16 %v1929
    %v2001 = vunpack.c.l.b16 %v1930
    %v2002 = vunpack.c.h.b16 %v1930
    %v2003 = vunpack.c.l.b16 %v1931
    %v2004 = vunpack.c.h.b16 %v1931
    %v2005 = vunpack.c.l.b16 %v1932
    %v2006 = vunpack.c.h.b16 %v1932
    %v2007 = vunpack.c.l.b16 %v1933
    %v2008 = vunpack.c.h.b16 %v1933
    %v2009 = vunpack.c.l.b16 %v1934
    %v2010 = vunpack.c.h.b16 %v1934
    %v2011 = vunpack.c.l.b16 %v1935
    %v2012 = vunpack.c.h.b16 %v1935
    %v2013 = vunpack.c.l.b16 %v1936
    %v2014 = vunpack.c.h.b16 %v1936
    %v2015 = vunpack.c.l.b16 %v1937
    %v2016 = vunpack.c.h.b16 %v1937
    %v2017 = vunpack.c.l.b16 %v1938
    %v2018 = vunpack.c.h.b16 %v1938
    %v2019 = vunpack.c.l.b16 %v1939
    %v2020 = vunpack.c.h.b16 %v1939
    %v2021 = vunpack.c.l.b16 %v1940
    %v2022 = vunpack.c.h.b16 %v1940
    %v2023 = vunpack.c.l.b16 %v1941
    %v2024 = vunpack.c.h.b16 %v1941
    %v2025 = vunpack.c.l.b16 %v1942
    %v2026 = vunpack.c.h.b16 %v1942
    %v2027 = vunpack.c.l.b16 %v1943
    %v2028 = vunpack.c.h.b16 %v1943
    %v2029 = vunpack.c.l.b16 %v1944
    %v2030 = vunpack.c.h.b16 %v1944
    %v2031 = vunpack.c.l.b16 %v1945
    %v2032 = vunpack.c.h.b16 %v1945
    %v2033 = vunpack.c.l.b16 %v1946
    %v2034 = vunpack.c.h.b16 %v1946
    %v2035 = vunpack.c.l.b16 %v1947
    %v2036 = vunpack.c.h.b16 %v1947
    %v2037 = vunpack.c.l.b16 %v1948
    %v2038 = vunpack.c.h.b16 %v1948
    %v2039 = vunpack.c.l.b16 %v1949
    %v2040 = vunpack.c.h.b16 %v1949
    %v2041 = vunpack.c.l.b16 %v1950
    %v2042 = vunpack.c.h.b16 %v1950
    %v2043 = vunpack.c.l.b16 %v1951
    %v2044 = vunpack.c.h.b16 %v1951
    %v2045 = vunpack.c.l.b16 %v1952
    %v2046 = vunpack.c.h.b16 %v1952
    %v2047 = vunpack.c.l.b16 %v1953
    %v2048 = vunpack.c.h.b16 %v1953
    %v2049 = vunpack.c.l.b16 %v1954
    %v2050 = vunpack.c.h.b16 %v1954
    %v2051 = vpack.c.b16 %v1991, %v1987
    %v2052 = vpack.c.b16 %v1992, %v1988
    %v2053 = vpack.c.b16 %v1993, %v1989
    %v2054 = vpack.c.b16 %v1994, %v1990
    %v2055 = vpack.c.b16 %v1999, %v1995
    %v2056 = vpack.c.b16 %v2000, %v1996
    %v2057 = vpack.c.b16 %v2001, %v1997
    %v2058 = vpack.c.b16 %v2002, %v1998
    %v2059 = vpack.c.b16 %v2007, %v2003
    %v2060 = vpack.c.b16 %v2008, %v2004
    %v2061 = vpack.c.b16 %v2009, %v2005
    %v2062 = vpack.c.b16 %v2010, %v2006
    %v2063 = vpack.c.b16 %v2015, %v2011
    %v2064 = vpack.c.b16 %v2016, %v2012
    %v2065 = vpack.c.b16 %v2017, %v2013
    %v2066 = vpack.c.b16 %v2018, %v2014
    %v2067 = vpack.c.b16 %v2023, %v2019
    %v2068 = vpack.c.b16 %v2024, %v2020
    %v2069 = vpack.c.b16 %v2025, %v2021
    %v2070 = vpack.c.b16 %v2026, %v2022
    %v2071 = vpack.c.b16 %v2031, %v2027
    %v2072 = vpack.c.b16 %v2032, %v2028
    %v2073 = vpack.c.b16 %v2033, %v2029
    %v2074 = vpack.c.b16 %v2034, %v2030
    %v2075 = vpack.c.b16 %v2039, %v2035
    %v2076 = vpack.c.b16 %v2040, %v2036
    %v2077 = vpack.c.b16 %v2041, %v2037
    %v2078 = vpack.c.b16 %v2042, %v2038
    %v2079 = vpack.c.b16 %v2047, %v2043
    %v2080 = vpack.c.b16 %v2048, %v2044
    %v2081 = vpack.c.b16 %v2049, %v2045
    %v2082 = vpack.c.b16 %v2050, %v2046
    %2115 = vmatpush.bf16.msra.mxu0 %v2079
    %2116 = vmatpush.bf16.msra.mxu0 %v2075
    %2117 = vmatpush.bf16.msra.mxu0 %v2071
    %2118 = vmatpush.bf16.msra.mxu0 %v2067
    %2119 = vmatpush.bf16.msra.mxu0 %v2063
    %2120 = vmatpush.bf16.msra.mxu0 %v2059
    %2121 = vmatpush.bf16.msra.mxu0 %v2055
    %2122 = vmatpush.bf16.msra.mxu0 %v2051
    %2123 = vmatmul.bf16.gmra.mxu0 %v1922
    %v2124 = vpop.f32.mrf.mxu0
    %v2125 = vadd.f32 0.0, %v2124
    %v2126 = vpop.f32.mrf.mxu0
    %2127 = vdwg.mxu0
    %2128 = vmatpush.bf16.msra.mxu0 %v2080
    %2129 = vmatpush.bf16.msra.mxu0 %v2076
    %2130 = vmatpush.bf16.msra.mxu0 %v2072
    %2131 = vmatpush.bf16.msra.mxu0 %v2068
    %2132 = vmatpush.bf16.msra.mxu0 %v2064
    %2133 = vmatpush.bf16.msra.mxu0 %v2060
    %2134 = vmatpush.bf16.msra.mxu0 %v2056
    %2135 = vmatpush.bf16.msra.mxu0 %v2052
    %2136 = vmatmul.bf16.gmra.mxu0 %v1922
    %v2137 = vpop.f32.mrf.mxu0
    %v2138 = vadd.f32 0.0, %v2137
    %v2139 = vpop.f32.mrf.mxu0
    %2140 = vdwg.mxu0
    %2141 = vmatpush.bf16.msra.mxu0 %v2081
    %2142 = vmatpush.bf16.msra.mxu0 %v2077
    %2143 = vmatpush.bf16.msra.mxu0 %v2073
    %2144 = vmatpush.bf16.msra.mxu0 %v2069
    %2145 = vmatpush.bf16.msra.mxu0 %v2065
    %2146 = vmatpush.bf16.msra.mxu0 %v2061
    %2147 = vmatpush.bf16.msra.mxu0 %v2057
    %2148 = vmatpush.bf16.msra.mxu0 %v2053
    %2149 = vmatmul.bf16.gmra.mxu0 %v1922
    %v2150 = vpop.f32.mrf.mxu0
    %v2151 = vadd.f32 0.0, %v2150
    %v2152 = vpop.f32.mrf.mxu0
    %2153 = vdwg.mxu0
    %2154 = vmatpush.bf16.msra.mxu0 %v2082
    %2155 = vmatpush.bf16.msra.mxu0 %v2078
    %2156 = vmatpush.bf16.msra.mxu0 %v2074
    %2157 = vmatpush.bf16.msra.mxu0 %v2070
    %2158 = vmatpush.bf16.msra.mxu0 %v2066
    %2159 = vmatpush.bf16.msra.mxu0 %v2062
    %2160 = vmatpush.bf16.msra.mxu0 %v2058
    %2161 = vmatpush.bf16.msra.mxu0 %v2054
    %2162 = vmatmul.bf16.gmra.mxu0 %v1922
    %v2163 = vpop.f32.mrf.mxu0
    %v2164 = vadd.f32 0.0, %v2163
    %v2165 = vpop.f32.mrf.mxu0
    %2166 = vdwg.mxu0
    %v2167 = vadd.f32 %v1918, %v2125
    %v2168 = vadd.f32 %v1919, %v2138
    %v2169 = vadd.f32 %v1920, %v2151
    %v2170 = vadd.f32 %v1921, %v2164
    %v2171 = vxor.u32 %v2167, 2147483648
    %v2172 = vmul.f32 %v2171, 1.442695
    %v2173 = vpow.pop %v2172
    %v2174 = vadd.f32 %v2173, 1.0
    %v2175 = vrcp.pop %v2174
    %v2176 = vmul.f32 %v2174, %v2175
    %v2177 = vsub.f32 1.0, %v2176
    %v2178 = vmul.f32 %v2175, %v2177
    %v2179 = vadd.f32 %v2175, %v2178
    %vm2180 = vweird.f32 %v2174
    %vm2181 = vweird.f32 %v2175
    %vm2182 = vmor %vm2180, %vm2181
    %v2183 = vsel %vm2182, %v2175, %v2179
    %v2184 = vand.u32 2147483647, %v2174
    %vm2185 = vcmp.eq.f32.partialorder %v2184, 8.507059e+37
    %v2186 = vand.u32 %v2174, 2147483648
    %v2187 = vor.u32 1.1754944e-38, %v2186
    %v2188 = vsel %vm2185, %v2187, %v2183
    %v2189 = vmul.f32 1.0, %v2188
    %v2190 = vxor.u32 %v2168, 2147483648
    %v2191 = vmul.f32 %v2190, 1.442695
    %v2192 = vpow.pop %v2191
    %v2193 = vadd.f32 %v2192, 1.0
    %v2194 = vrcp.pop %v2193
    %v2195 = vmul.f32 %v2193, %v2194
    %v2196 = vsub.f32 1.0, %v2195
    %v2197 = vmul.f32 %v2194, %v2196
    %v2198 = vadd.f32 %v2194, %v2197
    %vm2199 = vweird.f32 %v2193
    %vm2200 = vweird.f32 %v2194
    %vm2201 = vmor %vm2199, %vm2200
    %v2202 = vsel %vm2201, %v2194, %v2198
    %v2203 = vand.u32 2147483647, %v2193
    %vm2204 = vcmp.eq.f32.partialorder %v2203, 8.507059e+37
    %v2205 = vand.u32 %v2193, 2147483648
    %v2206 = vor.u32 1.1754944e-38, %v2205
    %v2207 = vsel %vm2204, %v2206, %v2202
    %v2208 = vmul.f32 1.0, %v2207
    %v2209 = vtanh.pop %v2169
    %v2210 = vxor.u32 %v2170, 2147483648
    %v2211 = vmul.f32 %v2210, 1.442695
    %v2212 = vpow.pop %v2211
    %v2213 = vadd.f32 %v2212, 1.0
    %v2214 = vrcp.pop %v2213
    %v2215 = vmul.f32 %v2213, %v2214
    %v2216 = vsub.f32 1.0, %v2215
    %v2217 = vmul.f32 %v2214, %v2216
    %v2218 = vadd.f32 %v2214, %v2217
    %vm2219 = vweird.f32 %v2213
    %vm2220 = vweird.f32 %v2214
    %vm2221 = vmor %vm2219, %vm2220
    %v2222 = vsel %vm2221, %v2214, %v2218
    %v2223 = vand.u32 2147483647, %v2213
    %vm2224 = vcmp.eq.f32.partialorder %v2223, 8.507059e+37
    %v2225 = vand.u32 %v2213, 2147483648
    %v2226 = vor.u32 1.1754944e-38, %v2225
    %v2227 = vsel %vm2224, %v2226, %v2222
    %v2228 = vmul.f32 1.0, %v2227
    %v2229 = vmul.f32 %v2208, %v1914
    %v2230 = vmul.f32 %v2189, %v2209
    %v2231 = vadd.f32 %v2229, %v2230
    %v2232 = vtanh.pop %v2231
    %v2233 = vmul.f32 %v2228, %v2232
    %2234 = vst [vmem:[#allocation3 + $0x20] sm:$0xff] %v2233
    %v2235 = vld [vmem:[#allocation4 + $0xa0] sm:$0xff]
    %v2236 = vld [vmem:[#allocation4 + $0xa8] sm:$0xff]
    %v2237 = vld [vmem:[#allocation4 + $0xb0] sm:$0xff]
    %v2238 = vld [vmem:[#allocation4 + $0xb8] sm:$0xff]
    %v2239 = vpack.c.bf16 %v2233, %v2233
    %v2240 = vld [vmem:[#allocation13] sm:$0xff]
    %v2241 = vld [vmem:[#allocation13 + $0x8] sm:$0xff]
    %v2242 = vld [vmem:[#allocation13 + $0x10] sm:$0xff]
    %v2243 = vld [vmem:[#allocation13 + $0x18] sm:$0xff]
    %v2244 = vld [vmem:[#allocation13 + $0x20] sm:$0xff]
    %v2245 = vld [vmem:[#allocation13 + $0x28] sm:$0xff]
    %v2246 = vld [vmem:[#allocation13 + $0x30] sm:$0xff]
    %v2247 = vld [vmem:[#allocation13 + $0x38] sm:$0xff]
    %v2248 = vld [vmem:[#allocation13 + $0x40] sm:$0xff]
    %v2249 = vld [vmem:[#allocation13 + $0x48] sm:$0xff]
    %v2250 = vld [vmem:[#allocation13 + $0x50] sm:$0xff]
    %v2251 = vld [vmem:[#allocation13 + $0x58] sm:$0xff]
    %v2252 = vld [vmem:[#allocation13 + $0x60] sm:$0xff]
    %v2253 = vld [vmem:[#allocation13 + $0x68] sm:$0xff]
    %v2254 = vld [vmem:[#allocation13 + $0x70] sm:$0xff]
    %v2255 = vld [vmem:[#allocation13 + $0x78] sm:$0xff]
    %v2256 = vld [vmem:[#allocation13 + $0x80] sm:$0xff]
    %v2257 = vld [vmem:[#allocation13 + $0x88] sm:$0xff]
    %v2258 = vld [vmem:[#allocation13 + $0x90] sm:$0xff]
    %v2259 = vld [vmem:[#allocation13 + $0x98] sm:$0xff]
    %v2260 = vld [vmem:[#allocation13 + $0xa0] sm:$0xff]
    %v2261 = vld [vmem:[#allocation13 + $0xa8] sm:$0xff]
    %v2262 = vld [vmem:[#allocation13 + $0xb0] sm:$0xff]
    %v2263 = vld [vmem:[#allocation13 + $0xb8] sm:$0xff]
    %v2264 = vld [vmem:[#allocation13 + $0xc0] sm:$0xff]
    %v2265 = vld [vmem:[#allocation13 + $0xc8] sm:$0xff]
    %v2266 = vld [vmem:[#allocation13 + $0xd0] sm:$0xff]
    %v2267 = vld [vmem:[#allocation13 + $0xd8] sm:$0xff]
    %v2268 = vld [vmem:[#allocation13 + $0xe0] sm:$0xff]
    %v2269 = vld [vmem:[#allocation13 + $0xe8] sm:$0xff]
    %v2270 = vld [vmem:[#allocation13 + $0xf0] sm:$0xff]
    %v2271 = vld [vmem:[#allocation13 + $0xf8] sm:$0xff]
    %v2304 = vunpack.c.l.b16 %v2240
    %v2305 = vunpack.c.h.b16 %v2240
    %v2306 = vunpack.c.l.b16 %v2241
    %v2307 = vunpack.c.h.b16 %v2241
    %v2308 = vunpack.c.l.b16 %v2242
    %v2309 = vunpack.c.h.b16 %v2242
    %v2310 = vunpack.c.l.b16 %v2243
    %v2311 = vunpack.c.h.b16 %v2243
    %v2312 = vunpack.c.l.b16 %v2244
    %v2313 = vunpack.c.h.b16 %v2244
    %v2314 = vunpack.c.l.b16 %v2245
    %v2315 = vunpack.c.h.b16 %v2245
    %v2316 = vunpack.c.l.b16 %v2246
    %v2317 = vunpack.c.h.b16 %v2246
    %v2318 = vunpack.c.l.b16 %v2247
    %v2319 = vunpack.c.h.b16 %v2247
    %v2320 = vunpack.c.l.b16 %v2248
    %v2321 = vunpack.c.h.b16 %v2248
    %v2322 = vunpack.c.l.b16 %v2249
    %v2323 = vunpack.c.h.b16 %v2249
    %v2324 = vunpack.c.l.b16 %v2250
    %v2325 = vunpack.c.h.b16 %v2250
    %v2326 = vunpack.c.l.b16 %v2251
    %v2327 = vunpack.c.h.b16 %v2251
    %v2328 = vunpack.c.l.b16 %v2252
    %v2329 = vunpack.c.h.b16 %v2252
    %v2330 = vunpack.c.l.b16 %v2253
    %v2331 = vunpack.c.h.b16 %v2253
    %v2332 = vunpack.c.l.b16 %v2254
    %v2333 = vunpack.c.h.b16 %v2254
    %v2334 = vunpack.c.l.b16 %v2255
    %v2335 = vunpack.c.h.b16 %v2255
    %v2336 = vunpack.c.l.b16 %v2256
    %v2337 = vunpack.c.h.b16 %v2256
    %v2338 = vunpack.c.l.b16 %v2257
    %v2339 = vunpack.c.h.b16 %v2257
    %v2340 = vunpack.c.l.b16 %v2258
    %v2341 = vunpack.c.h.b16 %v2258
    %v2342 = vunpack.c.l.b16 %v2259
    %v2343 = vunpack.c.h.b16 %v2259
    %v2344 = vunpack.c.l.b16 %v2260
    %v2345 = vunpack.c.h.b16 %v2260
    %v2346 = vunpack.c.l.b16 %v2261
    %v2347 = vunpack.c.h.b16 %v2261
    %v2348 = vunpack.c.l.b16 %v2262
    %v2349 = vunpack.c.h.b16 %v2262
    %v2350 = vunpack.c.l.b16 %v2263
    %v2351 = vunpack.c.h.b16 %v2263
    %v2352 = vunpack.c.l.b16 %v2264
    %v2353 = vunpack.c.h.b16 %v2264
    %v2354 = vunpack.c.l.b16 %v2265
    %v2355 = vunpack.c.h.b16 %v2265
    %v2356 = vunpack.c.l.b16 %v2266
    %v2357 = vunpack.c.h.b16 %v2266
    %v2358 = vunpack.c.l.b16 %v2267
    %v2359 = vunpack.c.h.b16 %v2267
    %v2360 = vunpack.c.l.b16 %v2268
    %v2361 = vunpack.c.h.b16 %v2268
    %v2362 = vunpack.c.l.b16 %v2269
    %v2363 = vunpack.c.h.b16 %v2269
    %v2364 = vunpack.c.l.b16 %v2270
    %v2365 = vunpack.c.h.b16 %v2270
    %v2366 = vunpack.c.l.b16 %v2271
    %v2367 = vunpack.c.h.b16 %v2271
    %v2368 = vpack.c.b16 %v2308, %v2304
    %v2369 = vpack.c.b16 %v2309, %v2305
    %v2370 = vpack.c.b16 %v2310, %v2306
    %v2371 = vpack.c.b16 %v2311, %v2307
    %v2372 = vpack.c.b16 %v2316, %v2312
    %v2373 = vpack.c.b16 %v2317, %v2313
    %v2374 = vpack.c.b16 %v2318, %v2314
    %v2375 = vpack.c.b16 %v2319, %v2315
    %v2376 = vpack.c.b16 %v2324, %v2320
    %v2377 = vpack.c.b16 %v2325, %v2321
    %v2378 = vpack.c.b16 %v2326, %v2322
    %v2379 = vpack.c.b16 %v2327, %v2323
    %v2380 = vpack.c.b16 %v2332, %v2328
    %v2381 = vpack.c.b16 %v2333, %v2329
    %v2382 = vpack.c.b16 %v2334, %v2330
    %v2383 = vpack.c.b16 %v2335, %v2331
    %v2384 = vpack.c.b16 %v2340, %v2336
    %v2385 = vpack.c.b16 %v2341, %v2337
    %v2386 = vpack.c.b16 %v2342, %v2338
    %v2387 = vpack.c.b16 %v2343, %v2339
    %v2388 = vpack.c.b16 %v2348, %v2344
    %v2389 = vpack.c.b16 %v2349, %v2345
    %v2390 = vpack.c.b16 %v2350, %v2346
    %v2391 = vpack.c.b16 %v2351, %v2347
    %v2392 = vpack.c.b16 %v2356, %v2352
    %v2393 = vpack.c.b16 %v2357, %v2353
    %v2394 = vpack.c.b16 %v2358, %v2354
    %v2395 = vpack.c.b16 %v2359, %v2355
    %v2396 = vpack.c.b16 %v2364, %v2360
    %v2397 = vpack.c.b16 %v2365, %v2361
    %v2398 = vpack.c.b16 %v2366, %v2362
    %v2399 = vpack.c.b16 %v2367, %v2363
    %2432 = vmatpush.bf16.msra.mxu0 %v2396
    %2433 = vmatpush.bf16.msra.mxu0 %v2392
    %2434 = vmatpush.bf16.msra.mxu0 %v2388
    %2435 = vmatpush.bf16.msra.mxu0 %v2384
    %2436 = vmatpush.bf16.msra.mxu0 %v2380
    %2437 = vmatpush.bf16.msra.mxu0 %v2376
    %2438 = vmatpush.bf16.msra.mxu0 %v2372
    %2439 = vmatpush.bf16.msra.mxu0 %v2368
    %2440 = vmatmul.bf16.gmra.mxu0 %v2239
    %v2441 = vpop.f32.mrf.mxu0
    %v2442 = vadd.f32 0.0, %v2441
    %v2443 = vpop.f32.mrf.mxu0
    %2444 = vdwg.mxu0
    %2445 = vmatpush.bf16.msra.mxu0 %v2397
    %2446 = vmatpush.bf16.msra.mxu0 %v2393
    %2447 = vmatpush.bf16.msra.mxu0 %v2389
    %2448 = vmatpush.bf16.msra.mxu0 %v2385
    %2449 = vmatpush.bf16.msra.mxu0 %v2381
    %2450 = vmatpush.bf16.msra.mxu0 %v2377
    %2451 = vmatpush.bf16.msra.mxu0 %v2373
    %2452 = vmatpush.bf16.msra.mxu0 %v2369
    %2453 = vmatmul.bf16.gmra.mxu0 %v2239
    %v2454 = vpop.f32.mrf.mxu0
    %v2455 = vadd.f32 0.0, %v2454
    %v2456 = vpop.f32.mrf.mxu0
    %2457 = vdwg.mxu0
    %2458 = vmatpush.bf16.msra.mxu0 %v2398
    %2459 = vmatpush.bf16.msra.mxu0 %v2394
    %2460 = vmatpush.bf16.msra.mxu0 %v2390
    %2461 = vmatpush.bf16.msra.mxu0 %v2386
    %2462 = vmatpush.bf16.msra.mxu0 %v2382
    %2463 = vmatpush.bf16.msra.mxu0 %v2378
    %2464 = vmatpush.bf16.msra.mxu0 %v2374
    %2465 = vmatpush.bf16.msra.mxu0 %v2370
    %2466 = vmatmul.bf16.gmra.mxu0 %v2239
    %v2467 = vpop.f32.mrf.mxu0
    %v2468 = vadd.f32 0.0, %v2467
    %v2469 = vpop.f32.mrf.mxu0
    %2470 = vdwg.mxu0
    %2471 = vmatpush.bf16.msra.mxu0 %v2399
    %2472 = vmatpush.bf16.msra.mxu0 %v2395
    %2473 = vmatpush.bf16.msra.mxu0 %v2391
    %2474 = vmatpush.bf16.msra.mxu0 %v2387
    %2475 = vmatpush.bf16.msra.mxu0 %v2383
    %2476 = vmatpush.bf16.msra.mxu0 %v2379
    %2477 = vmatpush.bf16.msra.mxu0 %v2375
    %2478 = vmatpush.bf16.msra.mxu0 %v2371
    %2479 = vmatmul.bf16.gmra.mxu0 %v2239
    %v2480 = vpop.f32.mrf.mxu0
    %v2481 = vadd.f32 0.0, %v2480
    %v2482 = vpop.f32.mrf.mxu0
    %2483 = vdwg.mxu0
    %v2484 = vadd.f32 %v2235, %v2442
    %v2485 = vadd.f32 %v2236, %v2455
    %v2486 = vadd.f32 %v2237, %v2468
    %v2487 = vadd.f32 %v2238, %v2481
    %v2488 = vxor.u32 %v2484, 2147483648
    %v2489 = vmul.f32 %v2488, 1.442695
    %v2490 = vpow.pop %v2489
    %v2491 = vadd.f32 %v2490, 1.0
    %v2492 = vrcp.pop %v2491
    %v2493 = vmul.f32 %v2491, %v2492
    %v2494 = vsub.f32 1.0, %v2493
    %v2495 = vmul.f32 %v2492, %v2494
    %v2496 = vadd.f32 %v2492, %v2495
    %vm2497 = vweird.f32 %v2491
    %vm2498 = vweird.f32 %v2492
    %vm2499 = vmor %vm2497, %vm2498
    %v2500 = vsel %vm2499, %v2492, %v2496
    %v2501 = vand.u32 2147483647, %v2491
    %vm2502 = vcmp.eq.f32.partialorder %v2501, 8.507059e+37
    %v2503 = vand.u32 %v2491, 2147483648
    %v2504 = vor.u32 1.1754944e-38, %v2503
    %v2505 = vsel %vm2502, %v2504, %v2500
    %v2506 = vmul.f32 1.0, %v2505
    %v2507 = vxor.u32 %v2485, 2147483648
    %v2508 = vmul.f32 %v2507, 1.442695
    %v2509 = vpow.pop %v2508
    %v2510 = vadd.f32 %v2509, 1.0
    %v2511 = vrcp.pop %v2510
    %v2512 = vmul.f32 %v2510, %v2511
    %v2513 = vsub.f32 1.0, %v2512
    %v2514 = vmul.f32 %v2511, %v2513
    %v2515 = vadd.f32 %v2511, %v2514
    %vm2516 = vweird.f32 %v2510
    %vm2517 = vweird.f32 %v2511
    %vm2518 = vmor %vm2516, %vm2517
    %v2519 = vsel %vm2518, %v2511, %v2515
    %v2520 = vand.u32 2147483647, %v2510
    %vm2521 = vcmp.eq.f32.partialorder %v2520, 8.507059e+37
    %v2522 = vand.u32 %v2510, 2147483648
    %v2523 = vor.u32 1.1754944e-38, %v2522
    %v2524 = vsel %vm2521, %v2523, %v2519
    %v2525 = vmul.f32 1.0, %v2524
    %v2526 = vtanh.pop %v2486
    %v2527 = vxor.u32 %v2487, 2147483648
    %v2528 = vmul.f32 %v2527, 1.442695
    %v2529 = vpow.pop %v2528
    %v2530 = vadd.f32 %v2529, 1.0
    %v2531 = vrcp.pop %v2530
    %v2532 = vmul.f32 %v2530, %v2531
    %v2533 = vsub.f32 1.0, %v2532
    %v2534 = vmul.f32 %v2531, %v2533
    %v2535 = vadd.f32 %v2531, %v2534
    %vm2536 = vweird.f32 %v2530
    %vm2537 = vweird.f32 %v2531
    %vm2538 = vmor %vm2536, %vm2537
    %v2539 = vsel %vm2538, %v2531, %v2535
    %v2540 = vand.u32 2147483647, %v2530
    %vm2541 = vcmp.eq.f32.partialorder %v2540, 8.507059e+37
    %v2542 = vand.u32 %v2530, 2147483648
    %v2543 = vor.u32 1.1754944e-38, %v2542
    %v2544 = vsel %vm2541, %v2543, %v2539
    %v2545 = vmul.f32 1.0, %v2544
    %v2546 = vmul.f32 %v2525, %v2231
    %v2547 = vmul.f32 %v2506, %v2526
    %v2548 = vadd.f32 %v2546, %v2547
    %v2549 = vtanh.pop %v2548
    %v2550 = vmul.f32 %v2545, %v2549
    %2551 = vst [vmem:[#allocation3 + $0x28] sm:$0xff] %v2550
    %v2552 = vld [vmem:[#allocation4 + $0xc0] sm:$0xff]
    %v2553 = vld [vmem:[#allocation4 + $0xc8] sm:$0xff]
    %v2554 = vld [vmem:[#allocation4 + $0xd0] sm:$0xff]
    %v2555 = vld [vmem:[#allocation4 + $0xd8] sm:$0xff]
    %v2556 = vpack.c.bf16 %v2550, %v2550
    %v2557 = vld [vmem:[#allocation13] sm:$0xff]
    %v2558 = vld [vmem:[#allocation13 + $0x8] sm:$0xff]
    %v2559 = vld [vmem:[#allocation13 + $0x10] sm:$0xff]
    %v2560 = vld [vmem:[#allocation13 + $0x18] sm:$0xff]
    %v2561 = vld [vmem:[#allocation13 + $0x20] sm:$0xff]
    %v2562 = vld [vmem:[#allocation13 + $0x28] sm:$0xff]
    %v2563 = vld [vmem:[#allocation13 + $0x30] sm:$0xff]
    %v2564 = vld [vmem:[#allocation13 + $0x38] sm:$0xff]
    %v2565 = vld [vmem:[#allocation13 + $0x40] sm:$0xff]
    %v2566 = vld [vmem:[#allocation13 + $0x48] sm:$0xff]
    %v2567 = vld [vmem:[#allocation13 + $0x50] sm:$0xff]
    %v2568 = vld [vmem:[#allocation13 + $0x58] sm:$0xff]
    %v2569 = vld [vmem:[#allocation13 + $0x60] sm:$0xff]
    %v2570 = vld [vmem:[#allocation13 + $0x68] sm:$0xff]
    %v2571 = vld [vmem:[#allocation13 + $0x70] sm:$0xff]
    %v2572 = vld [vmem:[#allocation13 + $0x78] sm:$0xff]
    %v2573 = vld [vmem:[#allocation13 + $0x80] sm:$0xff]
    %v2574 = vld [vmem:[#allocation13 + $0x88] sm:$0xff]
    %v2575 = vld [vmem:[#allocation13 + $0x90] sm:$0xff]
    %v2576 = vld [vmem:[#allocation13 + $0x98] sm:$0xff]
    %v2577 = vld [vmem:[#allocation13 + $0xa0] sm:$0xff]
    %v2578 = vld [vmem:[#allocation13 + $0xa8] sm:$0xff]
    %v2579 = vld [vmem:[#allocation13 + $0xb0] sm:$0xff]
    %v2580 = vld [vmem:[#allocation13 + $0xb8] sm:$0xff]
    %v2581 = vld [vmem:[#allocation13 + $0xc0] sm:$0xff]
    %v2582 = vld [vmem:[#allocation13 + $0xc8] sm:$0xff]
    %v2583 = vld [vmem:[#allocation13 + $0xd0] sm:$0xff]
    %v2584 = vld [vmem:[#allocation13 + $0xd8] sm:$0xff]
    %v2585 = vld [vmem:[#allocation13 + $0xe0] sm:$0xff]
    %v2586 = vld [vmem:[#allocation13 + $0xe8] sm:$0xff]
    %v2587 = vld [vmem:[#allocation13 + $0xf0] sm:$0xff]
    %v2588 = vld [vmem:[#allocation13 + $0xf8] sm:$0xff]
    %v2621 = vunpack.c.l.b16 %v2557
    %v2622 = vunpack.c.h.b16 %v2557
    %v2623 = vunpack.c.l.b16 %v2558
    %v2624 = vunpack.c.h.b16 %v2558
    %v2625 = vunpack.c.l.b16 %v2559
    %v2626 = vunpack.c.h.b16 %v2559
    %v2627 = vunpack.c.l.b16 %v2560
    %v2628 = vunpack.c.h.b16 %v2560
    %v2629 = vunpack.c.l.b16 %v2561
    %v2630 = vunpack.c.h.b16 %v2561
    %v2631 = vunpack.c.l.b16 %v2562
    %v2632 = vunpack.c.h.b16 %v2562
    %v2633 = vunpack.c.l.b16 %v2563
    %v2634 = vunpack.c.h.b16 %v2563
    %v2635 = vunpack.c.l.b16 %v2564
    %v2636 = vunpack.c.h.b16 %v2564
    %v2637 = vunpack.c.l.b16 %v2565
    %v2638 = vunpack.c.h.b16 %v2565
    %v2639 = vunpack.c.l.b16 %v2566
    %v2640 = vunpack.c.h.b16 %v2566
    %v2641 = vunpack.c.l.b16 %v2567
    %v2642 = vunpack.c.h.b16 %v2567
    %v2643 = vunpack.c.l.b16 %v2568
    %v2644 = vunpack.c.h.b16 %v2568
    %v2645 = vunpack.c.l.b16 %v2569
    %v2646 = vunpack.c.h.b16 %v2569
    %v2647 = vunpack.c.l.b16 %v2570
    %v2648 = vunpack.c.h.b16 %v2570
    %v2649 = vunpack.c.l.b16 %v2571
    %v2650 = vunpack.c.h.b16 %v2571
    %v2651 = vunpack.c.l.b16 %v2572
    %v2652 = vunpack.c.h.b16 %v2572
    %v2653 = vunpack.c.l.b16 %v2573
    %v2654 = vunpack.c.h.b16 %v2573
    %v2655 = vunpack.c.l.b16 %v2574
    %v2656 = vunpack.c.h.b16 %v2574
    %v2657 = vunpack.c.l.b16 %v2575
    %v2658 = vunpack.c.h.b16 %v2575
    %v2659 = vunpack.c.l.b16 %v2576
    %v2660 = vunpack.c.h.b16 %v2576
    %v2661 = vunpack.c.l.b16 %v2577
    %v2662 = vunpack.c.h.b16 %v2577
    %v2663 = vunpack.c.l.b16 %v2578
    %v2664 = vunpack.c.h.b16 %v2578
    %v2665 = vunpack.c.l.b16 %v2579
    %v2666 = vunpack.c.h.b16 %v2579
    %v2667 = vunpack.c.l.b16 %v2580
    %v2668 = vunpack.c.h.b16 %v2580
    %v2669 = vunpack.c.l.b16 %v2581
    %v2670 = vunpack.c.h.b16 %v2581
    %v2671 = vunpack.c.l.b16 %v2582
    %v2672 = vunpack.c.h.b16 %v2582
    %v2673 = vunpack.c.l.b16 %v2583
    %v2674 = vunpack.c.h.b16 %v2583
    %v2675 = vunpack.c.l.b16 %v2584
    %v2676 = vunpack.c.h.b16 %v2584
    %v2677 = vunpack.c.l.b16 %v2585
    %v2678 = vunpack.c.h.b16 %v2585
    %v2679 = vunpack.c.l.b16 %v2586
    %v2680 = vunpack.c.h.b16 %v2586
    %v2681 = vunpack.c.l.b16 %v2587
    %v2682 = vunpack.c.h.b16 %v2587
    %v2683 = vunpack.c.l.b16 %v2588
    %v2684 = vunpack.c.h.b16 %v2588
    %v2685 = vpack.c.b16 %v2625, %v2621
    %v2686 = vpack.c.b16 %v2626, %v2622
    %v2687 = vpack.c.b16 %v2627, %v2623
    %v2688 = vpack.c.b16 %v2628, %v2624
    %v2689 = vpack.c.b16 %v2633, %v2629
    %v2690 = vpack.c.b16 %v2634, %v2630
    %v2691 = vpack.c.b16 %v2635, %v2631
    %v2692 = vpack.c.b16 %v2636, %v2632
    %v2693 = vpack.c.b16 %v2641, %v2637
    %v2694 = vpack.c.b16 %v2642, %v2638
    %v2695 = vpack.c.b16 %v2643, %v2639
    %v2696 = vpack.c.b16 %v2644, %v2640
    %v2697 = vpack.c.b16 %v2649, %v2645
    %v2698 = vpack.c.b16 %v2650, %v2646
    %v2699 = vpack.c.b16 %v2651, %v2647
    %v2700 = vpack.c.b16 %v2652, %v2648
    %v2701 = vpack.c.b16 %v2657, %v2653
    %v2702 = vpack.c.b16 %v2658, %v2654
    %v2703 = vpack.c.b16 %v2659, %v2655
    %v2704 = vpack.c.b16 %v2660, %v2656
    %v2705 = vpack.c.b16 %v2665, %v2661
    %v2706 = vpack.c.b16 %v2666, %v2662
    %v2707 = vpack.c.b16 %v2667, %v2663
    %v2708 = vpack.c.b16 %v2668, %v2664
    %v2709 = vpack.c.b16 %v2673, %v2669
    %v2710 = vpack.c.b16 %v2674, %v2670
    %v2711 = vpack.c.b16 %v2675, %v2671
    %v2712 = vpack.c.b16 %v2676, %v2672
    %v2713 = vpack.c.b16 %v2681, %v2677
    %v2714 = vpack.c.b16 %v2682, %v2678
    %v2715 = vpack.c.b16 %v2683, %v2679
    %v2716 = vpack.c.b16 %v2684, %v2680
    %2749 = vmatpush.bf16.msra.mxu0 %v2713
    %2750 = vmatpush.bf16.msra.mxu0 %v2709
    %2751 = vmatpush.bf16.msra.mxu0 %v2705
    %2752 = vmatpush.bf16.msra.mxu0 %v2701
    %2753 = vmatpush.bf16.msra.mxu0 %v2697
    %2754 = vmatpush.bf16.msra.mxu0 %v2693
    %2755 = vmatpush.bf16.msra.mxu0 %v2689
    %2756 = vmatpush.bf16.msra.mxu0 %v2685
    %2757 = vmatmul.bf16.gmra.mxu0 %v2556
    %v2758 = vpop.f32.mrf.mxu0
    %v2759 = vadd.f32 0.0, %v2758
    %v2760 = vpop.f32.mrf.mxu0
    %2761 = vdwg.mxu0
    %2762 = vmatpush.bf16.msra.mxu0 %v2714
    %2763 = vmatpush.bf16.msra.mxu0 %v2710
    %2764 = vmatpush.bf16.msra.mxu0 %v2706
    %2765 = vmatpush.bf16.msra.mxu0 %v2702
    %2766 = vmatpush.bf16.msra.mxu0 %v2698
    %2767 = vmatpush.bf16.msra.mxu0 %v2694
    %2768 = vmatpush.bf16.msra.mxu0 %v2690
    %2769 = vmatpush.bf16.msra.mxu0 %v2686
    %2770 = vmatmul.bf16.gmra.mxu0 %v2556
    %v2771 = vpop.f32.mrf.mxu0
    %v2772 = vadd.f32 0.0, %v2771
    %v2773 = vpop.f32.mrf.mxu0
    %2774 = vdwg.mxu0
    %2775 = vmatpush.bf16.msra.mxu0 %v2715
    %2776 = vmatpush.bf16.msra.mxu0 %v2711
    %2777 = vmatpush.bf16.msra.mxu0 %v2707
    %2778 = vmatpush.bf16.msra.mxu0 %v2703
    %2779 = vmatpush.bf16.msra.mxu0 %v2699
    %2780 = vmatpush.bf16.msra.mxu0 %v2695
    %2781 = vmatpush.bf16.msra.mxu0 %v2691
    %2782 = vmatpush.bf16.msra.mxu0 %v2687
    %2783 = vmatmul.bf16.gmra.mxu0 %v2556
    %v2784 = vpop.f32.mrf.mxu0
    %v2785 = vadd.f32 0.0, %v2784
    %v2786 = vpop.f32.mrf.mxu0
    %2787 = vdwg.mxu0
    %2788 = vmatpush.bf16.msra.mxu0 %v2716
    %2789 = vmatpush.bf16.msra.mxu0 %v2712
    %2790 = vmatpush.bf16.msra.mxu0 %v2708
    %2791 = vmatpush.bf16.msra.mxu0 %v2704
    %2792 = vmatpush.bf16.msra.mxu0 %v2700
    %2793 = vmatpush.bf16.msra.mxu0 %v2696
    %2794 = vmatpush.bf16.msra.mxu0 %v2692
    %2795 = vmatpush.bf16.msra.mxu0 %v2688
    %2796 = vmatmul.bf16.gmra.mxu0 %v2556
    %v2797 = vpop.f32.mrf.mxu0
    %v2798 = vadd.f32 0.0, %v2797
    %v2799 = vpop.f32.mrf.mxu0
    %2800 = vdwg.mxu0
    %v2801 = vadd.f32 %v2552, %v2759
    %v2802 = vadd.f32 %v2553, %v2772
    %v2803 = vadd.f32 %v2554, %v2785
    %v2804 = vadd.f32 %v2555, %v2798
    %v2805 = vxor.u32 %v2801, 2147483648
    %v2806 = vmul.f32 %v2805, 1.442695
    %v2807 = vpow.pop %v2806
    %v2808 = vadd.f32 %v2807, 1.0
    %v2809 = vrcp.pop %v2808
    %v2810 = vmul.f32 %v2808, %v2809
    %v2811 = vsub.f32 1.0, %v2810
    %v2812 = vmul.f32 %v2809, %v2811
    %v2813 = vadd.f32 %v2809, %v2812
    %vm2814 = vweird.f32 %v2808
    %vm2815 = vweird.f32 %v2809
    %vm2816 = vmor %vm2814, %vm2815
    %v2817 = vsel %vm2816, %v2809, %v2813
    %v2818 = vand.u32 2147483647, %v2808
    %vm2819 = vcmp.eq.f32.partialorder %v2818, 8.507059e+37
    %v2820 = vand.u32 %v2808, 2147483648
    %v2821 = vor.u32 1.1754944e-38, %v2820
    %v2822 = vsel %vm2819, %v2821, %v2817
    %v2823 = vmul.f32 1.0, %v2822
    %v2824 = vxor.u32 %v2802, 2147483648
    %v2825 = vmul.f32 %v2824, 1.442695
    %v2826 = vpow.pop %v2825
    %v2827 = vadd.f32 %v2826, 1.0
    %v2828 = vrcp.pop %v2827
    %v2829 = vmul.f32 %v2827, %v2828
    %v2830 = vsub.f32 1.0, %v2829
    %v2831 = vmul.f32 %v2828, %v2830
    %v2832 = vadd.f32 %v2828, %v2831
    %vm2833 = vweird.f32 %v2827
    %vm2834 = vweird.f32 %v2828
    %vm2835 = vmor %vm2833, %vm2834
    %v2836 = vsel %vm2835, %v2828, %v2832
    %v2837 = vand.u32 2147483647, %v2827
    %vm2838 = vcmp.eq.f32.partialorder %v2837, 8.507059e+37
    %v2839 = vand.u32 %v2827, 2147483648
    %v2840 = vor.u32 1.1754944e-38, %v2839
    %v2841 = vsel %vm2838, %v2840, %v2836
    %v2842 = vmul.f32 1.0, %v2841
    %v2843 = vtanh.pop %v2803
    %v2844 = vxor.u32 %v2804, 2147483648
    %v2845 = vmul.f32 %v2844, 1.442695
    %v2846 = vpow.pop %v2845
    %v2847 = vadd.f32 %v2846, 1.0
    %v2848 = vrcp.pop %v2847
    %v2849 = vmul.f32 %v2847, %v2848
    %v2850 = vsub.f32 1.0, %v2849
    %v2851 = vmul.f32 %v2848, %v2850
    %v2852 = vadd.f32 %v2848, %v2851
    %vm2853 = vweird.f32 %v2847
    %vm2854 = vweird.f32 %v2848
    %vm2855 = vmor %vm2853, %vm2854
    %v2856 = vsel %vm2855, %v2848, %v2852
    %v2857 = vand.u32 2147483647, %v2847
    %vm2858 = vcmp.eq.f32.partialorder %v2857, 8.507059e+37
    %v2859 = vand.u32 %v2847, 2147483648
    %v2860 = vor.u32 1.1754944e-38, %v2859
    %v2861 = vsel %vm2858, %v2860, %v2856
    %v2862 = vmul.f32 1.0, %v2861
    %v2863 = vmul.f32 %v2842, %v2548
    %v2864 = vmul.f32 %v2823, %v2843
    %v2865 = vadd.f32 %v2863, %v2864
    %v2866 = vtanh.pop %v2865
    %v2867 = vmul.f32 %v2862, %v2866
    %2868 = vst [vmem:[#allocation3 + $0x30] sm:$0xff] %v2867
    %v2869 = vld [vmem:[#allocation4 + $0xe0] sm:$0xff]
    %v2870 = vld [vmem:[#allocation4 + $0xe8] sm:$0xff]
    %v2871 = vld [vmem:[#allocation4 + $0xf0] sm:$0xff]
    %v2872 = vld [vmem:[#allocation4 + $0xf8] sm:$0xff]
    %v2873 = vpack.c.bf16 %v2867, %v2867
    %v2874 = vld [vmem:[#allocation13] sm:$0xff]
    %v2875 = vld [vmem:[#allocation13 + $0x8] sm:$0xff]
    %v2876 = vld [vmem:[#allocation13 + $0x10] sm:$0xff]
    %v2877 = vld [vmem:[#allocation13 + $0x18] sm:$0xff]
    %v2878 = vld [vmem:[#allocation13 + $0x20] sm:$0xff]
    %v2879 = vld [vmem:[#allocation13 + $0x28] sm:$0xff]
    %v2880 = vld [vmem:[#allocation13 + $0x30] sm:$0xff]
    %v2881 = vld [vmem:[#allocation13 + $0x38] sm:$0xff]
    %v2882 = vld [vmem:[#allocation13 + $0x40] sm:$0xff]
    %v2883 = vld [vmem:[#allocation13 + $0x48] sm:$0xff]
    %v2884 = vld [vmem:[#allocation13 + $0x50] sm:$0xff]
    %v2885 = vld [vmem:[#allocation13 + $0x58] sm:$0xff]
    %v2886 = vld [vmem:[#allocation13 + $0x60] sm:$0xff]
    %v2887 = vld [vmem:[#allocation13 + $0x68] sm:$0xff]
    %v2888 = vld [vmem:[#allocation13 + $0x70] sm:$0xff]
    %v2889 = vld [vmem:[#allocation13 + $0x78] sm:$0xff]
    %v2890 = vld [vmem:[#allocation13 + $0x80] sm:$0xff]
    %v2891 = vld [vmem:[#allocation13 + $0x88] sm:$0xff]
    %v2892 = vld [vmem:[#allocation13 + $0x90] sm:$0xff]
    %v2893 = vld [vmem:[#allocation13 + $0x98] sm:$0xff]
    %v2894 = vld [vmem:[#allocation13 + $0xa0] sm:$0xff]
    %v2895 = vld [vmem:[#allocation13 + $0xa8] sm:$0xff]
    %v2896 = vld [vmem:[#allocation13 + $0xb0] sm:$0xff]
    %v2897 = vld [vmem:[#allocation13 + $0xb8] sm:$0xff]
    %v2898 = vld [vmem:[#allocation13 + $0xc0] sm:$0xff]
    %v2899 = vld [vmem:[#allocation13 + $0xc8] sm:$0xff]
    %v2900 = vld [vmem:[#allocation13 + $0xd0] sm:$0xff]
    %v2901 = vld [vmem:[#allocation13 + $0xd8] sm:$0xff]
    %v2902 = vld [vmem:[#allocation13 + $0xe0] sm:$0xff]
    %v2903 = vld [vmem:[#allocation13 + $0xe8] sm:$0xff]
    %v2904 = vld [vmem:[#allocation13 + $0xf0] sm:$0xff]
    %v2905 = vld [vmem:[#allocation13 + $0xf8] sm:$0xff]
    %v2938 = vunpack.c.l.b16 %v2874
    %v2939 = vunpack.c.h.b16 %v2874
    %v2940 = vunpack.c.l.b16 %v2875
    %v2941 = vunpack.c.h.b16 %v2875
    %v2942 = vunpack.c.l.b16 %v2876
    %v2943 = vunpack.c.h.b16 %v2876
    %v2944 = vunpack.c.l.b16 %v2877
    %v2945 = vunpack.c.h.b16 %v2877
    %v2946 = vunpack.c.l.b16 %v2878
    %v2947 = vunpack.c.h.b16 %v2878
    %v2948 = vunpack.c.l.b16 %v2879
    %v2949 = vunpack.c.h.b16 %v2879
    %v2950 = vunpack.c.l.b16 %v2880
    %v2951 = vunpack.c.h.b16 %v2880
    %v2952 = vunpack.c.l.b16 %v2881
    %v2953 = vunpack.c.h.b16 %v2881
    %v2954 = vunpack.c.l.b16 %v2882
    %v2955 = vunpack.c.h.b16 %v2882
    %v2956 = vunpack.c.l.b16 %v2883
    %v2957 = vunpack.c.h.b16 %v2883
    %v2958 = vunpack.c.l.b16 %v2884
    %v2959 = vunpack.c.h.b16 %v2884
    %v2960 = vunpack.c.l.b16 %v2885
    %v2961 = vunpack.c.h.b16 %v2885
    %v2962 = vunpack.c.l.b16 %v2886
    %v2963 = vunpack.c.h.b16 %v2886
    %v2964 = vunpack.c.l.b16 %v2887
    %v2965 = vunpack.c.h.b16 %v2887
    %v2966 = vunpack.c.l.b16 %v2888
    %v2967 = vunpack.c.h.b16 %v2888
    %v2968 = vunpack.c.l.b16 %v2889
    %v2969 = vunpack.c.h.b16 %v2889
    %v2970 = vunpack.c.l.b16 %v2890
    %v2971 = vunpack.c.h.b16 %v2890
    %v2972 = vunpack.c.l.b16 %v2891
    %v2973 = vunpack.c.h.b16 %v2891
    %v2974 = vunpack.c.l.b16 %v2892
    %v2975 = vunpack.c.h.b16 %v2892
    %v2976 = vunpack.c.l.b16 %v2893
    %v2977 = vunpack.c.h.b16 %v2893
    %v2978 = vunpack.c.l.b16 %v2894
    %v2979 = vunpack.c.h.b16 %v2894
    %v2980 = vunpack.c.l.b16 %v2895
    %v2981 = vunpack.c.h.b16 %v2895
    %v2982 = vunpack.c.l.b16 %v2896
    %v2983 = vunpack.c.h.b16 %v2896
    %v2984 = vunpack.c.l.b16 %v2897
    %v2985 = vunpack.c.h.b16 %v2897
    %v2986 = vunpack.c.l.b16 %v2898
    %v2987 = vunpack.c.h.b16 %v2898
    %v2988 = vunpack.c.l.b16 %v2899
    %v2989 = vunpack.c.h.b16 %v2899
    %v2990 = vunpack.c.l.b16 %v2900
    %v2991 = vunpack.c.h.b16 %v2900
    %v2992 = vunpack.c.l.b16 %v2901
    %v2993 = vunpack.c.h.b16 %v2901
    %v2994 = vunpack.c.l.b16 %v2902
    %v2995 = vunpack.c.h.b16 %v2902
    %v2996 = vunpack.c.l.b16 %v2903
    %v2997 = vunpack.c.h.b16 %v2903
    %v2998 = vunpack.c.l.b16 %v2904
    %v2999 = vunpack.c.h.b16 %v2904
    %v3000 = vunpack.c.l.b16 %v2905
    %v3001 = vunpack.c.h.b16 %v2905
    %v3002 = vpack.c.b16 %v2942, %v2938
    %v3003 = vpack.c.b16 %v2943, %v2939
    %v3004 = vpack.c.b16 %v2944, %v2940
    %v3005 = vpack.c.b16 %v2945, %v2941
    %v3006 = vpack.c.b16 %v2950, %v2946
    %v3007 = vpack.c.b16 %v2951, %v2947
    %v3008 = vpack.c.b16 %v2952, %v2948
    %v3009 = vpack.c.b16 %v2953, %v2949
    %v3010 = vpack.c.b16 %v2958, %v2954
    %v3011 = vpack.c.b16 %v2959, %v2955
    %v3012 = vpack.c.b16 %v2960, %v2956
    %v3013 = vpack.c.b16 %v2961, %v2957
    %v3014 = vpack.c.b16 %v2966, %v2962
    %v3015 = vpack.c.b16 %v2967, %v2963
    %v3016 = vpack.c.b16 %v2968, %v2964
    %v3017 = vpack.c.b16 %v2969, %v2965
    %v3018 = vpack.c.b16 %v2974, %v2970
    %v3019 = vpack.c.b16 %v2975, %v2971
    %v3020 = vpack.c.b16 %v2976, %v2972
    %v3021 = vpack.c.b16 %v2977, %v2973
    %v3022 = vpack.c.b16 %v2982, %v2978
    %v3023 = vpack.c.b16 %v2983, %v2979
    %v3024 = vpack.c.b16 %v2984, %v2980
    %v3025 = vpack.c.b16 %v2985, %v2981
    %v3026 = vpack.c.b16 %v2990, %v2986
    %v3027 = vpack.c.b16 %v2991, %v2987
    %v3028 = vpack.c.b16 %v2992, %v2988
    %v3029 = vpack.c.b16 %v2993, %v2989
    %v3030 = vpack.c.b16 %v2998, %v2994
    %v3031 = vpack.c.b16 %v2999, %v2995
    %v3032 = vpack.c.b16 %v3000, %v2996
    %v3033 = vpack.c.b16 %v3001, %v2997
    %3066 = vmatpush.bf16.msra.mxu0 %v3030
    %3067 = vmatpush.bf16.msra.mxu0 %v3026
    %3068 = vmatpush.bf16.msra.mxu0 %v3022
    %3069 = vmatpush.bf16.msra.mxu0 %v3018
    %3070 = vmatpush.bf16.msra.mxu0 %v3014
    %3071 = vmatpush.bf16.msra.mxu0 %v3010
    %3072 = vmatpush.bf16.msra.mxu0 %v3006
    %3073 = vmatpush.bf16.msra.mxu0 %v3002
    %3074 = vmatmul.bf16.gmra.mxu0 %v2873
    %v3075 = vpop.f32.mrf.mxu0
    %v3076 = vadd.f32 0.0, %v3075
    %v3077 = vpop.f32.mrf.mxu0
    %3078 = vdwg.mxu0
    %3079 = vmatpush.bf16.msra.mxu0 %v3031
    %3080 = vmatpush.bf16.msra.mxu0 %v3027
    %3081 = vmatpush.bf16.msra.mxu0 %v3023
    %3082 = vmatpush.bf16.msra.mxu0 %v3019
    %3083 = vmatpush.bf16.msra.mxu0 %v3015
    %3084 = vmatpush.bf16.msra.mxu0 %v3011
    %3085 = vmatpush.bf16.msra.mxu0 %v3007
    %3086 = vmatpush.bf16.msra.mxu0 %v3003
    %3087 = vmatmul.bf16.gmra.mxu0 %v2873
    %v3088 = vpop.f32.mrf.mxu0
    %v3089 = vadd.f32 0.0, %v3088
    %v3090 = vpop.f32.mrf.mxu0
    %3091 = vdwg.mxu0
    %3092 = vmatpush.bf16.msra.mxu0 %v3032
    %3093 = vmatpush.bf16.msra.mxu0 %v3028
    %3094 = vmatpush.bf16.msra.mxu0 %v3024
    %3095 = vmatpush.bf16.msra.mxu0 %v3020
    %3096 = vmatpush.bf16.msra.mxu0 %v3016
    %3097 = vmatpush.bf16.msra.mxu0 %v3012
    %3098 = vmatpush.bf16.msra.mxu0 %v3008
    %3099 = vmatpush.bf16.msra.mxu0 %v3004
    %3100 = vmatmul.bf16.gmra.mxu0 %v2873
    %v3101 = vpop.f32.mrf.mxu0
    %v3102 = vadd.f32 0.0, %v3101
    %v3103 = vpop.f32.mrf.mxu0
    %3104 = vdwg.mxu0
    %3105 = vmatpush.bf16.msra.mxu0 %v3033
    %3106 = vmatpush.bf16.msra.mxu0 %v3029
    %3107 = vmatpush.bf16.msra.mxu0 %v3025
    %3108 = vmatpush.bf16.msra.mxu0 %v3021
    %3109 = vmatpush.bf16.msra.mxu0 %v3017
    %3110 = vmatpush.bf16.msra.mxu0 %v3013
    %3111 = vmatpush.bf16.msra.mxu0 %v3009
    %3112 = vmatpush.bf16.msra.mxu0 %v3005
    %3113 = vmatmul.bf16.gmra.mxu0 %v2873
    %v3114 = vpop.f32.mrf.mxu0
    %v3115 = vadd.f32 0.0, %v3114
    %v3116 = vpop.f32.mrf.mxu0
    %3117 = vdwg.mxu0
    %v3118 = vadd.f32 %v2869, %v3076
    %v3119 = vadd.f32 %v2870, %v3089
    %v3120 = vadd.f32 %v2871, %v3102
    %v3121 = vadd.f32 %v2872, %v3115
    %v3122 = vxor.u32 %v3118, 2147483648
    %v3123 = vmul.f32 %v3122, 1.442695
    %v3124 = vpow.pop %v3123
    %v3125 = vadd.f32 %v3124, 1.0
    %v3126 = vrcp.pop %v3125
    %v3127 = vmul.f32 %v3125, %v3126
    %v3128 = vsub.f32 1.0, %v3127
    %v3129 = vmul.f32 %v3126, %v3128
    %v3130 = vadd.f32 %v3126, %v3129
    %vm3131 = vweird.f32 %v3125
    %vm3132 = vweird.f32 %v3126
    %vm3133 = vmor %vm3131, %vm3132
    %v3134 = vsel %vm3133, %v3126, %v3130
    %v3135 = vand.u32 2147483647, %v3125
    %vm3136 = vcmp.eq.f32.partialorder %v3135, 8.507059e+37
    %v3137 = vand.u32 %v3125, 2147483648
    %v3138 = vor.u32 1.1754944e-38, %v3137
    %v3139 = vsel %vm3136, %v3138, %v3134
    %v3140 = vmul.f32 1.0, %v3139
    %v3141 = vxor.u32 %v3119, 2147483648
    %v3142 = vmul.f32 %v3141, 1.442695
    %v3143 = vpow.pop %v3142
    %v3144 = vadd.f32 %v3143, 1.0
    %v3145 = vrcp.pop %v3144
    %v3146 = vmul.f32 %v3144, %v3145
    %v3147 = vsub.f32 1.0, %v3146
    %v3148 = vmul.f32 %v3145, %v3147
    %v3149 = vadd.f32 %v3145, %v3148
    %vm3150 = vweird.f32 %v3144
    %vm3151 = vweird.f32 %v3145
    %vm3152 = vmor %vm3150, %vm3151
    %v3153 = vsel %vm3152, %v3145, %v3149
    %v3154 = vand.u32 2147483647, %v3144
    %vm3155 = vcmp.eq.f32.partialorder %v3154, 8.507059e+37
    %v3156 = vand.u32 %v3144, 2147483648
    %v3157 = vor.u32 1.1754944e-38, %v3156
    %v3158 = vsel %vm3155, %v3157, %v3153
    %v3159 = vmul.f32 1.0, %v3158
    %v3160 = vtanh.pop %v3120
    %v3161 = vxor.u32 %v3121, 2147483648
    %v3162 = vmul.f32 %v3161, 1.442695
    %v3163 = vpow.pop %v3162
    %v3164 = vadd.f32 %v3163, 1.0
    %v3165 = vrcp.pop %v3164
    %v3166 = vmul.f32 %v3164, %v3165
    %v3167 = vsub.f32 1.0, %v3166
    %v3168 = vmul.f32 %v3165, %v3167
    %v3169 = vadd.f32 %v3165, %v3168
    %vm3170 = vweird.f32 %v3164
    %vm3171 = vweird.f32 %v3165
    %vm3172 = vmor %vm3170, %vm3171
    %v3173 = vsel %vm3172, %v3165, %v3169
    %v3174 = vand.u32 2147483647, %v3164
    %vm3175 = vcmp.eq.f32.partialorder %v3174, 8.507059e+37
    %v3176 = vand.u32 %v3164, 2147483648
    %v3177 = vor.u32 1.1754944e-38, %v3176
    %v3178 = vsel %vm3175, %v3177, %v3173
    %v3179 = vmul.f32 1.0, %v3178
    %v3180 = vmul.f32 %v3159, %v2865
    %v3181 = vmul.f32 %v3140, %v3160
    %v3182 = vadd.f32 %v3180, %v3181
    %v3183 = vtanh.pop %v3182
    %v3184 = vmul.f32 %v3179, %v3183
    %3185 = vst [vmem:[#allocation3 + $0x38] sm:$0xff] %v3184
    %v3186 = vld [vmem:[#allocation3] sm:$0xff]
    %v3187 = vld [vmem:[#allocation3 + $0x8] sm:$0xff]
    %v3188 = vld [vmem:[#allocation3 + $0x10] sm:$0xff]
    %v3189 = vld [vmem:[#allocation3 + $0x18] sm:$0xff]
    %v3190 = vld [vmem:[#allocation3 + $0x20] sm:$0xff]
    %v3191 = vld [vmem:[#allocation3 + $0x28] sm:$0xff]
    %v3192 = vld [vmem:[#allocation3 + $0x30] sm:$0xff]
    %v3193 = vld [vmem:[#allocation3 + $0x38] sm:$0xff]
    %v3194 = vpack.c.bf16 %v3187, %v3186
    %v3195 = vpack.c.bf16 %v3189, %v3188
    %v3196 = vpack.c.bf16 %v3191, %v3190
    %v3197 = vpack.c.bf16 %v3193, %v3192
    %v3198 = vld [vmem:[#allocation15] sm:$0xff]
    %v3199 = vld [vmem:[#allocation15 + $0x8] sm:$0xff]
    %v3200 = vld [vmem:[#allocation15 + $0x10] sm:$0xff]
    %v3201 = vld [vmem:[#allocation15 + $0x18] sm:$0xff]
    %v3202 = vld [vmem:[#allocation15 + $0x20] sm:$0xff]
    %v3203 = vld [vmem:[#allocation15 + $0x28] sm:$0xff]
    %v3204 = vld [vmem:[#allocation15 + $0x30] sm:$0xff]
    %v3205 = vld [vmem:[#allocation15 + $0x38] sm:$0xff]
    %v3206 = vld [vmem:[#allocation15 + $0x40] sm:$0xff]
    %v3207 = vld [vmem:[#allocation15 + $0x48] sm:$0xff]
    %v3208 = vld [vmem:[#allocation15 + $0x50] sm:$0xff]
    %v3209 = vld [vmem:[#allocation15 + $0x58] sm:$0xff]
    %v3210 = vld [vmem:[#allocation15 + $0x60] sm:$0xff]
    %v3211 = vld [vmem:[#allocation15 + $0x68] sm:$0xff]
    %v3212 = vld [vmem:[#allocation15 + $0x70] sm:$0xff]
    %v3213 = vld [vmem:[#allocation15 + $0x78] sm:$0xff]
    %v3214 = vld [vmem:[#allocation15 + $0x80] sm:$0xff]
    %v3215 = vld [vmem:[#allocation15 + $0x88] sm:$0xff]
    %v3216 = vld [vmem:[#allocation15 + $0x90] sm:$0xff]
    %v3217 = vld [vmem:[#allocation15 + $0x98] sm:$0xff]
    %v3218 = vld [vmem:[#allocation15 + $0xa0] sm:$0xff]
    %v3219 = vld [vmem:[#allocation15 + $0xa8] sm:$0xff]
    %v3220 = vld [vmem:[#allocation15 + $0xb0] sm:$0xff]
    %v3221 = vld [vmem:[#allocation15 + $0xb8] sm:$0xff]
    %v3222 = vld [vmem:[#allocation15 + $0xc0] sm:$0xff]
    %v3223 = vld [vmem:[#allocation15 + $0xc8] sm:$0xff]
    %v3224 = vld [vmem:[#allocation15 + $0xd0] sm:$0xff]
    %v3225 = vld [vmem:[#allocation15 + $0xd8] sm:$0xff]
    %v3226 = vld [vmem:[#allocation15 + $0xe0] sm:$0xff]
    %v3227 = vld [vmem:[#allocation15 + $0xe8] sm:$0xff]
    %v3228 = vld [vmem:[#allocation15 + $0xf0] sm:$0xff]
    %v3229 = vld [vmem:[#allocation15 + $0xf8] sm:$0xff]
    %v3230 = vld [vmem:[#allocation18] sm:$0xf]
    %v3232 = vperm.slane %v3230, 0
    %v3233 = vperm.slane %v3230, 1
    %v3234 = vperm.slane %v3230, 2
    %v3235 = vperm.slane %v3230, 3
    %v3272 = vunpack.c.l.b16 %v3198
    %v3273 = vunpack.c.h.b16 %v3198
    %v3274 = vunpack.c.l.b16 %v3199
    %v3275 = vunpack.c.h.b16 %v3199
    %v3276 = vunpack.c.l.b16 %v3200
    %v3277 = vunpack.c.h.b16 %v3200
    %v3278 = vunpack.c.l.b16 %v3201
    %v3279 = vunpack.c.h.b16 %v3201
    %v3280 = vunpack.c.l.b16 %v3202
    %v3281 = vunpack.c.h.b16 %v3202
    %v3282 = vunpack.c.l.b16 %v3203
    %v3283 = vunpack.c.h.b16 %v3203
    %v3284 = vunpack.c.l.b16 %v3204
    %v3285 = vunpack.c.h.b16 %v3204
    %v3286 = vunpack.c.l.b16 %v3205
    %v3287 = vunpack.c.h.b16 %v3205
    %v3288 = vunpack.c.l.b16 %v3206
    %v3289 = vunpack.c.h.b16 %v3206
    %v3290 = vunpack.c.l.b16 %v3207
    %v3291 = vunpack.c.h.b16 %v3207
    %v3292 = vunpack.c.l.b16 %v3208
    %v3293 = vunpack.c.h.b16 %v3208
    %v3294 = vunpack.c.l.b16 %v3209
    %v3295 = vunpack.c.h.b16 %v3209
    %v3296 = vunpack.c.l.b16 %v3210
    %v3297 = vunpack.c.h.b16 %v3210
    %v3298 = vunpack.c.l.b16 %v3211
    %v3299 = vunpack.c.h.b16 %v3211
    %v3300 = vunpack.c.l.b16 %v3212
    %v3301 = vunpack.c.h.b16 %v3212
    %v3302 = vunpack.c.l.b16 %v3213
    %v3303 = vunpack.c.h.b16 %v3213
    %v3304 = vunpack.c.l.b16 %v3214
    %v3305 = vunpack.c.h.b16 %v3214
    %v3306 = vunpack.c.l.b16 %v3215
    %v3307 = vunpack.c.h.b16 %v3215
    %v3308 = vunpack.c.l.b16 %v3216
    %v3309 = vunpack.c.h.b16 %v3216
    %v3310 = vunpack.c.l.b16 %v3217
    %v3311 = vunpack.c.h.b16 %v3217
    %v3312 = vunpack.c.l.b16 %v3218
    %v3313 = vunpack.c.h.b16 %v3218
    %v3314 = vunpack.c.l.b16 %v3219
    %v3315 = vunpack.c.h.b16 %v3219
    %v3316 = vunpack.c.l.b16 %v3220
    %v3317 = vunpack.c.h.b16 %v3220
    %v3318 = vunpack.c.l.b16 %v3221
    %v3319 = vunpack.c.h.b16 %v3221
    %v3320 = vunpack.c.l.b16 %v3222
    %v3321 = vunpack.c.h.b16 %v3222
    %v3322 = vunpack.c.l.b16 %v3223
    %v3323 = vunpack.c.h.b16 %v3223
    %v3324 = vunpack.c.l.b16 %v3224
    %v3325 = vunpack.c.h.b16 %v3224
    %v3326 = vunpack.c.l.b16 %v3225
    %v3327 = vunpack.c.h.b16 %v3225
    %v3328 = vunpack.c.l.b16 %v3226
    %v3329 = vunpack.c.h.b16 %v3226
    %v3330 = vunpack.c.l.b16 %v3227
    %v3331 = vunpack.c.h.b16 %v3227
    %v3332 = vunpack.c.l.b16 %v3228
    %v3333 = vunpack.c.h.b16 %v3228
    %v3334 = vunpack.c.l.b16 %v3229
    %v3335 = vunpack.c.h.b16 %v3229
    %v3336 = vpack.c.b16 %v3276, %v3272
    %v3337 = vpack.c.b16 %v3277, %v3273
    %v3338 = vpack.c.b16 %v3278, %v3274
    %v3339 = vpack.c.b16 %v3279, %v3275
    %v3340 = vpack.c.b16 %v3284, %v3280
    %v3341 = vpack.c.b16 %v3285, %v3281
    %v3342 = vpack.c.b16 %v3286, %v3282
    %v3343 = vpack.c.b16 %v3287, %v3283
    %v3344 = vpack.c.b16 %v3292, %v3288
    %v3345 = vpack.c.b16 %v3293, %v3289
    %v3346 = vpack.c.b16 %v3294, %v3290
    %v3347 = vpack.c.b16 %v3295, %v3291
    %v3348 = vpack.c.b16 %v3300, %v3296
    %v3349 = vpack.c.b16 %v3301, %v3297
    %v3350 = vpack.c.b16 %v3302, %v3298
    %v3351 = vpack.c.b16 %v3303, %v3299
    %v3352 = vpack.c.b16 %v3308, %v3304
    %v3353 = vpack.c.b16 %v3309, %v3305
    %v3354 = vpack.c.b16 %v3310, %v3306
    %v3355 = vpack.c.b16 %v3311, %v3307
    %v3356 = vpack.c.b16 %v3316, %v3312
    %v3357 = vpack.c.b16 %v3317, %v3313
    %v3358 = vpack.c.b16 %v3318, %v3314
    %v3359 = vpack.c.b16 %v3319, %v3315
    %v3360 = vpack.c.b16 %v3324, %v3320
    %v3361 = vpack.c.b16 %v3325, %v3321
    %v3362 = vpack.c.b16 %v3326, %v3322
    %v3363 = vpack.c.b16 %v3327, %v3323
    %v3364 = vpack.c.b16 %v3332, %v3328
    %v3365 = vpack.c.b16 %v3333, %v3329
    %v3366 = vpack.c.b16 %v3334, %v3330
    %v3367 = vpack.c.b16 %v3335, %v3331
    %3400 = vmatpush.bf16.msra.mxu0 %v3364
    %3401 = vmatpush.bf16.msra.mxu0 %v3360
    %3402 = vmatpush.bf16.msra.mxu0 %v3356
    %3403 = vmatpush.bf16.msra.mxu0 %v3352
    %3404 = vmatpush.bf16.msra.mxu0 %v3348
    %3405 = vmatpush.bf16.msra.mxu0 %v3344
    %3406 = vmatpush.bf16.msra.mxu0 %v3340
    %3407 = vmatpush.bf16.msra.mxu0 %v3336
    %3408 = vmatmul.bf16.gmra.mxu0 %v3194
    %v3409 = vpop.f32.mrf.mxu0
    %v3410 = vadd.f32 %v3232, %v3409
    %v3411 = vpop.f32.mrf.mxu0
    %v3412 = vadd.f32 %v3232, %v3411
    %3413 = vmatmul.bf16.gmra.mxu0 %v3195
    %v3414 = vpop.f32.mrf.mxu0
    %v3415 = vadd.f32 %v3232, %v3414
    %v3416 = vpop.f32.mrf.mxu0
    %v3417 = vadd.f32 %v3232, %v3416
    %3418 = vmatmul.bf16.gmra.mxu0 %v3196
    %v3419 = vpop.f32.mrf.mxu0
    %v3420 = vadd.f32 %v3232, %v3419
    %v3421 = vpop.f32.mrf.mxu0
    %v3422 = vadd.f32 %v3232, %v3421
    %3423 = vmatmul.bf16.gmra.mxu0 %v3197
    %v3424 = vpop.f32.mrf.mxu0
    %v3425 = vadd.f32 %v3232, %v3424
    %v3426 = vpop.f32.mrf.mxu0
    %v3427 = vadd.f32 %v3232, %v3426
    %3428 = vdwg.mxu0
    %3429 = vmatpush.bf16.msra.mxu0 %v3365
    %3430 = vmatpush.bf16.msra.mxu0 %v3361
    %3431 = vmatpush.bf16.msra.mxu0 %v3357
    %3432 = vmatpush.bf16.msra.mxu0 %v3353
    %3433 = vmatpush.bf16.msra.mxu0 %v3349
    %3434 = vmatpush.bf16.msra.mxu0 %v3345
    %3435 = vmatpush.bf16.msra.mxu0 %v3341
    %3436 = vmatpush.bf16.msra.mxu0 %v3337
    %3437 = vmatmul.bf16.gmra.mxu0 %v3194
    %v3438 = vpop.f32.mrf.mxu0
    %v3439 = vadd.f32 %v3233, %v3438
    %v3440 = vpop.f32.mrf.mxu0
    %v3441 = vadd.f32 %v3233, %v3440
    %3442 = vmatmul.bf16.gmra.mxu0 %v3195
    %v3443 = vpop.f32.mrf.mxu0
    %v3444 = vadd.f32 %v3233, %v3443
    %v3445 = vpop.f32.mrf.mxu0
    %v3446 = vadd.f32 %v3233, %v3445
    %3447 = vmatmul.bf16.gmra.mxu0 %v3196
    %v3448 = vpop.f32.mrf.mxu0
    %v3449 = vadd.f32 %v3233, %v3448
    %v3450 = vpop.f32.mrf.mxu0
    %v3451 = vadd.f32 %v3233, %v3450
    %3452 = vmatmul.bf16.gmra.mxu0 %v3197
    %v3453 = vpop.f32.mrf.mxu0
    %v3454 = vadd.f32 %v3233, %v3453
    %v3455 = vpop.f32.mrf.mxu0
    %v3456 = vadd.f32 %v3233, %v3455
    %3457 = vdwg.mxu0
    %3458 = vmatpush.bf16.msra.mxu0 %v3366
    %3459 = vmatpush.bf16.msra.mxu0 %v3362
    %3460 = vmatpush.bf16.msra.mxu0 %v3358
    %3461 = vmatpush.bf16.msra.mxu0 %v3354
    %3462 = vmatpush.bf16.msra.mxu0 %v3350
    %3463 = vmatpush.bf16.msra.mxu0 %v3346
    %3464 = vmatpush.bf16.msra.mxu0 %v3342
    %3465 = vmatpush.bf16.msra.mxu0 %v3338
    %3466 = vmatmul.bf16.gmra.mxu0 %v3194
    %v3467 = vpop.f32.mrf.mxu0
    %v3468 = vadd.f32 %v3234, %v3467
    %v3469 = vpop.f32.mrf.mxu0
    %v3470 = vadd.f32 %v3234, %v3469
    %3471 = vmatmul.bf16.gmra.mxu0 %v3195
    %v3472 = vpop.f32.mrf.mxu0
    %v3473 = vadd.f32 %v3234, %v3472
    %v3474 = vpop.f32.mrf.mxu0
    %v3475 = vadd.f32 %v3234, %v3474
    %3476 = vmatmul.bf16.gmra.mxu0 %v3196
    %v3477 = vpop.f32.mrf.mxu0
    %v3478 = vadd.f32 %v3234, %v3477
    %v3479 = vpop.f32.mrf.mxu0
    %v3480 = vadd.f32 %v3234, %v3479
    %3481 = vmatmul.bf16.gmra.mxu0 %v3197
    %v3482 = vpop.f32.mrf.mxu0
    %v3483 = vadd.f32 %v3234, %v3482
    %v3484 = vpop.f32.mrf.mxu0
    %v3485 = vadd.f32 %v3234, %v3484
    %3486 = vdwg.mxu0
    %3487 = vmatpush.bf16.msra.mxu0 %v3367
    %3488 = vmatpush.bf16.msra.mxu0 %v3363
    %3489 = vmatpush.bf16.msra.mxu0 %v3359
    %3490 = vmatpush.bf16.msra.mxu0 %v3355
    %3491 = vmatpush.bf16.msra.mxu0 %v3351
    %3492 = vmatpush.bf16.msra.mxu0 %v3347
    %3493 = vmatpush.bf16.msra.mxu0 %v3343
    %3494 = vmatpush.bf16.msra.mxu0 %v3339
    %3495 = vmatmul.bf16.gmra.mxu0 %v3194
    %v3496 = vpop.f32.mrf.mxu0
    %v3497 = vadd.f32 %v3235, %v3496
    %v3498 = vpop.f32.mrf.mxu0
    %v3499 = vadd.f32 %v3235, %v3498
    %3500 = vmatmul.bf16.gmra.mxu0 %v3195
    %v3501 = vpop.f32.mrf.mxu0
    %v3502 = vadd.f32 %v3235, %v3501
    %v3503 = vpop.f32.mrf.mxu0
    %v3504 = vadd.f32 %v3235, %v3503
    %3505 = vmatmul.bf16.gmra.mxu0 %v3196
    %v3506 = vpop.f32.mrf.mxu0
    %v3507 = vadd.f32 %v3235, %v3506
    %v3508 = vpop.f32.mrf.mxu0
    %v3509 = vadd.f32 %v3235, %v3508
    %3510 = vmatmul.bf16.gmra.mxu0 %v3197
    %v3511 = vpop.f32.mrf.mxu0
    %v3512 = vadd.f32 %v3235, %v3511
    %v3513 = vpop.f32.mrf.mxu0
    %v3514 = vadd.f32 %v3235, %v3513
    %3515 = vdwg.mxu0
    %3516 = vst [vmem:[#allocation4] sm:$0xff] %v3410
    %3517 = vst [vmem:[#allocation4 + $0x8] sm:$0xff] %v3439
    %3518 = vst [vmem:[#allocation4 + $0x10] sm:$0xff] %v3468
    %3519 = vst [vmem:[#allocation4 + $0x18] sm:$0xff] %v3497
    %3520 = vst [vmem:[#allocation4 + $0x20] sm:$0xff] %v3412
    %3521 = vst [vmem:[#allocation4 + $0x28] sm:$0xff] %v3441
    %3522 = vst [vmem:[#allocation4 + $0x30] sm:$0xff] %v3470
    %3523 = vst [vmem:[#allocation4 + $0x38] sm:$0xff] %v3499
    %3524 = vst [vmem:[#allocation4 + $0x40] sm:$0xff] %v3415
    %3525 = vst [vmem:[#allocation4 + $0x48] sm:$0xff] %v3444
    %3526 = vst [vmem:[#allocation4 + $0x50] sm:$0xff] %v3473
    %3527 = vst [vmem:[#allocation4 + $0x58] sm:$0xff] %v3502
    %3528 = vst [vmem:[#allocation4 + $0x60] sm:$0xff] %v3417
    %3529 = vst [vmem:[#allocation4 + $0x68] sm:$0xff] %v3446
    %3530 = vst [vmem:[#allocation4 + $0x70] sm:$0xff] %v3475
    %3531 = vst [vmem:[#allocation4 + $0x78] sm:$0xff] %v3504
    %3532 = vst [vmem:[#allocation4 + $0x80] sm:$0xff] %v3420
    %3533 = vst [vmem:[#allocation4 + $0x88] sm:$0xff] %v3449
    %3534 = vst [vmem:[#allocation4 + $0x90] sm:$0xff] %v3478
    %3535 = vst [vmem:[#allocation4 + $0x98] sm:$0xff] %v3507
    %3536 = vst [vmem:[#allocation4 + $0xa0] sm:$0xff] %v3422
    %3537 = vst [vmem:[#allocation4 + $0xa8] sm:$0xff] %v3451
    %3538 = vst [vmem:[#allocation4 + $0xb0] sm:$0xff] %v3480
    %3539 = vst [vmem:[#allocation4 + $0xb8] sm:$0xff] %v3509
    %3540 = vst [vmem:[#allocation4 + $0xc0] sm:$0xff] %v3425
    %3541 = vst [vmem:[#allocation4 + $0xc8] sm:$0xff] %v3454
    %3542 = vst [vmem:[#allocation4 + $0xd0] sm:$0xff] %v3483
    %3543 = vst [vmem:[#allocation4 + $0xd8] sm:$0xff] %v3512
    %3544 = vst [vmem:[#allocation4 + $0xe0] sm:$0xff] %v3427
    %3545 = vst [vmem:[#allocation4 + $0xe8] sm:$0xff] %v3456
    %3546 = vst [vmem:[#allocation4 + $0xf0] sm:$0xff] %v3485
    %3547 = vst [vmem:[#allocation4 + $0xf8] sm:$0xff] %v3514
    %v3548 = vld [vmem:[#allocation4] sm:$0xff]
    %v3549 = vld [vmem:[#allocation4 + $0x8] sm:$0xff]
    %v3550 = vld [vmem:[#allocation4 + $0x10] sm:$0xff]
    %v3551 = vld [vmem:[#allocation4 + $0x18] sm:$0xff]
    %v3552 = vld [vmem:[#allocation16] sm:$0xff]
    %v3553 = vld [vmem:[#allocation16 + $0x8] sm:$0xff]
    %v3554 = vld [vmem:[#allocation16 + $0x10] sm:$0xff]
    %v3555 = vld [vmem:[#allocation16 + $0x18] sm:$0xff]
    %v3556 = vld [vmem:[#allocation16 + $0x20] sm:$0xff]
    %v3557 = vld [vmem:[#allocation16 + $0x28] sm:$0xff]
    %v3558 = vld [vmem:[#allocation16 + $0x30] sm:$0xff]
    %v3559 = vld [vmem:[#allocation16 + $0x38] sm:$0xff]
    %v3560 = vld [vmem:[#allocation16 + $0x40] sm:$0xff]
    %v3561 = vld [vmem:[#allocation16 + $0x48] sm:$0xff]
    %v3562 = vld [vmem:[#allocation16 + $0x50] sm:$0xff]
    %v3563 = vld [vmem:[#allocation16 + $0x58] sm:$0xff]
    %v3564 = vld [vmem:[#allocation16 + $0x60] sm:$0xff]
    %v3565 = vld [vmem:[#allocation16 + $0x68] sm:$0xff]
    %v3566 = vld [vmem:[#allocation16 + $0x70] sm:$0xff]
    %v3567 = vld [vmem:[#allocation16 + $0x78] sm:$0xff]
    %v3568 = vld [vmem:[#allocation16 + $0x80] sm:$0xff]
    %v3569 = vld [vmem:[#allocation16 + $0x88] sm:$0xff]
    %v3570 = vld [vmem:[#allocation16 + $0x90] sm:$0xff]
    %v3571 = vld [vmem:[#allocation16 + $0x98] sm:$0xff]
    %v3572 = vld [vmem:[#allocation16 + $0xa0] sm:$0xff]
    %v3573 = vld [vmem:[#allocation16 + $0xa8] sm:$0xff]
    %v3574 = vld [vmem:[#allocation16 + $0xb0] sm:$0xff]
    %v3575 = vld [vmem:[#allocation16 + $0xb8] sm:$0xff]
    %v3576 = vld [vmem:[#allocation16 + $0xc0] sm:$0xff]
    %v3577 = vld [vmem:[#allocation16 + $0xc8] sm:$0xff]
    %v3578 = vld [vmem:[#allocation16 + $0xd0] sm:$0xff]
    %v3579 = vld [vmem:[#allocation16 + $0xd8] sm:$0xff]
    %v3580 = vld [vmem:[#allocation16 + $0xe0] sm:$0xff]
    %v3581 = vld [vmem:[#allocation16 + $0xe8] sm:$0xff]
    %v3582 = vld [vmem:[#allocation16 + $0xf0] sm:$0xff]
    %v3583 = vld [vmem:[#allocation16 + $0xf8] sm:$0xff]
    %v3616 = vunpack.c.l.b16 %v3552
    %v3617 = vunpack.c.h.b16 %v3552
    %v3618 = vunpack.c.l.b16 %v3553
    %v3619 = vunpack.c.h.b16 %v3553
    %v3620 = vunpack.c.l.b16 %v3554
    %v3621 = vunpack.c.h.b16 %v3554
    %v3622 = vunpack.c.l.b16 %v3555
    %v3623 = vunpack.c.h.b16 %v3555
    %v3624 = vunpack.c.l.b16 %v3556
    %v3625 = vunpack.c.h.b16 %v3556
    %v3626 = vunpack.c.l.b16 %v3557
    %v3627 = vunpack.c.h.b16 %v3557
    %v3628 = vunpack.c.l.b16 %v3558
    %v3629 = vunpack.c.h.b16 %v3558
    %v3630 = vunpack.c.l.b16 %v3559
    %v3631 = vunpack.c.h.b16 %v3559
    %v3632 = vunpack.c.l.b16 %v3560
    %v3633 = vunpack.c.h.b16 %v3560
    %v3634 = vunpack.c.l.b16 %v3561
    %v3635 = vunpack.c.h.b16 %v3561
    %v3636 = vunpack.c.l.b16 %v3562
    %v3637 = vunpack.c.h.b16 %v3562
    %v3638 = vunpack.c.l.b16 %v3563
    %v3639 = vunpack.c.h.b16 %v3563
    %v3640 = vunpack.c.l.b16 %v3564
    %v3641 = vunpack.c.h.b16 %v3564
    %v3642 = vunpack.c.l.b16 %v3565
    %v3643 = vunpack.c.h.b16 %v3565
    %v3644 = vunpack.c.l.b16 %v3566
    %v3645 = vunpack.c.h.b16 %v3566
    %v3646 = vunpack.c.l.b16 %v3567
    %v3647 = vunpack.c.h.b16 %v3567
    %v3648 = vunpack.c.l.b16 %v3568
    %v3649 = vunpack.c.h.b16 %v3568
    %v3650 = vunpack.c.l.b16 %v3569
    %v3651 = vunpack.c.h.b16 %v3569
    %v3652 = vunpack.c.l.b16 %v3570
    %v3653 = vunpack.c.h.b16 %v3570
    %v3654 = vunpack.c.l.b16 %v3571
    %v3655 = vunpack.c.h.b16 %v3571
    %v3656 = vunpack.c.l.b16 %v3572
    %v3657 = vunpack.c.h.b16 %v3572
    %v3658 = vunpack.c.l.b16 %v3573
    %v3659 = vunpack.c.h.b16 %v3573
    %v3660 = vunpack.c.l.b16 %v3574
    %v3661 = vunpack.c.h.b16 %v3574
    %v3662 = vunpack.c.l.b16 %v3575
    %v3663 = vunpack.c.h.b16 %v3575
    %v3664 = vunpack.c.l.b16 %v3576
    %v3665 = vunpack.c.h.b16 %v3576
    %v3666 = vunpack.c.l.b16 %v3577
    %v3667 = vunpack.c.h.b16 %v3577
    %v3668 = vunpack.c.l.b16 %v3578
    %v3669 = vunpack.c.h.b16 %v3578
    %v3670 = vunpack.c.l.b16 %v3579
    %v3671 = vunpack.c.h.b16 %v3579
    %v3672 = vunpack.c.l.b16 %v3580
    %v3673 = vunpack.c.h.b16 %v3580
    %v3674 = vunpack.c.l.b16 %v3581
    %v3675 = vunpack.c.h.b16 %v3581
    %v3676 = vunpack.c.l.b16 %v3582
    %v3677 = vunpack.c.h.b16 %v3582
    %v3678 = vunpack.c.l.b16 %v3583
    %v3679 = vunpack.c.h.b16 %v3583
    %v3680 = vpack.c.b16 %v3620, %v3616
    %v3681 = vpack.c.b16 %v3621, %v3617
    %v3682 = vpack.c.b16 %v3622, %v3618
    %v3683 = vpack.c.b16 %v3623, %v3619
    %v3684 = vpack.c.b16 %v3628, %v3624
    %v3685 = vpack.c.b16 %v3629, %v3625
    %v3686 = vpack.c.b16 %v3630, %v3626
    %v3687 = vpack.c.b16 %v3631, %v3627
    %v3688 = vpack.c.b16 %v3636, %v3632
    %v3689 = vpack.c.b16 %v3637, %v3633
    %v3690 = vpack.c.b16 %v3638, %v3634
    %v3691 = vpack.c.b16 %v3639, %v3635
    %v3692 = vpack.c.b16 %v3644, %v3640
    %v3693 = vpack.c.b16 %v3645, %v3641
    %v3694 = vpack.c.b16 %v3646, %v3642
    %v3695 = vpack.c.b16 %v3647, %v3643
    %v3696 = vpack.c.b16 %v3652, %v3648
    %v3697 = vpack.c.b16 %v3653, %v3649
    %v3698 = vpack.c.b16 %v3654, %v3650
    %v3699 = vpack.c.b16 %v3655, %v3651
    %v3700 = vpack.c.b16 %v3660, %v3656
    %v3701 = vpack.c.b16 %v3661, %v3657
    %v3702 = vpack.c.b16 %v3662, %v3658
    %v3703 = vpack.c.b16 %v3663, %v3659
    %v3704 = vpack.c.b16 %v3668, %v3664
    %v3705 = vpack.c.b16 %v3669, %v3665
    %v3706 = vpack.c.b16 %v3670, %v3666
    %v3707 = vpack.c.b16 %v3671, %v3667
    %v3708 = vpack.c.b16 %v3676, %v3672
    %v3709 = vpack.c.b16 %v3677, %v3673
    %v3710 = vpack.c.b16 %v3678, %v3674
    %v3711 = vpack.c.b16 %v3679, %v3675
    %3744 = vmatpush.bf16.msra.mxu0 %v3708
    %3745 = vmatpush.bf16.msra.mxu0 %v3704
    %3746 = vmatpush.bf16.msra.mxu0 %v3700
    %3747 = vmatpush.bf16.msra.mxu0 %v3696
    %3748 = vmatpush.bf16.msra.mxu0 %v3692
    %3749 = vmatpush.bf16.msra.mxu0 %v3688
    %3750 = vmatpush.bf16.msra.mxu0 %v3684
    %3751 = vmatpush.bf16.msra.mxu0 %v3680
    %3752 = vmatmul.bf16.gmra.mxu0 0
    %v3753 = vpop.f32.mrf.mxu0
    %v3754 = vadd.f32 0.0, %v3753
    %v3755 = vpop.f32.mrf.mxu0
    %3756 = vdwg.mxu0
    %3757 = vmatpush.bf16.msra.mxu0 %v3709
    %3758 = vmatpush.bf16.msra.mxu0 %v3705
    %3759 = vmatpush.bf16.msra.mxu0 %v3701
    %3760 = vmatpush.bf16.msra.mxu0 %v3697
    %3761 = vmatpush.bf16.msra.mxu0 %v3693
    %3762 = vmatpush.bf16.msra.mxu0 %v3689
    %3763 = vmatpush.bf16.msra.mxu0 %v3685
    %3764 = vmatpush.bf16.msra.mxu0 %v3681
    %3765 = vmatmul.bf16.gmra.mxu0 0
    %v3766 = vpop.f32.mrf.mxu0
    %v3767 = vadd.f32 0.0, %v3766
    %v3768 = vpop.f32.mrf.mxu0
    %3769 = vdwg.mxu0
    %3770 = vmatpush.bf16.msra.mxu0 %v3710
    %3771 = vmatpush.bf16.msra.mxu0 %v3706
    %3772 = vmatpush.bf16.msra.mxu0 %v3702
    %3773 = vmatpush.bf16.msra.mxu0 %v3698
    %3774 = vmatpush.bf16.msra.mxu0 %v3694
    %3775 = vmatpush.bf16.msra.mxu0 %v3690
    %3776 = vmatpush.bf16.msra.mxu0 %v3686
    %3777 = vmatpush.bf16.msra.mxu0 %v3682
    %3778 = vmatmul.bf16.gmra.mxu0 0
    %v3779 = vpop.f32.mrf.mxu0
    %v3780 = vadd.f32 0.0, %v3779
    %v3781 = vpop.f32.mrf.mxu0
    %3782 = vdwg.mxu0
    %3783 = vmatpush.bf16.msra.mxu0 %v3711
    %3784 = vmatpush.bf16.msra.mxu0 %v3707
    %3785 = vmatpush.bf16.msra.mxu0 %v3703
    %3786 = vmatpush.bf16.msra.mxu0 %v3699
    %3787 = vmatpush.bf16.msra.mxu0 %v3695
    %3788 = vmatpush.bf16.msra.mxu0 %v3691
    %3789 = vmatpush.bf16.msra.mxu0 %v3687
    %3790 = vmatpush.bf16.msra.mxu0 %v3683
    %3791 = vmatmul.bf16.gmra.mxu0 0
    %v3792 = vpop.f32.mrf.mxu0
    %v3793 = vadd.f32 0.0, %v3792
    %v3794 = vpop.f32.mrf.mxu0
    %3795 = vdwg.mxu0
    %v3796 = vadd.f32 %v3548, %v3754
    %v3797 = vadd.f32 %v3549, %v3767
    %v3798 = vadd.f32 %v3550, %v3780
    %v3799 = vadd.f32 %v3551, %v3793
    %v3800 = vxor.u32 %v3796, 2147483648
    %v3801 = vmul.f32 %v3800, 1.442695
    %v3802 = vpow.pop %v3801
    %v3803 = vadd.f32 %v3802, 1.0
    %v3804 = vrcp.pop %v3803
    %v3805 = vmul.f32 %v3803, %v3804
    %v3806 = vsub.f32 1.0, %v3805
    %v3807 = vmul.f32 %v3804, %v3806
    %v3808 = vadd.f32 %v3804, %v3807
    %vm3809 = vweird.f32 %v3803
    %vm3810 = vweird.f32 %v3804
    %vm3811 = vmor %vm3809, %vm3810
    %v3812 = vsel %vm3811, %v3804, %v3808
    %v3813 = vand.u32 2147483647, %v3803
    %vm3814 = vcmp.eq.f32.partialorder %v3813, 8.507059e+37
    %v3815 = vand.u32 %v3803, 2147483648
    %v3816 = vor.u32 1.1754944e-38, %v3815
    %v3817 = vsel %vm3814, %v3816, %v3812
    %v3818 = vmul.f32 1.0, %v3817
    %v3819 = vxor.u32 %v3797, 2147483648
    %v3820 = vmul.f32 %v3819, 1.442695
    %v3821 = vpow.pop %v3820
    %v3822 = vadd.f32 %v3821, 1.0
    %v3823 = vrcp.pop %v3822
    %v3824 = vmul.f32 %v3822, %v3823
    %v3825 = vsub.f32 1.0, %v3824
    %v3826 = vmul.f32 %v3823, %v3825
    %v3827 = vadd.f32 %v3823, %v3826
    %vm3828 = vweird.f32 %v3822
    %vm3829 = vweird.f32 %v3823
    %vm3830 = vmor %vm3828, %vm3829
    %v3831 = vsel %vm3830, %v3823, %v3827
    %v3832 = vand.u32 2147483647, %v3822
    %vm3833 = vcmp.eq.f32.partialorder %v3832, 8.507059e+37
    %v3834 = vand.u32 %v3822, 2147483648
    %v3835 = vor.u32 1.1754944e-38, %v3834
    %v3836 = vsel %vm3833, %v3835, %v3831
    %v3837 = vmul.f32 1.0, %v3836
    %v3838 = vtanh.pop %v3798
    %v3839 = vxor.u32 %v3799, 2147483648
    %v3840 = vmul.f32 %v3839, 1.442695
    %v3841 = vpow.pop %v3840
    %v3842 = vadd.f32 %v3841, 1.0
    %v3843 = vrcp.pop %v3842
    %v3844 = vmul.f32 %v3842, %v3843
    %v3845 = vsub.f32 1.0, %v3844
    %v3846 = vmul.f32 %v3843, %v3845
    %v3847 = vadd.f32 %v3843, %v3846
    %vm3848 = vweird.f32 %v3842
    %vm3849 = vweird.f32 %v3843
    %vm3850 = vmor %vm3848, %vm3849
    %v3851 = vsel %vm3850, %v3843, %v3847
    %v3852 = vand.u32 2147483647, %v3842
    %vm3853 = vcmp.eq.f32.partialorder %v3852, 8.507059e+37
    %v3854 = vand.u32 %v3842, 2147483648
    %v3855 = vor.u32 1.1754944e-38, %v3854
    %v3856 = vsel %vm3853, %v3855, %v3851
    %v3857 = vmul.f32 1.0, %v3856
    %v3858 = vmul.f32 %v3837, 0.0
    %v3859 = vmul.f32 %v3818, %v3838
    %v3860 = vadd.f32 %v3858, %v3859
    %v3861 = vtanh.pop %v3860
    %v3862 = vmul.f32 %v3857, %v3861
    %3863 = vst [vmem:[#allocation3] sm:$0xff] %v3862
    %v3864 = vld [vmem:[#allocation4 + $0x20] sm:$0xff]
    %v3865 = vld [vmem:[#allocation4 + $0x28] sm:$0xff]
    %v3866 = vld [vmem:[#allocation4 + $0x30] sm:$0xff]
    %v3867 = vld [vmem:[#allocation4 + $0x38] sm:$0xff]
    %v3868 = vpack.c.bf16 %v3862, %v3862
    %v3869 = vld [vmem:[#allocation16] sm:$0xff]
    %v3870 = vld [vmem:[#allocation16 + $0x8] sm:$0xff]
    %v3871 = vld [vmem:[#allocation16 + $0x10] sm:$0xff]
    %v3872 = vld [vmem:[#allocation16 + $0x18] sm:$0xff]
    %v3873 = vld [vmem:[#allocation16 + $0x20] sm:$0xff]
    %v3874 = vld [vmem:[#allocation16 + $0x28] sm:$0xff]
    %v3875 = vld [vmem:[#allocation16 + $0x30] sm:$0xff]
    %v3876 = vld [vmem:[#allocation16 + $0x38] sm:$0xff]
    %v3877 = vld [vmem:[#allocation16 + $0x40] sm:$0xff]
    %v3878 = vld [vmem:[#allocation16 + $0x48] sm:$0xff]
    %v3879 = vld [vmem:[#allocation16 + $0x50] sm:$0xff]
    %v3880 = vld [vmem:[#allocation16 + $0x58] sm:$0xff]
    %v3881 = vld [vmem:[#allocation16 + $0x60] sm:$0xff]
    %v3882 = vld [vmem:[#allocation16 + $0x68] sm:$0xff]
    %v3883 = vld [vmem:[#allocation16 + $0x70] sm:$0xff]
    %v3884 = vld [vmem:[#allocation16 + $0x78] sm:$0xff]
    %v3885 = vld [vmem:[#allocation16 + $0x80] sm:$0xff]
    %v3886 = vld [vmem:[#allocation16 + $0x88] sm:$0xff]
    %v3887 = vld [vmem:[#allocation16 + $0x90] sm:$0xff]
    %v3888 = vld [vmem:[#allocation16 + $0x98] sm:$0xff]
    %v3889 = vld [vmem:[#allocation16 + $0xa0] sm:$0xff]
    %v3890 = vld [vmem:[#allocation16 + $0xa8] sm:$0xff]
    %v3891 = vld [vmem:[#allocation16 + $0xb0] sm:$0xff]
    %v3892 = vld [vmem:[#allocation16 + $0xb8] sm:$0xff]
    %v3893 = vld [vmem:[#allocation16 + $0xc0] sm:$0xff]
    %v3894 = vld [vmem:[#allocation16 + $0xc8] sm:$0xff]
    %v3895 = vld [vmem:[#allocation16 + $0xd0] sm:$0xff]
    %v3896 = vld [vmem:[#allocation16 + $0xd8] sm:$0xff]
    %v3897 = vld [vmem:[#allocation16 + $0xe0] sm:$0xff]
    %v3898 = vld [vmem:[#allocation16 + $0xe8] sm:$0xff]
    %v3899 = vld [vmem:[#allocation16 + $0xf0] sm:$0xff]
    %v3900 = vld [vmem:[#allocation16 + $0xf8] sm:$0xff]
    %v3933 = vunpack.c.l.b16 %v3869
    %v3934 = vunpack.c.h.b16 %v3869
    %v3935 = vunpack.c.l.b16 %v3870
    %v3936 = vunpack.c.h.b16 %v3870
    %v3937 = vunpack.c.l.b16 %v3871
    %v3938 = vunpack.c.h.b16 %v3871
    %v3939 = vunpack.c.l.b16 %v3872
    %v3940 = vunpack.c.h.b16 %v3872
    %v3941 = vunpack.c.l.b16 %v3873
    %v3942 = vunpack.c.h.b16 %v3873
    %v3943 = vunpack.c.l.b16 %v3874
    %v3944 = vunpack.c.h.b16 %v3874
    %v3945 = vunpack.c.l.b16 %v3875
    %v3946 = vunpack.c.h.b16 %v3875
    %v3947 = vunpack.c.l.b16 %v3876
    %v3948 = vunpack.c.h.b16 %v3876
    %v3949 = vunpack.c.l.b16 %v3877
    %v3950 = vunpack.c.h.b16 %v3877
    %v3951 = vunpack.c.l.b16 %v3878
    %v3952 = vunpack.c.h.b16 %v3878
    %v3953 = vunpack.c.l.b16 %v3879
    %v3954 = vunpack.c.h.b16 %v3879
    %v3955 = vunpack.c.l.b16 %v3880
    %v3956 = vunpack.c.h.b16 %v3880
    %v3957 = vunpack.c.l.b16 %v3881
    %v3958 = vunpack.c.h.b16 %v3881
    %v3959 = vunpack.c.l.b16 %v3882
    %v3960 = vunpack.c.h.b16 %v3882
    %v3961 = vunpack.c.l.b16 %v3883
    %v3962 = vunpack.c.h.b16 %v3883
    %v3963 = vunpack.c.l.b16 %v3884
    %v3964 = vunpack.c.h.b16 %v3884
    %v3965 = vunpack.c.l.b16 %v3885
    %v3966 = vunpack.c.h.b16 %v3885
    %v3967 = vunpack.c.l.b16 %v3886
    %v3968 = vunpack.c.h.b16 %v3886
    %v3969 = vunpack.c.l.b16 %v3887
    %v3970 = vunpack.c.h.b16 %v3887
    %v3971 = vunpack.c.l.b16 %v3888
    %v3972 = vunpack.c.h.b16 %v3888
    %v3973 = vunpack.c.l.b16 %v3889
    %v3974 = vunpack.c.h.b16 %v3889
    %v3975 = vunpack.c.l.b16 %v3890
    %v3976 = vunpack.c.h.b16 %v3890
    %v3977 = vunpack.c.l.b16 %v3891
    %v3978 = vunpack.c.h.b16 %v3891
    %v3979 = vunpack.c.l.b16 %v3892
    %v3980 = vunpack.c.h.b16 %v3892
    %v3981 = vunpack.c.l.b16 %v3893
    %v3982 = vunpack.c.h.b16 %v3893
    %v3983 = vunpack.c.l.b16 %v3894
    %v3984 = vunpack.c.h.b16 %v3894
    %v3985 = vunpack.c.l.b16 %v3895
    %v3986 = vunpack.c.h.b16 %v3895
    %v3987 = vunpack.c.l.b16 %v3896
    %v3988 = vunpack.c.h.b16 %v3896
    %v3989 = vunpack.c.l.b16 %v3897
    %v3990 = vunpack.c.h.b16 %v3897
    %v3991 = vunpack.c.l.b16 %v3898
    %v3992 = vunpack.c.h.b16 %v3898
    %v3993 = vunpack.c.l.b16 %v3899
    %v3994 = vunpack.c.h.b16 %v3899
    %v3995 = vunpack.c.l.b16 %v3900
    %v3996 = vunpack.c.h.b16 %v3900
    %v3997 = vpack.c.b16 %v3937, %v3933
    %v3998 = vpack.c.b16 %v3938, %v3934
    %v3999 = vpack.c.b16 %v3939, %v3935
    %v4000 = vpack.c.b16 %v3940, %v3936
    %v4001 = vpack.c.b16 %v3945, %v3941
    %v4002 = vpack.c.b16 %v3946, %v3942
    %v4003 = vpack.c.b16 %v3947, %v3943
    %v4004 = vpack.c.b16 %v3948, %v3944
    %v4005 = vpack.c.b16 %v3953, %v3949
    %v4006 = vpack.c.b16 %v3954, %v3950
    %v4007 = vpack.c.b16 %v3955, %v3951
    %v4008 = vpack.c.b16 %v3956, %v3952
    %v4009 = vpack.c.b16 %v3961, %v3957
    %v4010 = vpack.c.b16 %v3962, %v3958
    %v4011 = vpack.c.b16 %v3963, %v3959
    %v4012 = vpack.c.b16 %v3964, %v3960
    %v4013 = vpack.c.b16 %v3969, %v3965
    %v4014 = vpack.c.b16 %v3970, %v3966
    %v4015 = vpack.c.b16 %v3971, %v3967
    %v4016 = vpack.c.b16 %v3972, %v3968
    %v4017 = vpack.c.b16 %v3977, %v3973
    %v4018 = vpack.c.b16 %v3978, %v3974
    %v4019 = vpack.c.b16 %v3979, %v3975
    %v4020 = vpack.c.b16 %v3980, %v3976
    %v4021 = vpack.c.b16 %v3985, %v3981
    %v4022 = vpack.c.b16 %v3986, %v3982
    %v4023 = vpack.c.b16 %v3987, %v3983
    %v4024 = vpack.c.b16 %v3988, %v3984
    %v4025 = vpack.c.b16 %v3993, %v3989
    %v4026 = vpack.c.b16 %v3994, %v3990
    %v4027 = vpack.c.b16 %v3995, %v3991
    %v4028 = vpack.c.b16 %v3996, %v3992
    %4061 = vmatpush.bf16.msra.mxu0 %v4025
    %4062 = vmatpush.bf16.msra.mxu0 %v4021
    %4063 = vmatpush.bf16.msra.mxu0 %v4017
    %4064 = vmatpush.bf16.msra.mxu0 %v4013
    %4065 = vmatpush.bf16.msra.mxu0 %v4009
    %4066 = vmatpush.bf16.msra.mxu0 %v4005
    %4067 = vmatpush.bf16.msra.mxu0 %v4001
    %4068 = vmatpush.bf16.msra.mxu0 %v3997
    %4069 = vmatmul.bf16.gmra.mxu0 %v3868
    %v4070 = vpop.f32.mrf.mxu0
    %v4071 = vadd.f32 0.0, %v4070
    %v4072 = vpop.f32.mrf.mxu0
    %4073 = vdwg.mxu0
    %4074 = vmatpush.bf16.msra.mxu0 %v4026
    %4075 = vmatpush.bf16.msra.mxu0 %v4022
    %4076 = vmatpush.bf16.msra.mxu0 %v4018
    %4077 = vmatpush.bf16.msra.mxu0 %v4014
    %4078 = vmatpush.bf16.msra.mxu0 %v4010
    %4079 = vmatpush.bf16.msra.mxu0 %v4006
    %4080 = vmatpush.bf16.msra.mxu0 %v4002
    %4081 = vmatpush.bf16.msra.mxu0 %v3998
    %4082 = vmatmul.bf16.gmra.mxu0 %v3868
    %v4083 = vpop.f32.mrf.mxu0
    %v4084 = vadd.f32 0.0, %v4083
    %v4085 = vpop.f32.mrf.mxu0
    %4086 = vdwg.mxu0
    %4087 = vmatpush.bf16.msra.mxu0 %v4027
    %4088 = vmatpush.bf16.msra.mxu0 %v4023
    %4089 = vmatpush.bf16.msra.mxu0 %v4019
    %4090 = vmatpush.bf16.msra.mxu0 %v4015
    %4091 = vmatpush.bf16.msra.mxu0 %v4011
    %4092 = vmatpush.bf16.msra.mxu0 %v4007
    %4093 = vmatpush.bf16.msra.mxu0 %v4003
    %4094 = vmatpush.bf16.msra.mxu0 %v3999
    %4095 = vmatmul.bf16.gmra.mxu0 %v3868
    %v4096 = vpop.f32.mrf.mxu0
    %v4097 = vadd.f32 0.0, %v4096
    %v4098 = vpop.f32.mrf.mxu0
    %4099 = vdwg.mxu0
    %4100 = vmatpush.bf16.msra.mxu0 %v4028
    %4101 = vmatpush.bf16.msra.mxu0 %v4024
    %4102 = vmatpush.bf16.msra.mxu0 %v4020
    %4103 = vmatpush.bf16.msra.mxu0 %v4016
    %4104 = vmatpush.bf16.msra.mxu0 %v4012
    %4105 = vmatpush.bf16.msra.mxu0 %v4008
    %4106 = vmatpush.bf16.msra.mxu0 %v4004
    %4107 = vmatpush.bf16.msra.mxu0 %v4000
    %4108 = vmatmul.bf16.gmra.mxu0 %v3868
    %v4109 = vpop.f32.mrf.mxu0
    %v4110 = vadd.f32 0.0, %v4109
    %v4111 = vpop.f32.mrf.mxu0
    %4112 = vdwg.mxu0
    %v4113 = vadd.f32 %v3864, %v4071
    %v4114 = vadd.f32 %v3865, %v4084
    %v4115 = vadd.f32 %v3866, %v4097
    %v4116 = vadd.f32 %v3867, %v4110
    %v4117 = vxor.u32 %v4113, 2147483648
    %v4118 = vmul.f32 %v4117, 1.442695
    %v4119 = vpow.pop %v4118
    %v4120 = vadd.f32 %v4119, 1.0
    %v4121 = vrcp.pop %v4120
    %v4122 = vmul.f32 %v4120, %v4121
    %v4123 = vsub.f32 1.0, %v4122
    %v4124 = vmul.f32 %v4121, %v4123
    %v4125 = vadd.f32 %v4121, %v4124
    %vm4126 = vweird.f32 %v4120
    %vm4127 = vweird.f32 %v4121
    %vm4128 = vmor %vm4126, %vm4127
    %v4129 = vsel %vm4128, %v4121, %v4125
    %v4130 = vand.u32 2147483647, %v4120
    %vm4131 = vcmp.eq.f32.partialorder %v4130, 8.507059e+37
    %v4132 = vand.u32 %v4120, 2147483648
    %v4133 = vor.u32 1.1754944e-38, %v4132
    %v4134 = vsel %vm4131, %v4133, %v4129
    %v4135 = vmul.f32 1.0, %v4134
    %v4136 = vxor.u32 %v4114, 2147483648
    %v4137 = vmul.f32 %v4136, 1.442695
    %v4138 = vpow.pop %v4137
    %v4139 = vadd.f32 %v4138, 1.0
    %v4140 = vrcp.pop %v4139
    %v4141 = vmul.f32 %v4139, %v4140
    %v4142 = vsub.f32 1.0, %v4141
    %v4143 = vmul.f32 %v4140, %v4142
    %v4144 = vadd.f32 %v4140, %v4143
    %vm4145 = vweird.f32 %v4139
    %vm4146 = vweird.f32 %v4140
    %vm4147 = vmor %vm4145, %vm4146
    %v4148 = vsel %vm4147, %v4140, %v4144
    %v4149 = vand.u32 2147483647, %v4139
    %vm4150 = vcmp.eq.f32.partialorder %v4149, 8.507059e+37
    %v4151 = vand.u32 %v4139, 2147483648
    %v4152 = vor.u32 1.1754944e-38, %v4151
    %v4153 = vsel %vm4150, %v4152, %v4148
    %v4154 = vmul.f32 1.0, %v4153
    %v4155 = vtanh.pop %v4115
    %v4156 = vxor.u32 %v4116, 2147483648
    %v4157 = vmul.f32 %v4156, 1.442695
    %v4158 = vpow.pop %v4157
    %v4159 = vadd.f32 %v4158, 1.0
    %v4160 = vrcp.pop %v4159
    %v4161 = vmul.f32 %v4159, %v4160
    %v4162 = vsub.f32 1.0, %v4161
    %v4163 = vmul.f32 %v4160, %v4162
    %v4164 = vadd.f32 %v4160, %v4163
    %vm4165 = vweird.f32 %v4159
    %vm4166 = vweird.f32 %v4160
    %vm4167 = vmor %vm4165, %vm4166
    %v4168 = vsel %vm4167, %v4160, %v4164
    %v4169 = vand.u32 2147483647, %v4159
    %vm4170 = vcmp.eq.f32.partialorder %v4169, 8.507059e+37
    %v4171 = vand.u32 %v4159, 2147483648
    %v4172 = vor.u32 1.1754944e-38, %v4171
    %v4173 = vsel %vm4170, %v4172, %v4168
    %v4174 = vmul.f32 1.0, %v4173
    %v4175 = vmul.f32 %v4154, %v3860
    %v4176 = vmul.f32 %v4135, %v4155
    %v4177 = vadd.f32 %v4175, %v4176
    %v4178 = vtanh.pop %v4177
    %v4179 = vmul.f32 %v4174, %v4178
    %4180 = vst [vmem:[#allocation3 + $0x8] sm:$0xff] %v4179
    %v4181 = vld [vmem:[#allocation4 + $0x40] sm:$0xff]
    %v4182 = vld [vmem:[#allocation4 + $0x48] sm:$0xff]
    %v4183 = vld [vmem:[#allocation4 + $0x50] sm:$0xff]
    %v4184 = vld [vmem:[#allocation4 + $0x58] sm:$0xff]
    %v4185 = vpack.c.bf16 %v4179, %v4179
    %v4186 = vld [vmem:[#allocation16] sm:$0xff]
    %v4187 = vld [vmem:[#allocation16 + $0x8] sm:$0xff]
    %v4188 = vld [vmem:[#allocation16 + $0x10] sm:$0xff]
    %v4189 = vld [vmem:[#allocation16 + $0x18] sm:$0xff]
    %v4190 = vld [vmem:[#allocation16 + $0x20] sm:$0xff]
    %v4191 = vld [vmem:[#allocation16 + $0x28] sm:$0xff]
    %v4192 = vld [vmem:[#allocation16 + $0x30] sm:$0xff]
    %v4193 = vld [vmem:[#allocation16 + $0x38] sm:$0xff]
    %v4194 = vld [vmem:[#allocation16 + $0x40] sm:$0xff]
    %v4195 = vld [vmem:[#allocation16 + $0x48] sm:$0xff]
    %v4196 = vld [vmem:[#allocation16 + $0x50] sm:$0xff]
    %v4197 = vld [vmem:[#allocation16 + $0x58] sm:$0xff]
    %v4198 = vld [vmem:[#allocation16 + $0x60] sm:$0xff]
    %v4199 = vld [vmem:[#allocation16 + $0x68] sm:$0xff]
    %v4200 = vld [vmem:[#allocation16 + $0x70] sm:$0xff]
    %v4201 = vld [vmem:[#allocation16 + $0x78] sm:$0xff]
    %v4202 = vld [vmem:[#allocation16 + $0x80] sm:$0xff]
    %v4203 = vld [vmem:[#allocation16 + $0x88] sm:$0xff]
    %v4204 = vld [vmem:[#allocation16 + $0x90] sm:$0xff]
    %v4205 = vld [vmem:[#allocation16 + $0x98] sm:$0xff]
    %v4206 = vld [vmem:[#allocation16 + $0xa0] sm:$0xff]
    %v4207 = vld [vmem:[#allocation16 + $0xa8] sm:$0xff]
    %v4208 = vld [vmem:[#allocation16 + $0xb0] sm:$0xff]
    %v4209 = vld [vmem:[#allocation16 + $0xb8] sm:$0xff]
    %v4210 = vld [vmem:[#allocation16 + $0xc0] sm:$0xff]
    %v4211 = vld [vmem:[#allocation16 + $0xc8] sm:$0xff]
    %v4212 = vld [vmem:[#allocation16 + $0xd0] sm:$0xff]
    %v4213 = vld [vmem:[#allocation16 + $0xd8] sm:$0xff]
    %v4214 = vld [vmem:[#allocation16 + $0xe0] sm:$0xff]
    %v4215 = vld [vmem:[#allocation16 + $0xe8] sm:$0xff]
    %v4216 = vld [vmem:[#allocation16 + $0xf0] sm:$0xff]
    %v4217 = vld [vmem:[#allocation16 + $0xf8] sm:$0xff]
    %v4250 = vunpack.c.l.b16 %v4186
    %v4251 = vunpack.c.h.b16 %v4186
    %v4252 = vunpack.c.l.b16 %v4187
    %v4253 = vunpack.c.h.b16 %v4187
    %v4254 = vunpack.c.l.b16 %v4188
    %v4255 = vunpack.c.h.b16 %v4188
    %v4256 = vunpack.c.l.b16 %v4189
    %v4257 = vunpack.c.h.b16 %v4189
    %v4258 = vunpack.c.l.b16 %v4190
    %v4259 = vunpack.c.h.b16 %v4190
    %v4260 = vunpack.c.l.b16 %v4191
    %v4261 = vunpack.c.h.b16 %v4191
    %v4262 = vunpack.c.l.b16 %v4192
    %v4263 = vunpack.c.h.b16 %v4192
    %v4264 = vunpack.c.l.b16 %v4193
    %v4265 = vunpack.c.h.b16 %v4193
    %v4266 = vunpack.c.l.b16 %v4194
    %v4267 = vunpack.c.h.b16 %v4194
    %v4268 = vunpack.c.l.b16 %v4195
    %v4269 = vunpack.c.h.b16 %v4195
    %v4270 = vunpack.c.l.b16 %v4196
    %v4271 = vunpack.c.h.b16 %v4196
    %v4272 = vunpack.c.l.b16 %v4197
    %v4273 = vunpack.c.h.b16 %v4197
    %v4274 = vunpack.c.l.b16 %v4198
    %v4275 = vunpack.c.h.b16 %v4198
    %v4276 = vunpack.c.l.b16 %v4199
    %v4277 = vunpack.c.h.b16 %v4199
    %v4278 = vunpack.c.l.b16 %v4200
    %v4279 = vunpack.c.h.b16 %v4200
    %v4280 = vunpack.c.l.b16 %v4201
    %v4281 = vunpack.c.h.b16 %v4201
    %v4282 = vunpack.c.l.b16 %v4202
    %v4283 = vunpack.c.h.b16 %v4202
    %v4284 = vunpack.c.l.b16 %v4203
    %v4285 = vunpack.c.h.b16 %v4203
    %v4286 = vunpack.c.l.b16 %v4204
    %v4287 = vunpack.c.h.b16 %v4204
    %v4288 = vunpack.c.l.b16 %v4205
    %v4289 = vunpack.c.h.b16 %v4205
    %v4290 = vunpack.c.l.b16 %v4206
    %v4291 = vunpack.c.h.b16 %v4206
    %v4292 = vunpack.c.l.b16 %v4207
    %v4293 = vunpack.c.h.b16 %v4207
    %v4294 = vunpack.c.l.b16 %v4208
    %v4295 = vunpack.c.h.b16 %v4208
    %v4296 = vunpack.c.l.b16 %v4209
    %v4297 = vunpack.c.h.b16 %v4209
    %v4298 = vunpack.c.l.b16 %v4210
    %v4299 = vunpack.c.h.b16 %v4210
    %v4300 = vunpack.c.l.b16 %v4211
    %v4301 = vunpack.c.h.b16 %v4211
    %v4302 = vunpack.c.l.b16 %v4212
    %v4303 = vunpack.c.h.b16 %v4212
    %v4304 = vunpack.c.l.b16 %v4213
    %v4305 = vunpack.c.h.b16 %v4213
    %v4306 = vunpack.c.l.b16 %v4214
    %v4307 = vunpack.c.h.b16 %v4214
    %v4308 = vunpack.c.l.b16 %v4215
    %v4309 = vunpack.c.h.b16 %v4215
    %v4310 = vunpack.c.l.b16 %v4216
    %v4311 = vunpack.c.h.b16 %v4216
    %v4312 = vunpack.c.l.b16 %v4217
    %v4313 = vunpack.c.h.b16 %v4217
    %v4314 = vpack.c.b16 %v4254, %v4250
    %v4315 = vpack.c.b16 %v4255, %v4251
    %v4316 = vpack.c.b16 %v4256, %v4252
    %v4317 = vpack.c.b16 %v4257, %v4253
    %v4318 = vpack.c.b16 %v4262, %v4258
    %v4319 = vpack.c.b16 %v4263, %v4259
    %v4320 = vpack.c.b16 %v4264, %v4260
    %v4321 = vpack.c.b16 %v4265, %v4261
    %v4322 = vpack.c.b16 %v4270, %v4266
    %v4323 = vpack.c.b16 %v4271, %v4267
    %v4324 = vpack.c.b16 %v4272, %v4268
    %v4325 = vpack.c.b16 %v4273, %v4269
    %v4326 = vpack.c.b16 %v4278, %v4274
    %v4327 = vpack.c.b16 %v4279, %v4275
    %v4328 = vpack.c.b16 %v4280, %v4276
    %v4329 = vpack.c.b16 %v4281, %v4277
    %v4330 = vpack.c.b16 %v4286, %v4282
    %v4331 = vpack.c.b16 %v4287, %v4283
    %v4332 = vpack.c.b16 %v4288, %v4284
    %v4333 = vpack.c.b16 %v4289, %v4285
    %v4334 = vpack.c.b16 %v4294, %v4290
    %v4335 = vpack.c.b16 %v4295, %v4291
    %v4336 = vpack.c.b16 %v4296, %v4292
    %v4337 = vpack.c.b16 %v4297, %v4293
    %v4338 = vpack.c.b16 %v4302, %v4298
    %v4339 = vpack.c.b16 %v4303, %v4299
    %v4340 = vpack.c.b16 %v4304, %v4300
    %v4341 = vpack.c.b16 %v4305, %v4301
    %v4342 = vpack.c.b16 %v4310, %v4306
    %v4343 = vpack.c.b16 %v4311, %v4307
    %v4344 = vpack.c.b16 %v4312, %v4308
    %v4345 = vpack.c.b16 %v4313, %v4309
    %4378 = vmatpush.bf16.msra.mxu0 %v4342
    %4379 = vmatpush.bf16.msra.mxu0 %v4338
    %4380 = vmatpush.bf16.msra.mxu0 %v4334
    %4381 = vmatpush.bf16.msra.mxu0 %v4330
    %4382 = vmatpush.bf16.msra.mxu0 %v4326
    %4383 = vmatpush.bf16.msra.mxu0 %v4322
    %4384 = vmatpush.bf16.msra.mxu0 %v4318
    %4385 = vmatpush.bf16.msra.mxu0 %v4314
    %4386 = vmatmul.bf16.gmra.mxu0 %v4185
    %v4387 = vpop.f32.mrf.mxu0
    %v4388 = vadd.f32 0.0, %v4387
    %v4389 = vpop.f32.mrf.mxu0
    %4390 = vdwg.mxu0
    %4391 = vmatpush.bf16.msra.mxu0 %v4343
    %4392 = vmatpush.bf16.msra.mxu0 %v4339
    %4393 = vmatpush.bf16.msra.mxu0 %v4335
    %4394 = vmatpush.bf16.msra.mxu0 %v4331
    %4395 = vmatpush.bf16.msra.mxu0 %v4327
    %4396 = vmatpush.bf16.msra.mxu0 %v4323
    %4397 = vmatpush.bf16.msra.mxu0 %v4319
    %4398 = vmatpush.bf16.msra.mxu0 %v4315
    %4399 = vmatmul.bf16.gmra.mxu0 %v4185
    %v4400 = vpop.f32.mrf.mxu0
    %v4401 = vadd.f32 0.0, %v4400
    %v4402 = vpop.f32.mrf.mxu0
    %4403 = vdwg.mxu0
    %4404 = vmatpush.bf16.msra.mxu0 %v4344
    %4405 = vmatpush.bf16.msra.mxu0 %v4340
    %4406 = vmatpush.bf16.msra.mxu0 %v4336
    %4407 = vmatpush.bf16.msra.mxu0 %v4332
    %4408 = vmatpush.bf16.msra.mxu0 %v4328
    %4409 = vmatpush.bf16.msra.mxu0 %v4324
    %4410 = vmatpush.bf16.msra.mxu0 %v4320
    %4411 = vmatpush.bf16.msra.mxu0 %v4316
    %4412 = vmatmul.bf16.gmra.mxu0 %v4185
    %v4413 = vpop.f32.mrf.mxu0
    %v4414 = vadd.f32 0.0, %v4413
    %v4415 = vpop.f32.mrf.mxu0
    %4416 = vdwg.mxu0
    %4417 = vmatpush.bf16.msra.mxu0 %v4345
    %4418 = vmatpush.bf16.msra.mxu0 %v4341
    %4419 = vmatpush.bf16.msra.mxu0 %v4337
    %4420 = vmatpush.bf16.msra.mxu0 %v4333
    %4421 = vmatpush.bf16.msra.mxu0 %v4329
    %4422 = vmatpush.bf16.msra.mxu0 %v4325
    %4423 = vmatpush.bf16.msra.mxu0 %v4321
    %4424 = vmatpush.bf16.msra.mxu0 %v4317
    %4425 = vmatmul.bf16.gmra.mxu0 %v4185
    %v4426 = vpop.f32.mrf.mxu0
    %v4427 = vadd.f32 0.0, %v4426
    %v4428 = vpop.f32.mrf.mxu0
    %4429 = vdwg.mxu0
    %v4430 = vadd.f32 %v4181, %v4388
    %v4431 = vadd.f32 %v4182, %v4401
    %v4432 = vadd.f32 %v4183, %v4414
    %v4433 = vadd.f32 %v4184, %v4427
    %v4434 = vxor.u32 %v4430, 2147483648
    %v4435 = vmul.f32 %v4434, 1.442695
    %v4436 = vpow.pop %v4435
    %v4437 = vadd.f32 %v4436, 1.0
    %v4438 = vrcp.pop %v4437
    %v4439 = vmul.f32 %v4437, %v4438
    %v4440 = vsub.f32 1.0, %v4439
    %v4441 = vmul.f32 %v4438, %v4440
    %v4442 = vadd.f32 %v4438, %v4441
    %vm4443 = vweird.f32 %v4437
    %vm4444 = vweird.f32 %v4438
    %vm4445 = vmor %vm4443, %vm4444
    %v4446 = vsel %vm4445, %v4438, %v4442
    %v4447 = vand.u32 2147483647, %v4437
    %vm4448 = vcmp.eq.f32.partialorder %v4447, 8.507059e+37
    %v4449 = vand.u32 %v4437, 2147483648
    %v4450 = vor.u32 1.1754944e-38, %v4449
    %v4451 = vsel %vm4448, %v4450, %v4446
    %v4452 = vmul.f32 1.0, %v4451
    %v4453 = vxor.u32 %v4431, 2147483648
    %v4454 = vmul.f32 %v4453, 1.442695
    %v4455 = vpow.pop %v4454
    %v4456 = vadd.f32 %v4455, 1.0
    %v4457 = vrcp.pop %v4456
    %v4458 = vmul.f32 %v4456, %v4457
    %v4459 = vsub.f32 1.0, %v4458
    %v4460 = vmul.f32 %v4457, %v4459
    %v4461 = vadd.f32 %v4457, %v4460
    %vm4462 = vweird.f32 %v4456
    %vm4463 = vweird.f32 %v4457
    %vm4464 = vmor %vm4462, %vm4463
    %v4465 = vsel %vm4464, %v4457, %v4461
    %v4466 = vand.u32 2147483647, %v4456
    %vm4467 = vcmp.eq.f32.partialorder %v4466, 8.507059e+37
    %v4468 = vand.u32 %v4456, 2147483648
    %v4469 = vor.u32 1.1754944e-38, %v4468
    %v4470 = vsel %vm4467, %v4469, %v4465
    %v4471 = vmul.f32 1.0, %v4470
    %v4472 = vtanh.pop %v4432
    %v4473 = vxor.u32 %v4433, 2147483648
    %v4474 = vmul.f32 %v4473, 1.442695
    %v4475 = vpow.pop %v4474
    %v4476 = vadd.f32 %v4475, 1.0
    %v4477 = vrcp.pop %v4476
    %v4478 = vmul.f32 %v4476, %v4477
    %v4479 = vsub.f32 1.0, %v4478
    %v4480 = vmul.f32 %v4477, %v4479
    %v4481 = vadd.f32 %v4477, %v4480
    %vm4482 = vweird.f32 %v4476
    %vm4483 = vweird.f32 %v4477
    %vm4484 = vmor %vm4482, %vm4483
    %v4485 = vsel %vm4484, %v4477, %v4481
    %v4486 = vand.u32 2147483647, %v4476
    %vm4487 = vcmp.eq.f32.partialorder %v4486, 8.507059e+37
    %v4488 = vand.u32 %v4476, 2147483648
    %v4489 = vor.u32 1.1754944e-38, %v4488
    %v4490 = vsel %vm4487, %v4489, %v4485
    %v4491 = vmul.f32 1.0, %v4490
    %v4492 = vmul.f32 %v4471, %v4177
    %v4493 = vmul.f32 %v4452, %v4472
    %v4494 = vadd.f32 %v4492, %v4493
    %v4495 = vtanh.pop %v4494
    %v4496 = vmul.f32 %v4491, %v4495
    %4497 = vst [vmem:[#allocation3 + $0x10] sm:$0xff] %v4496
    %v4498 = vld [vmem:[#allocation4 + $0x60] sm:$0xff]
    %v4499 = vld [vmem:[#allocation4 + $0x68] sm:$0xff]
    %v4500 = vld [vmem:[#allocation4 + $0x70] sm:$0xff]
    %v4501 = vld [vmem:[#allocation4 + $0x78] sm:$0xff]
    %v4502 = vpack.c.bf16 %v4496, %v4496
    %v4503 = vld [vmem:[#allocation16] sm:$0xff]
    %v4504 = vld [vmem:[#allocation16 + $0x8] sm:$0xff]
    %v4505 = vld [vmem:[#allocation16 + $0x10] sm:$0xff]
    %v4506 = vld [vmem:[#allocation16 + $0x18] sm:$0xff]
    %v4507 = vld [vmem:[#allocation16 + $0x20] sm:$0xff]
    %v4508 = vld [vmem:[#allocation16 + $0x28] sm:$0xff]
    %v4509 = vld [vmem:[#allocation16 + $0x30] sm:$0xff]
    %v4510 = vld [vmem:[#allocation16 + $0x38] sm:$0xff]
    %v4511 = vld [vmem:[#allocation16 + $0x40] sm:$0xff]
    %v4512 = vld [vmem:[#allocation16 + $0x48] sm:$0xff]
    %v4513 = vld [vmem:[#allocation16 + $0x50] sm:$0xff]
    %v4514 = vld [vmem:[#allocation16 + $0x58] sm:$0xff]
    %v4515 = vld [vmem:[#allocation16 + $0x60] sm:$0xff]
    %v4516 = vld [vmem:[#allocation16 + $0x68] sm:$0xff]
    %v4517 = vld [vmem:[#allocation16 + $0x70] sm:$0xff]
    %v4518 = vld [vmem:[#allocation16 + $0x78] sm:$0xff]
    %v4519 = vld [vmem:[#allocation16 + $0x80] sm:$0xff]
    %v4520 = vld [vmem:[#allocation16 + $0x88] sm:$0xff]
    %v4521 = vld [vmem:[#allocation16 + $0x90] sm:$0xff]
    %v4522 = vld [vmem:[#allocation16 + $0x98] sm:$0xff]
    %v4523 = vld [vmem:[#allocation16 + $0xa0] sm:$0xff]
    %v4524 = vld [vmem:[#allocation16 + $0xa8] sm:$0xff]
    %v4525 = vld [vmem:[#allocation16 + $0xb0] sm:$0xff]
    %v4526 = vld [vmem:[#allocation16 + $0xb8] sm:$0xff]
    %v4527 = vld [vmem:[#allocation16 + $0xc0] sm:$0xff]
    %v4528 = vld [vmem:[#allocation16 + $0xc8] sm:$0xff]
    %v4529 = vld [vmem:[#allocation16 + $0xd0] sm:$0xff]
    %v4530 = vld [vmem:[#allocation16 + $0xd8] sm:$0xff]
    %v4531 = vld [vmem:[#allocation16 + $0xe0] sm:$0xff]
    %v4532 = vld [vmem:[#allocation16 + $0xe8] sm:$0xff]
    %v4533 = vld [vmem:[#allocation16 + $0xf0] sm:$0xff]
    %v4534 = vld [vmem:[#allocation16 + $0xf8] sm:$0xff]
    %v4567 = vunpack.c.l.b16 %v4503
    %v4568 = vunpack.c.h.b16 %v4503
    %v4569 = vunpack.c.l.b16 %v4504
    %v4570 = vunpack.c.h.b16 %v4504
    %v4571 = vunpack.c.l.b16 %v4505
    %v4572 = vunpack.c.h.b16 %v4505
    %v4573 = vunpack.c.l.b16 %v4506
    %v4574 = vunpack.c.h.b16 %v4506
    %v4575 = vunpack.c.l.b16 %v4507
    %v4576 = vunpack.c.h.b16 %v4507
    %v4577 = vunpack.c.l.b16 %v4508
    %v4578 = vunpack.c.h.b16 %v4508
    %v4579 = vunpack.c.l.b16 %v4509
    %v4580 = vunpack.c.h.b16 %v4509
    %v4581 = vunpack.c.l.b16 %v4510
    %v4582 = vunpack.c.h.b16 %v4510
    %v4583 = vunpack.c.l.b16 %v4511
    %v4584 = vunpack.c.h.b16 %v4511
    %v4585 = vunpack.c.l.b16 %v4512
    %v4586 = vunpack.c.h.b16 %v4512
    %v4587 = vunpack.c.l.b16 %v4513
    %v4588 = vunpack.c.h.b16 %v4513
    %v4589 = vunpack.c.l.b16 %v4514
    %v4590 = vunpack.c.h.b16 %v4514
    %v4591 = vunpack.c.l.b16 %v4515
    %v4592 = vunpack.c.h.b16 %v4515
    %v4593 = vunpack.c.l.b16 %v4516
    %v4594 = vunpack.c.h.b16 %v4516
    %v4595 = vunpack.c.l.b16 %v4517
    %v4596 = vunpack.c.h.b16 %v4517
    %v4597 = vunpack.c.l.b16 %v4518
    %v4598 = vunpack.c.h.b16 %v4518
    %v4599 = vunpack.c.l.b16 %v4519
    %v4600 = vunpack.c.h.b16 %v4519
    %v4601 = vunpack.c.l.b16 %v4520
    %v4602 = vunpack.c.h.b16 %v4520
    %v4603 = vunpack.c.l.b16 %v4521
    %v4604 = vunpack.c.h.b16 %v4521
    %v4605 = vunpack.c.l.b16 %v4522
    %v4606 = vunpack.c.h.b16 %v4522
    %v4607 = vunpack.c.l.b16 %v4523
    %v4608 = vunpack.c.h.b16 %v4523
    %v4609 = vunpack.c.l.b16 %v4524
    %v4610 = vunpack.c.h.b16 %v4524
    %v4611 = vunpack.c.l.b16 %v4525
    %v4612 = vunpack.c.h.b16 %v4525
    %v4613 = vunpack.c.l.b16 %v4526
    %v4614 = vunpack.c.h.b16 %v4526
    %v4615 = vunpack.c.l.b16 %v4527
    %v4616 = vunpack.c.h.b16 %v4527
    %v4617 = vunpack.c.l.b16 %v4528
    %v4618 = vunpack.c.h.b16 %v4528
    %v4619 = vunpack.c.l.b16 %v4529
    %v4620 = vunpack.c.h.b16 %v4529
    %v4621 = vunpack.c.l.b16 %v4530
    %v4622 = vunpack.c.h.b16 %v4530
    %v4623 = vunpack.c.l.b16 %v4531
    %v4624 = vunpack.c.h.b16 %v4531
    %v4625 = vunpack.c.l.b16 %v4532
    %v4626 = vunpack.c.h.b16 %v4532
    %v4627 = vunpack.c.l.b16 %v4533
    %v4628 = vunpack.c.h.b16 %v4533
    %v4629 = vunpack.c.l.b16 %v4534
    %v4630 = vunpack.c.h.b16 %v4534
    %v4631 = vpack.c.b16 %v4571, %v4567
    %v4632 = vpack.c.b16 %v4572, %v4568
    %v4633 = vpack.c.b16 %v4573, %v4569
    %v4634 = vpack.c.b16 %v4574, %v4570
    %v4635 = vpack.c.b16 %v4579, %v4575
    %v4636 = vpack.c.b16 %v4580, %v4576
    %v4637 = vpack.c.b16 %v4581, %v4577
    %v4638 = vpack.c.b16 %v4582, %v4578
    %v4639 = vpack.c.b16 %v4587, %v4583
    %v4640 = vpack.c.b16 %v4588, %v4584
    %v4641 = vpack.c.b16 %v4589, %v4585
    %v4642 = vpack.c.b16 %v4590, %v4586
    %v4643 = vpack.c.b16 %v4595, %v4591
    %v4644 = vpack.c.b16 %v4596, %v4592
    %v4645 = vpack.c.b16 %v4597, %v4593
    %v4646 = vpack.c.b16 %v4598, %v4594
    %v4647 = vpack.c.b16 %v4603, %v4599
    %v4648 = vpack.c.b16 %v4604, %v4600
    %v4649 = vpack.c.b16 %v4605, %v4601
    %v4650 = vpack.c.b16 %v4606, %v4602
    %v4651 = vpack.c.b16 %v4611, %v4607
    %v4652 = vpack.c.b16 %v4612, %v4608
    %v4653 = vpack.c.b16 %v4613, %v4609
    %v4654 = vpack.c.b16 %v4614, %v4610
    %v4655 = vpack.c.b16 %v4619, %v4615
    %v4656 = vpack.c.b16 %v4620, %v4616
    %v4657 = vpack.c.b16 %v4621, %v4617
    %v4658 = vpack.c.b16 %v4622, %v4618
    %v4659 = vpack.c.b16 %v4627, %v4623
    %v4660 = vpack.c.b16 %v4628, %v4624
    %v4661 = vpack.c.b16 %v4629, %v4625
    %v4662 = vpack.c.b16 %v4630, %v4626
    %4695 = vmatpush.bf16.msra.mxu0 %v4659
    %4696 = vmatpush.bf16.msra.mxu0 %v4655
    %4697 = vmatpush.bf16.msra.mxu0 %v4651
    %4698 = vmatpush.bf16.msra.mxu0 %v4647
    %4699 = vmatpush.bf16.msra.mxu0 %v4643
    %4700 = vmatpush.bf16.msra.mxu0 %v4639
    %4701 = vmatpush.bf16.msra.mxu0 %v4635
    %4702 = vmatpush.bf16.msra.mxu0 %v4631
    %4703 = vmatmul.bf16.gmra.mxu0 %v4502
    %v4704 = vpop.f32.mrf.mxu0
    %v4705 = vadd.f32 0.0, %v4704
    %v4706 = vpop.f32.mrf.mxu0
    %4707 = vdwg.mxu0
    %4708 = vmatpush.bf16.msra.mxu0 %v4660
    %4709 = vmatpush.bf16.msra.mxu0 %v4656
    %4710 = vmatpush.bf16.msra.mxu0 %v4652
    %4711 = vmatpush.bf16.msra.mxu0 %v4648
    %4712 = vmatpush.bf16.msra.mxu0 %v4644
    %4713 = vmatpush.bf16.msra.mxu0 %v4640
    %4714 = vmatpush.bf16.msra.mxu0 %v4636
    %4715 = vmatpush.bf16.msra.mxu0 %v4632
    %4716 = vmatmul.bf16.gmra.mxu0 %v4502
    %v4717 = vpop.f32.mrf.mxu0
    %v4718 = vadd.f32 0.0, %v4717
    %v4719 = vpop.f32.mrf.mxu0
    %4720 = vdwg.mxu0
    %4721 = vmatpush.bf16.msra.mxu0 %v4661
    %4722 = vmatpush.bf16.msra.mxu0 %v4657
    %4723 = vmatpush.bf16.msra.mxu0 %v4653
    %4724 = vmatpush.bf16.msra.mxu0 %v4649
    %4725 = vmatpush.bf16.msra.mxu0 %v4645
    %4726 = vmatpush.bf16.msra.mxu0 %v4641
    %4727 = vmatpush.bf16.msra.mxu0 %v4637
    %4728 = vmatpush.bf16.msra.mxu0 %v4633
    %4729 = vmatmul.bf16.gmra.mxu0 %v4502
    %v4730 = vpop.f32.mrf.mxu0
    %v4731 = vadd.f32 0.0, %v4730
    %v4732 = vpop.f32.mrf.mxu0
    %4733 = vdwg.mxu0
    %4734 = vmatpush.bf16.msra.mxu0 %v4662
    %4735 = vmatpush.bf16.msra.mxu0 %v4658
    %4736 = vmatpush.bf16.msra.mxu0 %v4654
    %4737 = vmatpush.bf16.msra.mxu0 %v4650
    %4738 = vmatpush.bf16.msra.mxu0 %v4646
    %4739 = vmatpush.bf16.msra.mxu0 %v4642
    %4740 = vmatpush.bf16.msra.mxu0 %v4638
    %4741 = vmatpush.bf16.msra.mxu0 %v4634
    %4742 = vmatmul.bf16.gmra.mxu0 %v4502
    %v4743 = vpop.f32.mrf.mxu0
    %v4744 = vadd.f32 0.0, %v4743
    %v4745 = vpop.f32.mrf.mxu0
    %4746 = vdwg.mxu0
    %v4747 = vadd.f32 %v4498, %v4705
    %v4748 = vadd.f32 %v4499, %v4718
    %v4749 = vadd.f32 %v4500, %v4731
    %v4750 = vadd.f32 %v4501, %v4744
    %v4751 = vxor.u32 %v4747, 2147483648
    %v4752 = vmul.f32 %v4751, 1.442695
    %v4753 = vpow.pop %v4752
    %v4754 = vadd.f32 %v4753, 1.0
    %v4755 = vrcp.pop %v4754
    %v4756 = vmul.f32 %v4754, %v4755
    %v4757 = vsub.f32 1.0, %v4756
    %v4758 = vmul.f32 %v4755, %v4757
    %v4759 = vadd.f32 %v4755, %v4758
    %vm4760 = vweird.f32 %v4754
    %vm4761 = vweird.f32 %v4755
    %vm4762 = vmor %vm4760, %vm4761
    %v4763 = vsel %vm4762, %v4755, %v4759
    %v4764 = vand.u32 2147483647, %v4754
    %vm4765 = vcmp.eq.f32.partialorder %v4764, 8.507059e+37
    %v4766 = vand.u32 %v4754, 2147483648
    %v4767 = vor.u32 1.1754944e-38, %v4766
    %v4768 = vsel %vm4765, %v4767, %v4763
    %v4769 = vmul.f32 1.0, %v4768
    %v4770 = vxor.u32 %v4748, 2147483648
    %v4771 = vmul.f32 %v4770, 1.442695
    %v4772 = vpow.pop %v4771
    %v4773 = vadd.f32 %v4772, 1.0
    %v4774 = vrcp.pop %v4773
    %v4775 = vmul.f32 %v4773, %v4774
    %v4776 = vsub.f32 1.0, %v4775
    %v4777 = vmul.f32 %v4774, %v4776
    %v4778 = vadd.f32 %v4774, %v4777
    %vm4779 = vweird.f32 %v4773
    %vm4780 = vweird.f32 %v4774
    %vm4781 = vmor %vm4779, %vm4780
    %v4782 = vsel %vm4781, %v4774, %v4778
    %v4783 = vand.u32 2147483647, %v4773
    %vm4784 = vcmp.eq.f32.partialorder %v4783, 8.507059e+37
    %v4785 = vand.u32 %v4773, 2147483648
    %v4786 = vor.u32 1.1754944e-38, %v4785
    %v4787 = vsel %vm4784, %v4786, %v4782
    %v4788 = vmul.f32 1.0, %v4787
    %v4789 = vtanh.pop %v4749
    %v4790 = vxor.u32 %v4750, 2147483648
    %v4791 = vmul.f32 %v4790, 1.442695
    %v4792 = vpow.pop %v4791
    %v4793 = vadd.f32 %v4792, 1.0
    %v4794 = vrcp.pop %v4793
    %v4795 = vmul.f32 %v4793, %v4794
    %v4796 = vsub.f32 1.0, %v4795
    %v4797 = vmul.f32 %v4794, %v4796
    %v4798 = vadd.f32 %v4794, %v4797
    %vm4799 = vweird.f32 %v4793
    %vm4800 = vweird.f32 %v4794
    %vm4801 = vmor %vm4799, %vm4800
    %v4802 = vsel %vm4801, %v4794, %v4798
    %v4803 = vand.u32 2147483647, %v4793
    %vm4804 = vcmp.eq.f32.partialorder %v4803, 8.507059e+37
    %v4805 = vand.u32 %v4793, 2147483648
    %v4806 = vor.u32 1.1754944e-38, %v4805
    %v4807 = vsel %vm4804, %v4806, %v4802
    %v4808 = vmul.f32 1.0, %v4807
    %v4809 = vmul.f32 %v4788, %v4494
    %v4810 = vmul.f32 %v4769, %v4789
    %v4811 = vadd.f32 %v4809, %v4810
    %v4812 = vtanh.pop %v4811
    %v4813 = vmul.f32 %v4808, %v4812
    %4814 = vst [vmem:[#allocation3 + $0x18] sm:$0xff] %v4813
    %v4815 = vld [vmem:[#allocation4 + $0x80] sm:$0xff]
    %v4816 = vld [vmem:[#allocation4 + $0x88] sm:$0xff]
    %v4817 = vld [vmem:[#allocation4 + $0x90] sm:$0xff]
    %v4818 = vld [vmem:[#allocation4 + $0x98] sm:$0xff]
    %v4819 = vpack.c.bf16 %v4813, %v4813
    %v4820 = vld [vmem:[#allocation16] sm:$0xff]
    %v4821 = vld [vmem:[#allocation16 + $0x8] sm:$0xff]
    %v4822 = vld [vmem:[#allocation16 + $0x10] sm:$0xff]
    %v4823 = vld [vmem:[#allocation16 + $0x18] sm:$0xff]
    %v4824 = vld [vmem:[#allocation16 + $0x20] sm:$0xff]
    %v4825 = vld [vmem:[#allocation16 + $0x28] sm:$0xff]
    %v4826 = vld [vmem:[#allocation16 + $0x30] sm:$0xff]
    %v4827 = vld [vmem:[#allocation16 + $0x38] sm:$0xff]
    %v4828 = vld [vmem:[#allocation16 + $0x40] sm:$0xff]
    %v4829 = vld [vmem:[#allocation16 + $0x48] sm:$0xff]
    %v4830 = vld [vmem:[#allocation16 + $0x50] sm:$0xff]
    %v4831 = vld [vmem:[#allocation16 + $0x58] sm:$0xff]
    %v4832 = vld [vmem:[#allocation16 + $0x60] sm:$0xff]
    %v4833 = vld [vmem:[#allocation16 + $0x68] sm:$0xff]
    %v4834 = vld [vmem:[#allocation16 + $0x70] sm:$0xff]
    %v4835 = vld [vmem:[#allocation16 + $0x78] sm:$0xff]
    %v4836 = vld [vmem:[#allocation16 + $0x80] sm:$0xff]
    %v4837 = vld [vmem:[#allocation16 + $0x88] sm:$0xff]
    %v4838 = vld [vmem:[#allocation16 + $0x90] sm:$0xff]
    %v4839 = vld [vmem:[#allocation16 + $0x98] sm:$0xff]
    %v4840 = vld [vmem:[#allocation16 + $0xa0] sm:$0xff]
    %v4841 = vld [vmem:[#allocation16 + $0xa8] sm:$0xff]
    %v4842 = vld [vmem:[#allocation16 + $0xb0] sm:$0xff]
    %v4843 = vld [vmem:[#allocation16 + $0xb8] sm:$0xff]
    %v4844 = vld [vmem:[#allocation16 + $0xc0] sm:$0xff]
    %v4845 = vld [vmem:[#allocation16 + $0xc8] sm:$0xff]
    %v4846 = vld [vmem:[#allocation16 + $0xd0] sm:$0xff]
    %v4847 = vld [vmem:[#allocation16 + $0xd8] sm:$0xff]
    %v4848 = vld [vmem:[#allocation16 + $0xe0] sm:$0xff]
    %v4849 = vld [vmem:[#allocation16 + $0xe8] sm:$0xff]
    %v4850 = vld [vmem:[#allocation16 + $0xf0] sm:$0xff]
    %v4851 = vld [vmem:[#allocation16 + $0xf8] sm:$0xff]
    %v4884 = vunpack.c.l.b16 %v4820
    %v4885 = vunpack.c.h.b16 %v4820
    %v4886 = vunpack.c.l.b16 %v4821
    %v4887 = vunpack.c.h.b16 %v4821
    %v4888 = vunpack.c.l.b16 %v4822
    %v4889 = vunpack.c.h.b16 %v4822
    %v4890 = vunpack.c.l.b16 %v4823
    %v4891 = vunpack.c.h.b16 %v4823
    %v4892 = vunpack.c.l.b16 %v4824
    %v4893 = vunpack.c.h.b16 %v4824
    %v4894 = vunpack.c.l.b16 %v4825
    %v4895 = vunpack.c.h.b16 %v4825
    %v4896 = vunpack.c.l.b16 %v4826
    %v4897 = vunpack.c.h.b16 %v4826
    %v4898 = vunpack.c.l.b16 %v4827
    %v4899 = vunpack.c.h.b16 %v4827
    %v4900 = vunpack.c.l.b16 %v4828
    %v4901 = vunpack.c.h.b16 %v4828
    %v4902 = vunpack.c.l.b16 %v4829
    %v4903 = vunpack.c.h.b16 %v4829
    %v4904 = vunpack.c.l.b16 %v4830
    %v4905 = vunpack.c.h.b16 %v4830
    %v4906 = vunpack.c.l.b16 %v4831
    %v4907 = vunpack.c.h.b16 %v4831
    %v4908 = vunpack.c.l.b16 %v4832
    %v4909 = vunpack.c.h.b16 %v4832
    %v4910 = vunpack.c.l.b16 %v4833
    %v4911 = vunpack.c.h.b16 %v4833
    %v4912 = vunpack.c.l.b16 %v4834
    %v4913 = vunpack.c.h.b16 %v4834
    %v4914 = vunpack.c.l.b16 %v4835
    %v4915 = vunpack.c.h.b16 %v4835
    %v4916 = vunpack.c.l.b16 %v4836
    %v4917 = vunpack.c.h.b16 %v4836
    %v4918 = vunpack.c.l.b16 %v4837
    %v4919 = vunpack.c.h.b16 %v4837
    %v4920 = vunpack.c.l.b16 %v4838
    %v4921 = vunpack.c.h.b16 %v4838
    %v4922 = vunpack.c.l.b16 %v4839
    %v4923 = vunpack.c.h.b16 %v4839
    %v4924 = vunpack.c.l.b16 %v4840
    %v4925 = vunpack.c.h.b16 %v4840
    %v4926 = vunpack.c.l.b16 %v4841
    %v4927 = vunpack.c.h.b16 %v4841
    %v4928 = vunpack.c.l.b16 %v4842
    %v4929 = vunpack.c.h.b16 %v4842
    %v4930 = vunpack.c.l.b16 %v4843
    %v4931 = vunpack.c.h.b16 %v4843
    %v4932 = vunpack.c.l.b16 %v4844
    %v4933 = vunpack.c.h.b16 %v4844
    %v4934 = vunpack.c.l.b16 %v4845
    %v4935 = vunpack.c.h.b16 %v4845
    %v4936 = vunpack.c.l.b16 %v4846
    %v4937 = vunpack.c.h.b16 %v4846
    %v4938 = vunpack.c.l.b16 %v4847
    %v4939 = vunpack.c.h.b16 %v4847
    %v4940 = vunpack.c.l.b16 %v4848
    %v4941 = vunpack.c.h.b16 %v4848
    %v4942 = vunpack.c.l.b16 %v4849
    %v4943 = vunpack.c.h.b16 %v4849
    %v4944 = vunpack.c.l.b16 %v4850
    %v4945 = vunpack.c.h.b16 %v4850
    %v4946 = vunpack.c.l.b16 %v4851
    %v4947 = vunpack.c.h.b16 %v4851
    %v4948 = vpack.c.b16 %v4888, %v4884
    %v4949 = vpack.c.b16 %v4889, %v4885
    %v4950 = vpack.c.b16 %v4890, %v4886
    %v4951 = vpack.c.b16 %v4891, %v4887
    %v4952 = vpack.c.b16 %v4896, %v4892
    %v4953 = vpack.c.b16 %v4897, %v4893
    %v4954 = vpack.c.b16 %v4898, %v4894
    %v4955 = vpack.c.b16 %v4899, %v4895
    %v4956 = vpack.c.b16 %v4904, %v4900
    %v4957 = vpack.c.b16 %v4905, %v4901
    %v4958 = vpack.c.b16 %v4906, %v4902
    %v4959 = vpack.c.b16 %v4907, %v4903
    %v4960 = vpack.c.b16 %v4912, %v4908
    %v4961 = vpack.c.b16 %v4913, %v4909
    %v4962 = vpack.c.b16 %v4914, %v4910
    %v4963 = vpack.c.b16 %v4915, %v4911
    %v4964 = vpack.c.b16 %v4920, %v4916
    %v4965 = vpack.c.b16 %v4921, %v4917
    %v4966 = vpack.c.b16 %v4922, %v4918
    %v4967 = vpack.c.b16 %v4923, %v4919
    %v4968 = vpack.c.b16 %v4928, %v4924
    %v4969 = vpack.c.b16 %v4929, %v4925
    %v4970 = vpack.c.b16 %v4930, %v4926
    %v4971 = vpack.c.b16 %v4931, %v4927
    %v4972 = vpack.c.b16 %v4936, %v4932
    %v4973 = vpack.c.b16 %v4937, %v4933
    %v4974 = vpack.c.b16 %v4938, %v4934
    %v4975 = vpack.c.b16 %v4939, %v4935
    %v4976 = vpack.c.b16 %v4944, %v4940
    %v4977 = vpack.c.b16 %v4945, %v4941
    %v4978 = vpack.c.b16 %v4946, %v4942
    %v4979 = vpack.c.b16 %v4947, %v4943
    %5012 = vmatpush.bf16.msra.mxu0 %v4976
    %5013 = vmatpush.bf16.msra.mxu0 %v4972
    %5014 = vmatpush.bf16.msra.mxu0 %v4968
    %5015 = vmatpush.bf16.msra.mxu0 %v4964
    %5016 = vmatpush.bf16.msra.mxu0 %v4960
    %5017 = vmatpush.bf16.msra.mxu0 %v4956
    %5018 = vmatpush.bf16.msra.mxu0 %v4952
    %5019 = vmatpush.bf16.msra.mxu0 %v4948
    %5020 = vmatmul.bf16.gmra.mxu0 %v4819
    %v5021 = vpop.f32.mrf.mxu0
    %v5022 = vadd.f32 0.0, %v5021
    %v5023 = vpop.f32.mrf.mxu0
    %5024 = vdwg.mxu0
    %5025 = vmatpush.bf16.msra.mxu0 %v4977
    %5026 = vmatpush.bf16.msra.mxu0 %v4973
    %5027 = vmatpush.bf16.msra.mxu0 %v4969
    %5028 = vmatpush.bf16.msra.mxu0 %v4965
    %5029 = vmatpush.bf16.msra.mxu0 %v4961
    %5030 = vmatpush.bf16.msra.mxu0 %v4957
    %5031 = vmatpush.bf16.msra.mxu0 %v4953
    %5032 = vmatpush.bf16.msra.mxu0 %v4949
    %5033 = vmatmul.bf16.gmra.mxu0 %v4819
    %v5034 = vpop.f32.mrf.mxu0
    %v5035 = vadd.f32 0.0, %v5034
    %v5036 = vpop.f32.mrf.mxu0
    %5037 = vdwg.mxu0
    %5038 = vmatpush.bf16.msra.mxu0 %v4978
    %5039 = vmatpush.bf16.msra.mxu0 %v4974
    %5040 = vmatpush.bf16.msra.mxu0 %v4970
    %5041 = vmatpush.bf16.msra.mxu0 %v4966
    %5042 = vmatpush.bf16.msra.mxu0 %v4962
    %5043 = vmatpush.bf16.msra.mxu0 %v4958
    %5044 = vmatpush.bf16.msra.mxu0 %v4954
    %5045 = vmatpush.bf16.msra.mxu0 %v4950
    %5046 = vmatmul.bf16.gmra.mxu0 %v4819
    %v5047 = vpop.f32.mrf.mxu0
    %v5048 = vadd.f32 0.0, %v5047
    %v5049 = vpop.f32.mrf.mxu0
    %5050 = vdwg.mxu0
    %5051 = vmatpush.bf16.msra.mxu0 %v4979
    %5052 = vmatpush.bf16.msra.mxu0 %v4975
    %5053 = vmatpush.bf16.msra.mxu0 %v4971
    %5054 = vmatpush.bf16.msra.mxu0 %v4967
    %5055 = vmatpush.bf16.msra.mxu0 %v4963
    %5056 = vmatpush.bf16.msra.mxu0 %v4959
    %5057 = vmatpush.bf16.msra.mxu0 %v4955
    %5058 = vmatpush.bf16.msra.mxu0 %v4951
    %5059 = vmatmul.bf16.gmra.mxu0 %v4819
    %v5060 = vpop.f32.mrf.mxu0
    %v5061 = vadd.f32 0.0, %v5060
    %v5062 = vpop.f32.mrf.mxu0
    %5063 = vdwg.mxu0
    %v5064 = vadd.f32 %v4815, %v5022
    %v5065 = vadd.f32 %v4816, %v5035
    %v5066 = vadd.f32 %v4817, %v5048
    %v5067 = vadd.f32 %v4818, %v5061
    %v5068 = vxor.u32 %v5064, 2147483648
    %v5069 = vmul.f32 %v5068, 1.442695
    %v5070 = vpow.pop %v5069
    %v5071 = vadd.f32 %v5070, 1.0
    %v5072 = vrcp.pop %v5071
    %v5073 = vmul.f32 %v5071, %v5072
    %v5074 = vsub.f32 1.0, %v5073
    %v5075 = vmul.f32 %v5072, %v5074
    %v5076 = vadd.f32 %v5072, %v5075
    %vm5077 = vweird.f32 %v5071
    %vm5078 = vweird.f32 %v5072
    %vm5079 = vmor %vm5077, %vm5078
    %v5080 = vsel %vm5079, %v5072, %v5076
    %v5081 = vand.u32 2147483647, %v5071
    %vm5082 = vcmp.eq.f32.partialorder %v5081, 8.507059e+37
    %v5083 = vand.u32 %v5071, 2147483648
    %v5084 = vor.u32 1.1754944e-38, %v5083
    %v5085 = vsel %vm5082, %v5084, %v5080
    %v5086 = vmul.f32 1.0, %v5085
    %v5087 = vxor.u32 %v5065, 2147483648
    %v5088 = vmul.f32 %v5087, 1.442695
    %v5089 = vpow.pop %v5088
    %v5090 = vadd.f32 %v5089, 1.0
    %v5091 = vrcp.pop %v5090
    %v5092 = vmul.f32 %v5090, %v5091
    %v5093 = vsub.f32 1.0, %v5092
    %v5094 = vmul.f32 %v5091, %v5093
    %v5095 = vadd.f32 %v5091, %v5094
    %vm5096 = vweird.f32 %v5090
    %vm5097 = vweird.f32 %v5091
    %vm5098 = vmor %vm5096, %vm5097
    %v5099 = vsel %vm5098, %v5091, %v5095
    %v5100 = vand.u32 2147483647, %v5090
    %vm5101 = vcmp.eq.f32.partialorder %v5100, 8.507059e+37
    %v5102 = vand.u32 %v5090, 2147483648
    %v5103 = vor.u32 1.1754944e-38, %v5102
    %v5104 = vsel %vm5101, %v5103, %v5099
    %v5105 = vmul.f32 1.0, %v5104
    %v5106 = vtanh.pop %v5066
    %v5107 = vxor.u32 %v5067, 2147483648
    %v5108 = vmul.f32 %v5107, 1.442695
    %v5109 = vpow.pop %v5108
    %v5110 = vadd.f32 %v5109, 1.0
    %v5111 = vrcp.pop %v5110
    %v5112 = vmul.f32 %v5110, %v5111
    %v5113 = vsub.f32 1.0, %v5112
    %v5114 = vmul.f32 %v5111, %v5113
    %v5115 = vadd.f32 %v5111, %v5114
    %vm5116 = vweird.f32 %v5110
    %vm5117 = vweird.f32 %v5111
    %vm5118 = vmor %vm5116, %vm5117
    %v5119 = vsel %vm5118, %v5111, %v5115
    %v5120 = vand.u32 2147483647, %v5110
    %vm5121 = vcmp.eq.f32.partialorder %v5120, 8.507059e+37
    %v5122 = vand.u32 %v5110, 2147483648
    %v5123 = vor.u32 1.1754944e-38, %v5122
    %v5124 = vsel %vm5121, %v5123, %v5119
    %v5125 = vmul.f32 1.0, %v5124
    %v5126 = vmul.f32 %v5105, %v4811
    %v5127 = vmul.f32 %v5086, %v5106
    %v5128 = vadd.f32 %v5126, %v5127
    %v5129 = vtanh.pop %v5128
    %v5130 = vmul.f32 %v5125, %v5129
    %5131 = vst [vmem:[#allocation3 + $0x20] sm:$0xff] %v5130
    %v5132 = vld [vmem:[#allocation4 + $0xa0] sm:$0xff]
    %v5133 = vld [vmem:[#allocation4 + $0xa8] sm:$0xff]
    %v5134 = vld [vmem:[#allocation4 + $0xb0] sm:$0xff]
    %v5135 = vld [vmem:[#allocation4 + $0xb8] sm:$0xff]
    %v5136 = vpack.c.bf16 %v5130, %v5130
    %v5137 = vld [vmem:[#allocation16] sm:$0xff]
    %v5138 = vld [vmem:[#allocation16 + $0x8] sm:$0xff]
    %v5139 = vld [vmem:[#allocation16 + $0x10] sm:$0xff]
    %v5140 = vld [vmem:[#allocation16 + $0x18] sm:$0xff]
    %v5141 = vld [vmem:[#allocation16 + $0x20] sm:$0xff]
    %v5142 = vld [vmem:[#allocation16 + $0x28] sm:$0xff]
    %v5143 = vld [vmem:[#allocation16 + $0x30] sm:$0xff]
    %v5144 = vld [vmem:[#allocation16 + $0x38] sm:$0xff]
    %v5145 = vld [vmem:[#allocation16 + $0x40] sm:$0xff]
    %v5146 = vld [vmem:[#allocation16 + $0x48] sm:$0xff]
    %v5147 = vld [vmem:[#allocation16 + $0x50] sm:$0xff]
    %v5148 = vld [vmem:[#allocation16 + $0x58] sm:$0xff]
    %v5149 = vld [vmem:[#allocation16 + $0x60] sm:$0xff]
    %v5150 = vld [vmem:[#allocation16 + $0x68] sm:$0xff]
    %v5151 = vld [vmem:[#allocation16 + $0x70] sm:$0xff]
    %v5152 = vld [vmem:[#allocation16 + $0x78] sm:$0xff]
    %v5153 = vld [vmem:[#allocation16 + $0x80] sm:$0xff]
    %v5154 = vld [vmem:[#allocation16 + $0x88] sm:$0xff]
    %v5155 = vld [vmem:[#allocation16 + $0x90] sm:$0xff]
    %v5156 = vld [vmem:[#allocation16 + $0x98] sm:$0xff]
    %v5157 = vld [vmem:[#allocation16 + $0xa0] sm:$0xff]
    %v5158 = vld [vmem:[#allocation16 + $0xa8] sm:$0xff]
    %v5159 = vld [vmem:[#allocation16 + $0xb0] sm:$0xff]
    %v5160 = vld [vmem:[#allocation16 + $0xb8] sm:$0xff]
    %v5161 = vld [vmem:[#allocation16 + $0xc0] sm:$0xff]
    %v5162 = vld [vmem:[#allocation16 + $0xc8] sm:$0xff]
    %v5163 = vld [vmem:[#allocation16 + $0xd0] sm:$0xff]
    %v5164 = vld [vmem:[#allocation16 + $0xd8] sm:$0xff]
    %v5165 = vld [vmem:[#allocation16 + $0xe0] sm:$0xff]
    %v5166 = vld [vmem:[#allocation16 + $0xe8] sm:$0xff]
    %v5167 = vld [vmem:[#allocation16 + $0xf0] sm:$0xff]
    %v5168 = vld [vmem:[#allocation16 + $0xf8] sm:$0xff]
    %v5201 = vunpack.c.l.b16 %v5137
    %v5202 = vunpack.c.h.b16 %v5137
    %v5203 = vunpack.c.l.b16 %v5138
    %v5204 = vunpack.c.h.b16 %v5138
    %v5205 = vunpack.c.l.b16 %v5139
    %v5206 = vunpack.c.h.b16 %v5139
    %v5207 = vunpack.c.l.b16 %v5140
    %v5208 = vunpack.c.h.b16 %v5140
    %v5209 = vunpack.c.l.b16 %v5141
    %v5210 = vunpack.c.h.b16 %v5141
    %v5211 = vunpack.c.l.b16 %v5142
    %v5212 = vunpack.c.h.b16 %v5142
    %v5213 = vunpack.c.l.b16 %v5143
    %v5214 = vunpack.c.h.b16 %v5143
    %v5215 = vunpack.c.l.b16 %v5144
    %v5216 = vunpack.c.h.b16 %v5144
    %v5217 = vunpack.c.l.b16 %v5145
    %v5218 = vunpack.c.h.b16 %v5145
    %v5219 = vunpack.c.l.b16 %v5146
    %v5220 = vunpack.c.h.b16 %v5146
    %v5221 = vunpack.c.l.b16 %v5147
    %v5222 = vunpack.c.h.b16 %v5147
    %v5223 = vunpack.c.l.b16 %v5148
    %v5224 = vunpack.c.h.b16 %v5148
    %v5225 = vunpack.c.l.b16 %v5149
    %v5226 = vunpack.c.h.b16 %v5149
    %v5227 = vunpack.c.l.b16 %v5150
    %v5228 = vunpack.c.h.b16 %v5150
    %v5229 = vunpack.c.l.b16 %v5151
    %v5230 = vunpack.c.h.b16 %v5151
    %v5231 = vunpack.c.l.b16 %v5152
    %v5232 = vunpack.c.h.b16 %v5152
    %v5233 = vunpack.c.l.b16 %v5153
    %v5234 = vunpack.c.h.b16 %v5153
    %v5235 = vunpack.c.l.b16 %v5154
    %v5236 = vunpack.c.h.b16 %v5154
    %v5237 = vunpack.c.l.b16 %v5155
    %v5238 = vunpack.c.h.b16 %v5155
    %v5239 = vunpack.c.l.b16 %v5156
    %v5240 = vunpack.c.h.b16 %v5156
    %v5241 = vunpack.c.l.b16 %v5157
    %v5242 = vunpack.c.h.b16 %v5157
    %v5243 = vunpack.c.l.b16 %v5158
    %v5244 = vunpack.c.h.b16 %v5158
    %v5245 = vunpack.c.l.b16 %v5159
    %v5246 = vunpack.c.h.b16 %v5159
    %v5247 = vunpack.c.l.b16 %v5160
    %v5248 = vunpack.c.h.b16 %v5160
    %v5249 = vunpack.c.l.b16 %v5161
    %v5250 = vunpack.c.h.b16 %v5161
    %v5251 = vunpack.c.l.b16 %v5162
    %v5252 = vunpack.c.h.b16 %v5162
    %v5253 = vunpack.c.l.b16 %v5163
    %v5254 = vunpack.c.h.b16 %v5163
    %v5255 = vunpack.c.l.b16 %v5164
    %v5256 = vunpack.c.h.b16 %v5164
    %v5257 = vunpack.c.l.b16 %v5165
    %v5258 = vunpack.c.h.b16 %v5165
    %v5259 = vunpack.c.l.b16 %v5166
    %v5260 = vunpack.c.h.b16 %v5166
    %v5261 = vunpack.c.l.b16 %v5167
    %v5262 = vunpack.c.h.b16 %v5167
    %v5263 = vunpack.c.l.b16 %v5168
    %v5264 = vunpack.c.h.b16 %v5168
    %v5265 = vpack.c.b16 %v5205, %v5201
    %v5266 = vpack.c.b16 %v5206, %v5202
    %v5267 = vpack.c.b16 %v5207, %v5203
    %v5268 = vpack.c.b16 %v5208, %v5204
    %v5269 = vpack.c.b16 %v5213, %v5209
    %v5270 = vpack.c.b16 %v5214, %v5210
    %v5271 = vpack.c.b16 %v5215, %v5211
    %v5272 = vpack.c.b16 %v5216, %v5212
    %v5273 = vpack.c.b16 %v5221, %v5217
    %v5274 = vpack.c.b16 %v5222, %v5218
    %v5275 = vpack.c.b16 %v5223, %v5219
    %v5276 = vpack.c.b16 %v5224, %v5220
    %v5277 = vpack.c.b16 %v5229, %v5225
    %v5278 = vpack.c.b16 %v5230, %v5226
    %v5279 = vpack.c.b16 %v5231, %v5227
    %v5280 = vpack.c.b16 %v5232, %v5228
    %v5281 = vpack.c.b16 %v5237, %v5233
    %v5282 = vpack.c.b16 %v5238, %v5234
    %v5283 = vpack.c.b16 %v5239, %v5235
    %v5284 = vpack.c.b16 %v5240, %v5236
    %v5285 = vpack.c.b16 %v5245, %v5241
    %v5286 = vpack.c.b16 %v5246, %v5242
    %v5287 = vpack.c.b16 %v5247, %v5243
    %v5288 = vpack.c.b16 %v5248, %v5244
    %v5289 = vpack.c.b16 %v5253, %v5249
    %v5290 = vpack.c.b16 %v5254, %v5250
    %v5291 = vpack.c.b16 %v5255, %v5251
    %v5292 = vpack.c.b16 %v5256, %v5252
    %v5293 = vpack.c.b16 %v5261, %v5257
    %v5294 = vpack.c.b16 %v5262, %v5258
    %v5295 = vpack.c.b16 %v5263, %v5259
    %v5296 = vpack.c.b16 %v5264, %v5260
    %5329 = vmatpush.bf16.msra.mxu0 %v5293
    %5330 = vmatpush.bf16.msra.mxu0 %v5289
    %5331 = vmatpush.bf16.msra.mxu0 %v5285
    %5332 = vmatpush.bf16.msra.mxu0 %v5281
    %5333 = vmatpush.bf16.msra.mxu0 %v5277
    %5334 = vmatpush.bf16.msra.mxu0 %v5273
    %5335 = vmatpush.bf16.msra.mxu0 %v5269
    %5336 = vmatpush.bf16.msra.mxu0 %v5265
    %5337 = vmatmul.bf16.gmra.mxu0 %v5136
    %v5338 = vpop.f32.mrf.mxu0
    %v5339 = vadd.f32 0.0, %v5338
    %v5340 = vpop.f32.mrf.mxu0
    %5341 = vdwg.mxu0
    %5342 = vmatpush.bf16.msra.mxu0 %v5294
    %5343 = vmatpush.bf16.msra.mxu0 %v5290
    %5344 = vmatpush.bf16.msra.mxu0 %v5286
    %5345 = vmatpush.bf16.msra.mxu0 %v5282
    %5346 = vmatpush.bf16.msra.mxu0 %v5278
    %5347 = vmatpush.bf16.msra.mxu0 %v5274
    %5348 = vmatpush.bf16.msra.mxu0 %v5270
    %5349 = vmatpush.bf16.msra.mxu0 %v5266
    %5350 = vmatmul.bf16.gmra.mxu0 %v5136
    %v5351 = vpop.f32.mrf.mxu0
    %v5352 = vadd.f32 0.0, %v5351
    %v5353 = vpop.f32.mrf.mxu0
    %5354 = vdwg.mxu0
    %5355 = vmatpush.bf16.msra.mxu0 %v5295
    %5356 = vmatpush.bf16.msra.mxu0 %v5291
    %5357 = vmatpush.bf16.msra.mxu0 %v5287
    %5358 = vmatpush.bf16.msra.mxu0 %v5283
    %5359 = vmatpush.bf16.msra.mxu0 %v5279
    %5360 = vmatpush.bf16.msra.mxu0 %v5275
    %5361 = vmatpush.bf16.msra.mxu0 %v5271
    %5362 = vmatpush.bf16.msra.mxu0 %v5267
    %5363 = vmatmul.bf16.gmra.mxu0 %v5136
    %v5364 = vpop.f32.mrf.mxu0
    %v5365 = vadd.f32 0.0, %v5364
    %v5366 = vpop.f32.mrf.mxu0
    %5367 = vdwg.mxu0
    %5368 = vmatpush.bf16.msra.mxu0 %v5296
    %5369 = vmatpush.bf16.msra.mxu0 %v5292
    %5370 = vmatpush.bf16.msra.mxu0 %v5288
    %5371 = vmatpush.bf16.msra.mxu0 %v5284
    %5372 = vmatpush.bf16.msra.mxu0 %v5280
    %5373 = vmatpush.bf16.msra.mxu0 %v5276
    %5374 = vmatpush.bf16.msra.mxu0 %v5272
    %5375 = vmatpush.bf16.msra.mxu0 %v5268
    %5376 = vmatmul.bf16.gmra.mxu0 %v5136
    %v5377 = vpop.f32.mrf.mxu0
    %v5378 = vadd.f32 0.0, %v5377
    %v5379 = vpop.f32.mrf.mxu0
    %5380 = vdwg.mxu0
    %v5381 = vadd.f32 %v5132, %v5339
    %v5382 = vadd.f32 %v5133, %v5352
    %v5383 = vadd.f32 %v5134, %v5365
    %v5384 = vadd.f32 %v5135, %v5378
    %v5385 = vxor.u32 %v5381, 2147483648
    %v5386 = vmul.f32 %v5385, 1.442695
    %v5387 = vpow.pop %v5386
    %v5388 = vadd.f32 %v5387, 1.0
    %v5389 = vrcp.pop %v5388
    %v5390 = vmul.f32 %v5388, %v5389
    %v5391 = vsub.f32 1.0, %v5390
    %v5392 = vmul.f32 %v5389, %v5391
    %v5393 = vadd.f32 %v5389, %v5392
    %vm5394 = vweird.f32 %v5388
    %vm5395 = vweird.f32 %v5389
    %vm5396 = vmor %vm5394, %vm5395
    %v5397 = vsel %vm5396, %v5389, %v5393
    %v5398 = vand.u32 2147483647, %v5388
    %vm5399 = vcmp.eq.f32.partialorder %v5398, 8.507059e+37
    %v5400 = vand.u32 %v5388, 2147483648
    %v5401 = vor.u32 1.1754944e-38, %v5400
    %v5402 = vsel %vm5399, %v5401, %v5397
    %v5403 = vmul.f32 1.0, %v5402
    %v5404 = vxor.u32 %v5382, 2147483648
    %v5405 = vmul.f32 %v5404, 1.442695
    %v5406 = vpow.pop %v5405
    %v5407 = vadd.f32 %v5406, 1.0
    %v5408 = vrcp.pop %v5407
    %v5409 = vmul.f32 %v5407, %v5408
    %v5410 = vsub.f32 1.0, %v5409
    %v5411 = vmul.f32 %v5408, %v5410
    %v5412 = vadd.f32 %v5408, %v5411
    %vm5413 = vweird.f32 %v5407
    %vm5414 = vweird.f32 %v5408
    %vm5415 = vmor %vm5413, %vm5414
    %v5416 = vsel %vm5415, %v5408, %v5412
    %v5417 = vand.u32 2147483647, %v5407
    %vm5418 = vcmp.eq.f32.partialorder %v5417, 8.507059e+37
    %v5419 = vand.u32 %v5407, 2147483648
    %v5420 = vor.u32 1.1754944e-38, %v5419
    %v5421 = vsel %vm5418, %v5420, %v5416
    %v5422 = vmul.f32 1.0, %v5421
    %v5423 = vtanh.pop %v5383
    %v5424 = vxor.u32 %v5384, 2147483648
    %v5425 = vmul.f32 %v5424, 1.442695
    %v5426 = vpow.pop %v5425
    %v5427 = vadd.f32 %v5426, 1.0
    %v5428 = vrcp.pop %v5427
    %v5429 = vmul.f32 %v5427, %v5428
    %v5430 = vsub.f32 1.0, %v5429
    %v5431 = vmul.f32 %v5428, %v5430
    %v5432 = vadd.f32 %v5428, %v5431
    %vm5433 = vweird.f32 %v5427
    %vm5434 = vweird.f32 %v5428
    %vm5435 = vmor %vm5433, %vm5434
    %v5436 = vsel %vm5435, %v5428, %v5432
    %v5437 = vand.u32 2147483647, %v5427
    %vm5438 = vcmp.eq.f32.partialorder %v5437, 8.507059e+37
    %v5439 = vand.u32 %v5427, 2147483648
    %v5440 = vor.u32 1.1754944e-38, %v5439
    %v5441 = vsel %vm5438, %v5440, %v5436
    %v5442 = vmul.f32 1.0, %v5441
    %v5443 = vmul.f32 %v5422, %v5128
    %v5444 = vmul.f32 %v5403, %v5423
    %v5445 = vadd.f32 %v5443, %v5444
    %v5446 = vtanh.pop %v5445
    %v5447 = vmul.f32 %v5442, %v5446
    %5448 = vst [vmem:[#allocation3 + $0x28] sm:$0xff] %v5447
    %v5449 = vld [vmem:[#allocation4 + $0xc0] sm:$0xff]
    %v5450 = vld [vmem:[#allocation4 + $0xc8] sm:$0xff]
    %v5451 = vld [vmem:[#allocation4 + $0xd0] sm:$0xff]
    %v5452 = vld [vmem:[#allocation4 + $0xd8] sm:$0xff]
    %v5453 = vpack.c.bf16 %v5447, %v5447
    %v5454 = vld [vmem:[#allocation16] sm:$0xff]
    %v5455 = vld [vmem:[#allocation16 + $0x8] sm:$0xff]
    %v5456 = vld [vmem:[#allocation16 + $0x10] sm:$0xff]
    %v5457 = vld [vmem:[#allocation16 + $0x18] sm:$0xff]
    %v5458 = vld [vmem:[#allocation16 + $0x20] sm:$0xff]
    %v5459 = vld [vmem:[#allocation16 + $0x28] sm:$0xff]
    %v5460 = vld [vmem:[#allocation16 + $0x30] sm:$0xff]
    %v5461 = vld [vmem:[#allocation16 + $0x38] sm:$0xff]
    %v5462 = vld [vmem:[#allocation16 + $0x40] sm:$0xff]
    %v5463 = vld [vmem:[#allocation16 + $0x48] sm:$0xff]
    %v5464 = vld [vmem:[#allocation16 + $0x50] sm:$0xff]
    %v5465 = vld [vmem:[#allocation16 + $0x58] sm:$0xff]
    %v5466 = vld [vmem:[#allocation16 + $0x60] sm:$0xff]
    %v5467 = vld [vmem:[#allocation16 + $0x68] sm:$0xff]
    %v5468 = vld [vmem:[#allocation16 + $0x70] sm:$0xff]
    %v5469 = vld [vmem:[#allocation16 + $0x78] sm:$0xff]
    %v5470 = vld [vmem:[#allocation16 + $0x80] sm:$0xff]
    %v5471 = vld [vmem:[#allocation16 + $0x88] sm:$0xff]
    %v5472 = vld [vmem:[#allocation16 + $0x90] sm:$0xff]
    %v5473 = vld [vmem:[#allocation16 + $0x98] sm:$0xff]
    %v5474 = vld [vmem:[#allocation16 + $0xa0] sm:$0xff]
    %v5475 = vld [vmem:[#allocation16 + $0xa8] sm:$0xff]
    %v5476 = vld [vmem:[#allocation16 + $0xb0] sm:$0xff]
    %v5477 = vld [vmem:[#allocation16 + $0xb8] sm:$0xff]
    %v5478 = vld [vmem:[#allocation16 + $0xc0] sm:$0xff]
    %v5479 = vld [vmem:[#allocation16 + $0xc8] sm:$0xff]
    %v5480 = vld [vmem:[#allocation16 + $0xd0] sm:$0xff]
    %v5481 = vld [vmem:[#allocation16 + $0xd8] sm:$0xff]
    %v5482 = vld [vmem:[#allocation16 + $0xe0] sm:$0xff]
    %v5483 = vld [vmem:[#allocation16 + $0xe8] sm:$0xff]
    %v5484 = vld [vmem:[#allocation16 + $0xf0] sm:$0xff]
    %v5485 = vld [vmem:[#allocation16 + $0xf8] sm:$0xff]
    %v5518 = vunpack.c.l.b16 %v5454
    %v5519 = vunpack.c.h.b16 %v5454
    %v5520 = vunpack.c.l.b16 %v5455
    %v5521 = vunpack.c.h.b16 %v5455
    %v5522 = vunpack.c.l.b16 %v5456
    %v5523 = vunpack.c.h.b16 %v5456
    %v5524 = vunpack.c.l.b16 %v5457
    %v5525 = vunpack.c.h.b16 %v5457
    %v5526 = vunpack.c.l.b16 %v5458
    %v5527 = vunpack.c.h.b16 %v5458
    %v5528 = vunpack.c.l.b16 %v5459
    %v5529 = vunpack.c.h.b16 %v5459
    %v5530 = vunpack.c.l.b16 %v5460
    %v5531 = vunpack.c.h.b16 %v5460
    %v5532 = vunpack.c.l.b16 %v5461
    %v5533 = vunpack.c.h.b16 %v5461
    %v5534 = vunpack.c.l.b16 %v5462
    %v5535 = vunpack.c.h.b16 %v5462
    %v5536 = vunpack.c.l.b16 %v5463
    %v5537 = vunpack.c.h.b16 %v5463
    %v5538 = vunpack.c.l.b16 %v5464
    %v5539 = vunpack.c.h.b16 %v5464
    %v5540 = vunpack.c.l.b16 %v5465
    %v5541 = vunpack.c.h.b16 %v5465
    %v5542 = vunpack.c.l.b16 %v5466
    %v5543 = vunpack.c.h.b16 %v5466
    %v5544 = vunpack.c.l.b16 %v5467
    %v5545 = vunpack.c.h.b16 %v5467
    %v5546 = vunpack.c.l.b16 %v5468
    %v5547 = vunpack.c.h.b16 %v5468
    %v5548 = vunpack.c.l.b16 %v5469
    %v5549 = vunpack.c.h.b16 %v5469
    %v5550 = vunpack.c.l.b16 %v5470
    %v5551 = vunpack.c.h.b16 %v5470
    %v5552 = vunpack.c.l.b16 %v5471
    %v5553 = vunpack.c.h.b16 %v5471
    %v5554 = vunpack.c.l.b16 %v5472
    %v5555 = vunpack.c.h.b16 %v5472
    %v5556 = vunpack.c.l.b16 %v5473
    %v5557 = vunpack.c.h.b16 %v5473
    %v5558 = vunpack.c.l.b16 %v5474
    %v5559 = vunpack.c.h.b16 %v5474
    %v5560 = vunpack.c.l.b16 %v5475
    %v5561 = vunpack.c.h.b16 %v5475
    %v5562 = vunpack.c.l.b16 %v5476
    %v5563 = vunpack.c.h.b16 %v5476
    %v5564 = vunpack.c.l.b16 %v5477
    %v5565 = vunpack.c.h.b16 %v5477
    %v5566 = vunpack.c.l.b16 %v5478
    %v5567 = vunpack.c.h.b16 %v5478
    %v5568 = vunpack.c.l.b16 %v5479
    %v5569 = vunpack.c.h.b16 %v5479
    %v5570 = vunpack.c.l.b16 %v5480
    %v5571 = vunpack.c.h.b16 %v5480
    %v5572 = vunpack.c.l.b16 %v5481
    %v5573 = vunpack.c.h.b16 %v5481
    %v5574 = vunpack.c.l.b16 %v5482
    %v5575 = vunpack.c.h.b16 %v5482
    %v5576 = vunpack.c.l.b16 %v5483
    %v5577 = vunpack.c.h.b16 %v5483
    %v5578 = vunpack.c.l.b16 %v5484
    %v5579 = vunpack.c.h.b16 %v5484
    %v5580 = vunpack.c.l.b16 %v5485
    %v5581 = vunpack.c.h.b16 %v5485
    %v5582 = vpack.c.b16 %v5522, %v5518
    %v5583 = vpack.c.b16 %v5523, %v5519
    %v5584 = vpack.c.b16 %v5524, %v5520
    %v5585 = vpack.c.b16 %v5525, %v5521
    %v5586 = vpack.c.b16 %v5530, %v5526
    %v5587 = vpack.c.b16 %v5531, %v5527
    %v5588 = vpack.c.b16 %v5532, %v5528
    %v5589 = vpack.c.b16 %v5533, %v5529
    %v5590 = vpack.c.b16 %v5538, %v5534
    %v5591 = vpack.c.b16 %v5539, %v5535
    %v5592 = vpack.c.b16 %v5540, %v5536
    %v5593 = vpack.c.b16 %v5541, %v5537
    %v5594 = vpack.c.b16 %v5546, %v5542
    %v5595 = vpack.c.b16 %v5547, %v5543
    %v5596 = vpack.c.b16 %v5548, %v5544
    %v5597 = vpack.c.b16 %v5549, %v5545
    %v5598 = vpack.c.b16 %v5554, %v5550
    %v5599 = vpack.c.b16 %v5555, %v5551
    %v5600 = vpack.c.b16 %v5556, %v5552
    %v5601 = vpack.c.b16 %v5557, %v5553
    %v5602 = vpack.c.b16 %v5562, %v5558
    %v5603 = vpack.c.b16 %v5563, %v5559
    %v5604 = vpack.c.b16 %v5564, %v5560
    %v5605 = vpack.c.b16 %v5565, %v5561
    %v5606 = vpack.c.b16 %v5570, %v5566
    %v5607 = vpack.c.b16 %v5571, %v5567
    %v5608 = vpack.c.b16 %v5572, %v5568
    %v5609 = vpack.c.b16 %v5573, %v5569
    %v5610 = vpack.c.b16 %v5578, %v5574
    %v5611 = vpack.c.b16 %v5579, %v5575
    %v5612 = vpack.c.b16 %v5580, %v5576
    %v5613 = vpack.c.b16 %v5581, %v5577
    %5646 = vmatpush.bf16.msra.mxu0 %v5610
    %5647 = vmatpush.bf16.msra.mxu0 %v5606
    %5648 = vmatpush.bf16.msra.mxu0 %v5602
    %5649 = vmatpush.bf16.msra.mxu0 %v5598
    %5650 = vmatpush.bf16.msra.mxu0 %v5594
    %5651 = vmatpush.bf16.msra.mxu0 %v5590
    %5652 = vmatpush.bf16.msra.mxu0 %v5586
    %5653 = vmatpush.bf16.msra.mxu0 %v5582
    %5654 = vmatmul.bf16.gmra.mxu0 %v5453
    %v5655 = vpop.f32.mrf.mxu0
    %v5656 = vadd.f32 0.0, %v5655
    %v5657 = vpop.f32.mrf.mxu0
    %5658 = vdwg.mxu0
    %5659 = vmatpush.bf16.msra.mxu0 %v5611
    %5660 = vmatpush.bf16.msra.mxu0 %v5607
    %5661 = vmatpush.bf16.msra.mxu0 %v5603
    %5662 = vmatpush.bf16.msra.mxu0 %v5599
    %5663 = vmatpush.bf16.msra.mxu0 %v5595
    %5664 = vmatpush.bf16.msra.mxu0 %v5591
    %5665 = vmatpush.bf16.msra.mxu0 %v5587
    %5666 = vmatpush.bf16.msra.mxu0 %v5583
    %5667 = vmatmul.bf16.gmra.mxu0 %v5453
    %v5668 = vpop.f32.mrf.mxu0
    %v5669 = vadd.f32 0.0, %v5668
    %v5670 = vpop.f32.mrf.mxu0
    %5671 = vdwg.mxu0
    %5672 = vmatpush.bf16.msra.mxu0 %v5612
    %5673 = vmatpush.bf16.msra.mxu0 %v5608
    %5674 = vmatpush.bf16.msra.mxu0 %v5604
    %5675 = vmatpush.bf16.msra.mxu0 %v5600
    %5676 = vmatpush.bf16.msra.mxu0 %v5596
    %5677 = vmatpush.bf16.msra.mxu0 %v5592
    %5678 = vmatpush.bf16.msra.mxu0 %v5588
    %5679 = vmatpush.bf16.msra.mxu0 %v5584
    %5680 = vmatmul.bf16.gmra.mxu0 %v5453
    %v5681 = vpop.f32.mrf.mxu0
    %v5682 = vadd.f32 0.0, %v5681
    %v5683 = vpop.f32.mrf.mxu0
    %5684 = vdwg.mxu0
    %5685 = vmatpush.bf16.msra.mxu0 %v5613
    %5686 = vmatpush.bf16.msra.mxu0 %v5609
    %5687 = vmatpush.bf16.msra.mxu0 %v5605
    %5688 = vmatpush.bf16.msra.mxu0 %v5601
    %5689 = vmatpush.bf16.msra.mxu0 %v5597
    %5690 = vmatpush.bf16.msra.mxu0 %v5593
    %5691 = vmatpush.bf16.msra.mxu0 %v5589
    %5692 = vmatpush.bf16.msra.mxu0 %v5585
    %5693 = vmatmul.bf16.gmra.mxu0 %v5453
    %v5694 = vpop.f32.mrf.mxu0
    %v5695 = vadd.f32 0.0, %v5694
    %v5696 = vpop.f32.mrf.mxu0
    %5697 = vdwg.mxu0
    %v5698 = vadd.f32 %v5449, %v5656
    %v5699 = vadd.f32 %v5450, %v5669
    %v5700 = vadd.f32 %v5451, %v5682
    %v5701 = vadd.f32 %v5452, %v5695
    %v5702 = vxor.u32 %v5698, 2147483648
    %v5703 = vmul.f32 %v5702, 1.442695
    %v5704 = vpow.pop %v5703
    %v5705 = vadd.f32 %v5704, 1.0
    %v5706 = vrcp.pop %v5705
    %v5707 = vmul.f32 %v5705, %v5706
    %v5708 = vsub.f32 1.0, %v5707
    %v5709 = vmul.f32 %v5706, %v5708
    %v5710 = vadd.f32 %v5706, %v5709
    %vm5711 = vweird.f32 %v5705
    %vm5712 = vweird.f32 %v5706
    %vm5713 = vmor %vm5711, %vm5712
    %v5714 = vsel %vm5713, %v5706, %v5710
    %v5715 = vand.u32 2147483647, %v5705
    %vm5716 = vcmp.eq.f32.partialorder %v5715, 8.507059e+37
    %v5717 = vand.u32 %v5705, 2147483648
    %v5718 = vor.u32 1.1754944e-38, %v5717
    %v5719 = vsel %vm5716, %v5718, %v5714
    %v5720 = vmul.f32 1.0, %v5719
    %v5721 = vxor.u32 %v5699, 2147483648
    %v5722 = vmul.f32 %v5721, 1.442695
    %v5723 = vpow.pop %v5722
    %v5724 = vadd.f32 %v5723, 1.0
    %v5725 = vrcp.pop %v5724
    %v5726 = vmul.f32 %v5724, %v5725
    %v5727 = vsub.f32 1.0, %v5726
    %v5728 = vmul.f32 %v5725, %v5727
    %v5729 = vadd.f32 %v5725, %v5728
    %vm5730 = vweird.f32 %v5724
    %vm5731 = vweird.f32 %v5725
    %vm5732 = vmor %vm5730, %vm5731
    %v5733 = vsel %vm5732, %v5725, %v5729
    %v5734 = vand.u32 2147483647, %v5724
    %vm5735 = vcmp.eq.f32.partialorder %v5734, 8.507059e+37
    %v5736 = vand.u32 %v5724, 2147483648
    %v5737 = vor.u32 1.1754944e-38, %v5736
    %v5738 = vsel %vm5735, %v5737, %v5733
    %v5739 = vmul.f32 1.0, %v5738
    %v5740 = vtanh.pop %v5700
    %v5741 = vxor.u32 %v5701, 2147483648
    %v5742 = vmul.f32 %v5741, 1.442695
    %v5743 = vpow.pop %v5742
    %v5744 = vadd.f32 %v5743, 1.0
    %v5745 = vrcp.pop %v5744
    %v5746 = vmul.f32 %v5744, %v5745
    %v5747 = vsub.f32 1.0, %v5746
    %v5748 = vmul.f32 %v5745, %v5747
    %v5749 = vadd.f32 %v5745, %v5748
    %vm5750 = vweird.f32 %v5744
    %vm5751 = vweird.f32 %v5745
    %vm5752 = vmor %vm5750, %vm5751
    %v5753 = vsel %vm5752, %v5745, %v5749
    %v5754 = vand.u32 2147483647, %v5744
    %vm5755 = vcmp.eq.f32.partialorder %v5754, 8.507059e+37
    %v5756 = vand.u32 %v5744, 2147483648
    %v5757 = vor.u32 1.1754944e-38, %v5756
    %v5758 = vsel %vm5755, %v5757, %v5753
    %v5759 = vmul.f32 1.0, %v5758
    %v5760 = vmul.f32 %v5739, %v5445
    %v5761 = vmul.f32 %v5720, %v5740
    %v5762 = vadd.f32 %v5760, %v5761
    %v5763 = vtanh.pop %v5762
    %v5764 = vmul.f32 %v5759, %v5763
    %5765 = vst [vmem:[#allocation3 + $0x30] sm:$0xff] %v5764
    %v5766 = vld [vmem:[#allocation4 + $0xe0] sm:$0xff]
    %v5767 = vld [vmem:[#allocation4 + $0xe8] sm:$0xff]
    %v5768 = vld [vmem:[#allocation4 + $0xf0] sm:$0xff]
    %v5769 = vld [vmem:[#allocation4 + $0xf8] sm:$0xff]
    %v5770 = vpack.c.bf16 %v5764, %v5764
    %v5771 = vld [vmem:[#allocation16] sm:$0xff]
    %v5772 = vld [vmem:[#allocation16 + $0x8] sm:$0xff]
    %v5773 = vld [vmem:[#allocation16 + $0x10] sm:$0xff]
    %v5774 = vld [vmem:[#allocation16 + $0x18] sm:$0xff]
    %v5775 = vld [vmem:[#allocation16 + $0x20] sm:$0xff]
    %v5776 = vld [vmem:[#allocation16 + $0x28] sm:$0xff]
    %v5777 = vld [vmem:[#allocation16 + $0x30] sm:$0xff]
    %v5778 = vld [vmem:[#allocation16 + $0x38] sm:$0xff]
    %v5779 = vld [vmem:[#allocation16 + $0x40] sm:$0xff]
    %v5780 = vld [vmem:[#allocation16 + $0x48] sm:$0xff]
    %v5781 = vld [vmem:[#allocation16 + $0x50] sm:$0xff]
    %v5782 = vld [vmem:[#allocation16 + $0x58] sm:$0xff]
    %v5783 = vld [vmem:[#allocation16 + $0x60] sm:$0xff]
    %v5784 = vld [vmem:[#allocation16 + $0x68] sm:$0xff]
    %v5785 = vld [vmem:[#allocation16 + $0x70] sm:$0xff]
    %v5786 = vld [vmem:[#allocation16 + $0x78] sm:$0xff]
    %v5787 = vld [vmem:[#allocation16 + $0x80] sm:$0xff]
    %v5788 = vld [vmem:[#allocation16 + $0x88] sm:$0xff]
    %v5789 = vld [vmem:[#allocation16 + $0x90] sm:$0xff]
    %v5790 = vld [vmem:[#allocation16 + $0x98] sm:$0xff]
    %v5791 = vld [vmem:[#allocation16 + $0xa0] sm:$0xff]
    %v5792 = vld [vmem:[#allocation16 + $0xa8] sm:$0xff]
    %v5793 = vld [vmem:[#allocation16 + $0xb0] sm:$0xff]
    %v5794 = vld [vmem:[#allocation16 + $0xb8] sm:$0xff]
    %v5795 = vld [vmem:[#allocation16 + $0xc0] sm:$0xff]
    %v5796 = vld [vmem:[#allocation16 + $0xc8] sm:$0xff]
    %v5797 = vld [vmem:[#allocation16 + $0xd0] sm:$0xff]
    %v5798 = vld [vmem:[#allocation16 + $0xd8] sm:$0xff]
    %v5799 = vld [vmem:[#allocation16 + $0xe0] sm:$0xff]
    %v5800 = vld [vmem:[#allocation16 + $0xe8] sm:$0xff]
    %v5801 = vld [vmem:[#allocation16 + $0xf0] sm:$0xff]
    %v5802 = vld [vmem:[#allocation16 + $0xf8] sm:$0xff]
    %v5835 = vunpack.c.l.b16 %v5771
    %v5836 = vunpack.c.h.b16 %v5771
    %v5837 = vunpack.c.l.b16 %v5772
    %v5838 = vunpack.c.h.b16 %v5772
    %v5839 = vunpack.c.l.b16 %v5773
    %v5840 = vunpack.c.h.b16 %v5773
    %v5841 = vunpack.c.l.b16 %v5774
    %v5842 = vunpack.c.h.b16 %v5774
    %v5843 = vunpack.c.l.b16 %v5775
    %v5844 = vunpack.c.h.b16 %v5775
    %v5845 = vunpack.c.l.b16 %v5776
    %v5846 = vunpack.c.h.b16 %v5776
    %v5847 = vunpack.c.l.b16 %v5777
    %v5848 = vunpack.c.h.b16 %v5777
    %v5849 = vunpack.c.l.b16 %v5778
    %v5850 = vunpack.c.h.b16 %v5778
    %v5851 = vunpack.c.l.b16 %v5779
    %v5852 = vunpack.c.h.b16 %v5779
    %v5853 = vunpack.c.l.b16 %v5780
    %v5854 = vunpack.c.h.b16 %v5780
    %v5855 = vunpack.c.l.b16 %v5781
    %v5856 = vunpack.c.h.b16 %v5781
    %v5857 = vunpack.c.l.b16 %v5782
    %v5858 = vunpack.c.h.b16 %v5782
    %v5859 = vunpack.c.l.b16 %v5783
    %v5860 = vunpack.c.h.b16 %v5783
    %v5861 = vunpack.c.l.b16 %v5784
    %v5862 = vunpack.c.h.b16 %v5784
    %v5863 = vunpack.c.l.b16 %v5785
    %v5864 = vunpack.c.h.b16 %v5785
    %v5865 = vunpack.c.l.b16 %v5786
    %v5866 = vunpack.c.h.b16 %v5786
    %v5867 = vunpack.c.l.b16 %v5787
    %v5868 = vunpack.c.h.b16 %v5787
    %v5869 = vunpack.c.l.b16 %v5788
    %v5870 = vunpack.c.h.b16 %v5788
    %v5871 = vunpack.c.l.b16 %v5789
    %v5872 = vunpack.c.h.b16 %v5789
    %v5873 = vunpack.c.l.b16 %v5790
    %v5874 = vunpack.c.h.b16 %v5790
    %v5875 = vunpack.c.l.b16 %v5791
    %v5876 = vunpack.c.h.b16 %v5791
    %v5877 = vunpack.c.l.b16 %v5792
    %v5878 = vunpack.c.h.b16 %v5792
    %v5879 = vunpack.c.l.b16 %v5793
    %v5880 = vunpack.c.h.b16 %v5793
    %v5881 = vunpack.c.l.b16 %v5794
    %v5882 = vunpack.c.h.b16 %v5794
    %v5883 = vunpack.c.l.b16 %v5795
    %v5884 = vunpack.c.h.b16 %v5795
    %v5885 = vunpack.c.l.b16 %v5796
    %v5886 = vunpack.c.h.b16 %v5796
    %v5887 = vunpack.c.l.b16 %v5797
    %v5888 = vunpack.c.h.b16 %v5797
    %v5889 = vunpack.c.l.b16 %v5798
    %v5890 = vunpack.c.h.b16 %v5798
    %v5891 = vunpack.c.l.b16 %v5799
    %v5892 = vunpack.c.h.b16 %v5799
    %v5893 = vunpack.c.l.b16 %v5800
    %v5894 = vunpack.c.h.b16 %v5800
    %v5895 = vunpack.c.l.b16 %v5801
    %v5896 = vunpack.c.h.b16 %v5801
    %v5897 = vunpack.c.l.b16 %v5802
    %v5898 = vunpack.c.h.b16 %v5802
    %v5899 = vpack.c.b16 %v5839, %v5835
    %v5900 = vpack.c.b16 %v5840, %v5836
    %v5901 = vpack.c.b16 %v5841, %v5837
    %v5902 = vpack.c.b16 %v5842, %v5838
    %v5903 = vpack.c.b16 %v5847, %v5843
    %v5904 = vpack.c.b16 %v5848, %v5844
    %v5905 = vpack.c.b16 %v5849, %v5845
    %v5906 = vpack.c.b16 %v5850, %v5846
    %v5907 = vpack.c.b16 %v5855, %v5851
    %v5908 = vpack.c.b16 %v5856, %v5852
    %v5909 = vpack.c.b16 %v5857, %v5853
    %v5910 = vpack.c.b16 %v5858, %v5854
    %v5911 = vpack.c.b16 %v5863, %v5859
    %v5912 = vpack.c.b16 %v5864, %v5860
    %v5913 = vpack.c.b16 %v5865, %v5861
    %v5914 = vpack.c.b16 %v5866, %v5862
    %v5915 = vpack.c.b16 %v5871, %v5867
    %v5916 = vpack.c.b16 %v5872, %v5868
    %v5917 = vpack.c.b16 %v5873, %v5869
    %v5918 = vpack.c.b16 %v5874, %v5870
    %v5919 = vpack.c.b16 %v5879, %v5875
    %v5920 = vpack.c.b16 %v5880, %v5876
    %v5921 = vpack.c.b16 %v5881, %v5877
    %v5922 = vpack.c.b16 %v5882, %v5878
    %v5923 = vpack.c.b16 %v5887, %v5883
    %v5924 = vpack.c.b16 %v5888, %v5884
    %v5925 = vpack.c.b16 %v5889, %v5885
    %v5926 = vpack.c.b16 %v5890, %v5886
    %v5927 = vpack.c.b16 %v5895, %v5891
    %v5928 = vpack.c.b16 %v5896, %v5892
    %v5929 = vpack.c.b16 %v5897, %v5893
    %v5930 = vpack.c.b16 %v5898, %v5894
    %5963 = vmatpush.bf16.msra.mxu0 %v5927
    %5964 = vmatpush.bf16.msra.mxu0 %v5923
    %5965 = vmatpush.bf16.msra.mxu0 %v5919
    %5966 = vmatpush.bf16.msra.mxu0 %v5915
    %5967 = vmatpush.bf16.msra.mxu0 %v5911
    %5968 = vmatpush.bf16.msra.mxu0 %v5907
    %5969 = vmatpush.bf16.msra.mxu0 %v5903
    %5970 = vmatpush.bf16.msra.mxu0 %v5899
    %5971 = vmatmul.bf16.gmra.mxu0 %v5770
    %v5972 = vpop.f32.mrf.mxu0
    %v5973 = vadd.f32 0.0, %v5972
    %v5974 = vpop.f32.mrf.mxu0
    %5975 = vdwg.mxu0
    %5976 = vmatpush.bf16.msra.mxu0 %v5928
    %5977 = vmatpush.bf16.msra.mxu0 %v5924
    %5978 = vmatpush.bf16.msra.mxu0 %v5920
    %5979 = vmatpush.bf16.msra.mxu0 %v5916
    %5980 = vmatpush.bf16.msra.mxu0 %v5912
    %5981 = vmatpush.bf16.msra.mxu0 %v5908
    %5982 = vmatpush.bf16.msra.mxu0 %v5904
    %5983 = vmatpush.bf16.msra.mxu0 %v5900
    %5984 = vmatmul.bf16.gmra.mxu0 %v5770
    %v5985 = vpop.f32.mrf.mxu0
    %v5986 = vadd.f32 0.0, %v5985
    %v5987 = vpop.f32.mrf.mxu0
    %5988 = vdwg.mxu0
    %5989 = vmatpush.bf16.msra.mxu0 %v5929
    %5990 = vmatpush.bf16.msra.mxu0 %v5925
    %5991 = vmatpush.bf16.msra.mxu0 %v5921
    %5992 = vmatpush.bf16.msra.mxu0 %v5917
    %5993 = vmatpush.bf16.msra.mxu0 %v5913
    %5994 = vmatpush.bf16.msra.mxu0 %v5909
    %5995 = vmatpush.bf16.msra.mxu0 %v5905
    %5996 = vmatpush.bf16.msra.mxu0 %v5901
    %5997 = vmatmul.bf16.gmra.mxu0 %v5770
    %v5998 = vpop.f32.mrf.mxu0
    %v5999 = vadd.f32 0.0, %v5998
    %v6000 = vpop.f32.mrf.mxu0
    %6001 = vdwg.mxu0
    %6002 = vmatpush.bf16.msra.mxu0 %v5930
    %6003 = vmatpush.bf16.msra.mxu0 %v5926
    %6004 = vmatpush.bf16.msra.mxu0 %v5922
    %6005 = vmatpush.bf16.msra.mxu0 %v5918
    %6006 = vmatpush.bf16.msra.mxu0 %v5914
    %6007 = vmatpush.bf16.msra.mxu0 %v5910
    %6008 = vmatpush.bf16.msra.mxu0 %v5906
    %6009 = vmatpush.bf16.msra.mxu0 %v5902
    %6010 = vmatmul.bf16.gmra.mxu0 %v5770
    %v6011 = vpop.f32.mrf.mxu0
    %v6012 = vadd.f32 0.0, %v6011
    %v6013 = vpop.f32.mrf.mxu0
    %6014 = vdwg.mxu0
    %v6015 = vadd.f32 %v5766, %v5973
    %v6016 = vadd.f32 %v5767, %v5986
    %v6017 = vadd.f32 %v5768, %v5999
    %v6018 = vadd.f32 %v5769, %v6012
    %v6019 = vxor.u32 %v6015, 2147483648
    %v6020 = vmul.f32 %v6019, 1.442695
    %v6021 = vpow.pop %v6020
    %v6022 = vadd.f32 %v6021, 1.0
    %v6023 = vrcp.pop %v6022
    %v6024 = vmul.f32 %v6022, %v6023
    %v6025 = vsub.f32 1.0, %v6024
    %v6026 = vmul.f32 %v6023, %v6025
    %v6027 = vadd.f32 %v6023, %v6026
    %vm6028 = vweird.f32 %v6022
    %vm6029 = vweird.f32 %v6023
    %vm6030 = vmor %vm6028, %vm6029
    %v6031 = vsel %vm6030, %v6023, %v6027
    %v6032 = vand.u32 2147483647, %v6022
    %vm6033 = vcmp.eq.f32.partialorder %v6032, 8.507059e+37
    %v6034 = vand.u32 %v6022, 2147483648
    %v6035 = vor.u32 1.1754944e-38, %v6034
    %v6036 = vsel %vm6033, %v6035, %v6031
    %v6037 = vmul.f32 1.0, %v6036
    %v6038 = vxor.u32 %v6016, 2147483648
    %v6039 = vmul.f32 %v6038, 1.442695
    %v6040 = vpow.pop %v6039
    %v6041 = vadd.f32 %v6040, 1.0
    %v6042 = vrcp.pop %v6041
    %v6043 = vmul.f32 %v6041, %v6042
    %v6044 = vsub.f32 1.0, %v6043
    %v6045 = vmul.f32 %v6042, %v6044
    %v6046 = vadd.f32 %v6042, %v6045
    %vm6047 = vweird.f32 %v6041
    %vm6048 = vweird.f32 %v6042
    %vm6049 = vmor %vm6047, %vm6048
    %v6050 = vsel %vm6049, %v6042, %v6046
    %v6051 = vand.u32 2147483647, %v6041
    %vm6052 = vcmp.eq.f32.partialorder %v6051, 8.507059e+37
    %v6053 = vand.u32 %v6041, 2147483648
    %v6054 = vor.u32 1.1754944e-38, %v6053
    %v6055 = vsel %vm6052, %v6054, %v6050
    %v6056 = vmul.f32 1.0, %v6055
    %v6057 = vtanh.pop %v6017
    %v6058 = vxor.u32 %v6018, 2147483648
    %v6059 = vmul.f32 %v6058, 1.442695
    %v6060 = vpow.pop %v6059
    %v6061 = vadd.f32 %v6060, 1.0
    %v6062 = vrcp.pop %v6061
    %v6063 = vmul.f32 %v6061, %v6062
    %v6064 = vsub.f32 1.0, %v6063
    %v6065 = vmul.f32 %v6062, %v6064
    %v6066 = vadd.f32 %v6062, %v6065
    %vm6067 = vweird.f32 %v6061
    %vm6068 = vweird.f32 %v6062
    %vm6069 = vmor %vm6067, %vm6068
    %v6070 = vsel %vm6069, %v6062, %v6066
    %v6071 = vand.u32 2147483647, %v6061
    %vm6072 = vcmp.eq.f32.partialorder %v6071, 8.507059e+37
    %v6073 = vand.u32 %v6061, 2147483648
    %v6074 = vor.u32 1.1754944e-38, %v6073
    %v6075 = vsel %vm6072, %v6074, %v6070
    %v6076 = vmul.f32 1.0, %v6075
    %v6077 = vmul.f32 %v6056, %v5762
    %v6078 = vmul.f32 %v6037, %v6057
    %v6079 = vadd.f32 %v6077, %v6078
    %v6080 = vtanh.pop %v6079
    %v6081 = vmul.f32 %v6076, %v6080
    %6082 = vst [vmem:[#allocation3 + $0x38] sm:$0xff] %v6081
    %v6083 = vld [vmem:[#allocation3] sm:$0xff]
    %v6084 = vld [vmem:[#allocation3 + $0x8] sm:$0xff]
    %v6085 = vld [vmem:[#allocation3 + $0x10] sm:$0xff]
    %v6086 = vld [vmem:[#allocation3 + $0x18] sm:$0xff]
    %v6087 = vld [vmem:[#allocation3 + $0x20] sm:$0xff]
    %v6088 = vld [vmem:[#allocation3 + $0x28] sm:$0xff]
    %v6089 = vld [vmem:[#allocation3 + $0x30] sm:$0xff]
    %v6090 = vld [vmem:[#allocation3 + $0x38] sm:$0xff]
    %v6091 = vpack.c.bf16 %v6084, %v6083
    %v6092 = vpack.c.bf16 %v6086, %v6085
    %v6093 = vpack.c.bf16 %v6088, %v6087
    %v6094 = vpack.c.bf16 %v6090, %v6089
    %v6095 = vld [vmem:[#allocation19] sm:$0xf]
    %v6096 = vld [vmem:[#allocation19 + $0x4] sm:$0xf]
    %v6097 = vld [vmem:[#allocation19 + $0x8] sm:$0xf]
    %v6098 = vld [vmem:[#allocation19 + $0xc] sm:$0xf]
    %v6099 = vld [vmem:[#allocation19 + $0x10] sm:$0xf]
    %v6100 = vld [vmem:[#allocation19 + $0x14] sm:$0xf]
    %v6101 = vld [vmem:[#allocation19 + $0x18] sm:$0xf]
    %v6102 = vld [vmem:[#allocation19 + $0x1c] sm:$0xf]
    %v6103 = vld [vmem:[#allocation19 + $0x20] sm:$0xf]
    %v6104 = vld [vmem:[#allocation19 + $0x24] sm:$0xf]
    %v6105 = vld [vmem:[#allocation19 + $0x28] sm:$0xf]
    %v6106 = vld [vmem:[#allocation19 + $0x2c] sm:$0xf]
    %v6107 = vld [vmem:[#allocation19 + $0x30] sm:$0xf]
    %v6108 = vld [vmem:[#allocation19 + $0x34] sm:$0xf]
    %v6109 = vld [vmem:[#allocation19 + $0x38] sm:$0xf]
    %v6110 = vld [vmem:[#allocation19 + $0x3c] sm:$0xf]
    %v6111 = vld [vmem:[%s10] sm:$0x1]
    %v6113 = vperm.slane %v6111, 0
    %v6131 = vunpack.c.l.b16 %v6095
    %v6132 = vunpack.c.l.b16 %v6096
    %v6133 = vunpack.c.l.b16 %v6097
    %v6134 = vunpack.c.l.b16 %v6098
    %v6135 = vunpack.c.l.b16 %v6099
    %v6136 = vunpack.c.l.b16 %v6100
    %v6137 = vunpack.c.l.b16 %v6101
    %v6138 = vunpack.c.l.b16 %v6102
    %v6139 = vunpack.c.l.b16 %v6103
    %v6140 = vunpack.c.l.b16 %v6104
    %v6141 = vunpack.c.l.b16 %v6105
    %v6142 = vunpack.c.l.b16 %v6106
    %v6143 = vunpack.c.l.b16 %v6107
    %v6144 = vunpack.c.l.b16 %v6108
    %v6145 = vunpack.c.l.b16 %v6109
    %v6146 = vunpack.c.l.b16 %v6110
    %v6147 = vpack.c.b16 %v6132, %v6131
    %v6148 = vpack.c.b16 %v6134, %v6133
    %v6149 = vpack.c.b16 %v6136, %v6135
    %v6150 = vpack.c.b16 %v6138, %v6137
    %v6151 = vpack.c.b16 %v6140, %v6139
    %v6152 = vpack.c.b16 %v6142, %v6141
    %v6153 = vpack.c.b16 %v6144, %v6143
    %v6154 = vpack.c.b16 %v6146, %v6145
    %6163 = vmatpush.bf16.msra.mxu0 %v6154
    %6164 = vmatpush.bf16.msra.mxu0 %v6153
    %6165 = vmatpush.bf16.msra.mxu0 %v6152
    %6166 = vmatpush.bf16.msra.mxu0 %v6151
    %6167 = vmatpush.bf16.msra.mxu0 %v6150
    %6168 = vmatpush.bf16.msra.mxu0 %v6149
    %6169 = vmatpush.bf16.msra.mxu0 %v6148
    %6170 = vmatpush.bf16.msra.mxu0 %v6147
    %6171 = vmatmul.bf16.gmra.mxu0 %v6091
    %v6172 = vpop.f32.mrf.mxu0
    %v6173 = vadd.f32 %v6113, %v6172
    %v6174 = vpop.f32.mrf.mxu0
    %v6175 = vadd.f32 %v6113, %v6174
    %6176 = vmatmul.bf16.gmra.mxu0 %v6092
    %v6177 = vpop.f32.mrf.mxu0
    %v6178 = vadd.f32 %v6113, %v6177
    %v6179 = vpop.f32.mrf.mxu0
    %v6180 = vadd.f32 %v6113, %v6179
    %6181 = vmatmul.bf16.gmra.mxu0 %v6093
    %v6182 = vpop.f32.mrf.mxu0
    %v6183 = vadd.f32 %v6113, %v6182
    %v6184 = vpop.f32.mrf.mxu0
    %v6185 = vadd.f32 %v6113, %v6184
    %6186 = vmatmul.bf16.gmra.mxu0 %v6094
    %v6187 = vpop.f32.mrf.mxu0
    %v6188 = vadd.f32 %v6113, %v6187
    %v6189 = vpop.f32.mrf.mxu0
    %v6190 = vadd.f32 %v6113, %v6189
    %6191 = vdwg.mxu0
    %6192 = vst [vmem:[#allocation21] sm:$0xff] %v6173
    %6193 = vst [vmem:[#allocation21 + $0x8] sm:$0xff] %v6175
    %6194 = vst [vmem:[#allocation21 + $0x10] sm:$0xff] %v6178
    %6195 = vst [vmem:[#allocation21 + $0x18] sm:$0xff] %v6180
    %6196 = vst [vmem:[#allocation21 + $0x20] sm:$0xff] %v6183
    %6197 = vst [vmem:[#allocation21 + $0x28] sm:$0xff] %v6185
    %6198 = vst [vmem:[#allocation21 + $0x30] sm:$0xff] %v6188
    %6199 = vst [vmem:[#allocation21 + $0x38] sm:$0xff] %v6190
    // Predicated region
    $region74: #{tpu_custom_call.1} parent=1 // pred_check
      _
    $region75: #{tpu_custom_call.1} parent=1 // pred_check_branch
      %6201 = sbr.rel (0) target = $region77
    $region76: #{tpu_custom_call.1} parent=1 // pred_region
      %6203 = vsyncadd [#allocation9], 0
      %s6204 = sshll.u32 [#allocation21], 4
      %s6205 = int_to_ptr.vmem [resolvable:$true] %s6204
      %s6206 = sshll.u32 %s11, 4
      %s6207 = int_to_ptr.hbm [resolvable:$true] %s6206
      %6212 = dma.vmem_to_hbm [thread:$0]  %s6205, 1024, %s6207, [#allocation9], 128, 128, 8
    $region77: #{tpu_custom_call.1} parent=1 // pred_fallthru
      _
    // Predicated region
    $region78: #{tpu_custom_call.1} parent=1 // pred_check
      _
    $region79: #{tpu_custom_call.1} parent=1 // pred_check_branch
      %6214 = sbr.rel (0) target = $region81
    $region80: #{tpu_custom_call.1} parent=1 // pred_region
      %6216 = dma.done [#allocation9], 1024
    $region81: #{tpu_custom_call.1} parent=1 // pred_fallthru
      _
    %6217 = vsyncpa [#allocation8], 1
    %6218 = vsyncpa [#allocation11], 1
    %6219 = vsyncpa [#allocation14], 1
    %6220 = vsyncpa [#allocation17], 1
    %6221 = vsyncpa [#allocation20], 1
    %6222 = vsyncpa [#allocation9], 1

</llo_original>
